<compile_context>
chip_gen: v6e
topology: v6e:2x2x1
jax: 0.10.0
libtpu: 0.0.40
codegen_flags: <defaults>
</compile_context>

<pallas_src>
import jax
import jax.numpy as jnp
from jax.experimental import pallas as pl
from jax.experimental.pallas import tpu as pltpu

LATENT_DIM = 100
COND_SIZE = 10
FC_CH, FC_H, FC_W = 128, 4, 4                       # fc output viewed as (128, 4, 4)
_K_PAD = 128                                        # FC contraction padded 110 -> 128
_OUT_HW = 28
_TB = 8                                             # samples per grid step (sublane batch)
_LINE0 = FC_W * FC_CH                               # 512 lanes per input line

# (param name, input spatial size, stride, padding, K_in padded, per-kh N padded)
_CONV_LAYERS = (
    ("conv1_w", 4, 2, 1, 512, 512),
    ("conv2_w", 7, 2, 1, 512, 512),
    ("conv3_w", 14, 2, 1, 512, 128),
)


# ----------------------------------------------------------------------------
# Parameter init (same shapes / layout as the PyTorch module).
# ----------------------------------------------------------------------------
def init_generator_params(key, latent_dim=LATENT_DIM, condition_size=COND_SIZE):
    ks = jax.random.split(key, 5)

    def u(k, shape, fan_in):
        lim = 1.0 / jnp.sqrt(jnp.float32(fan_in))
        return jax.random.uniform(k, shape, jnp.float32, -lim, lim)

    in_dim = latent_dim + condition_size
    return {
        # Linear(110 -> 4*4*128), stored as (in, out) for x @ W
        "fc_w": u(ks[0], (in_dim, FC_H * FC_W * FC_CH), in_dim),
        "fc_b": u(ks[1], (1, FC_H * FC_W * FC_CH), in_dim),
        # ConvTranspose2d weights in PyTorch layout (Cin, Cout, kH, kW), bias=False
        "conv1_w": u(ks[2], (128, 64, 3, 3), 128 * 3 * 3),
        "conv2_w": u(ks[3], (64, 32, 4, 4), 64 * 4 * 4),
        "conv3_w": u(ks[4], (32, 1, 4, 4), 32 * 4 * 4),
    }


# ----------------------------------------------------------------------------
# One-time preprocessing of each ConvTranspose2d into
#     out = sum_kh  S[kh] @ (x @ B[kh])            (x in line layout)
# where B[kh] folds kernel-width taps + fractional stride + padding into one
# lane->lane map and S[kh] is a 0/1 row-placement matrix for the height axis.
# Here the k_h chunks of B are concatenated (each lane-padded to `n_pad`) so
# the kernel does one big matmul per layer, and S is kron'ed with I_TB so it
# acts per sample on the batched h-major layout (row index = h*TB + b).
# ----------------------------------------------------------------------------
def _tconv_operators(w_pt, n_in, stride, pad, k_in_pad, n_pad, tb,
                     permute_out=False, dtype=jnp.bfloat16):
    cin, cout, k, _ = w_pt.shape
    pp = k - 1 - pad                                  # equivalent direct-conv padding
    m = (n_in - 1) * stride - 2 * pad + k             # output spatial size
    # flipped kernel: wf[kh, kw, ci, co] = w_pt[ci, co, k-1-kh, k-1-kw]
    wf = jnp.transpose(w_pt[:, :, ::-1, ::-1], (2, 3, 0, 1))
    w_idx = jnp.arange(n_in)[:, None]                 # input column
    ow_idx = jnp.arange(m)[None, :]                   # output column
    kw = pp + w_idx * stride - ow_idx                 # width tap linking w -> ow
    valid = (kw >= 0) & (kw < k)
    kw_c = jnp.clip(kw, 0, k - 1)

    b_chunks = []
    for kh in range(k):
        bk = wf[kh][kw_c]                             # (n_in, m, Cin, Cout)
        bk = jnp.where(valid[:, :, None, None], bk, 0.0)
        bk = jnp.transpose(bk, (0, 2, 1, 3)).reshape(n_in * cin, m * cout)
        # pad K rows (input lane padding of previous layer) + N lanes to 128-mult
        bk = jnp.pad(bk, ((0, k_in_pad - n_in * cin), (0, n_pad - m * cout)))
        b_chunks.append(bk)
    b_cat = jnp.concatenate(b_chunks, axis=1).astype(dtype)   # (k_in_pad, k*n_pad)

    oh_idx = jnp.arange(m)[:, None]
    h_idx = jnp.arange(n_in)[None, :]
    eye = jnp.eye(tb, dtype=jnp.float32)
    if permute_out:
        # new row b*m + oh  <-  old row oh*tb + b   (emit batch-major output)
        out_perm = (jnp.arange(m)[None, :] * tb
                    + jnp.arange(tb)[:, None]).reshape(-1)
    s_list = []
    for kh in range(k):
        s = (pp + h_idx * stride == oh_idx + kh).astype(jnp.float32)   # (m, n_in)
        sb = jnp.kron(s, eye)                         # rows oh*tb+b, cols h*tb+b
        if permute_out:
            sb = sb[out_perm]
        s_list.append(sb)
    s_op = jnp.stack(s_list, axis=0)                  # (k, m*tb, n_in*tb) f32
    return s_op, b_cat


def prepare_kernel_params(params, tb=_TB):
    """Repack weights for the fused kernel (runs once, outside the hot path)."""
    in_dim = params["fc_w"].shape[0]
    # Permute FC output order (ci, h, w) -> (h, w, ci) so the FC result is
    # already NHWC "lines"; pad the contraction dim 110 -> 128.
    fcw = params["fc_w"].reshape(in_dim, FC_CH, FC_H, FC_W)
    fcw = jnp.transpose(fcw, (0, 2, 3, 1)).reshape(in_dim, FC_H * FC_W * FC_CH)
    fcw = jnp.pad(fcw, ((0, _K_PAD - in_dim), (0, 0)))
    fcb = params["fc_b"].reshape(1, FC_CH, FC_H, FC_W)
    fcb = jnp.transpose(fcb, (0, 2, 3, 1)).reshape(1, FC_H * FC_W * FC_CH)
    kp = {"fc_w": fcw.astype(jnp.bfloat16), "fc_b": fcb.astype(jnp.float32)}
    n_layers = len(_CONV_LAYERS)
    for li, (name, n_in, stride, pad, k_in_pad, n_pad) in enumerate(_CONV_LAYERS, 1):
        s_op, b_cat = _tconv_operators(
            params[name], n_in, stride, pad, k_in_pad, n_pad, tb,
            permute_out=(li == n_layers))
        kp[f"s{li}"] = s_op
        kp[f"b{li}"] = b_cat
    return kp


# ----------------------------------------------------------------------------
# Fused generator kernel: FC + 3 transposed convs for a TILE of _TB samples,
# all activations resident in VMEM, all contractions on the MXU
# (bf16 operands, f32 accumulation; 0/1 S placement matrices in f32).
# ----------------------------------------------------------------------------
def _generator_kernel(v_ref, fcw_ref, fcb_ref,
                      s1_ref, b1_ref, s2_ref, b2_ref, s3_ref, b3_ref,
                      o_ref, xline_ref):
    f32 = jnp.float32
    tb = v_ref.shape[0]

    # FC: (TB, 128) @ (128, 2048) + bias, ReLU.  Output lanes ordered (h, w, ci).
    v = v_ref[...].astype(jnp.bfloat16)
    y = jnp.dot(v, fcw_ref[...], preferred_element_type=f32)
    y = jnp.maximum(y + fcb_ref[...], 0.0)                      # (TB, 2048)

    # Re-arrange the FC output into batched h-major line layout
    # (FC_H*TB, W*Cin) = (32, 512): contiguous 8-row stores, static lane slices.
    for h in range(FC_H):
        xline_ref[h * tb:(h + 1) * tb, :] = y[:, h * _LINE0:(h + 1) * _LINE0]
    x = xline_ref[...]                                          # (32, 512) f32

    def tconv(x_lines, s_ref, b_ref):
        # ConvTranspose2d(stride=2)  ==  sum_kh  S[kh] @ (x_lines @ B[kh]);
        # B chunks are pre-concatenated -> one big MXU matmul, then aligned
        # lane slices + tiny 0/1 row-placement matmuls.
        k = s_ref.shape[0]
        n_pad = b_ref.shape[1] // k
        xb = x_lines.astype(jnp.bfloat16)
        t = jnp.dot(xb, b_ref[...], preferred_element_type=f32)  # (H*TB, k*n_pad)
        acc = None
        for kh in range(k):
            tk = t[:, kh * n_pad:(kh + 1) * n_pad]               # 128-aligned slice
            r = jnp.dot(s_ref[kh], tk, preferred_element_type=f32)
            acc = r if acc is None else acc + r
        return acc

    y1 = jnp.maximum(tconv(x, s1_ref, b1_ref), 0.0)             # (7*TB, 512)  valid 448
    y2 = jnp.maximum(tconv(y1, s2_ref, b2_ref), 0.0)            # (14*TB, 512) valid 448
    y3 = jnp.tanh(tconv(y2, s3_ref, b3_ref))                    # (TB*28, 128) b-major rows

    o_ref[...] = y3[:, :_OUT_HW].reshape(tb, _OUT_HW, _OUT_HW)


@jax.jit
def generator_forward(kparams, x, c):
    """Equivalent of Generator.forward(x, c) -> (B, 1, 28, 28)."""
    bsz = x.shape[0]
    v = jnp.concatenate(
        [x.reshape(bsz, -1).astype(jnp.float32), c.astype(jnp.float32)], axis=1)
    v = jnp.pad(v, ((0, 0), (0, _K_PAD - v.shape[1])))          # K: 110 -> 128
    b_pad = ((bsz + _TB - 1) // _TB) * _TB
    v = jnp.pad(v, ((0, b_pad - bsz), (0, 0)))                  # batch -> mult of TB

    def const_spec(a):
        zeros = (0,) * a.ndim
        return pl.BlockSpec(a.shape, lambda i, _z=zeros: _z)

    out = pl.pallas_call(
        _generator_kernel,
        out_shape=jax.ShapeDtypeStruct((b_pad, _OUT_HW, _OUT_HW), jnp.float32),
        grid=(b_pad // _TB,),
        in_specs=[
            pl.BlockSpec((_TB, _K_PAD), lambda i: (i, 0)),
            const_spec(kparams["fc_w"]), const_spec(kparams["fc_b"]),
            const_spec(kparams["s1"]), const_spec(kparams["b1"]),
            const_spec(kparams["s2"]), const_spec(kparams["b2"]),
            const_spec(kparams["s3"]), const_spec(kparams["b3"]),
        ],
        out_specs=pl.BlockSpec((_TB, _OUT_HW, _OUT_HW), lambda i: (i, 0, 0)),
        scratch_shapes=[pltpu.VMEM((FC_H * _TB, _LINE0), jnp.float32)],
        compiler_params=pltpu.CompilerParams(
            dimension_semantics=("parallel",),
            vmem_limit_bytes=32 * 1024 * 1024),
    )(v, kparams["fc_w"], kparams["fc_b"],
      kparams["s1"], kparams["b1"], kparams["s2"], kparams["b2"],
      kparams["s3"], kparams["b3"])
    return out[:bsz].reshape(bsz, 1, _OUT_HW, _OUT_HW)


# ----------------------------------------------------------------------------
# Pure-XLA reference of the exact PyTorch forward (validation only).
# ----------------------------------------------------------------------------
def _conv_transpose_ref(x_nhwc, w_pt, stride, pad):
    bsz, h, w, cin = x_nhwc.shape
    _, cout, k, _ = w_pt.shape
    oh = (h - 1) * stride - 2 * pad + k
    ow = (w - 1) * stride - 2 * pad + k
    up = jnp.zeros((bsz, (h - 1) * stride + 1, (w - 1) * stride + 1, cin),
                   x_nhwc.dtype)
    up = up.at[:, ::stride, ::stride, :].set(x_nhwc)
    pp = k - 1 - pad
    padded = jnp.pad(up, ((0, 0), (pp, pp), (pp, pp), (0, 0)))
    wf = jnp.transpose(w_pt[:, :, ::-1, ::-1], (2, 3, 0, 1))    # (kh, kw, ci, co)
    out = jnp.zeros((bsz, oh, ow, cout), jnp.float32)
    for kh in range(k):
        for kw in range(k):
            out = out + jnp.einsum("bhwc,cd->bhwd",
                                   padded[:, kh:kh + oh, kw:kw + ow, :],
                                   wf[kh, kw])
    return out


def generator_reference(params, x, c):
    bsz = x.shape[0]
    v = jnp.concatenate(
        [x.reshape(bsz, -1).astype(jnp.float32), c.astype(jnp.float32)], axis=1)
    y = jax.nn.relu(v @ params["fc_w"] + params["fc_b"])
    y = jnp.transpose(y.reshape(bsz, FC_CH, FC_H, FC_W), (0, 2, 3, 1))
    y = jax.nn.relu(_conv_transpose_ref(y, params["conv1_w"], 2, 1))
    y = jax.nn.relu(_conv_transpose_ref(y, params["conv2_w"], 2, 1))
    y = jnp.tanh(_conv_transpose_ref(y, params["conv3_w"], 2, 1))
    return jnp.transpose(y, (0, 3, 1, 2))


if __name__ == "__main__":
    key = jax.random.PRNGKey(0)
    k_par, k_x, k_c = jax.random.split(key, 3)

    params = init_generator_params(k_par)
    kparams = prepare_kernel_params(params)

    B = 2
    x = jax.random.normal(k_x, (B, LATENT_DIM), jnp.float32)     # latent noise
    labels = jax.random.randint(k_c, (B,), 0, COND_SIZE)
    c = jax.nn.one_hot(labels, COND_SIZE, dtype=jnp.float32)     # condition

    out = generator_forward(kparams, x, c)
    out = jax.block_until_ready(out)

    assert out.shape == (B, 1, 28, 28), out.shape
    assert bool(jnp.all(jnp.isfinite(out)))
    assert bool(jnp.all(jnp.abs(out) <= 1.0 + 1e-6))             # tanh range

    # Validate the fused Pallas kernel against the plain-XLA reference
    # (bf16 weights / f32 accumulation -> loose tolerance).
    ref = generator_reference(params, x, c)
    err = float(jnp.max(jnp.abs(out - ref)))
    scale = float(jnp.max(jnp.abs(ref)))
    assert err <= 0.06 * scale + 1e-4, (err, scale)

    print("KERNEL_OK")
</pallas_src>

<mosaic_0001>
module attributes {stable_mosaic.version = 11 : i64} {
  func.func @_generator_kernel(%arg0: i32, %arg1: memref<8x128xf32, #tpu.memory_space<vmem>>, %arg2: memref<128x2048xbf16, #tpu.memory_space<vmem>>, %arg3: memref<1x2048xf32, #tpu.memory_space<vmem>>, %arg4: memref<3x56x32xf32, #tpu.memory_space<vmem>>, %arg5: memref<512x1536xbf16, #tpu.memory_space<vmem>>, %arg6: memref<4x112x56xf32, #tpu.memory_space<vmem>>, %arg7: memref<512x2048xbf16, #tpu.memory_space<vmem>>, %arg8: memref<4x224x112xf32, #tpu.memory_space<vmem>>, %arg9: memref<512x512xbf16, #tpu.memory_space<vmem>>, %arg10: memref<8x28x28xf32, #tpu.memory_space<vmem>>, %arg11: memref<32x512xf32, #tpu.memory_space<vmem>>) attributes {dimension_semantics = [#tpu.dimension_semantics<parallel>], iteration_bounds = array<i64: 1>, scalar_prefetch = 0 : i64, scratch_operands = 1 : i64, tpu.core_type = #tpu.core_type<tc>, window_params = [{transform_indices = @transform_0, window_bounds = array<i64: 8, 128>}, {pipeline_mode = #tpu.pipeline_mode<synchronous>, transform_indices = @transform_1, window_bounds = array<i64: 128, 2048>}, {pipeline_mode = #tpu.pipeline_mode<synchronous>, transform_indices = @transform_2, window_bounds = array<i64: 1, 2048>}, {pipeline_mode = #tpu.pipeline_mode<synchronous>, transform_indices = @transform_3, window_bounds = array<i64: 3, 56, 32>}, {pipeline_mode = #tpu.pipeline_mode<synchronous>, transform_indices = @transform_4, window_bounds = array<i64: 512, 1536>}, {pipeline_mode = #tpu.pipeline_mode<synchronous>, transform_indices = @transform_5, window_bounds = array<i64: 4, 112, 56>}, {pipeline_mode = #tpu.pipeline_mode<synchronous>, transform_indices = @transform_6, window_bounds = array<i64: 512, 2048>}, {pipeline_mode = #tpu.pipeline_mode<synchronous>, transform_indices = @transform_7, window_bounds = array<i64: 4, 224, 112>}, {pipeline_mode = #tpu.pipeline_mode<synchronous>, transform_indices = @transform_8, window_bounds = array<i64: 512, 512>}, {transform_indices = @transform_9, window_bounds = array<i64: 8, 28, 28>}]} {
    %c0 = arith.constant 0 : index
    %c0_0 = arith.constant 0 : index
    %0 = vector.load %arg1[%c0, %c0_0] : memref<8x128xf32, #tpu.memory_space<vmem>>, vector<8x128xf32>
    %1 = arith.truncf %0 : vector<8x128xf32> to vector<8x128xbf16>
    %c0_1 = arith.constant 0 : index
    %c0_2 = arith.constant 0 : index
    %2 = vector.load %arg2[%c0_1, %c0_2] : memref<128x2048xbf16, #tpu.memory_space<vmem>>, vector<128x2048xbf16>
    %cst = arith.constant dense<0.000000e+00> : vector<8x2048xf32>
    %3 = tpu.matmul %1, %2, %cst {dimension_numbers = #tpu.dot_dimension_numbers<[1], [0], [0], [1], [0, 0, 1, 1], [], []>} : vector<8x128xbf16>, vector<128x2048xbf16>, vector<8x2048xf32> -> vector<8x2048xf32>
    %c0_3 = arith.constant 0 : index
    %c0_4 = arith.constant 0 : index
    %4 = vector.load %arg3[%c0_3, %c0_4] : memref<1x2048xf32, #tpu.memory_space<vmem>>, vector<1x2048xf32>
    %5 = vector.broadcast %4 : vector<1x2048xf32> to vector<8x2048xf32>
    %6 = arith.addf %3, %5 : vector<8x2048xf32>
    %cst_5 = arith.constant 0.000000e+00 : f32
    %7 = vector.broadcast %cst_5 : f32 to vector<8x2048xf32>
    %8 = arith.maximumf %6, %7 : vector<8x2048xf32>
    %9 = vector.extract_strided_slice %8 {offsets = [0, 0], sizes = [8, 512], strides = [1, 1]} : vector<8x2048xf32> to vector<8x512xf32>
    %c0_6 = arith.constant 0 : index
    %c0_7 = arith.constant 0 : index
    %10 = vector.load %arg11[%c0_6, %c0_7] : memref<32x512xf32, #tpu.memory_space<vmem>>, vector<8x512xf32>
    tpu.vector_store %arg11[%c0_6, %c0_7], %9 {strides = array<i32>} : memref<32x512xf32, #tpu.memory_space<vmem>>, vector<8x512xf32>,
    %11 = vector.extract_strided_slice %8 {offsets = [0, 512], sizes = [8, 512], strides = [1, 1]} : vector<8x2048xf32> to vector<8x512xf32>
    %c8 = arith.constant 8 : index
    %c0_8 = arith.constant 0 : index
    %12 = vector.load %arg11[%c8, %c0_8] : memref<32x512xf32, #tpu.memory_space<vmem>>, vector<8x512xf32>
    tpu.vector_store %arg11[%c8, %c0_8], %11 {strides = array<i32>} : memref<32x512xf32, #tpu.memory_space<vmem>>, vector<8x512xf32>,
    %13 = vector.extract_strided_slice %8 {offsets = [0, 1024], sizes = [8, 512], strides = [1, 1]} : vector<8x2048xf32> to vector<8x512xf32>
    %c16 = arith.constant 16 : index
    %c0_9 = arith.constant 0 : index
    %14 = vector.load %arg11[%c16, %c0_9] : memref<32x512xf32, #tpu.memory_space<vmem>>, vector<8x512xf32>
    tpu.vector_store %arg11[%c16, %c0_9], %13 {strides = array<i32>} : memref<32x512xf32, #tpu.memory_space<vmem>>, vector<8x512xf32>,
    %15 = vector.extract_strided_slice %8 {offsets = [0, 1536], sizes = [8, 512], strides = [1, 1]} : vector<8x2048xf32> to vector<8x512xf32>
    %c24 = arith.constant 24 : index
    %c0_10 = arith.constant 0 : index
    %16 = vector.load %arg11[%c24, %c0_10] : memref<32x512xf32, #tpu.memory_space<vmem>>, vector<8x512xf32>
    tpu.vector_store %arg11[%c24, %c0_10], %15 {strides = array<i32>} : memref<32x512xf32, #tpu.memory_space<vmem>>, vector<8x512xf32>,
    %c0_11 = arith.constant 0 : index
    %c0_12 = arith.constant 0 : index
    %17 = vector.load %arg11[%c0_11, %c0_12] : memref<32x512xf32, #tpu.memory_space<vmem>>, vector<32x512xf32>
    %18 = arith.truncf %17 : vector<32x512xf32> to vector<32x512xbf16>
    %c0_13 = arith.constant 0 : index
    %c0_14 = arith.constant 0 : index
    %19 = vector.load %arg5[%c0_13, %c0_14] : memref<512x1536xbf16, #tpu.memory_space<vmem>>, vector<512x1536xbf16>
    %cst_15 = arith.constant dense<0.000000e+00> : vector<32x1536xf32>
    %20 = tpu.matmul %18, %19, %cst_15 {dimension_numbers = #tpu.dot_dimension_numbers<[1], [0], [0], [1], [0, 0, 1, 1], [], []>} : vector<32x512xbf16>, vector<512x1536xbf16>, vector<32x1536xf32> -> vector<32x1536xf32>
    %21 = vector.extract_strided_slice %20 {offsets = [0, 0], sizes = [32, 512], strides = [1, 1]} : vector<32x1536xf32> to vector<32x512xf32>
    %c0_16 = arith.constant 0 : index
    %c0_17 = arith.constant 0 : index
    %c0_18 = arith.constant 0 : index
    %22 = vector.load %arg4[%c0_16, %c0_17, %c0_18] : memref<3x56x32xf32, #tpu.memory_space<vmem>>, vector<1x56x32xf32>
    %23 = vector.shape_cast %22 : vector<1x56x32xf32> to vector<56x32xf32>
    %cst_19 = arith.constant dense<0.000000e+00> : vector<56x512xf32>
    %24 = tpu.matmul %23, %21, %cst_19 {dimension_numbers = #tpu.dot_dimension_numbers<[1], [0], [0], [1], [0, 0, 1, 1], [], []>} : vector<56x32xf32>, vector<32x512xf32>, vector<56x512xf32> -> vector<56x512xf32>
    %25 = vector.extract_strided_slice %20 {offsets = [0, 512], sizes = [32, 512], strides = [1, 1]} : vector<32x1536xf32> to vector<32x512xf32>
    %c1 = arith.constant 1 : index
    %c0_20 = arith.constant 0 : index
    %c0_21 = arith.constant 0 : index
    %26 = vector.load %arg4[%c1, %c0_20, %c0_21] : memref<3x56x32xf32, #tpu.memory_space<vmem>>, vector<1x56x32xf32>
    %27 = vector.shape_cast %26 : vector<1x56x32xf32> to vector<56x32xf32>
    %cst_22 = arith.constant dense<0.000000e+00> : vector<56x512xf32>
    %28 = tpu.matmul %27, %25, %cst_22 {dimension_numbers = #tpu.dot_dimension_numbers<[1], [0], [0], [1], [0, 0, 1, 1], [], []>} : vector<56x32xf32>, vector<32x512xf32>, vector<56x512xf32> -> vector<56x512xf32>
    %29 = arith.addf %24, %28 : vector<56x512xf32>
    %30 = vector.extract_strided_slice %20 {offsets = [0, 1024], sizes = [32, 512], strides = [1, 1]} : vector<32x1536xf32> to vector<32x512xf32>
    %c2 = arith.constant 2 : index
    %c0_23 = arith.constant 0 : index
    %c0_24 = arith.constant 0 : index
    %31 = vector.load %arg4[%c2, %c0_23, %c0_24] : memref<3x56x32xf32, #tpu.memory_space<vmem>>, vector<1x56x32xf32>
    %32 = vector.shape_cast %31 : vector<1x56x32xf32> to vector<56x32xf32>
    %cst_25 = arith.constant dense<0.000000e+00> : vector<56x512xf32>
    %33 = tpu.matmul %32, %30, %cst_25 {dimension_numbers = #tpu.dot_dimension_numbers<[1], [0], [0], [1], [0, 0, 1, 1], [], []>} : vector<56x32xf32>, vector<32x512xf32>, vector<56x512xf32> -> vector<56x512xf32>
    %34 = arith.addf %29, %33 : vector<56x512xf32>
    %cst_26 = arith.constant 0.000000e+00 : f32
    %35 = vector.broadcast %cst_26 : f32 to vector<56x512xf32>
    %36 = arith.maximumf %34, %35 : vector<56x512xf32>
    %37 = arith.truncf %36 : vector<56x512xf32> to vector<56x512xbf16>
    %c0_27 = arith.constant 0 : index
    %c0_28 = arith.constant 0 : index
    %38 = vector.load %arg7[%c0_27, %c0_28] : memref<512x2048xbf16, #tpu.memory_space<vmem>>, vector<512x2048xbf16>
    %cst_29 = arith.constant dense<0.000000e+00> : vector<56x2048xf32>
    %39 = tpu.matmul %37, %38, %cst_29 {dimension_numbers = #tpu.dot_dimension_numbers<[1], [0], [0], [1], [0, 0, 1, 1], [], []>} : vector<56x512xbf16>, vector<512x2048xbf16>, vector<56x2048xf32> -> vector<56x2048xf32>
    %40 = vector.extract_strided_slice %39 {offsets = [0, 0], sizes = [56, 512], strides = [1, 1]} : vector<56x2048xf32> to vector<56x512xf32>
    %c0_30 = arith.constant 0 : index
    %c0_31 = arith.constant 0 : index
    %c0_32 = arith.constant 0 : index
    %41 = vector.load %arg6[%c0_30, %c0_31, %c0_32] : memref<4x112x56xf32, #tpu.memory_space<vmem>>, vector<1x112x56xf32>
    %42 = vector.shape_cast %41 : vector<1x112x56xf32> to vector<112x56xf32>
    %cst_33 = arith.constant dense<0.000000e+00> : vector<112x512xf32>
    %43 = tpu.matmul %42, %40, %cst_33 {dimension_numbers = #tpu.dot_dimension_numbers<[1], [0], [0], [1], [0, 0, 1, 1], [], []>} : vector<112x56xf32>, vector<56x512xf32>, vector<112x512xf32> -> vector<112x512xf32>
    %44 = vector.extract_strided_slice %39 {offsets = [0, 512], sizes = [56, 512], strides = [1, 1]} : vector<56x2048xf32> to vector<56x512xf32>
    %c1_34 = arith.constant 1 : index
    %c0_35 = arith.constant 0 : index
    %c0_36 = arith.constant 0 : index
    %45 = vector.load %arg6[%c1_34, %c0_35, %c0_36] : memref<4x112x56xf32, #tpu.memory_space<vmem>>, vector<1x112x56xf32>
    %46 = vector.shape_cast %45 : vector<1x112x56xf32> to vector<112x56xf32>
    %cst_37 = arith.constant dense<0.000000e+00> : vector<112x512xf32>
    %47 = tpu.matmul %46, %44, %cst_37 {dimension_numbers = #tpu.dot_dimension_numbers<[1], [0], [0], [1], [0, 0, 1, 1], [], []>} : vector<112x56xf32>, vector<56x512xf32>, vector<112x512xf32> -> vector<112x512xf32>
    %48 = arith.addf %43, %47 : vector<112x512xf32>
    %49 = vector.extract_strided_slice %39 {offsets = [0, 1024], sizes = [56, 512], strides = [1, 1]} : vector<56x2048xf32> to vector<56x512xf32>
    %c2_38 = arith.constant 2 : index
    %c0_39 = arith.constant 0 : index
    %c0_40 = arith.constant 0 : index
    %50 = vector.load %arg6[%c2_38, %c0_39, %c0_40] : memref<4x112x56xf32, #tpu.memory_space<vmem>>, vector<1x112x56xf32>
    %51 = vector.shape_cast %50 : vector<1x112x56xf32> to vector<112x56xf32>
    %cst_41 = arith.constant dense<0.000000e+00> : vector<112x512xf32>
    %52 = tpu.matmul %51, %49, %cst_41 {dimension_numbers = #tpu.dot_dimension_numbers<[1], [0], [0], [1], [0, 0, 1, 1], [], []>} : vector<112x56xf32>, vector<56x512xf32>, vector<112x512xf32> -> vector<112x512xf32>
    %53 = arith.addf %48, %52 : vector<112x512xf32>
    %54 = vector.extract_strided_slice %39 {offsets = [0, 1536], sizes = [56, 512], strides = [1, 1]} : vector<56x2048xf32> to vector<56x512xf32>
    %c3 = arith.constant 3 : index
    %c0_42 = arith.constant 0 : index
    %c0_43 = arith.constant 0 : index
    %55 = vector.load %arg6[%c3, %c0_42, %c0_43] : memref<4x112x56xf32, #tpu.memory_space<vmem>>, vector<1x112x56xf32>
    %56 = vector.shape_cast %55 : vector<1x112x56xf32> to vector<112x56xf32>
    %cst_44 = arith.constant dense<0.000000e+00> : vector<112x512xf32>
    %57 = tpu.matmul %56, %54, %cst_44 {dimension_numbers = #tpu.dot_dimension_numbers<[1], [0], [0], [1], [0, 0, 1, 1], [], []>} : vector<112x56xf32>, vector<56x512xf32>, vector<112x512xf32> -> vector<112x512xf32>
    %58 = arith.addf %53, %57 : vector<112x512xf32>
    %cst_45 = arith.constant 0.000000e+00 : f32
    %59 = vector.broadcast %cst_45 : f32 to vector<112x512xf32>
    %60 = arith.maximumf %58, %59 : vector<112x512xf32>
    %61 = arith.truncf %60 : vector<112x512xf32> to vector<112x512xbf16>
    %c0_46 = arith.constant 0 : index
    %c0_47 = arith.constant 0 : index
    %62 = vector.load %arg9[%c0_46, %c0_47] : memref<512x512xbf16, #tpu.memory_space<vmem>>, vector<512x512xbf16>
    %cst_48 = arith.constant dense<0.000000e+00> : vector<112x512xf32>
    %63 = tpu.matmul %61, %62, %cst_48 {dimension_numbers = #tpu.dot_dimension_numbers<[1], [0], [0], [1], [0, 0, 1, 1], [], []>} : vector<112x512xbf16>, vector<512x512xbf16>, vector<112x512xf32> -> vector<112x512xf32>
    %64 = vector.extract_strided_slice %63 {offsets = [0, 0], sizes = [112, 128], strides = [1, 1]} : vector<112x512xf32> to vector<112x128xf32>
    %c0_49 = arith.constant 0 : index
    %c0_50 = arith.constant 0 : index
    %c0_51 = arith.constant 0 : index
    %65 = vector.load %arg8[%c0_49, %c0_50, %c0_51] : memref<4x224x112xf32, #tpu.memory_space<vmem>>, vector<1x224x112xf32>
    %66 = vector.shape_cast %65 : vector<1x224x112xf32> to vector<224x112xf32>
    %cst_52 = arith.constant dense<0.000000e+00> : vector<224x128xf32>
    %67 = tpu.matmul %66, %64, %cst_52 {dimension_numbers = #tpu.dot_dimension_numbers<[1], [0], [0], [1], [0, 0, 1, 1], [], []>} : vector<224x112xf32>, vector<112x128xf32>, vector<224x128xf32> -> vector<224x128xf32>
    %68 = vector.extract_strided_slice %63 {offsets = [0, 128], sizes = [112, 128], strides = [1, 1]} : vector<112x512xf32> to vector<112x128xf32>
    %c1_53 = arith.constant 1 : index
    %c0_54 = arith.constant 0 : index
    %c0_55 = arith.constant 0 : index
    %69 = vector.load %arg8[%c1_53, %c0_54, %c0_55] : memref<4x224x112xf32, #tpu.memory_space<vmem>>, vector<1x224x112xf32>
    %70 = vector.shape_cast %69 : vector<1x224x112xf32> to vector<224x112xf32>
    %cst_56 = arith.constant dense<0.000000e+00> : vector<224x128xf32>
    %71 = tpu.matmul %70, %68, %cst_56 {dimension_numbers = #tpu.dot_dimension_numbers<[1], [0], [0], [1], [0, 0, 1, 1], [], []>} : vector<224x112xf32>, vector<112x128xf32>, vector<224x128xf32> -> vector<224x128xf32>
    %72 = arith.addf %67, %71 : vector<224x128xf32>
    %73 = vector.extract_strided_slice %63 {offsets = [0, 256], sizes = [112, 128], strides = [1, 1]} : vector<112x512xf32> to vector<112x128xf32>
    %c2_57 = arith.constant 2 : index
    %c0_58 = arith.constant 0 : index
    %c0_59 = arith.constant 0 : index
    %74 = vector.load %arg8[%c2_57, %c0_58, %c0_59] : memref<4x224x112xf32, #tpu.memory_space<vmem>>, vector<1x224x112xf32>
    %75 = vector.shape_cast %74 : vector<1x224x112xf32> to vector<224x112xf32>
    %cst_60 = arith.constant dense<0.000000e+00> : vector<224x128xf32>
    %76 = tpu.matmul %75, %73, %cst_60 {dimension_numbers = #tpu.dot_dimension_numbers<[1], [0], [0], [1], [0, 0, 1, 1], [], []>} : vector<224x112xf32>, vector<112x128xf32>, vector<224x128xf32> -> vector<224x128xf32>
    %77 = arith.addf %72, %76 : vector<224x128xf32>
    %78 = vector.extract_strided_slice %63 {offsets = [0, 384], sizes = [112, 128], strides = [1, 1]} : vector<112x512xf32> to vector<112x128xf32>
    %c3_61 = arith.constant 3 : index
    %c0_62 = arith.constant 0 : index
    %c0_63 = arith.constant 0 : index
    %79 = vector.load %arg8[%c3_61, %c0_62, %c0_63] : memref<4x224x112xf32, #tpu.memory_space<vmem>>, vector<1x224x112xf32>
    %80 = vector.shape_cast %79 : vector<1x224x112xf32> to vector<224x112xf32>
    %cst_64 = arith.constant dense<0.000000e+00> : vector<224x128xf32>
    %81 = tpu.matmul %80, %78, %cst_64 {dimension_numbers = #tpu.dot_dimension_numbers<[1], [0], [0], [1], [0, 0, 1, 1], [], []>} : vector<224x112xf32>, vector<112x128xf32>, vector<224x128xf32> -> vector<224x128xf32>
    %82 = arith.addf %77, %81 : vector<224x128xf32>
    %83 = math.tanh %82 : vector<224x128xf32>
    %84 = vector.extract_strided_slice %83 {offsets = [0, 0], sizes = [224, 28], strides = [1, 1]} : vector<224x128xf32> to vector<224x28xf32>
    %85 = vector.shape_cast %84 : vector<224x28xf32> to vector<8x28x28xf32>
    %c0_65 = arith.constant 0 : index
    %c0_66 = arith.constant 0 : index
    %c0_67 = arith.constant 0 : index
    %86 = vector.load %arg10[%c0_65, %c0_66, %c0_67] : memref<8x28x28xf32, #tpu.memory_space<vmem>>, vector<8x28x28xf32>
    tpu.vector_store %arg10[%c0_65, %c0_66, %c0_67], %85 {strides = array<i32>} : memref<8x28x28xf32, #tpu.memory_space<vmem>>, vector<8x28x28xf32>,
    return
  }
  func.func @transform_0(%arg0: i32) -> (i32, i32) {
    %c0_i32 = arith.constant 0 : i32
    %c0_i32_0 = arith.constant 0 : i32
    return %arg0, %c0_i32 : i32, i32
  }
  func.func @transform_1(%arg0: i32) -> (i32, i32) {
    %c0_i32 = arith.constant 0 : i32
    %c0_i32_0 = arith.constant 0 : i32
    %c0_i32_1 = arith.constant 0 : i32
    return %c0_i32, %c0_i32_0 : i32, i32
  }
  func.func @transform_2(%arg0: i32) -> (i32, i32) {
    %c0_i32 = arith.constant 0 : i32
    %c0_i32_0 = arith.constant 0 : i32
    %c0_i32_1 = arith.constant 0 : i32
    return %c0_i32, %c0_i32_0 : i32, i32
  }
  func.func @transform_3(%arg0: i32) -> (i32, i32, i32) {
    %c0_i32 = arith.constant 0 : i32
    %c0_i32_0 = arith.constant 0 : i32
    %c0_i32_1 = arith.constant 0 : i32
    %c0_i32_2 = arith.constant 0 : i32
    return %c0_i32, %c0_i32_0, %c0_i32_1 : i32, i32, i32
  }
  func.func @transform_4(%arg0: i32) -> (i32, i32) {
    %c0_i32 = arith.constant 0 : i32
    %c0_i32_0 = arith.constant 0 : i32
    %c0_i32_1 = arith.constant 0 : i32
    return %c0_i32, %c0_i32_0 : i32, i32
  }
  func.func @transform_5(%arg0: i32) -> (i32, i32, i32) {
    %c0_i32 = arith.constant 0 : i32
    %c0_i32_0 = arith.constant 0 : i32
    %c0_i32_1 = arith.constant 0 : i32
    %c0_i32_2 = arith.constant 0 : i32
    return %c0_i32, %c0_i32_0, %c0_i32_1 : i32, i32, i32
  }
  func.func @transform_6(%arg0: i32) -> (i32, i32) {
    %c0_i32 = arith.constant 0 : i32
    %c0_i32_0 = arith.constant 0 : i32
    %c0_i32_1 = arith.constant 0 : i32
    return %c0_i32, %c0_i32_0 : i32, i32
  }
  func.func @transform_7(%arg0: i32) -> (i32, i32, i32) {
    %c0_i32 = arith.constant 0 : i32
    %c0_i32_0 = arith.constant 0 : i32
    %c0_i32_1 = arith.constant 0 : i32
    %c0_i32_2 = arith.constant 0 : i32
    return %c0_i32, %c0_i32_0, %c0_i32_1 : i32, i32, i32
  }
  func.func @transform_8(%arg0: i32) -> (i32, i32) {
    %c0_i32 = arith.constant 0 : i32
    %c0_i32_0 = arith.constant 0 : i32
    %c0_i32_1 = arith.constant 0 : i32
    return %c0_i32, %c0_i32_0 : i32, i32
  }
  func.func @transform_9(%arg0: i32) -> (i32, i32, i32) {
    %c0_i32 = arith.constant 0 : i32
    %c0_i32_0 = arith.constant 0 : i32
    %c0_i32_1 = arith.constant 0 : i32
    return %arg0, %c0_i32, %c0_i32_0 : i32, i32, i32
  }
}

</mosaic_0001>

<llo_original>
// kernel: generator_forward.1
$region0: #{generator_forward.1}
  #allocation0 [shape = 'u32[]', space=smem, size = 0x4, offset = 0x4, fixed_abs, tag = 'smem constant byte address 0x4 - core index']
  #allocation1 [shape = 'u32[144,128]{1,0:T(1,128)}', space=vmem, size = 0x12000, scoped, tag = 'internal scratch']
  #allocation2 [shape = 'f32[32,512]{1,0:T(8,128)}', space=vmem, size = 0x10000, scoped, tag = 'scratch operand']
  %s0 = inlined_call_operand.vmem [shape: f32[8,128], index: 0, kind: input, shape index: {}]
  %s1 = inlined_call_operand.hbm [shape: bf16[128,2048], index: 1, kind: input, shape index: {}]
  %s2 = inlined_call_operand.hbm [shape: f32[1,2048], index: 2, kind: input, shape index: {}]
  %s3 = inlined_call_operand.vmem [shape: f32[3,56,32], index: 3, kind: input, shape index: {}]
  %s4 = inlined_call_operand.hbm [shape: bf16[512,1536], index: 4, kind: input, shape index: {}]
  %s5 = inlined_call_operand.vmem [shape: f32[4,112,56], index: 5, kind: input, shape index: {}]
  %s6 = inlined_call_operand.hbm [shape: bf16[512,2048], index: 6, kind: input, shape index: {}]
  %s7 = inlined_call_operand.hbm [shape: f32[4,224,112], index: 7, kind: input, shape index: {}]
  %s8 = inlined_call_operand.hbm [shape: bf16[512,512], index: 8, kind: input, shape index: {}]
  %s9 = inlined_call_operand.vmem [shape: f32[8,28,28], index: 9, kind: output, shape index: {}]
  %s10 = sld [smem:[#allocation0]]
  $region70: #{generator_forward.1} parent=0
    _
  %s12 = ssub.s32 1, %s10
  %s13 = scalar_select 0, %s12, %s10
  $region1: #{generator_forward.1} parent=0
    #allocation3 [shape = 'u8[524288]{0}', space=vmem, size = 0x80000, scoped, tag = 'input window, operand 1, single buffered']
    #allocation4 [shape = 's32[1]{0}', space=sflag, size = 0x4, scoped, tag = 'scoped memory for generator_forward.1']
    #allocation5 [shape = 'u8[8192]{0}', space=vmem, size = 0x2000, scoped, tag = 'input window, operand 2, single buffered']
    #allocation6 [shape = 's32[1]{0}', space=sflag, size = 0x4, scoped, tag = 'scoped memory for generator_forward.1']
    #allocation7 [shape = 'u8[1572864]{0}', space=vmem, size = 0x180000, scoped, tag = 'input window, operand 4, single buffered']
    #allocation8 [shape = 'u8[2097152]{0}', space=vmem, size = 0x200000, scoped, tag = 'input window, operand 6, single buffered']
    #allocation9 [shape = 's32[1]{0}', space=sflag, size = 0x4, scoped, tag = 'scoped memory for generator_forward.1']
    #allocation10 [shape = 'u8[458752]{0}', space=vmem, size = 0x70000, scoped, tag = 'input window, operand 7, single buffered']
    #allocation11 [shape = 'u8[524288]{0}', space=vmem, size = 0x80000, scoped, tag = 'input window, operand 8, single buffered']
    #allocation12 [shape = 's32[1]{0}', space=sflag, size = 0x4, scoped, tag = 'scoped memory for generator_forward.1']
    %14 = vsyncpa [#allocation4], 0
    %15 = vsyncpa [#allocation6], 0
    %16 = vsyncpa [#allocation9], 0
    %17 = vsyncpa [#allocation12], 0
    // Predicated region
    $region2: #{generator_forward.1} parent=1 // pred_check
      _
    $region3: #{generator_forward.1} parent=1 // pred_check_branch
      %19 = sbr.rel (0) target = $region5
    $region4: #{generator_forward.1} parent=1 // pred_region
      _
    $region5: #{generator_forward.1} parent=1 // pred_fallthru
      _
    // Predicated region
    $region6: #{generator_forward.1} parent=1 // pred_check
      _
    $region7: #{generator_forward.1} parent=1 // pred_check_branch
      %21 = sbr.rel (0) target = $region9
    $region8: #{generator_forward.1} parent=1 // pred_region
      %s23 = ssub.s32 16384, 16384
      %24 = vsyncadd [#allocation4], %s23
      %s25 = sshll.u32 [#allocation3], 4
      %s26 = int_to_ptr.vmem [resolvable:$true] %s25
      %31 = dma.hbm_to_vmem [thread:$0]  %s1, 16384, %s26, [#allocation4], 1024, 1024, 64
    $region9: #{generator_forward.1} parent=1 // pred_fallthru
      _
    // Predicated region
    $region10: #{generator_forward.1} parent=1 // pred_check
      _
    $region11: #{generator_forward.1} parent=1 // pred_check_branch
      %33 = sbr.rel (0) target = $region13
    $region12: #{generator_forward.1} parent=1 // pred_region
      %s35 = ssub.s32 256, 256
      %36 = vsyncadd [#allocation6], %s35
      %s38 = sshll.u32 [#allocation5], 4
      %s39 = int_to_ptr.vmem [resolvable:$true] %s38
      %41 = dma.hbm_to_vmem [thread:$0]  %s2, 256, %s39, [#allocation6]
    $region13: #{generator_forward.1} parent=1 // pred_fallthru
      _
    // Predicated region
    $region14: #{generator_forward.1} parent=1 // pred_check
      _
    $region15: #{generator_forward.1} parent=1 // pred_check_branch
      %43 = sbr.rel (0) target = $region17
    $region16: #{generator_forward.1} parent=1 // pred_region
      _
    $region17: #{generator_forward.1} parent=1 // pred_fallthru
      _
    // Predicated region
    $region18: #{generator_forward.1} parent=1 // pred_check
      _
    $region19: #{generator_forward.1} parent=1 // pred_check_branch
      %45 = sbr.rel (0) target = $region21
    $region20: #{generator_forward.1} parent=1 // pred_region
      %s47 = ssub.s32 49152, 49152
      %48 = vsyncadd [#allocation6], %s47
      %s49 = sshll.u32 [#allocation7], 4
      %s50 = int_to_ptr.vmem [resolvable:$true] %s49
      %55 = dma.hbm_to_vmem [thread:$0]  %s4, 49152, %s50, [#allocation6], 768, 768, 48
    $region21: #{generator_forward.1} parent=1 // pred_fallthru
      _
    // Predicated region
    $region22: #{generator_forward.1} parent=1 // pred_check
      _
    $region23: #{generator_forward.1} parent=1 // pred_check_branch
      %57 = sbr.rel (0) target = $region25
    $region24: #{generator_forward.1} parent=1 // pred_region
      _
    $region25: #{generator_forward.1} parent=1 // pred_fallthru
      _
    // Predicated region
    $region26: #{generator_forward.1} parent=1 // pred_check
      _
    $region27: #{generator_forward.1} parent=1 // pred_check_branch
      %59 = sbr.rel (0) target = $region29
    $region28: #{generator_forward.1} parent=1 // pred_region
      %s61 = ssub.s32 65536, 65536
      %62 = vsyncadd [#allocation9], %s61
      %s63 = sshll.u32 [#allocation8], 4
      %s64 = int_to_ptr.vmem [resolvable:$true] %s63
      %69 = dma.hbm_to_vmem [thread:$0]  %s6, 65536, %s64, [#allocation9], 1024, 1024, 64
    $region29: #{generator_forward.1} parent=1 // pred_fallthru
      _
    // Predicated region
    $region30: #{generator_forward.1} parent=1 // pred_check
      _
    $region31: #{generator_forward.1} parent=1 // pred_check_branch
      %71 = sbr.rel (0) target = $region33
    $region32: #{generator_forward.1} parent=1 // pred_region
      %s73 = ssub.s32 14336, 14336
      %74 = vsyncadd [#allocation9], %s73
      %s75 = sshll.u32 [#allocation10], 4
      %s76 = int_to_ptr.vmem [resolvable:$true] %s75
      %81 = dma.hbm_to_vmem [thread:$0]  %s7, 14336, %s76, [#allocation9], 128, 128, 8
    $region33: #{generator_forward.1} parent=1 // pred_fallthru
      _
    // Predicated region
    $region34: #{generator_forward.1} parent=1 // pred_check
      _
    $region35: #{generator_forward.1} parent=1 // pred_check_branch
      %83 = sbr.rel (0) target = $region37
    $region36: #{generator_forward.1} parent=1 // pred_region
      %s85 = ssub.s32 16384, 16384
      %86 = vsyncadd [#allocation12], %s85
      %s87 = sshll.u32 [#allocation11], 4
      %s88 = int_to_ptr.vmem [resolvable:$true] %s87
      %93 = dma.hbm_to_vmem [thread:$0]  %s8, 16384, %s88, [#allocation12], 256, 256, 16
    $region37: #{generator_forward.1} parent=1 // pred_fallthru
      _
    // Predicated region
    $region38: #{generator_forward.1} parent=1 // pred_check
      _
    $region39: #{generator_forward.1} parent=1 // pred_check_branch
      %95 = sbr.rel (0) target = $region41
    $region40: #{generator_forward.1} parent=1 // pred_region
      %96 = dma.done [#allocation4], 16384
    $region41: #{generator_forward.1} parent=1 // pred_fallthru
      _
    // Predicated region
    $region42: #{generator_forward.1} parent=1 // pred_check
      _
    $region43: #{generator_forward.1} parent=1 // pred_check_branch
      %98 = sbr.rel (0) target = $region45
    $region44: #{generator_forward.1} parent=1 // pred_region
      %99 = dma.done [#allocation6], 256
    $region45: #{generator_forward.1} parent=1 // pred_fallthru
      _
    // Predicated region
    $region46: #{generator_forward.1} parent=1 // pred_check
      _
    $region47: #{generator_forward.1} parent=1 // pred_check_branch
      %101 = sbr.rel (0) target = $region49
    $region48: #{generator_forward.1} parent=1 // pred_region
      %102 = dma.done [#allocation6], 49152
    $region49: #{generator_forward.1} parent=1 // pred_fallthru
      _
    // Predicated region
    $region50: #{generator_forward.1} parent=1 // pred_check
      _
    $region51: #{generator_forward.1} parent=1 // pred_check_branch
      %104 = sbr.rel (0) target = $region53
    $region52: #{generator_forward.1} parent=1 // pred_region
      %105 = dma.done [#allocation9], 65536
    $region53: #{generator_forward.1} parent=1 // pred_fallthru
      _
    // Predicated region
    $region54: #{generator_forward.1} parent=1 // pred_check
      _
    $region55: #{generator_forward.1} parent=1 // pred_check_branch
      %107 = sbr.rel (0) target = $region57
    $region56: #{generator_forward.1} parent=1 // pred_region
      %108 = dma.done [#allocation9], 14336
    $region57: #{generator_forward.1} parent=1 // pred_fallthru
      _
    // Predicated region
    $region58: #{generator_forward.1} parent=1 // pred_check
      _
    $region59: #{generator_forward.1} parent=1 // pred_check_branch
      %110 = sbr.rel (0) target = $region61
    $region60: #{generator_forward.1} parent=1 // pred_region
      %111 = dma.done [#allocation12], 16384
    $region61: #{generator_forward.1} parent=1 // pred_fallthru
      _
    %v113 = vld [vmem:[%s0] sm:$0xff]
    %v114 = vpack.c.bf16 %v113, %v113
    %v115 = vld [vmem:[#allocation3] sm:$0xff]
    %v116 = vld [vmem:[#allocation3 + $0x8] sm:$0xff]
    %v117 = vld [vmem:[#allocation3 + $0x10] sm:$0xff]
    %v118 = vld [vmem:[#allocation3 + $0x18] sm:$0xff]
    %v119 = vld [vmem:[#allocation3 + $0x20] sm:$0xff]
    %v120 = vld [vmem:[#allocation3 + $0x28] sm:$0xff]
    %v121 = vld [vmem:[#allocation3 + $0x30] sm:$0xff]
    %v122 = vld [vmem:[#allocation3 + $0x38] sm:$0xff]
    %v123 = vld [vmem:[#allocation3 + $0x40] sm:$0xff]
    %v124 = vld [vmem:[#allocation3 + $0x48] sm:$0xff]
    %v125 = vld [vmem:[#allocation3 + $0x50] sm:$0xff]
    %v126 = vld [vmem:[#allocation3 + $0x58] sm:$0xff]
    %v127 = vld [vmem:[#allocation3 + $0x60] sm:$0xff]
    %v128 = vld [vmem:[#allocation3 + $0x68] sm:$0xff]
    %v129 = vld [vmem:[#allocation3 + $0x70] sm:$0xff]
    %v130 = vld [vmem:[#allocation3 + $0x78] sm:$0xff]
    %v131 = vld [vmem:[#allocation3 + $0x80] sm:$0xff]
    %v132 = vld [vmem:[#allocation3 + $0x88] sm:$0xff]
    %v133 = vld [vmem:[#allocation3 + $0x90] sm:$0xff]
    %v134 = vld [vmem:[#allocation3 + $0x98] sm:$0xff]
    %v135 = vld [vmem:[#allocation3 + $0xa0] sm:$0xff]
    %v136 = vld [vmem:[#allocation3 + $0xa8] sm:$0xff]
    %v137 = vld [vmem:[#allocation3 + $0xb0] sm:$0xff]
    %v138 = vld [vmem:[#allocation3 + $0xb8] sm:$0xff]
    %v139 = vld [vmem:[#allocation3 + $0xc0] sm:$0xff]
    %v140 = vld [vmem:[#allocation3 + $0xc8] sm:$0xff]
    %v141 = vld [vmem:[#allocation3 + $0xd0] sm:$0xff]
    %v142 = vld [vmem:[#allocation3 + $0xd8] sm:$0xff]
    %v143 = vld [vmem:[#allocation3 + $0xe0] sm:$0xff]
    %v144 = vld [vmem:[#allocation3 + $0xe8] sm:$0xff]
    %v145 = vld [vmem:[#allocation3 + $0xf0] sm:$0xff]
    %v146 = vld [vmem:[#allocation3 + $0xf8] sm:$0xff]
    %v147 = vld [vmem:[#allocation3 + $0x100] sm:$0xff]
    %v148 = vld [vmem:[#allocation3 + $0x108] sm:$0xff]
    %v149 = vld [vmem:[#allocation3 + $0x110] sm:$0xff]
    %v150 = vld [vmem:[#allocation3 + $0x118] sm:$0xff]
    %v151 = vld [vmem:[#allocation3 + $0x120] sm:$0xff]
    %v152 = vld [vmem:[#allocation3 + $0x128] sm:$0xff]
    %v153 = vld [vmem:[#allocation3 + $0x130] sm:$0xff]
    %v154 = vld [vmem:[#allocation3 + $0x138] sm:$0xff]
    %v155 = vld [vmem:[#allocation3 + $0x140] sm:$0xff]
    %v156 = vld [vmem:[#allocation3 + $0x148] sm:$0xff]
    %v157 = vld [vmem:[#allocation3 + $0x150] sm:$0xff]
    %v158 = vld [vmem:[#allocation3 + $0x158] sm:$0xff]
    %v159 = vld [vmem:[#allocation3 + $0x160] sm:$0xff]
    %v160 = vld [vmem:[#allocation3 + $0x168] sm:$0xff]
    %v161 = vld [vmem:[#allocation3 + $0x170] sm:$0xff]
    %v162 = vld [vmem:[#allocation3 + $0x178] sm:$0xff]
    %v163 = vld [vmem:[#allocation3 + $0x180] sm:$0xff]
    %v164 = vld [vmem:[#allocation3 + $0x188] sm:$0xff]
    %v165 = vld [vmem:[#allocation3 + $0x190] sm:$0xff]
    %v166 = vld [vmem:[#allocation3 + $0x198] sm:$0xff]
    %v167 = vld [vmem:[#allocation3 + $0x1a0] sm:$0xff]
    %v168 = vld [vmem:[#allocation3 + $0x1a8] sm:$0xff]
    %v169 = vld [vmem:[#allocation3 + $0x1b0] sm:$0xff]
    %v170 = vld [vmem:[#allocation3 + $0x1b8] sm:$0xff]
    %v171 = vld [vmem:[#allocation3 + $0x1c0] sm:$0xff]
    %v172 = vld [vmem:[#allocation3 + $0x1c8] sm:$0xff]
    %v173 = vld [vmem:[#allocation3 + $0x1d0] sm:$0xff]
    %v174 = vld [vmem:[#allocation3 + $0x1d8] sm:$0xff]
    %v175 = vld [vmem:[#allocation3 + $0x1e0] sm:$0xff]
    %v176 = vld [vmem:[#allocation3 + $0x1e8] sm:$0xff]
    %v177 = vld [vmem:[#allocation3 + $0x1f0] sm:$0xff]
    %v178 = vld [vmem:[#allocation3 + $0x1f8] sm:$0xff]
    %v179 = vld [vmem:[#allocation3 + $0x200] sm:$0xff]
    %v180 = vld [vmem:[#allocation3 + $0x208] sm:$0xff]
    %v181 = vld [vmem:[#allocation3 + $0x210] sm:$0xff]
    %v182 = vld [vmem:[#allocation3 + $0x218] sm:$0xff]
    %v183 = vld [vmem:[#allocation3 + $0x220] sm:$0xff]
    %v184 = vld [vmem:[#allocation3 + $0x228] sm:$0xff]
    %v185 = vld [vmem:[#allocation3 + $0x230] sm:$0xff]
    %v186 = vld [vmem:[#allocation3 + $0x238] sm:$0xff]
    %v187 = vld [vmem:[#allocation3 + $0x240] sm:$0xff]
    %v188 = vld [vmem:[#allocation3 + $0x248] sm:$0xff]
    %v189 = vld [vmem:[#allocation3 + $0x250] sm:$0xff]
    %v190 = vld [vmem:[#allocation3 + $0x258] sm:$0xff]
    %v191 = vld [vmem:[#allocation3 + $0x260] sm:$0xff]
    %v192 = vld [vmem:[#allocation3 + $0x268] sm:$0xff]
    %v193 = vld [vmem:[#allocation3 + $0x270] sm:$0xff]
    %v194 = vld [vmem:[#allocation3 + $0x278] sm:$0xff]
    %v195 = vld [vmem:[#allocation3 + $0x280] sm:$0xff]
    %v196 = vld [vmem:[#allocation3 + $0x288] sm:$0xff]
    %v197 = vld [vmem:[#allocation3 + $0x290] sm:$0xff]
    %v198 = vld [vmem:[#allocation3 + $0x298] sm:$0xff]
    %v199 = vld [vmem:[#allocation3 + $0x2a0] sm:$0xff]
    %v200 = vld [vmem:[#allocation3 + $0x2a8] sm:$0xff]
    %v201 = vld [vmem:[#allocation3 + $0x2b0] sm:$0xff]
    %v202 = vld [vmem:[#allocation3 + $0x2b8] sm:$0xff]
    %v203 = vld [vmem:[#allocation3 + $0x2c0] sm:$0xff]
    %v204 = vld [vmem:[#allocation3 + $0x2c8] sm:$0xff]
    %v205 = vld [vmem:[#allocation3 + $0x2d0] sm:$0xff]
    %v206 = vld [vmem:[#allocation3 + $0x2d8] sm:$0xff]
    %v207 = vld [vmem:[#allocation3 + $0x2e0] sm:$0xff]
    %v208 = vld [vmem:[#allocation3 + $0x2e8] sm:$0xff]
    %v209 = vld [vmem:[#allocation3 + $0x2f0] sm:$0xff]
    %v210 = vld [vmem:[#allocation3 + $0x2f8] sm:$0xff]
    %v211 = vld [vmem:[#allocation3 + $0x300] sm:$0xff]
    %v212 = vld [vmem:[#allocation3 + $0x308] sm:$0xff]
    %v213 = vld [vmem:[#allocation3 + $0x310] sm:$0xff]
    %v214 = vld [vmem:[#allocation3 + $0x318] sm:$0xff]
    %v215 = vld [vmem:[#allocation3 + $0x320] sm:$0xff]
    %v216 = vld [vmem:[#allocation3 + $0x328] sm:$0xff]
    %v217 = vld [vmem:[#allocation3 + $0x330] sm:$0xff]
    %v218 = vld [vmem:[#allocation3 + $0x338] sm:$0xff]
    %v219 = vld [vmem:[#allocation3 + $0x340] sm:$0xff]
    %v220 = vld [vmem:[#allocation3 + $0x348] sm:$0xff]
    %v221 = vld [vmem:[#allocation3 + $0x350] sm:$0xff]
    %v222 = vld [vmem:[#allocation3 + $0x358] sm:$0xff]
    %v223 = vld [vmem:[#allocation3 + $0x360] sm:$0xff]
    %v224 = vld [vmem:[#allocation3 + $0x368] sm:$0xff]
    %v225 = vld [vmem:[#allocation3 + $0x370] sm:$0xff]
    %v226 = vld [vmem:[#allocation3 + $0x378] sm:$0xff]
    %v227 = vld [vmem:[#allocation3 + $0x380] sm:$0xff]
    %v228 = vld [vmem:[#allocation3 + $0x388] sm:$0xff]
    %v229 = vld [vmem:[#allocation3 + $0x390] sm:$0xff]
    %v230 = vld [vmem:[#allocation3 + $0x398] sm:$0xff]
    %v231 = vld [vmem:[#allocation3 + $0x3a0] sm:$0xff]
    %v232 = vld [vmem:[#allocation3 + $0x3a8] sm:$0xff]
    %v233 = vld [vmem:[#allocation3 + $0x3b0] sm:$0xff]
    %v234 = vld [vmem:[#allocation3 + $0x3b8] sm:$0xff]
    %v235 = vld [vmem:[#allocation3 + $0x3c0] sm:$0xff]
    %v236 = vld [vmem:[#allocation3 + $0x3c8] sm:$0xff]
    %v237 = vld [vmem:[#allocation3 + $0x3d0] sm:$0xff]
    %v238 = vld [vmem:[#allocation3 + $0x3d8] sm:$0xff]
    %v239 = vld [vmem:[#allocation3 + $0x3e0] sm:$0xff]
    %v240 = vld [vmem:[#allocation3 + $0x3e8] sm:$0xff]
    %v241 = vld [vmem:[#allocation3 + $0x3f0] sm:$0xff]
    %v242 = vld [vmem:[#allocation3 + $0x3f8] sm:$0xff]
    %v243 = vld [vmem:[#allocation5] sm:$0xff]
    %v244 = vld [vmem:[#allocation5 + $0x8] sm:$0xff]
    %v247 = vlaneseq
    %v248 = vshrl.u32 %v247, 7
    %v249 = vsub.s32 0, %v248
    %v250 = vrot.slane %v243, %v249
    %v251 = vlaneseq
    %v252 = vshrl.u32 %v251, 7
    %v253 = vsub.s32 1, %v252
    %v254 = vrot.slane %v243, %v253
    %v255 = vlaneseq
    %v256 = vshrl.u32 %v255, 7
    %v257 = vsub.s32 2, %v256
    %v258 = vrot.slane %v243, %v257
    %v259 = vlaneseq
    %v260 = vshrl.u32 %v259, 7
    %v261 = vsub.s32 3, %v260
    %v262 = vrot.slane %v243, %v261
    %v263 = vlaneseq
    %v264 = vshrl.u32 %v263, 7
    %v265 = vsub.s32 4, %v264
    %v266 = vrot.slane %v243, %v265
    %v267 = vlaneseq
    %v268 = vshrl.u32 %v267, 7
    %v269 = vsub.s32 5, %v268
    %v270 = vrot.slane %v243, %v269
    %v271 = vlaneseq
    %v272 = vshrl.u32 %v271, 7
    %v273 = vsub.s32 6, %v272
    %v274 = vrot.slane %v243, %v273
    %v275 = vlaneseq
    %v276 = vshrl.u32 %v275, 7
    %v277 = vsub.s32 7, %v276
    %v278 = vrot.slane %v243, %v277
    %v279 = vlaneseq
    %v280 = vshrl.u32 %v279, 7
    %v281 = vsub.s32 0, %v280
    %v282 = vrot.slane %v244, %v281
    %v283 = vlaneseq
    %v284 = vshrl.u32 %v283, 7
    %v285 = vsub.s32 1, %v284
    %v286 = vrot.slane %v244, %v285
    %v287 = vlaneseq
    %v288 = vshrl.u32 %v287, 7
    %v289 = vsub.s32 2, %v288
    %v290 = vrot.slane %v244, %v289
    %v291 = vlaneseq
    %v292 = vshrl.u32 %v291, 7
    %v293 = vsub.s32 3, %v292
    %v294 = vrot.slane %v244, %v293
    %v295 = vlaneseq
    %v296 = vshrl.u32 %v295, 7
    %v297 = vsub.s32 4, %v296
    %v298 = vrot.slane %v244, %v297
    %v299 = vlaneseq
    %v300 = vshrl.u32 %v299, 7
    %v301 = vsub.s32 5, %v300
    %v302 = vrot.slane %v244, %v301
    %v303 = vlaneseq
    %v304 = vshrl.u32 %v303, 7
    %v305 = vsub.s32 6, %v304
    %v306 = vrot.slane %v244, %v305
    %v307 = vlaneseq
    %v308 = vshrl.u32 %v307, 7
    %v309 = vsub.s32 7, %v308
    %v310 = vrot.slane %v244, %v309
    %v455 = vunpack.c.l.b16 %v115
    %v456 = vunpack.c.h.b16 %v115
    %v457 = vunpack.c.l.b16 %v116
    %v458 = vunpack.c.h.b16 %v116
    %v459 = vunpack.c.l.b16 %v117
    %v460 = vunpack.c.h.b16 %v117
    %v461 = vunpack.c.l.b16 %v118
    %v462 = vunpack.c.h.b16 %v118
    %v463 = vunpack.c.l.b16 %v119
    %v464 = vunpack.c.h.b16 %v119
    %v465 = vunpack.c.l.b16 %v120
    %v466 = vunpack.c.h.b16 %v120
    %v467 = vunpack.c.l.b16 %v121
    %v468 = vunpack.c.h.b16 %v121
    %v469 = vunpack.c.l.b16 %v122
    %v470 = vunpack.c.h.b16 %v122
    %v471 = vunpack.c.l.b16 %v123
    %v472 = vunpack.c.h.b16 %v123
    %v473 = vunpack.c.l.b16 %v124
    %v474 = vunpack.c.h.b16 %v124
    %v475 = vunpack.c.l.b16 %v125
    %v476 = vunpack.c.h.b16 %v125
    %v477 = vunpack.c.l.b16 %v126
    %v478 = vunpack.c.h.b16 %v126
    %v479 = vunpack.c.l.b16 %v127
    %v480 = vunpack.c.h.b16 %v127
    %v481 = vunpack.c.l.b16 %v128
    %v482 = vunpack.c.h.b16 %v128
    %v483 = vunpack.c.l.b16 %v129
    %v484 = vunpack.c.h.b16 %v129
    %v485 = vunpack.c.l.b16 %v130
    %v486 = vunpack.c.h.b16 %v130
    %v487 = vunpack.c.l.b16 %v131
    %v488 = vunpack.c.h.b16 %v131
    %v489 = vunpack.c.l.b16 %v132
    %v490 = vunpack.c.h.b16 %v132
    %v491 = vunpack.c.l.b16 %v133
    %v492 = vunpack.c.h.b16 %v133
    %v493 = vunpack.c.l.b16 %v134
    %v494 = vunpack.c.h.b16 %v134
    %v495 = vunpack.c.l.b16 %v135
    %v496 = vunpack.c.h.b16 %v135
    %v497 = vunpack.c.l.b16 %v136
    %v498 = vunpack.c.h.b16 %v136
    %v499 = vunpack.c.l.b16 %v137
    %v500 = vunpack.c.h.b16 %v137
    %v501 = vunpack.c.l.b16 %v138
    %v502 = vunpack.c.h.b16 %v138
    %v503 = vunpack.c.l.b16 %v139
    %v504 = vunpack.c.h.b16 %v139
    %v505 = vunpack.c.l.b16 %v140
    %v506 = vunpack.c.h.b16 %v140
    %v507 = vunpack.c.l.b16 %v141
    %v508 = vunpack.c.h.b16 %v141
    %v509 = vunpack.c.l.b16 %v142
    %v510 = vunpack.c.h.b16 %v142
    %v511 = vunpack.c.l.b16 %v143
    %v512 = vunpack.c.h.b16 %v143
    %v513 = vunpack.c.l.b16 %v144
    %v514 = vunpack.c.h.b16 %v144
    %v515 = vunpack.c.l.b16 %v145
    %v516 = vunpack.c.h.b16 %v145
    %v517 = vunpack.c.l.b16 %v146
    %v518 = vunpack.c.h.b16 %v146
    %v519 = vunpack.c.l.b16 %v147
    %v520 = vunpack.c.h.b16 %v147
    %v521 = vunpack.c.l.b16 %v148
    %v522 = vunpack.c.h.b16 %v148
    %v523 = vunpack.c.l.b16 %v149
    %v524 = vunpack.c.h.b16 %v149
    %v525 = vunpack.c.l.b16 %v150
    %v526 = vunpack.c.h.b16 %v150
    %v527 = vunpack.c.l.b16 %v151
    %v528 = vunpack.c.h.b16 %v151
    %v529 = vunpack.c.l.b16 %v152
    %v530 = vunpack.c.h.b16 %v152
    %v531 = vunpack.c.l.b16 %v153
    %v532 = vunpack.c.h.b16 %v153
    %v533 = vunpack.c.l.b16 %v154
    %v534 = vunpack.c.h.b16 %v154
    %v535 = vunpack.c.l.b16 %v155
    %v536 = vunpack.c.h.b16 %v155
    %v537 = vunpack.c.l.b16 %v156
    %v538 = vunpack.c.h.b16 %v156
    %v539 = vunpack.c.l.b16 %v157
    %v540 = vunpack.c.h.b16 %v157
    %v541 = vunpack.c.l.b16 %v158
    %v542 = vunpack.c.h.b16 %v158
    %v543 = vunpack.c.l.b16 %v159
    %v544 = vunpack.c.h.b16 %v159
    %v545 = vunpack.c.l.b16 %v160
    %v546 = vunpack.c.h.b16 %v160
    %v547 = vunpack.c.l.b16 %v161
    %v548 = vunpack.c.h.b16 %v161
    %v549 = vunpack.c.l.b16 %v162
    %v550 = vunpack.c.h.b16 %v162
    %v551 = vunpack.c.l.b16 %v163
    %v552 = vunpack.c.h.b16 %v163
    %v553 = vunpack.c.l.b16 %v164
    %v554 = vunpack.c.h.b16 %v164
    %v555 = vunpack.c.l.b16 %v165
    %v556 = vunpack.c.h.b16 %v165
    %v557 = vunpack.c.l.b16 %v166
    %v558 = vunpack.c.h.b16 %v166
    %v559 = vunpack.c.l.b16 %v167
    %v560 = vunpack.c.h.b16 %v167
    %v561 = vunpack.c.l.b16 %v168
    %v562 = vunpack.c.h.b16 %v168
    %v563 = vunpack.c.l.b16 %v169
    %v564 = vunpack.c.h.b16 %v169
    %v565 = vunpack.c.l.b16 %v170
    %v566 = vunpack.c.h.b16 %v170
    %v567 = vunpack.c.l.b16 %v171
    %v568 = vunpack.c.h.b16 %v171
    %v569 = vunpack.c.l.b16 %v172
    %v570 = vunpack.c.h.b16 %v172
    %v571 = vunpack.c.l.b16 %v173
    %v572 = vunpack.c.h.b16 %v173
    %v573 = vunpack.c.l.b16 %v174
    %v574 = vunpack.c.h.b16 %v174
    %v575 = vunpack.c.l.b16 %v175
    %v576 = vunpack.c.h.b16 %v175
    %v577 = vunpack.c.l.b16 %v176
    %v578 = vunpack.c.h.b16 %v176
    %v579 = vunpack.c.l.b16 %v177
    %v580 = vunpack.c.h.b16 %v177
    %v581 = vunpack.c.l.b16 %v178
    %v582 = vunpack.c.h.b16 %v178
    %v583 = vunpack.c.l.b16 %v179
    %v584 = vunpack.c.h.b16 %v179
    %v585 = vunpack.c.l.b16 %v180
    %v586 = vunpack.c.h.b16 %v180
    %v587 = vunpack.c.l.b16 %v181
    %v588 = vunpack.c.h.b16 %v181
    %v589 = vunpack.c.l.b16 %v182
    %v590 = vunpack.c.h.b16 %v182
    %v591 = vunpack.c.l.b16 %v183
    %v592 = vunpack.c.h.b16 %v183
    %v593 = vunpack.c.l.b16 %v184
    %v594 = vunpack.c.h.b16 %v184
    %v595 = vunpack.c.l.b16 %v185
    %v596 = vunpack.c.h.b16 %v185
    %v597 = vunpack.c.l.b16 %v186
    %v598 = vunpack.c.h.b16 %v186
    %v599 = vunpack.c.l.b16 %v187
    %v600 = vunpack.c.h.b16 %v187
    %v601 = vunpack.c.l.b16 %v188
    %v602 = vunpack.c.h.b16 %v188
    %v603 = vunpack.c.l.b16 %v189
    %v604 = vunpack.c.h.b16 %v189
    %v605 = vunpack.c.l.b16 %v190
    %v606 = vunpack.c.h.b16 %v190
    %v607 = vunpack.c.l.b16 %v191
    %v608 = vunpack.c.h.b16 %v191
    %v609 = vunpack.c.l.b16 %v192
    %v610 = vunpack.c.h.b16 %v192
    %v611 = vunpack.c.l.b16 %v193
    %v612 = vunpack.c.h.b16 %v193
    %v613 = vunpack.c.l.b16 %v194
    %v614 = vunpack.c.h.b16 %v194
    %v615 = vunpack.c.l.b16 %v195
    %v616 = vunpack.c.h.b16 %v195
    %v617 = vunpack.c.l.b16 %v196
    %v618 = vunpack.c.h.b16 %v196
    %v619 = vunpack.c.l.b16 %v197
    %v620 = vunpack.c.h.b16 %v197
    %v621 = vunpack.c.l.b16 %v198
    %v622 = vunpack.c.h.b16 %v198
    %v623 = vunpack.c.l.b16 %v199
    %v624 = vunpack.c.h.b16 %v199
    %v625 = vunpack.c.l.b16 %v200
    %v626 = vunpack.c.h.b16 %v200
    %v627 = vunpack.c.l.b16 %v201
    %v628 = vunpack.c.h.b16 %v201
    %v629 = vunpack.c.l.b16 %v202
    %v630 = vunpack.c.h.b16 %v202
    %v631 = vunpack.c.l.b16 %v203
    %v632 = vunpack.c.h.b16 %v203
    %v633 = vunpack.c.l.b16 %v204
    %v634 = vunpack.c.h.b16 %v204
    %v635 = vunpack.c.l.b16 %v205
    %v636 = vunpack.c.h.b16 %v205
    %v637 = vunpack.c.l.b16 %v206
    %v638 = vunpack.c.h.b16 %v206
    %v639 = vunpack.c.l.b16 %v207
    %v640 = vunpack.c.h.b16 %v207
    %v641 = vunpack.c.l.b16 %v208
    %v642 = vunpack.c.h.b16 %v208
    %v643 = vunpack.c.l.b16 %v209
    %v644 = vunpack.c.h.b16 %v209
    %v645 = vunpack.c.l.b16 %v210
    %v646 = vunpack.c.h.b16 %v210
    %v647 = vunpack.c.l.b16 %v211
    %v648 = vunpack.c.h.b16 %v211
    %v649 = vunpack.c.l.b16 %v212
    %v650 = vunpack.c.h.b16 %v212
    %v651 = vunpack.c.l.b16 %v213
    %v652 = vunpack.c.h.b16 %v213
    %v653 = vunpack.c.l.b16 %v214
    %v654 = vunpack.c.h.b16 %v214
    %v655 = vunpack.c.l.b16 %v215
    %v656 = vunpack.c.h.b16 %v215
    %v657 = vunpack.c.l.b16 %v216
    %v658 = vunpack.c.h.b16 %v216
    %v659 = vunpack.c.l.b16 %v217
    %v660 = vunpack.c.h.b16 %v217
    %v661 = vunpack.c.l.b16 %v218
    %v662 = vunpack.c.h.b16 %v218
    %v663 = vunpack.c.l.b16 %v219
    %v664 = vunpack.c.h.b16 %v219
    %v665 = vunpack.c.l.b16 %v220
    %v666 = vunpack.c.h.b16 %v220
    %v667 = vunpack.c.l.b16 %v221
    %v668 = vunpack.c.h.b16 %v221
    %v669 = vunpack.c.l.b16 %v222
    %v670 = vunpack.c.h.b16 %v222
    %v671 = vunpack.c.l.b16 %v223
    %v672 = vunpack.c.h.b16 %v223
    %v673 = vunpack.c.l.b16 %v224
    %v674 = vunpack.c.h.b16 %v224
    %v675 = vunpack.c.l.b16 %v225
    %v676 = vunpack.c.h.b16 %v225
    %v677 = vunpack.c.l.b16 %v226
    %v678 = vunpack.c.h.b16 %v226
    %v679 = vunpack.c.l.b16 %v227
    %v680 = vunpack.c.h.b16 %v227
    %v681 = vunpack.c.l.b16 %v228
    %v682 = vunpack.c.h.b16 %v228
    %v683 = vunpack.c.l.b16 %v229
    %v684 = vunpack.c.h.b16 %v229
    %v685 = vunpack.c.l.b16 %v230
    %v686 = vunpack.c.h.b16 %v230
    %v687 = vunpack.c.l.b16 %v231
    %v688 = vunpack.c.h.b16 %v231
    %v689 = vunpack.c.l.b16 %v232
    %v690 = vunpack.c.h.b16 %v232
    %v691 = vunpack.c.l.b16 %v233
    %v692 = vunpack.c.h.b16 %v233
    %v693 = vunpack.c.l.b16 %v234
    %v694 = vunpack.c.h.b16 %v234
    %v695 = vunpack.c.l.b16 %v235
    %v696 = vunpack.c.h.b16 %v235
    %v697 = vunpack.c.l.b16 %v236
    %v698 = vunpack.c.h.b16 %v236
    %v699 = vunpack.c.l.b16 %v237
    %v700 = vunpack.c.h.b16 %v237
    %v701 = vunpack.c.l.b16 %v238
    %v702 = vunpack.c.h.b16 %v238
    %v703 = vunpack.c.l.b16 %v239
    %v704 = vunpack.c.h.b16 %v239
    %v705 = vunpack.c.l.b16 %v240
    %v706 = vunpack.c.h.b16 %v240
    %v707 = vunpack.c.l.b16 %v241
    %v708 = vunpack.c.h.b16 %v241
    %v709 = vunpack.c.l.b16 %v242
    %v710 = vunpack.c.h.b16 %v242
    %v711 = vpack.c.b16 %v471, %v455
    %v712 = vpack.c.b16 %v472, %v456
    %v713 = vpack.c.b16 %v473, %v457
    %v714 = vpack.c.b16 %v474, %v458
    %v715 = vpack.c.b16 %v475, %v459
    %v716 = vpack.c.b16 %v476, %v460
    %v717 = vpack.c.b16 %v477, %v461
    %v718 = vpack.c.b16 %v478, %v462
    %v719 = vpack.c.b16 %v479, %v463
    %v720 = vpack.c.b16 %v480, %v464
    %v721 = vpack.c.b16 %v481, %v465
    %v722 = vpack.c.b16 %v482, %v466
    %v723 = vpack.c.b16 %v483, %v467
    %v724 = vpack.c.b16 %v484, %v468
    %v725 = vpack.c.b16 %v485, %v469
    %v726 = vpack.c.b16 %v486, %v470
    %v727 = vpack.c.b16 %v503, %v487
    %v728 = vpack.c.b16 %v504, %v488
    %v729 = vpack.c.b16 %v505, %v489
    %v730 = vpack.c.b16 %v506, %v490
    %v731 = vpack.c.b16 %v507, %v491
    %v732 = vpack.c.b16 %v508, %v492
    %v733 = vpack.c.b16 %v509, %v493
    %v734 = vpack.c.b16 %v510, %v494
    %v735 = vpack.c.b16 %v511, %v495
    %v736 = vpack.c.b16 %v512, %v496
    %v737 = vpack.c.b16 %v513, %v497
    %v738 = vpack.c.b16 %v514, %v498
    %v739 = vpack.c.b16 %v515, %v499
    %v740 = vpack.c.b16 %v516, %v500
    %v741 = vpack.c.b16 %v517, %v501
    %v742 = vpack.c.b16 %v518, %v502
    %v743 = vpack.c.b16 %v535, %v519
    %v744 = vpack.c.b16 %v536, %v520
    %v745 = vpack.c.b16 %v537, %v521
    %v746 = vpack.c.b16 %v538, %v522
    %v747 = vpack.c.b16 %v539, %v523
    %v748 = vpack.c.b16 %v540, %v524
    %v749 = vpack.c.b16 %v541, %v525
    %v750 = vpack.c.b16 %v542, %v526
    %v751 = vpack.c.b16 %v543, %v527
    %v752 = vpack.c.b16 %v544, %v528
    %v753 = vpack.c.b16 %v545, %v529
    %v754 = vpack.c.b16 %v546, %v530
    %v755 = vpack.c.b16 %v547, %v531
    %v756 = vpack.c.b16 %v548, %v532
    %v757 = vpack.c.b16 %v549, %v533
    %v758 = vpack.c.b16 %v550, %v534
    %v759 = vpack.c.b16 %v567, %v551
    %v760 = vpack.c.b16 %v568, %v552
    %v761 = vpack.c.b16 %v569, %v553
    %v762 = vpack.c.b16 %v570, %v554
    %v763 = vpack.c.b16 %v571, %v555
    %v764 = vpack.c.b16 %v572, %v556
    %v765 = vpack.c.b16 %v573, %v557
    %v766 = vpack.c.b16 %v574, %v558
    %v767 = vpack.c.b16 %v575, %v559
    %v768 = vpack.c.b16 %v576, %v560
    %v769 = vpack.c.b16 %v577, %v561
    %v770 = vpack.c.b16 %v578, %v562
    %v771 = vpack.c.b16 %v579, %v563
    %v772 = vpack.c.b16 %v580, %v564
    %v773 = vpack.c.b16 %v581, %v565
    %v774 = vpack.c.b16 %v582, %v566
    %v775 = vpack.c.b16 %v599, %v583
    %v776 = vpack.c.b16 %v600, %v584
    %v777 = vpack.c.b16 %v601, %v585
    %v778 = vpack.c.b16 %v602, %v586
    %v779 = vpack.c.b16 %v603, %v587
    %v780 = vpack.c.b16 %v604, %v588
    %v781 = vpack.c.b16 %v605, %v589
    %v782 = vpack.c.b16 %v606, %v590
    %v783 = vpack.c.b16 %v607, %v591
    %v784 = vpack.c.b16 %v608, %v592
    %v785 = vpack.c.b16 %v609, %v593
    %v786 = vpack.c.b16 %v610, %v594
    %v787 = vpack.c.b16 %v611, %v595
    %v788 = vpack.c.b16 %v612, %v596
    %v789 = vpack.c.b16 %v613, %v597
    %v790 = vpack.c.b16 %v614, %v598
    %v791 = vpack.c.b16 %v631, %v615
    %v792 = vpack.c.b16 %v632, %v616
    %v793 = vpack.c.b16 %v633, %v617
    %v794 = vpack.c.b16 %v634, %v618
    %v795 = vpack.c.b16 %v635, %v619
    %v796 = vpack.c.b16 %v636, %v620
    %v797 = vpack.c.b16 %v637, %v621
    %v798 = vpack.c.b16 %v638, %v622
    %v799 = vpack.c.b16 %v639, %v623
    %v800 = vpack.c.b16 %v640, %v624
    %v801 = vpack.c.b16 %v641, %v625
    %v802 = vpack.c.b16 %v642, %v626
    %v803 = vpack.c.b16 %v643, %v627
    %v804 = vpack.c.b16 %v644, %v628
    %v805 = vpack.c.b16 %v645, %v629
    %v806 = vpack.c.b16 %v646, %v630
    %v807 = vpack.c.b16 %v663, %v647
    %v808 = vpack.c.b16 %v664, %v648
    %v809 = vpack.c.b16 %v665, %v649
    %v810 = vpack.c.b16 %v666, %v650
    %v811 = vpack.c.b16 %v667, %v651
    %v812 = vpack.c.b16 %v668, %v652
    %v813 = vpack.c.b16 %v669, %v653
    %v814 = vpack.c.b16 %v670, %v654
    %v815 = vpack.c.b16 %v671, %v655
    %v816 = vpack.c.b16 %v672, %v656
    %v817 = vpack.c.b16 %v673, %v657
    %v818 = vpack.c.b16 %v674, %v658
    %v819 = vpack.c.b16 %v675, %v659
    %v820 = vpack.c.b16 %v676, %v660
    %v821 = vpack.c.b16 %v677, %v661
    %v822 = vpack.c.b16 %v678, %v662
    %v823 = vpack.c.b16 %v695, %v679
    %v824 = vpack.c.b16 %v696, %v680
    %v825 = vpack.c.b16 %v697, %v681
    %v826 = vpack.c.b16 %v698, %v682
    %v827 = vpack.c.b16 %v699, %v683
    %v828 = vpack.c.b16 %v700, %v684
    %v829 = vpack.c.b16 %v701, %v685
    %v830 = vpack.c.b16 %v702, %v686
    %v831 = vpack.c.b16 %v703, %v687
    %v832 = vpack.c.b16 %v704, %v688
    %v833 = vpack.c.b16 %v705, %v689
    %v834 = vpack.c.b16 %v706, %v690
    %v835 = vpack.c.b16 %v707, %v691
    %v836 = vpack.c.b16 %v708, %v692
    %v837 = vpack.c.b16 %v709, %v693
    %v838 = vpack.c.b16 %v710, %v694
    %967 = vmatprep.subr.bf16.mxu0 %v824
    %968 = vmatpush1.bf16.msra.mxu0 %v823
    %969 = vmatprep.subr.bf16.mxu0 %v808
    %970 = vmatpush1.bf16.msra.mxu0 %v807
    %971 = vmatprep.subr.bf16.mxu0 %v792
    %972 = vmatpush1.bf16.msra.mxu0 %v791
    %973 = vmatprep.subr.bf16.mxu0 %v776
    %974 = vmatpush1.bf16.msra.mxu0 %v775
    %975 = vmatprep.subr.bf16.mxu0 %v760
    %976 = vmatpush1.bf16.msra.mxu0 %v759
    %977 = vmatprep.subr.bf16.mxu0 %v744
    %978 = vmatpush1.bf16.msra.mxu0 %v743
    %979 = vmatprep.subr.bf16.mxu0 %v728
    %980 = vmatpush1.bf16.msra.mxu0 %v727
    %981 = vmatprep.subr.bf16.mxu0 %v712
    %982 = vmatpush1.bf16.msra.mxu0 %v711
    %983 = vmatprep.subr.bf16.mxu0 0
    %984 = vmatpush2.bf16.msra.mxu0 0
    %985 = vmatprep.subr.bf16.mxu0 0
    %986 = vmatpush2.bf16.msra.mxu0 0
    %987 = vmatprep.subr.bf16.mxu0 0
    %988 = vmatpush2.bf16.msra.mxu0 0
    %989 = vmatprep.subr.bf16.mxu0 0
    %990 = vmatpush2.bf16.msra.mxu0 0
    %991 = vmatprep.subr.bf16.mxu0 0
    %992 = vmatpush2.bf16.msra.mxu0 0
    %993 = vmatprep.subr.bf16.mxu0 0
    %994 = vmatpush2.bf16.msra.mxu0 0
    %995 = vmatprep.subr.bf16.mxu0 0
    %996 = vmatpush2.bf16.msra.mxu0 0
    %997 = vmatprep.subr.bf16.mxu0 0
    %998 = vmatpush2.bf16.msra.mxu0 0
    %999 = vmatprep.mubr.bf16.mxu0 0
    %1000 = vmatmul.mubr.bf16.gmra.mxu0 %v114
    %v1001 = vpop.f32.mrf.mxu0
    %v1002 = vadd.f32 %v250, %v1001
    %v1003 = vpop.f32.mrf.mxu0
    %v1004 = vadd.f32 %v254, %v1003
    %v1005 = vpop.f32.mrf.mxu0
    %v1006 = vpop.f32.mrf.mxu0
    %1007 = vdwg.mxu0
    %1008 = vmatprep.subr.bf16.mxu0 %v826
    %1009 = vmatpush1.bf16.msra.mxu0 %v825
    %1010 = vmatprep.subr.bf16.mxu0 %v810
    %1011 = vmatpush1.bf16.msra.mxu0 %v809
    %1012 = vmatprep.subr.bf16.mxu0 %v794
    %1013 = vmatpush1.bf16.msra.mxu0 %v793
    %1014 = vmatprep.subr.bf16.mxu0 %v778
    %1015 = vmatpush1.bf16.msra.mxu0 %v777
    %1016 = vmatprep.subr.bf16.mxu0 %v762
    %1017 = vmatpush1.bf16.msra.mxu0 %v761
    %1018 = vmatprep.subr.bf16.mxu0 %v746
    %1019 = vmatpush1.bf16.msra.mxu0 %v745
    %1020 = vmatprep.subr.bf16.mxu0 %v730
    %1021 = vmatpush1.bf16.msra.mxu0 %v729
    %1022 = vmatprep.subr.bf16.mxu0 %v714
    %1023 = vmatpush1.bf16.msra.mxu0 %v713
    %1024 = vmatprep.subr.bf16.mxu0 0
    %1025 = vmatpush2.bf16.msra.mxu0 0
    %1026 = vmatprep.subr.bf16.mxu0 0
    %1027 = vmatpush2.bf16.msra.mxu0 0
    %1028 = vmatprep.subr.bf16.mxu0 0
    %1029 = vmatpush2.bf16.msra.mxu0 0
    %1030 = vmatprep.subr.bf16.mxu0 0
    %1031 = vmatpush2.bf16.msra.mxu0 0
    %1032 = vmatprep.subr.bf16.mxu0 0
    %1033 = vmatpush2.bf16.msra.mxu0 0
    %1034 = vmatprep.subr.bf16.mxu0 0
    %1035 = vmatpush2.bf16.msra.mxu0 0
    %1036 = vmatprep.subr.bf16.mxu0 0
    %1037 = vmatpush2.bf16.msra.mxu0 0
    %1038 = vmatprep.subr.bf16.mxu0 0
    %1039 = vmatpush2.bf16.msra.mxu0 0
    %1040 = vmatprep.mubr.bf16.mxu0 0
    %1041 = vmatmul.mubr.bf16.gmra.mxu0 %v114
    %v1042 = vpop.f32.mrf.mxu0
    %v1043 = vadd.f32 %v258, %v1042
    %v1044 = vpop.f32.mrf.mxu0
    %v1045 = vadd.f32 %v262, %v1044
    %v1046 = vpop.f32.mrf.mxu0
    %v1047 = vpop.f32.mrf.mxu0
    %1048 = vdwg.mxu0
    %1049 = vmatprep.subr.bf16.mxu0 %v828
    %1050 = vmatpush1.bf16.msra.mxu0 %v827
    %1051 = vmatprep.subr.bf16.mxu0 %v812
    %1052 = vmatpush1.bf16.msra.mxu0 %v811
    %1053 = vmatprep.subr.bf16.mxu0 %v796
    %1054 = vmatpush1.bf16.msra.mxu0 %v795
    %1055 = vmatprep.subr.bf16.mxu0 %v780
    %1056 = vmatpush1.bf16.msra.mxu0 %v779
    %1057 = vmatprep.subr.bf16.mxu0 %v764
    %1058 = vmatpush1.bf16.msra.mxu0 %v763
    %1059 = vmatprep.subr.bf16.mxu0 %v748
    %1060 = vmatpush1.bf16.msra.mxu0 %v747
    %1061 = vmatprep.subr.bf16.mxu0 %v732
    %1062 = vmatpush1.bf16.msra.mxu0 %v731
    %1063 = vmatprep.subr.bf16.mxu0 %v716
    %1064 = vmatpush1.bf16.msra.mxu0 %v715
    %1065 = vmatprep.subr.bf16.mxu0 0
    %1066 = vmatpush2.bf16.msra.mxu0 0
    %1067 = vmatprep.subr.bf16.mxu0 0
    %1068 = vmatpush2.bf16.msra.mxu0 0
    %1069 = vmatprep.subr.bf16.mxu0 0
    %1070 = vmatpush2.bf16.msra.mxu0 0
    %1071 = vmatprep.subr.bf16.mxu0 0
    %1072 = vmatpush2.bf16.msra.mxu0 0
    %1073 = vmatprep.subr.bf16.mxu0 0
    %1074 = vmatpush2.bf16.msra.mxu0 0
    %1075 = vmatprep.subr.bf16.mxu0 0
    %1076 = vmatpush2.bf16.msra.mxu0 0
    %1077 = vmatprep.subr.bf16.mxu0 0
    %1078 = vmatpush2.bf16.msra.mxu0 0
    %1079 = vmatprep.subr.bf16.mxu0 0
    %1080 = vmatpush2.bf16.msra.mxu0 0
    %1081 = vmatprep.mubr.bf16.mxu0 0
    %1082 = vmatmul.mubr.bf16.gmra.mxu0 %v114
    %v1083 = vpop.f32.mrf.mxu0
    %v1084 = vadd.f32 %v266, %v1083
    %v1085 = vpop.f32.mrf.mxu0
    %v1086 = vadd.f32 %v270, %v1085
    %v1087 = vpop.f32.mrf.mxu0
    %v1088 = vpop.f32.mrf.mxu0
    %1089 = vdwg.mxu0
    %1090 = vmatprep.subr.bf16.mxu0 %v830
    %1091 = vmatpush1.bf16.msra.mxu0 %v829
    %1092 = vmatprep.subr.bf16.mxu0 %v814
    %1093 = vmatpush1.bf16.msra.mxu0 %v813
    %1094 = vmatprep.subr.bf16.mxu0 %v798
    %1095 = vmatpush1.bf16.msra.mxu0 %v797
    %1096 = vmatprep.subr.bf16.mxu0 %v782
    %1097 = vmatpush1.bf16.msra.mxu0 %v781
    %1098 = vmatprep.subr.bf16.mxu0 %v766
    %1099 = vmatpush1.bf16.msra.mxu0 %v765
    %1100 = vmatprep.subr.bf16.mxu0 %v750
    %1101 = vmatpush1.bf16.msra.mxu0 %v749
    %1102 = vmatprep.subr.bf16.mxu0 %v734
    %1103 = vmatpush1.bf16.msra.mxu0 %v733
    %1104 = vmatprep.subr.bf16.mxu0 %v718
    %1105 = vmatpush1.bf16.msra.mxu0 %v717
    %1106 = vmatprep.subr.bf16.mxu0 0
    %1107 = vmatpush2.bf16.msra.mxu0 0
    %1108 = vmatprep.subr.bf16.mxu0 0
    %1109 = vmatpush2.bf16.msra.mxu0 0
    %1110 = vmatprep.subr.bf16.mxu0 0
    %1111 = vmatpush2.bf16.msra.mxu0 0
    %1112 = vmatprep.subr.bf16.mxu0 0
    %1113 = vmatpush2.bf16.msra.mxu0 0
    %1114 = vmatprep.subr.bf16.mxu0 0
    %1115 = vmatpush2.bf16.msra.mxu0 0
    %1116 = vmatprep.subr.bf16.mxu0 0
    %1117 = vmatpush2.bf16.msra.mxu0 0
    %1118 = vmatprep.subr.bf16.mxu0 0
    %1119 = vmatpush2.bf16.msra.mxu0 0
    %1120 = vmatprep.subr.bf16.mxu0 0
    %1121 = vmatpush2.bf16.msra.mxu0 0
    %1122 = vmatprep.mubr.bf16.mxu0 0
    %1123 = vmatmul.mubr.bf16.gmra.mxu0 %v114
    %v1124 = vpop.f32.mrf.mxu0
    %v1125 = vadd.f32 %v274, %v1124
    %v1126 = vpop.f32.mrf.mxu0
    %v1127 = vadd.f32 %v278, %v1126
    %v1128 = vpop.f32.mrf.mxu0
    %v1129 = vpop.f32.mrf.mxu0
    %1130 = vdwg.mxu0
    %1131 = vmatprep.subr.bf16.mxu0 %v832
    %1132 = vmatpush1.bf16.msra.mxu0 %v831
    %1133 = vmatprep.subr.bf16.mxu0 %v816
    %1134 = vmatpush1.bf16.msra.mxu0 %v815
    %1135 = vmatprep.subr.bf16.mxu0 %v800
    %1136 = vmatpush1.bf16.msra.mxu0 %v799
    %1137 = vmatprep.subr.bf16.mxu0 %v784
    %1138 = vmatpush1.bf16.msra.mxu0 %v783
    %1139 = vmatprep.subr.bf16.mxu0 %v768
    %1140 = vmatpush1.bf16.msra.mxu0 %v767
    %1141 = vmatprep.subr.bf16.mxu0 %v752
    %1142 = vmatpush1.bf16.msra.mxu0 %v751
    %1143 = vmatprep.subr.bf16.mxu0 %v736
    %1144 = vmatpush1.bf16.msra.mxu0 %v735
    %1145 = vmatprep.subr.bf16.mxu0 %v720
    %1146 = vmatpush1.bf16.msra.mxu0 %v719
    %1147 = vmatprep.subr.bf16.mxu0 0
    %1148 = vmatpush2.bf16.msra.mxu0 0
    %1149 = vmatprep.subr.bf16.mxu0 0
    %1150 = vmatpush2.bf16.msra.mxu0 0
    %1151 = vmatprep.subr.bf16.mxu0 0
    %1152 = vmatpush2.bf16.msra.mxu0 0
    %1153 = vmatprep.subr.bf16.mxu0 0
    %1154 = vmatpush2.bf16.msra.mxu0 0
    %1155 = vmatprep.subr.bf16.mxu0 0
    %1156 = vmatpush2.bf16.msra.mxu0 0
    %1157 = vmatprep.subr.bf16.mxu0 0
    %1158 = vmatpush2.bf16.msra.mxu0 0
    %1159 = vmatprep.subr.bf16.mxu0 0
    %1160 = vmatpush2.bf16.msra.mxu0 0
    %1161 = vmatprep.subr.bf16.mxu0 0
    %1162 = vmatpush2.bf16.msra.mxu0 0
    %1163 = vmatprep.mubr.bf16.mxu0 0
    %1164 = vmatmul.mubr.bf16.gmra.mxu0 %v114
    %v1165 = vpop.f32.mrf.mxu0
    %v1166 = vadd.f32 %v282, %v1165
    %v1167 = vpop.f32.mrf.mxu0
    %v1168 = vadd.f32 %v286, %v1167
    %v1169 = vpop.f32.mrf.mxu0
    %v1170 = vpop.f32.mrf.mxu0
    %1171 = vdwg.mxu0
    %1172 = vmatprep.subr.bf16.mxu0 %v834
    %1173 = vmatpush1.bf16.msra.mxu0 %v833
    %1174 = vmatprep.subr.bf16.mxu0 %v818
    %1175 = vmatpush1.bf16.msra.mxu0 %v817
    %1176 = vmatprep.subr.bf16.mxu0 %v802
    %1177 = vmatpush1.bf16.msra.mxu0 %v801
    %1178 = vmatprep.subr.bf16.mxu0 %v786
    %1179 = vmatpush1.bf16.msra.mxu0 %v785
    %1180 = vmatprep.subr.bf16.mxu0 %v770
    %1181 = vmatpush1.bf16.msra.mxu0 %v769
    %1182 = vmatprep.subr.bf16.mxu0 %v754
    %1183 = vmatpush1.bf16.msra.mxu0 %v753
    %1184 = vmatprep.subr.bf16.mxu0 %v738
    %1185 = vmatpush1.bf16.msra.mxu0 %v737
    %1186 = vmatprep.subr.bf16.mxu0 %v722
    %1187 = vmatpush1.bf16.msra.mxu0 %v721
    %1188 = vmatprep.subr.bf16.mxu0 0
    %1189 = vmatpush2.bf16.msra.mxu0 0
    %1190 = vmatprep.subr.bf16.mxu0 0
    %1191 = vmatpush2.bf16.msra.mxu0 0
    %1192 = vmatprep.subr.bf16.mxu0 0
    %1193 = vmatpush2.bf16.msra.mxu0 0
    %1194 = vmatprep.subr.bf16.mxu0 0
    %1195 = vmatpush2.bf16.msra.mxu0 0
    %1196 = vmatprep.subr.bf16.mxu0 0
    %1197 = vmatpush2.bf16.msra.mxu0 0
    %1198 = vmatprep.subr.bf16.mxu0 0
    %1199 = vmatpush2.bf16.msra.mxu0 0
    %1200 = vmatprep.subr.bf16.mxu0 0
    %1201 = vmatpush2.bf16.msra.mxu0 0
    %1202 = vmatprep.subr.bf16.mxu0 0
    %1203 = vmatpush2.bf16.msra.mxu0 0
    %1204 = vmatprep.mubr.bf16.mxu0 0
    %1205 = vmatmul.mubr.bf16.gmra.mxu0 %v114
    %v1206 = vpop.f32.mrf.mxu0
    %v1207 = vadd.f32 %v290, %v1206
    %v1208 = vpop.f32.mrf.mxu0
    %v1209 = vadd.f32 %v294, %v1208
    %v1210 = vpop.f32.mrf.mxu0
    %v1211 = vpop.f32.mrf.mxu0
    %1212 = vdwg.mxu0
    %1213 = vmatprep.subr.bf16.mxu0 %v836
    %1214 = vmatpush1.bf16.msra.mxu0 %v835
    %1215 = vmatprep.subr.bf16.mxu0 %v820
    %1216 = vmatpush1.bf16.msra.mxu0 %v819
    %1217 = vmatprep.subr.bf16.mxu0 %v804
    %1218 = vmatpush1.bf16.msra.mxu0 %v803
    %1219 = vmatprep.subr.bf16.mxu0 %v788
    %1220 = vmatpush1.bf16.msra.mxu0 %v787
    %1221 = vmatprep.subr.bf16.mxu0 %v772
    %1222 = vmatpush1.bf16.msra.mxu0 %v771
    %1223 = vmatprep.subr.bf16.mxu0 %v756
    %1224 = vmatpush1.bf16.msra.mxu0 %v755
    %1225 = vmatprep.subr.bf16.mxu0 %v740
    %1226 = vmatpush1.bf16.msra.mxu0 %v739
    %1227 = vmatprep.subr.bf16.mxu0 %v724
    %1228 = vmatpush1.bf16.msra.mxu0 %v723
    %1229 = vmatprep.subr.bf16.mxu0 0
    %1230 = vmatpush2.bf16.msra.mxu0 0
    %1231 = vmatprep.subr.bf16.mxu0 0
    %1232 = vmatpush2.bf16.msra.mxu0 0
    %1233 = vmatprep.subr.bf16.mxu0 0
    %1234 = vmatpush2.bf16.msra.mxu0 0
    %1235 = vmatprep.subr.bf16.mxu0 0
    %1236 = vmatpush2.bf16.msra.mxu0 0
    %1237 = vmatprep.subr.bf16.mxu0 0
    %1238 = vmatpush2.bf16.msra.mxu0 0
    %1239 = vmatprep.subr.bf16.mxu0 0
    %1240 = vmatpush2.bf16.msra.mxu0 0
    %1241 = vmatprep.subr.bf16.mxu0 0
    %1242 = vmatpush2.bf16.msra.mxu0 0
    %1243 = vmatprep.subr.bf16.mxu0 0
    %1244 = vmatpush2.bf16.msra.mxu0 0
    %1245 = vmatprep.mubr.bf16.mxu0 0
    %1246 = vmatmul.mubr.bf16.gmra.mxu0 %v114
    %v1247 = vpop.f32.mrf.mxu0
    %v1248 = vadd.f32 %v298, %v1247
    %v1249 = vpop.f32.mrf.mxu0
    %v1250 = vadd.f32 %v302, %v1249
    %v1251 = vpop.f32.mrf.mxu0
    %v1252 = vpop.f32.mrf.mxu0
    %1253 = vdwg.mxu0
    %1254 = vmatprep.subr.bf16.mxu0 %v838
    %1255 = vmatpush1.bf16.msra.mxu0 %v837
    %1256 = vmatprep.subr.bf16.mxu0 %v822
    %1257 = vmatpush1.bf16.msra.mxu0 %v821
    %1258 = vmatprep.subr.bf16.mxu0 %v806
    %1259 = vmatpush1.bf16.msra.mxu0 %v805
    %1260 = vmatprep.subr.bf16.mxu0 %v790
    %1261 = vmatpush1.bf16.msra.mxu0 %v789
    %1262 = vmatprep.subr.bf16.mxu0 %v774
    %1263 = vmatpush1.bf16.msra.mxu0 %v773
    %1264 = vmatprep.subr.bf16.mxu0 %v758
    %1265 = vmatpush1.bf16.msra.mxu0 %v757
    %1266 = vmatprep.subr.bf16.mxu0 %v742
    %1267 = vmatpush1.bf16.msra.mxu0 %v741
    %1268 = vmatprep.subr.bf16.mxu0 %v726
    %1269 = vmatpush1.bf16.msra.mxu0 %v725
    %1270 = vmatprep.subr.bf16.mxu0 0
    %1271 = vmatpush2.bf16.msra.mxu0 0
    %1272 = vmatprep.subr.bf16.mxu0 0
    %1273 = vmatpush2.bf16.msra.mxu0 0
    %1274 = vmatprep.subr.bf16.mxu0 0
    %1275 = vmatpush2.bf16.msra.mxu0 0
    %1276 = vmatprep.subr.bf16.mxu0 0
    %1277 = vmatpush2.bf16.msra.mxu0 0
    %1278 = vmatprep.subr.bf16.mxu0 0
    %1279 = vmatpush2.bf16.msra.mxu0 0
    %1280 = vmatprep.subr.bf16.mxu0 0
    %1281 = vmatpush2.bf16.msra.mxu0 0
    %1282 = vmatprep.subr.bf16.mxu0 0
    %1283 = vmatpush2.bf16.msra.mxu0 0
    %1284 = vmatprep.subr.bf16.mxu0 0
    %1285 = vmatpush2.bf16.msra.mxu0 0
    %1286 = vmatprep.mubr.bf16.mxu0 0
    %1287 = vmatmul.mubr.bf16.gmra.mxu0 %v114
    %v1288 = vpop.f32.mrf.mxu0
    %v1289 = vadd.f32 %v306, %v1288
    %v1290 = vpop.f32.mrf.mxu0
    %v1291 = vadd.f32 %v310, %v1290
    %v1292 = vpop.f32.mrf.mxu0
    %v1293 = vpop.f32.mrf.mxu0
    %1294 = vdwg.mxu0
    %v1295 = vmax.f32 %v1002, 0.0
    %v1296 = vmax.f32 %v1004, 0.0
    %v1297 = vmax.f32 %v1043, 0.0
    %v1298 = vmax.f32 %v1045, 0.0
    %v1299 = vmax.f32 %v1084, 0.0
    %v1300 = vmax.f32 %v1086, 0.0
    %v1301 = vmax.f32 %v1125, 0.0
    %v1302 = vmax.f32 %v1127, 0.0
    %v1303 = vmax.f32 %v1166, 0.0
    %v1304 = vmax.f32 %v1168, 0.0
    %v1305 = vmax.f32 %v1207, 0.0
    %v1306 = vmax.f32 %v1209, 0.0
    %v1307 = vmax.f32 %v1248, 0.0
    %v1308 = vmax.f32 %v1250, 0.0
    %v1309 = vmax.f32 %v1289, 0.0
    %v1310 = vmax.f32 %v1291, 0.0
    %1311 = vst [vmem:[#allocation2] sm:$0xff] %v1295
    %1312 = vst [vmem:[#allocation2 + $0x8] sm:$0xff] %v1296
    %1313 = vst [vmem:[#allocation2 + $0x10] sm:$0xff] %v1297
    %1314 = vst [vmem:[#allocation2 + $0x18] sm:$0xff] %v1298
    %1315 = vst [vmem:[#allocation2 + $0x20] sm:$0xff] %v1299
    %1316 = vst [vmem:[#allocation2 + $0x28] sm:$0xff] %v1300
    %1317 = vst [vmem:[#allocation2 + $0x30] sm:$0xff] %v1301
    %1318 = vst [vmem:[#allocation2 + $0x38] sm:$0xff] %v1302
    %1319 = vst [vmem:[#allocation2 + $0x40] sm:$0xff] %v1303
    %1320 = vst [vmem:[#allocation2 + $0x48] sm:$0xff] %v1304
    %1321 = vst [vmem:[#allocation2 + $0x50] sm:$0xff] %v1305
    %1322 = vst [vmem:[#allocation2 + $0x58] sm:$0xff] %v1306
    %1323 = vst [vmem:[#allocation2 + $0x60] sm:$0xff] %v1307
    %1324 = vst [vmem:[#allocation2 + $0x68] sm:$0xff] %v1308
    %1325 = vst [vmem:[#allocation2 + $0x70] sm:$0xff] %v1309
    %1326 = vst [vmem:[#allocation2 + $0x78] sm:$0xff] %v1310
    %v1327 = vld [vmem:[#allocation2] sm:$0xff]
    %v1328 = vld [vmem:[#allocation2 + $0x8] sm:$0xff]
    %v1329 = vld [vmem:[#allocation2 + $0x10] sm:$0xff]
    %v1330 = vld [vmem:[#allocation2 + $0x18] sm:$0xff]
    %v1331 = vld [vmem:[#allocation2 + $0x20] sm:$0xff]
    %v1332 = vld [vmem:[#allocation2 + $0x28] sm:$0xff]
    %v1333 = vld [vmem:[#allocation2 + $0x30] sm:$0xff]
    %v1334 = vld [vmem:[#allocation2 + $0x38] sm:$0xff]
    %v1335 = vld [vmem:[#allocation2 + $0x40] sm:$0xff]
    %v1336 = vld [vmem:[#allocation2 + $0x48] sm:$0xff]
    %v1337 = vld [vmem:[#allocation2 + $0x50] sm:$0xff]
    %v1338 = vld [vmem:[#allocation2 + $0x58] sm:$0xff]
    %v1339 = vld [vmem:[#allocation2 + $0x60] sm:$0xff]
    %v1340 = vld [vmem:[#allocation2 + $0x68] sm:$0xff]
    %v1341 = vld [vmem:[#allocation2 + $0x70] sm:$0xff]
    %v1342 = vld [vmem:[#allocation2 + $0x78] sm:$0xff]
    %v1343 = vpack.c.bf16 %v1331, %v1327
    %v1344 = vpack.c.bf16 %v1332, %v1328
    %v1345 = vpack.c.bf16 %v1333, %v1329
    %v1346 = vpack.c.bf16 %v1334, %v1330
    %v1347 = vpack.c.bf16 %v1339, %v1335
    %v1348 = vpack.c.bf16 %v1340, %v1336
    %v1349 = vpack.c.bf16 %v1341, %v1337
    %v1350 = vpack.c.bf16 %v1342, %v1338
    %v1351 = vld [vmem:[#allocation7] sm:$0xff]
    %v1352 = vld [vmem:[#allocation7 + $0x8] sm:$0xff]
    %v1353 = vld [vmem:[#allocation7 + $0x10] sm:$0xff]
    %v1354 = vld [vmem:[#allocation7 + $0x18] sm:$0xff]
    %v1355 = vld [vmem:[#allocation7 + $0x20] sm:$0xff]
    %v1356 = vld [vmem:[#allocation7 + $0x28] sm:$0xff]
    %v1357 = vld [vmem:[#allocation7 + $0x30] sm:$0xff]
    %v1358 = vld [vmem:[#allocation7 + $0x38] sm:$0xff]
    %v1359 = vld [vmem:[#allocation7 + $0x40] sm:$0xff]
    %v1360 = vld [vmem:[#allocation7 + $0x48] sm:$0xff]
    %v1361 = vld [vmem:[#allocation7 + $0x50] sm:$0xff]
    %v1362 = vld [vmem:[#allocation7 + $0x58] sm:$0xff]
    %v1363 = vld [vmem:[#allocation7 + $0x60] sm:$0xff]
    %v1364 = vld [vmem:[#allocation7 + $0x68] sm:$0xff]
    %v1365 = vld [vmem:[#allocation7 + $0x70] sm:$0xff]
    %v1366 = vld [vmem:[#allocation7 + $0x78] sm:$0xff]
    %v1367 = vld [vmem:[#allocation7 + $0x80] sm:$0xff]
    %v1368 = vld [vmem:[#allocation7 + $0x88] sm:$0xff]
    %v1369 = vld [vmem:[#allocation7 + $0x90] sm:$0xff]
    %v1370 = vld [vmem:[#allocation7 + $0x98] sm:$0xff]
    %v1371 = vld [vmem:[#allocation7 + $0xa0] sm:$0xff]
    %v1372 = vld [vmem:[#allocation7 + $0xa8] sm:$0xff]
    %v1373 = vld [vmem:[#allocation7 + $0xb0] sm:$0xff]
    %v1374 = vld [vmem:[#allocation7 + $0xb8] sm:$0xff]
    %v1375 = vld [vmem:[#allocation7 + $0xc0] sm:$0xff]
    %v1376 = vld [vmem:[#allocation7 + $0xc8] sm:$0xff]
    %v1377 = vld [vmem:[#allocation7 + $0xd0] sm:$0xff]
    %v1378 = vld [vmem:[#allocation7 + $0xd8] sm:$0xff]
    %v1379 = vld [vmem:[#allocation7 + $0xe0] sm:$0xff]
    %v1380 = vld [vmem:[#allocation7 + $0xe8] sm:$0xff]
    %v1381 = vld [vmem:[#allocation7 + $0xf0] sm:$0xff]
    %v1382 = vld [vmem:[#allocation7 + $0xf8] sm:$0xff]
    %v1383 = vld [vmem:[#allocation7 + $0x100] sm:$0xff]
    %v1384 = vld [vmem:[#allocation7 + $0x108] sm:$0xff]
    %v1385 = vld [vmem:[#allocation7 + $0x110] sm:$0xff]
    %v1386 = vld [vmem:[#allocation7 + $0x118] sm:$0xff]
    %v1387 = vld [vmem:[#allocation7 + $0x120] sm:$0xff]
    %v1388 = vld [vmem:[#allocation7 + $0x128] sm:$0xff]
    %v1389 = vld [vmem:[#allocation7 + $0x130] sm:$0xff]
    %v1390 = vld [vmem:[#allocation7 + $0x138] sm:$0xff]
    %v1391 = vld [vmem:[#allocation7 + $0x140] sm:$0xff]
    %v1392 = vld [vmem:[#allocation7 + $0x148] sm:$0xff]
    %v1393 = vld [vmem:[#allocation7 + $0x150] sm:$0xff]
    %v1394 = vld [vmem:[#allocation7 + $0x158] sm:$0xff]
    %v1395 = vld [vmem:[#allocation7 + $0x160] sm:$0xff]
    %v1396 = vld [vmem:[#allocation7 + $0x168] sm:$0xff]
    %v1397 = vld [vmem:[#allocation7 + $0x170] sm:$0xff]
    %v1398 = vld [vmem:[#allocation7 + $0x178] sm:$0xff]
    %v1399 = vld [vmem:[#allocation7 + $0x180] sm:$0xff]
    %v1400 = vld [vmem:[#allocation7 + $0x188] sm:$0xff]
    %v1401 = vld [vmem:[#allocation7 + $0x190] sm:$0xff]
    %v1402 = vld [vmem:[#allocation7 + $0x198] sm:$0xff]
    %v1403 = vld [vmem:[#allocation7 + $0x1a0] sm:$0xff]
    %v1404 = vld [vmem:[#allocation7 + $0x1a8] sm:$0xff]
    %v1405 = vld [vmem:[#allocation7 + $0x1b0] sm:$0xff]
    %v1406 = vld [vmem:[#allocation7 + $0x1b8] sm:$0xff]
    %v1407 = vld [vmem:[#allocation7 + $0x1c0] sm:$0xff]
    %v1408 = vld [vmem:[#allocation7 + $0x1c8] sm:$0xff]
    %v1409 = vld [vmem:[#allocation7 + $0x1d0] sm:$0xff]
    %v1410 = vld [vmem:[#allocation7 + $0x1d8] sm:$0xff]
    %v1411 = vld [vmem:[#allocation7 + $0x1e0] sm:$0xff]
    %v1412 = vld [vmem:[#allocation7 + $0x1e8] sm:$0xff]
    %v1413 = vld [vmem:[#allocation7 + $0x1f0] sm:$0xff]
    %v1414 = vld [vmem:[#allocation7 + $0x1f8] sm:$0xff]
    %v1415 = vld [vmem:[#allocation7 + $0x200] sm:$0xff]
    %v1416 = vld [vmem:[#allocation7 + $0x208] sm:$0xff]
    %v1417 = vld [vmem:[#allocation7 + $0x210] sm:$0xff]
    %v1418 = vld [vmem:[#allocation7 + $0x218] sm:$0xff]
    %v1419 = vld [vmem:[#allocation7 + $0x220] sm:$0xff]
    %v1420 = vld [vmem:[#allocation7 + $0x228] sm:$0xff]
    %v1421 = vld [vmem:[#allocation7 + $0x230] sm:$0xff]
    %v1422 = vld [vmem:[#allocation7 + $0x238] sm:$0xff]
    %v1423 = vld [vmem:[#allocation7 + $0x240] sm:$0xff]
    %v1424 = vld [vmem:[#allocation7 + $0x248] sm:$0xff]
    %v1425 = vld [vmem:[#allocation7 + $0x250] sm:$0xff]
    %v1426 = vld [vmem:[#allocation7 + $0x258] sm:$0xff]
    %v1427 = vld [vmem:[#allocation7 + $0x260] sm:$0xff]
    %v1428 = vld [vmem:[#allocation7 + $0x268] sm:$0xff]
    %v1429 = vld [vmem:[#allocation7 + $0x270] sm:$0xff]
    %v1430 = vld [vmem:[#allocation7 + $0x278] sm:$0xff]
    %v1431 = vld [vmem:[#allocation7 + $0x280] sm:$0xff]
    %v1432 = vld [vmem:[#allocation7 + $0x288] sm:$0xff]
    %v1433 = vld [vmem:[#allocation7 + $0x290] sm:$0xff]
    %v1434 = vld [vmem:[#allocation7 + $0x298] sm:$0xff]
    %v1435 = vld [vmem:[#allocation7 + $0x2a0] sm:$0xff]
    %v1436 = vld [vmem:[#allocation7 + $0x2a8] sm:$0xff]
    %v1437 = vld [vmem:[#allocation7 + $0x2b0] sm:$0xff]
    %v1438 = vld [vmem:[#allocation7 + $0x2b8] sm:$0xff]
    %v1439 = vld [vmem:[#allocation7 + $0x2c0] sm:$0xff]
    %v1440 = vld [vmem:[#allocation7 + $0x2c8] sm:$0xff]
    %v1441 = vld [vmem:[#allocation7 + $0x2d0] sm:$0xff]
    %v1442 = vld [vmem:[#allocation7 + $0x2d8] sm:$0xff]
    %v1443 = vld [vmem:[#allocation7 + $0x2e0] sm:$0xff]
    %v1444 = vld [vmem:[#allocation7 + $0x2e8] sm:$0xff]
    %v1445 = vld [vmem:[#allocation7 + $0x2f0] sm:$0xff]
    %v1446 = vld [vmem:[#allocation7 + $0x2f8] sm:$0xff]
    %v1447 = vld [vmem:[#allocation7 + $0x300] sm:$0xff]
    %v1448 = vld [vmem:[#allocation7 + $0x308] sm:$0xff]
    %v1449 = vld [vmem:[#allocation7 + $0x310] sm:$0xff]
    %v1450 = vld [vmem:[#allocation7 + $0x318] sm:$0xff]
    %v1451 = vld [vmem:[#allocation7 + $0x320] sm:$0xff]
    %v1452 = vld [vmem:[#allocation7 + $0x328] sm:$0xff]
    %v1453 = vld [vmem:[#allocation7 + $0x330] sm:$0xff]
    %v1454 = vld [vmem:[#allocation7 + $0x338] sm:$0xff]
    %v1455 = vld [vmem:[#allocation7 + $0x340] sm:$0xff]
    %v1456 = vld [vmem:[#allocation7 + $0x348] sm:$0xff]
    %v1457 = vld [vmem:[#allocation7 + $0x350] sm:$0xff]
    %v1458 = vld [vmem:[#allocation7 + $0x358] sm:$0xff]
    %v1459 = vld [vmem:[#allocation7 + $0x360] sm:$0xff]
    %v1460 = vld [vmem:[#allocation7 + $0x368] sm:$0xff]
    %v1461 = vld [vmem:[#allocation7 + $0x370] sm:$0xff]
    %v1462 = vld [vmem:[#allocation7 + $0x378] sm:$0xff]
    %v1463 = vld [vmem:[#allocation7 + $0x380] sm:$0xff]
    %v1464 = vld [vmem:[#allocation7 + $0x388] sm:$0xff]
    %v1465 = vld [vmem:[#allocation7 + $0x390] sm:$0xff]
    %v1466 = vld [vmem:[#allocation7 + $0x398] sm:$0xff]
    %v1467 = vld [vmem:[#allocation7 + $0x3a0] sm:$0xff]
    %v1468 = vld [vmem:[#allocation7 + $0x3a8] sm:$0xff]
    %v1469 = vld [vmem:[#allocation7 + $0x3b0] sm:$0xff]
    %v1470 = vld [vmem:[#allocation7 + $0x3b8] sm:$0xff]
    %v1471 = vld [vmem:[#allocation7 + $0x3c0] sm:$0xff]
    %v1472 = vld [vmem:[#allocation7 + $0x3c8] sm:$0xff]
    %v1473 = vld [vmem:[#allocation7 + $0x3d0] sm:$0xff]
    %v1474 = vld [vmem:[#allocation7 + $0x3d8] sm:$0xff]
    %v1475 = vld [vmem:[#allocation7 + $0x3e0] sm:$0xff]
    %v1476 = vld [vmem:[#allocation7 + $0x3e8] sm:$0xff]
    %v1477 = vld [vmem:[#allocation7 + $0x3f0] sm:$0xff]
    %v1478 = vld [vmem:[#allocation7 + $0x3f8] sm:$0xff]
    %v1479 = vld [vmem:[#allocation7 + $0x400] sm:$0xff]
    %v1480 = vld [vmem:[#allocation7 + $0x408] sm:$0xff]
    %v1481 = vld [vmem:[#allocation7 + $0x410] sm:$0xff]
    %v1482 = vld [vmem:[#allocation7 + $0x418] sm:$0xff]
    %v1483 = vld [vmem:[#allocation7 + $0x420] sm:$0xff]
    %v1484 = vld [vmem:[#allocation7 + $0x428] sm:$0xff]
    %v1485 = vld [vmem:[#allocation7 + $0x430] sm:$0xff]
    %v1486 = vld [vmem:[#allocation7 + $0x438] sm:$0xff]
    %v1487 = vld [vmem:[#allocation7 + $0x440] sm:$0xff]
    %v1488 = vld [vmem:[#allocation7 + $0x448] sm:$0xff]
    %v1489 = vld [vmem:[#allocation7 + $0x450] sm:$0xff]
    %v1490 = vld [vmem:[#allocation7 + $0x458] sm:$0xff]
    %v1491 = vld [vmem:[#allocation7 + $0x460] sm:$0xff]
    %v1492 = vld [vmem:[#allocation7 + $0x468] sm:$0xff]
    %v1493 = vld [vmem:[#allocation7 + $0x470] sm:$0xff]
    %v1494 = vld [vmem:[#allocation7 + $0x478] sm:$0xff]
    %v1495 = vld [vmem:[#allocation7 + $0x480] sm:$0xff]
    %v1496 = vld [vmem:[#allocation7 + $0x488] sm:$0xff]
    %v1497 = vld [vmem:[#allocation7 + $0x490] sm:$0xff]
    %v1498 = vld [vmem:[#allocation7 + $0x498] sm:$0xff]
    %v1499 = vld [vmem:[#allocation7 + $0x4a0] sm:$0xff]
    %v1500 = vld [vmem:[#allocation7 + $0x4a8] sm:$0xff]
    %v1501 = vld [vmem:[#allocation7 + $0x4b0] sm:$0xff]
    %v1502 = vld [vmem:[#allocation7 + $0x4b8] sm:$0xff]
    %v1503 = vld [vmem:[#allocation7 + $0x4c0] sm:$0xff]
    %v1504 = vld [vmem:[#allocation7 + $0x4c8] sm:$0xff]
    %v1505 = vld [vmem:[#allocation7 + $0x4d0] sm:$0xff]
    %v1506 = vld [vmem:[#allocation7 + $0x4d8] sm:$0xff]
    %v1507 = vld [vmem:[#allocation7 + $0x4e0] sm:$0xff]
    %v1508 = vld [vmem:[#allocation7 + $0x4e8] sm:$0xff]
    %v1509 = vld [vmem:[#allocation7 + $0x4f0] sm:$0xff]
    %v1510 = vld [vmem:[#allocation7 + $0x4f8] sm:$0xff]
    %v1511 = vld [vmem:[#allocation7 + $0x500] sm:$0xff]
    %v1512 = vld [vmem:[#allocation7 + $0x508] sm:$0xff]
    %v1513 = vld [vmem:[#allocation7 + $0x510] sm:$0xff]
    %v1514 = vld [vmem:[#allocation7 + $0x518] sm:$0xff]
    %v1515 = vld [vmem:[#allocation7 + $0x520] sm:$0xff]
    %v1516 = vld [vmem:[#allocation7 + $0x528] sm:$0xff]
    %v1517 = vld [vmem:[#allocation7 + $0x530] sm:$0xff]
    %v1518 = vld [vmem:[#allocation7 + $0x538] sm:$0xff]
    %v1519 = vld [vmem:[#allocation7 + $0x540] sm:$0xff]
    %v1520 = vld [vmem:[#allocation7 + $0x548] sm:$0xff]
    %v1521 = vld [vmem:[#allocation7 + $0x550] sm:$0xff]
    %v1522 = vld [vmem:[#allocation7 + $0x558] sm:$0xff]
    %v1523 = vld [vmem:[#allocation7 + $0x560] sm:$0xff]
    %v1524 = vld [vmem:[#allocation7 + $0x568] sm:$0xff]
    %v1525 = vld [vmem:[#allocation7 + $0x570] sm:$0xff]
    %v1526 = vld [vmem:[#allocation7 + $0x578] sm:$0xff]
    %v1527 = vld [vmem:[#allocation7 + $0x580] sm:$0xff]
    %v1528 = vld [vmem:[#allocation7 + $0x588] sm:$0xff]
    %v1529 = vld [vmem:[#allocation7 + $0x590] sm:$0xff]
    %v1530 = vld [vmem:[#allocation7 + $0x598] sm:$0xff]
    %v1531 = vld [vmem:[#allocation7 + $0x5a0] sm:$0xff]
    %v1532 = vld [vmem:[#allocation7 + $0x5a8] sm:$0xff]
    %v1533 = vld [vmem:[#allocation7 + $0x5b0] sm:$0xff]
    %v1534 = vld [vmem:[#allocation7 + $0x5b8] sm:$0xff]
    %v1535 = vld [vmem:[#allocation7 + $0x5c0] sm:$0xff]
    %v1536 = vld [vmem:[#allocation7 + $0x5c8] sm:$0xff]
    %v1537 = vld [vmem:[#allocation7 + $0x5d0] sm:$0xff]
    %v1538 = vld [vmem:[#allocation7 + $0x5d8] sm:$0xff]
    %v1539 = vld [vmem:[#allocation7 + $0x5e0] sm:$0xff]
    %v1540 = vld [vmem:[#allocation7 + $0x5e8] sm:$0xff]
    %v1541 = vld [vmem:[#allocation7 + $0x5f0] sm:$0xff]
    %v1542 = vld [vmem:[#allocation7 + $0x5f8] sm:$0xff]
    %v1543 = vld [vmem:[#allocation7 + $0x600] sm:$0xff]
    %v1544 = vld [vmem:[#allocation7 + $0x608] sm:$0xff]
    %v1545 = vld [vmem:[#allocation7 + $0x610] sm:$0xff]
    %v1546 = vld [vmem:[#allocation7 + $0x618] sm:$0xff]
    %v1547 = vld [vmem:[#allocation7 + $0x620] sm:$0xff]
    %v1548 = vld [vmem:[#allocation7 + $0x628] sm:$0xff]
    %v1549 = vld [vmem:[#allocation7 + $0x630] sm:$0xff]
    %v1550 = vld [vmem:[#allocation7 + $0x638] sm:$0xff]
    %v1551 = vld [vmem:[#allocation7 + $0x640] sm:$0xff]
    %v1552 = vld [vmem:[#allocation7 + $0x648] sm:$0xff]
    %v1553 = vld [vmem:[#allocation7 + $0x650] sm:$0xff]
    %v1554 = vld [vmem:[#allocation7 + $0x658] sm:$0xff]
    %v1555 = vld [vmem:[#allocation7 + $0x660] sm:$0xff]
    %v1556 = vld [vmem:[#allocation7 + $0x668] sm:$0xff]
    %v1557 = vld [vmem:[#allocation7 + $0x670] sm:$0xff]
    %v1558 = vld [vmem:[#allocation7 + $0x678] sm:$0xff]
    %v1559 = vld [vmem:[#allocation7 + $0x680] sm:$0xff]
    %v1560 = vld [vmem:[#allocation7 + $0x688] sm:$0xff]
    %v1561 = vld [vmem:[#allocation7 + $0x690] sm:$0xff]
    %v1562 = vld [vmem:[#allocation7 + $0x698] sm:$0xff]
    %v1563 = vld [vmem:[#allocation7 + $0x6a0] sm:$0xff]
    %v1564 = vld [vmem:[#allocation7 + $0x6a8] sm:$0xff]
    %v1565 = vld [vmem:[#allocation7 + $0x6b0] sm:$0xff]
    %v1566 = vld [vmem:[#allocation7 + $0x6b8] sm:$0xff]
    %v1567 = vld [vmem:[#allocation7 + $0x6c0] sm:$0xff]
    %v1568 = vld [vmem:[#allocation7 + $0x6c8] sm:$0xff]
    %v1569 = vld [vmem:[#allocation7 + $0x6d0] sm:$0xff]
    %v1570 = vld [vmem:[#allocation7 + $0x6d8] sm:$0xff]
    %v1571 = vld [vmem:[#allocation7 + $0x6e0] sm:$0xff]
    %v1572 = vld [vmem:[#allocation7 + $0x6e8] sm:$0xff]
    %v1573 = vld [vmem:[#allocation7 + $0x6f0] sm:$0xff]
    %v1574 = vld [vmem:[#allocation7 + $0x6f8] sm:$0xff]
    %v1575 = vld [vmem:[#allocation7 + $0x700] sm:$0xff]
    %v1576 = vld [vmem:[#allocation7 + $0x708] sm:$0xff]
    %v1577 = vld [vmem:[#allocation7 + $0x710] sm:$0xff]
    %v1578 = vld [vmem:[#allocation7 + $0x718] sm:$0xff]
    %v1579 = vld [vmem:[#allocation7 + $0x720] sm:$0xff]
    %v1580 = vld [vmem:[#allocation7 + $0x728] sm:$0xff]
    %v1581 = vld [vmem:[#allocation7 + $0x730] sm:$0xff]
    %v1582 = vld [vmem:[#allocation7 + $0x738] sm:$0xff]
    %v1583 = vld [vmem:[#allocation7 + $0x740] sm:$0xff]
    %v1584 = vld [vmem:[#allocation7 + $0x748] sm:$0xff]
    %v1585 = vld [vmem:[#allocation7 + $0x750] sm:$0xff]
    %v1586 = vld [vmem:[#allocation7 + $0x758] sm:$0xff]
    %v1587 = vld [vmem:[#allocation7 + $0x760] sm:$0xff]
    %v1588 = vld [vmem:[#allocation7 + $0x768] sm:$0xff]
    %v1589 = vld [vmem:[#allocation7 + $0x770] sm:$0xff]
    %v1590 = vld [vmem:[#allocation7 + $0x778] sm:$0xff]
    %v1591 = vld [vmem:[#allocation7 + $0x780] sm:$0xff]
    %v1592 = vld [vmem:[#allocation7 + $0x788] sm:$0xff]
    %v1593 = vld [vmem:[#allocation7 + $0x790] sm:$0xff]
    %v1594 = vld [vmem:[#allocation7 + $0x798] sm:$0xff]
    %v1595 = vld [vmem:[#allocation7 + $0x7a0] sm:$0xff]
    %v1596 = vld [vmem:[#allocation7 + $0x7a8] sm:$0xff]
    %v1597 = vld [vmem:[#allocation7 + $0x7b0] sm:$0xff]
    %v1598 = vld [vmem:[#allocation7 + $0x7b8] sm:$0xff]
    %v1599 = vld [vmem:[#allocation7 + $0x7c0] sm:$0xff]
    %v1600 = vld [vmem:[#allocation7 + $0x7c8] sm:$0xff]
    %v1601 = vld [vmem:[#allocation7 + $0x7d0] sm:$0xff]
    %v1602 = vld [vmem:[#allocation7 + $0x7d8] sm:$0xff]
    %v1603 = vld [vmem:[#allocation7 + $0x7e0] sm:$0xff]
    %v1604 = vld [vmem:[#allocation7 + $0x7e8] sm:$0xff]
    %v1605 = vld [vmem:[#allocation7 + $0x7f0] sm:$0xff]
    %v1606 = vld [vmem:[#allocation7 + $0x7f8] sm:$0xff]
    %v1607 = vld [vmem:[#allocation7 + $0x800] sm:$0xff]
    %v1608 = vld [vmem:[#allocation7 + $0x808] sm:$0xff]
    %v1609 = vld [vmem:[#allocation7 + $0x810] sm:$0xff]
    %v1610 = vld [vmem:[#allocation7 + $0x818] sm:$0xff]
    %v1611 = vld [vmem:[#allocation7 + $0x820] sm:$0xff]
    %v1612 = vld [vmem:[#allocation7 + $0x828] sm:$0xff]
    %v1613 = vld [vmem:[#allocation7 + $0x830] sm:$0xff]
    %v1614 = vld [vmem:[#allocation7 + $0x838] sm:$0xff]
    %v1615 = vld [vmem:[#allocation7 + $0x840] sm:$0xff]
    %v1616 = vld [vmem:[#allocation7 + $0x848] sm:$0xff]
    %v1617 = vld [vmem:[#allocation7 + $0x850] sm:$0xff]
    %v1618 = vld [vmem:[#allocation7 + $0x858] sm:$0xff]
    %v1619 = vld [vmem:[#allocation7 + $0x860] sm:$0xff]
    %v1620 = vld [vmem:[#allocation7 + $0x868] sm:$0xff]
    %v1621 = vld [vmem:[#allocation7 + $0x870] sm:$0xff]
    %v1622 = vld [vmem:[#allocation7 + $0x878] sm:$0xff]
    %v1623 = vld [vmem:[#allocation7 + $0x880] sm:$0xff]
    %v1624 = vld [vmem:[#allocation7 + $0x888] sm:$0xff]
    %v1625 = vld [vmem:[#allocation7 + $0x890] sm:$0xff]
    %v1626 = vld [vmem:[#allocation7 + $0x898] sm:$0xff]
    %v1627 = vld [vmem:[#allocation7 + $0x8a0] sm:$0xff]
    %v1628 = vld [vmem:[#allocation7 + $0x8a8] sm:$0xff]
    %v1629 = vld [vmem:[#allocation7 + $0x8b0] sm:$0xff]
    %v1630 = vld [vmem:[#allocation7 + $0x8b8] sm:$0xff]
    %v1631 = vld [vmem:[#allocation7 + $0x8c0] sm:$0xff]
    %v1632 = vld [vmem:[#allocation7 + $0x8c8] sm:$0xff]
    %v1633 = vld [vmem:[#allocation7 + $0x8d0] sm:$0xff]
    %v1634 = vld [vmem:[#allocation7 + $0x8d8] sm:$0xff]
    %v1635 = vld [vmem:[#allocation7 + $0x8e0] sm:$0xff]
    %v1636 = vld [vmem:[#allocation7 + $0x8e8] sm:$0xff]
    %v1637 = vld [vmem:[#allocation7 + $0x8f0] sm:$0xff]
    %v1638 = vld [vmem:[#allocation7 + $0x8f8] sm:$0xff]
    %v1639 = vld [vmem:[#allocation7 + $0x900] sm:$0xff]
    %v1640 = vld [vmem:[#allocation7 + $0x908] sm:$0xff]
    %v1641 = vld [vmem:[#allocation7 + $0x910] sm:$0xff]
    %v1642 = vld [vmem:[#allocation7 + $0x918] sm:$0xff]
    %v1643 = vld [vmem:[#allocation7 + $0x920] sm:$0xff]
    %v1644 = vld [vmem:[#allocation7 + $0x928] sm:$0xff]
    %v1645 = vld [vmem:[#allocation7 + $0x930] sm:$0xff]
    %v1646 = vld [vmem:[#allocation7 + $0x938] sm:$0xff]
    %v1647 = vld [vmem:[#allocation7 + $0x940] sm:$0xff]
    %v1648 = vld [vmem:[#allocation7 + $0x948] sm:$0xff]
    %v1649 = vld [vmem:[#allocation7 + $0x950] sm:$0xff]
    %v1650 = vld [vmem:[#allocation7 + $0x958] sm:$0xff]
    %v1651 = vld [vmem:[#allocation7 + $0x960] sm:$0xff]
    %v1652 = vld [vmem:[#allocation7 + $0x968] sm:$0xff]
    %v1653 = vld [vmem:[#allocation7 + $0x970] sm:$0xff]
    %v1654 = vld [vmem:[#allocation7 + $0x978] sm:$0xff]
    %v1655 = vld [vmem:[#allocation7 + $0x980] sm:$0xff]
    %v1656 = vld [vmem:[#allocation7 + $0x988] sm:$0xff]
    %v1657 = vld [vmem:[#allocation7 + $0x990] sm:$0xff]
    %v1658 = vld [vmem:[#allocation7 + $0x998] sm:$0xff]
    %v1659 = vld [vmem:[#allocation7 + $0x9a0] sm:$0xff]
    %v1660 = vld [vmem:[#allocation7 + $0x9a8] sm:$0xff]
    %v1661 = vld [vmem:[#allocation7 + $0x9b0] sm:$0xff]
    %v1662 = vld [vmem:[#allocation7 + $0x9b8] sm:$0xff]
    %v1663 = vld [vmem:[#allocation7 + $0x9c0] sm:$0xff]
    %v1664 = vld [vmem:[#allocation7 + $0x9c8] sm:$0xff]
    %v1665 = vld [vmem:[#allocation7 + $0x9d0] sm:$0xff]
    %v1666 = vld [vmem:[#allocation7 + $0x9d8] sm:$0xff]
    %v1667 = vld [vmem:[#allocation7 + $0x9e0] sm:$0xff]
    %v1668 = vld [vmem:[#allocation7 + $0x9e8] sm:$0xff]
    %v1669 = vld [vmem:[#allocation7 + $0x9f0] sm:$0xff]
    %v1670 = vld [vmem:[#allocation7 + $0x9f8] sm:$0xff]
    %v1671 = vld [vmem:[#allocation7 + $0xa00] sm:$0xff]
    %v1672 = vld [vmem:[#allocation7 + $0xa08] sm:$0xff]
    %v1673 = vld [vmem:[#allocation7 + $0xa10] sm:$0xff]
    %v1674 = vld [vmem:[#allocation7 + $0xa18] sm:$0xff]
    %v1675 = vld [vmem:[#allocation7 + $0xa20] sm:$0xff]
    %v1676 = vld [vmem:[#allocation7 + $0xa28] sm:$0xff]
    %v1677 = vld [vmem:[#allocation7 + $0xa30] sm:$0xff]
    %v1678 = vld [vmem:[#allocation7 + $0xa38] sm:$0xff]
    %v1679 = vld [vmem:[#allocation7 + $0xa40] sm:$0xff]
    %v1680 = vld [vmem:[#allocation7 + $0xa48] sm:$0xff]
    %v1681 = vld [vmem:[#allocation7 + $0xa50] sm:$0xff]
    %v1682 = vld [vmem:[#allocation7 + $0xa58] sm:$0xff]
    %v1683 = vld [vmem:[#allocation7 + $0xa60] sm:$0xff]
    %v1684 = vld [vmem:[#allocation7 + $0xa68] sm:$0xff]
    %v1685 = vld [vmem:[#allocation7 + $0xa70] sm:$0xff]
    %v1686 = vld [vmem:[#allocation7 + $0xa78] sm:$0xff]
    %v1687 = vld [vmem:[#allocation7 + $0xa80] sm:$0xff]
    %v1688 = vld [vmem:[#allocation7 + $0xa88] sm:$0xff]
    %v1689 = vld [vmem:[#allocation7 + $0xa90] sm:$0xff]
    %v1690 = vld [vmem:[#allocation7 + $0xa98] sm:$0xff]
    %v1691 = vld [vmem:[#allocation7 + $0xaa0] sm:$0xff]
    %v1692 = vld [vmem:[#allocation7 + $0xaa8] sm:$0xff]
    %v1693 = vld [vmem:[#allocation7 + $0xab0] sm:$0xff]
    %v1694 = vld [vmem:[#allocation7 + $0xab8] sm:$0xff]
    %v1695 = vld [vmem:[#allocation7 + $0xac0] sm:$0xff]
    %v1696 = vld [vmem:[#allocation7 + $0xac8] sm:$0xff]
    %v1697 = vld [vmem:[#allocation7 + $0xad0] sm:$0xff]
    %v1698 = vld [vmem:[#allocation7 + $0xad8] sm:$0xff]
    %v1699 = vld [vmem:[#allocation7 + $0xae0] sm:$0xff]
    %v1700 = vld [vmem:[#allocation7 + $0xae8] sm:$0xff]
    %v1701 = vld [vmem:[#allocation7 + $0xaf0] sm:$0xff]
    %v1702 = vld [vmem:[#allocation7 + $0xaf8] sm:$0xff]
    %v1703 = vld [vmem:[#allocation7 + $0xb00] sm:$0xff]
    %v1704 = vld [vmem:[#allocation7 + $0xb08] sm:$0xff]
    %v1705 = vld [vmem:[#allocation7 + $0xb10] sm:$0xff]
    %v1706 = vld [vmem:[#allocation7 + $0xb18] sm:$0xff]
    %v1707 = vld [vmem:[#allocation7 + $0xb20] sm:$0xff]
    %v1708 = vld [vmem:[#allocation7 + $0xb28] sm:$0xff]
    %v1709 = vld [vmem:[#allocation7 + $0xb30] sm:$0xff]
    %v1710 = vld [vmem:[#allocation7 + $0xb38] sm:$0xff]
    %v1711 = vld [vmem:[#allocation7 + $0xb40] sm:$0xff]
    %v1712 = vld [vmem:[#allocation7 + $0xb48] sm:$0xff]
    %v1713 = vld [vmem:[#allocation7 + $0xb50] sm:$0xff]
    %v1714 = vld [vmem:[#allocation7 + $0xb58] sm:$0xff]
    %v1715 = vld [vmem:[#allocation7 + $0xb60] sm:$0xff]
    %v1716 = vld [vmem:[#allocation7 + $0xb68] sm:$0xff]
    %v1717 = vld [vmem:[#allocation7 + $0xb70] sm:$0xff]
    %v1718 = vld [vmem:[#allocation7 + $0xb78] sm:$0xff]
    %v1719 = vld [vmem:[#allocation7 + $0xb80] sm:$0xff]
    %v1720 = vld [vmem:[#allocation7 + $0xb88] sm:$0xff]
    %v1721 = vld [vmem:[#allocation7 + $0xb90] sm:$0xff]
    %v1722 = vld [vmem:[#allocation7 + $0xb98] sm:$0xff]
    %v1723 = vld [vmem:[#allocation7 + $0xba0] sm:$0xff]
    %v1724 = vld [vmem:[#allocation7 + $0xba8] sm:$0xff]
    %v1725 = vld [vmem:[#allocation7 + $0xbb0] sm:$0xff]
    %v1726 = vld [vmem:[#allocation7 + $0xbb8] sm:$0xff]
    %v1727 = vld [vmem:[#allocation7 + $0xbc0] sm:$0xff]
    %v1728 = vld [vmem:[#allocation7 + $0xbc8] sm:$0xff]
    %v1729 = vld [vmem:[#allocation7 + $0xbd0] sm:$0xff]
    %v1730 = vld [vmem:[#allocation7 + $0xbd8] sm:$0xff]
    %v1731 = vld [vmem:[#allocation7 + $0xbe0] sm:$0xff]
    %v1732 = vld [vmem:[#allocation7 + $0xbe8] sm:$0xff]
    %v1733 = vld [vmem:[#allocation7 + $0xbf0] sm:$0xff]
    %v1734 = vld [vmem:[#allocation7 + $0xbf8] sm:$0xff]
    %v2119 = vunpack.c.l.b16 %v1351
    %v2120 = vunpack.c.h.b16 %v1351
    %v2121 = vunpack.c.l.b16 %v1352
    %v2122 = vunpack.c.h.b16 %v1352
    %v2123 = vunpack.c.l.b16 %v1353
    %v2124 = vunpack.c.h.b16 %v1353
    %v2125 = vunpack.c.l.b16 %v1354
    %v2126 = vunpack.c.h.b16 %v1354
    %v2127 = vunpack.c.l.b16 %v1355
    %v2128 = vunpack.c.h.b16 %v1355
    %v2129 = vunpack.c.l.b16 %v1356
    %v2130 = vunpack.c.h.b16 %v1356
    %v2131 = vunpack.c.l.b16 %v1357
    %v2132 = vunpack.c.h.b16 %v1357
    %v2133 = vunpack.c.l.b16 %v1358
    %v2134 = vunpack.c.h.b16 %v1358
    %v2135 = vunpack.c.l.b16 %v1359
    %v2136 = vunpack.c.h.b16 %v1359
    %v2137 = vunpack.c.l.b16 %v1360
    %v2138 = vunpack.c.h.b16 %v1360
    %v2139 = vunpack.c.l.b16 %v1361
    %v2140 = vunpack.c.h.b16 %v1361
    %v2141 = vunpack.c.l.b16 %v1362
    %v2142 = vunpack.c.h.b16 %v1362
    %v2143 = vunpack.c.l.b16 %v1363
    %v2144 = vunpack.c.h.b16 %v1363
    %v2145 = vunpack.c.l.b16 %v1364
    %v2146 = vunpack.c.h.b16 %v1364
    %v2147 = vunpack.c.l.b16 %v1365
    %v2148 = vunpack.c.h.b16 %v1365
    %v2149 = vunpack.c.l.b16 %v1366
    %v2150 = vunpack.c.h.b16 %v1366
    %v2151 = vunpack.c.l.b16 %v1367
    %v2152 = vunpack.c.h.b16 %v1367
    %v2153 = vunpack.c.l.b16 %v1368
    %v2154 = vunpack.c.h.b16 %v1368
    %v2155 = vunpack.c.l.b16 %v1369
    %v2156 = vunpack.c.h.b16 %v1369
    %v2157 = vunpack.c.l.b16 %v1370
    %v2158 = vunpack.c.h.b16 %v1370
    %v2159 = vunpack.c.l.b16 %v1371
    %v2160 = vunpack.c.h.b16 %v1371
    %v2161 = vunpack.c.l.b16 %v1372
    %v2162 = vunpack.c.h.b16 %v1372
    %v2163 = vunpack.c.l.b16 %v1373
    %v2164 = vunpack.c.h.b16 %v1373
    %v2165 = vunpack.c.l.b16 %v1374
    %v2166 = vunpack.c.h.b16 %v1374
    %v2167 = vunpack.c.l.b16 %v1375
    %v2168 = vunpack.c.h.b16 %v1375
    %v2169 = vunpack.c.l.b16 %v1376
    %v2170 = vunpack.c.h.b16 %v1376
    %v2171 = vunpack.c.l.b16 %v1377
    %v2172 = vunpack.c.h.b16 %v1377
    %v2173 = vunpack.c.l.b16 %v1378
    %v2174 = vunpack.c.h.b16 %v1378
    %v2175 = vunpack.c.l.b16 %v1379
    %v2176 = vunpack.c.h.b16 %v1379
    %v2177 = vunpack.c.l.b16 %v1380
    %v2178 = vunpack.c.h.b16 %v1380
    %v2179 = vunpack.c.l.b16 %v1381
    %v2180 = vunpack.c.h.b16 %v1381
    %v2181 = vunpack.c.l.b16 %v1382
    %v2182 = vunpack.c.h.b16 %v1382
    %v2183 = vunpack.c.l.b16 %v1383
    %v2184 = vunpack.c.h.b16 %v1383
    %v2185 = vunpack.c.l.b16 %v1384
    %v2186 = vunpack.c.h.b16 %v1384
    %v2187 = vunpack.c.l.b16 %v1385
    %v2188 = vunpack.c.h.b16 %v1385
    %v2189 = vunpack.c.l.b16 %v1386
    %v2190 = vunpack.c.h.b16 %v1386
    %v2191 = vunpack.c.l.b16 %v1387
    %v2192 = vunpack.c.h.b16 %v1387
    %v2193 = vunpack.c.l.b16 %v1388
    %v2194 = vunpack.c.h.b16 %v1388
    %v2195 = vunpack.c.l.b16 %v1389
    %v2196 = vunpack.c.h.b16 %v1389
    %v2197 = vunpack.c.l.b16 %v1390
    %v2198 = vunpack.c.h.b16 %v1390
    %v2199 = vunpack.c.l.b16 %v1391
    %v2200 = vunpack.c.h.b16 %v1391
    %v2201 = vunpack.c.l.b16 %v1392
    %v2202 = vunpack.c.h.b16 %v1392
    %v2203 = vunpack.c.l.b16 %v1393
    %v2204 = vunpack.c.h.b16 %v1393
    %v2205 = vunpack.c.l.b16 %v1394
    %v2206 = vunpack.c.h.b16 %v1394
    %v2207 = vunpack.c.l.b16 %v1395
    %v2208 = vunpack.c.h.b16 %v1395
    %v2209 = vunpack.c.l.b16 %v1396
    %v2210 = vunpack.c.h.b16 %v1396
    %v2211 = vunpack.c.l.b16 %v1397
    %v2212 = vunpack.c.h.b16 %v1397
    %v2213 = vunpack.c.l.b16 %v1398
    %v2214 = vunpack.c.h.b16 %v1398
    %v2215 = vunpack.c.l.b16 %v1399
    %v2216 = vunpack.c.h.b16 %v1399
    %v2217 = vunpack.c.l.b16 %v1400
    %v2218 = vunpack.c.h.b16 %v1400
    %v2219 = vunpack.c.l.b16 %v1401
    %v2220 = vunpack.c.h.b16 %v1401
    %v2221 = vunpack.c.l.b16 %v1402
    %v2222 = vunpack.c.h.b16 %v1402
    %v2223 = vunpack.c.l.b16 %v1403
    %v2224 = vunpack.c.h.b16 %v1403
    %v2225 = vunpack.c.l.b16 %v1404
    %v2226 = vunpack.c.h.b16 %v1404
    %v2227 = vunpack.c.l.b16 %v1405
    %v2228 = vunpack.c.h.b16 %v1405
    %v2229 = vunpack.c.l.b16 %v1406
    %v2230 = vunpack.c.h.b16 %v1406
    %v2231 = vunpack.c.l.b16 %v1407
    %v2232 = vunpack.c.h.b16 %v1407
    %v2233 = vunpack.c.l.b16 %v1408
    %v2234 = vunpack.c.h.b16 %v1408
    %v2235 = vunpack.c.l.b16 %v1409
    %v2236 = vunpack.c.h.b16 %v1409
    %v2237 = vunpack.c.l.b16 %v1410
    %v2238 = vunpack.c.h.b16 %v1410
    %v2239 = vunpack.c.l.b16 %v1411
    %v2240 = vunpack.c.h.b16 %v1411
    %v2241 = vunpack.c.l.b16 %v1412
    %v2242 = vunpack.c.h.b16 %v1412
    %v2243 = vunpack.c.l.b16 %v1413
    %v2244 = vunpack.c.h.b16 %v1413
    %v2245 = vunpack.c.l.b16 %v1414
    %v2246 = vunpack.c.h.b16 %v1414
    %v2247 = vunpack.c.l.b16 %v1415
    %v2248 = vunpack.c.h.b16 %v1415
    %v2249 = vunpack.c.l.b16 %v1416
    %v2250 = vunpack.c.h.b16 %v1416
    %v2251 = vunpack.c.l.b16 %v1417
    %v2252 = vunpack.c.h.b16 %v1417
    %v2253 = vunpack.c.l.b16 %v1418
    %v2254 = vunpack.c.h.b16 %v1418
    %v2255 = vunpack.c.l.b16 %v1419
    %v2256 = vunpack.c.h.b16 %v1419
    %v2257 = vunpack.c.l.b16 %v1420
    %v2258 = vunpack.c.h.b16 %v1420
    %v2259 = vunpack.c.l.b16 %v1421
    %v2260 = vunpack.c.h.b16 %v1421
    %v2261 = vunpack.c.l.b16 %v1422
    %v2262 = vunpack.c.h.b16 %v1422
    %v2263 = vunpack.c.l.b16 %v1423
    %v2264 = vunpack.c.h.b16 %v1423
    %v2265 = vunpack.c.l.b16 %v1424
    %v2266 = vunpack.c.h.b16 %v1424
    %v2267 = vunpack.c.l.b16 %v1425
    %v2268 = vunpack.c.h.b16 %v1425
    %v2269 = vunpack.c.l.b16 %v1426
    %v2270 = vunpack.c.h.b16 %v1426
    %v2271 = vunpack.c.l.b16 %v1427
    %v2272 = vunpack.c.h.b16 %v1427
    %v2273 = vunpack.c.l.b16 %v1428
    %v2274 = vunpack.c.h.b16 %v1428
    %v2275 = vunpack.c.l.b16 %v1429
    %v2276 = vunpack.c.h.b16 %v1429
    %v2277 = vunpack.c.l.b16 %v1430
    %v2278 = vunpack.c.h.b16 %v1430
    %v2279 = vunpack.c.l.b16 %v1431
    %v2280 = vunpack.c.h.b16 %v1431
    %v2281 = vunpack.c.l.b16 %v1432
    %v2282 = vunpack.c.h.b16 %v1432
    %v2283 = vunpack.c.l.b16 %v1433
    %v2284 = vunpack.c.h.b16 %v1433
    %v2285 = vunpack.c.l.b16 %v1434
    %v2286 = vunpack.c.h.b16 %v1434
    %v2287 = vunpack.c.l.b16 %v1435
    %v2288 = vunpack.c.h.b16 %v1435
    %v2289 = vunpack.c.l.b16 %v1436
    %v2290 = vunpack.c.h.b16 %v1436
    %v2291 = vunpack.c.l.b16 %v1437
    %v2292 = vunpack.c.h.b16 %v1437
    %v2293 = vunpack.c.l.b16 %v1438
    %v2294 = vunpack.c.h.b16 %v1438
    %v2295 = vunpack.c.l.b16 %v1439
    %v2296 = vunpack.c.h.b16 %v1439
    %v2297 = vunpack.c.l.b16 %v1440
    %v2298 = vunpack.c.h.b16 %v1440
    %v2299 = vunpack.c.l.b16 %v1441
    %v2300 = vunpack.c.h.b16 %v1441
    %v2301 = vunpack.c.l.b16 %v1442
    %v2302 = vunpack.c.h.b16 %v1442
    %v2303 = vunpack.c.l.b16 %v1443
    %v2304 = vunpack.c.h.b16 %v1443
    %v2305 = vunpack.c.l.b16 %v1444
    %v2306 = vunpack.c.h.b16 %v1444
    %v2307 = vunpack.c.l.b16 %v1445
    %v2308 = vunpack.c.h.b16 %v1445
    %v2309 = vunpack.c.l.b16 %v1446
    %v2310 = vunpack.c.h.b16 %v1446
    %v2311 = vunpack.c.l.b16 %v1447
    %v2312 = vunpack.c.h.b16 %v1447
    %v2313 = vunpack.c.l.b16 %v1448
    %v2314 = vunpack.c.h.b16 %v1448
    %v2315 = vunpack.c.l.b16 %v1449
    %v2316 = vunpack.c.h.b16 %v1449
    %v2317 = vunpack.c.l.b16 %v1450
    %v2318 = vunpack.c.h.b16 %v1450
    %v2319 = vunpack.c.l.b16 %v1451
    %v2320 = vunpack.c.h.b16 %v1451
    %v2321 = vunpack.c.l.b16 %v1452
    %v2322 = vunpack.c.h.b16 %v1452
    %v2323 = vunpack.c.l.b16 %v1453
    %v2324 = vunpack.c.h.b16 %v1453
    %v2325 = vunpack.c.l.b16 %v1454
    %v2326 = vunpack.c.h.b16 %v1454
    %v2327 = vunpack.c.l.b16 %v1455
    %v2328 = vunpack.c.h.b16 %v1455
    %v2329 = vunpack.c.l.b16 %v1456
    %v2330 = vunpack.c.h.b16 %v1456
    %v2331 = vunpack.c.l.b16 %v1457
    %v2332 = vunpack.c.h.b16 %v1457
    %v2333 = vunpack.c.l.b16 %v1458
    %v2334 = vunpack.c.h.b16 %v1458
    %v2335 = vunpack.c.l.b16 %v1459
    %v2336 = vunpack.c.h.b16 %v1459
    %v2337 = vunpack.c.l.b16 %v1460
    %v2338 = vunpack.c.h.b16 %v1460
    %v2339 = vunpack.c.l.b16 %v1461
    %v2340 = vunpack.c.h.b16 %v1461
    %v2341 = vunpack.c.l.b16 %v1462
    %v2342 = vunpack.c.h.b16 %v1462
    %v2343 = vunpack.c.l.b16 %v1463
    %v2344 = vunpack.c.h.b16 %v1463
    %v2345 = vunpack.c.l.b16 %v1464
    %v2346 = vunpack.c.h.b16 %v1464
    %v2347 = vunpack.c.l.b16 %v1465
    %v2348 = vunpack.c.h.b16 %v1465
    %v2349 = vunpack.c.l.b16 %v1466
    %v2350 = vunpack.c.h.b16 %v1466
    %v2351 = vunpack.c.l.b16 %v1467
    %v2352 = vunpack.c.h.b16 %v1467
    %v2353 = vunpack.c.l.b16 %v1468
    %v2354 = vunpack.c.h.b16 %v1468
    %v2355 = vunpack.c.l.b16 %v1469
    %v2356 = vunpack.c.h.b16 %v1469
    %v2357 = vunpack.c.l.b16 %v1470
    %v2358 = vunpack.c.h.b16 %v1470
    %v2359 = vunpack.c.l.b16 %v1471
    %v2360 = vunpack.c.h.b16 %v1471
    %v2361 = vunpack.c.l.b16 %v1472
    %v2362 = vunpack.c.h.b16 %v1472
    %v2363 = vunpack.c.l.b16 %v1473
    %v2364 = vunpack.c.h.b16 %v1473
    %v2365 = vunpack.c.l.b16 %v1474
    %v2366 = vunpack.c.h.b16 %v1474
    %v2367 = vunpack.c.l.b16 %v1475
    %v2368 = vunpack.c.h.b16 %v1475
    %v2369 = vunpack.c.l.b16 %v1476
    %v2370 = vunpack.c.h.b16 %v1476
    %v2371 = vunpack.c.l.b16 %v1477
    %v2372 = vunpack.c.h.b16 %v1477
    %v2373 = vunpack.c.l.b16 %v1478
    %v2374 = vunpack.c.h.b16 %v1478
    %v2375 = vunpack.c.l.b16 %v1479
    %v2376 = vunpack.c.h.b16 %v1479
    %v2377 = vunpack.c.l.b16 %v1480
    %v2378 = vunpack.c.h.b16 %v1480
    %v2379 = vunpack.c.l.b16 %v1481
    %v2380 = vunpack.c.h.b16 %v1481
    %v2381 = vunpack.c.l.b16 %v1482
    %v2382 = vunpack.c.h.b16 %v1482
    %v2383 = vunpack.c.l.b16 %v1483
    %v2384 = vunpack.c.h.b16 %v1483
    %v2385 = vunpack.c.l.b16 %v1484
    %v2386 = vunpack.c.h.b16 %v1484
    %v2387 = vunpack.c.l.b16 %v1485
    %v2388 = vunpack.c.h.b16 %v1485
    %v2389 = vunpack.c.l.b16 %v1486
    %v2390 = vunpack.c.h.b16 %v1486
    %v2391 = vunpack.c.l.b16 %v1487
    %v2392 = vunpack.c.h.b16 %v1487
    %v2393 = vunpack.c.l.b16 %v1488
    %v2394 = vunpack.c.h.b16 %v1488
    %v2395 = vunpack.c.l.b16 %v1489
    %v2396 = vunpack.c.h.b16 %v1489
    %v2397 = vunpack.c.l.b16 %v1490
    %v2398 = vunpack.c.h.b16 %v1490
    %v2399 = vunpack.c.l.b16 %v1491
    %v2400 = vunpack.c.h.b16 %v1491
    %v2401 = vunpack.c.l.b16 %v1492
    %v2402 = vunpack.c.h.b16 %v1492
    %v2403 = vunpack.c.l.b16 %v1493
    %v2404 = vunpack.c.h.b16 %v1493
    %v2405 = vunpack.c.l.b16 %v1494
    %v2406 = vunpack.c.h.b16 %v1494
    %v2407 = vunpack.c.l.b16 %v1495
    %v2408 = vunpack.c.h.b16 %v1495
    %v2409 = vunpack.c.l.b16 %v1496
    %v2410 = vunpack.c.h.b16 %v1496
    %v2411 = vunpack.c.l.b16 %v1497
    %v2412 = vunpack.c.h.b16 %v1497
    %v2413 = vunpack.c.l.b16 %v1498
    %v2414 = vunpack.c.h.b16 %v1498
    %v2415 = vunpack.c.l.b16 %v1499
    %v2416 = vunpack.c.h.b16 %v1499
    %v2417 = vunpack.c.l.b16 %v1500
    %v2418 = vunpack.c.h.b16 %v1500
    %v2419 = vunpack.c.l.b16 %v1501
    %v2420 = vunpack.c.h.b16 %v1501
    %v2421 = vunpack.c.l.b16 %v1502
    %v2422 = vunpack.c.h.b16 %v1502
    %v2423 = vunpack.c.l.b16 %v1503
    %v2424 = vunpack.c.h.b16 %v1503
    %v2425 = vunpack.c.l.b16 %v1504
    %v2426 = vunpack.c.h.b16 %v1504
    %v2427 = vunpack.c.l.b16 %v1505
    %v2428 = vunpack.c.h.b16 %v1505
    %v2429 = vunpack.c.l.b16 %v1506
    %v2430 = vunpack.c.h.b16 %v1506
    %v2431 = vunpack.c.l.b16 %v1507
    %v2432 = vunpack.c.h.b16 %v1507
    %v2433 = vunpack.c.l.b16 %v1508
    %v2434 = vunpack.c.h.b16 %v1508
    %v2435 = vunpack.c.l.b16 %v1509
    %v2436 = vunpack.c.h.b16 %v1509
    %v2437 = vunpack.c.l.b16 %v1510
    %v2438 = vunpack.c.h.b16 %v1510
    %v2439 = vunpack.c.l.b16 %v1511
    %v2440 = vunpack.c.h.b16 %v1511
    %v2441 = vunpack.c.l.b16 %v1512
    %v2442 = vunpack.c.h.b16 %v1512
    %v2443 = vunpack.c.l.b16 %v1513
    %v2444 = vunpack.c.h.b16 %v1513
    %v2445 = vunpack.c.l.b16 %v1514
    %v2446 = vunpack.c.h.b16 %v1514
    %v2447 = vunpack.c.l.b16 %v1515
    %v2448 = vunpack.c.h.b16 %v1515
    %v2449 = vunpack.c.l.b16 %v1516
    %v2450 = vunpack.c.h.b16 %v1516
    %v2451 = vunpack.c.l.b16 %v1517
    %v2452 = vunpack.c.h.b16 %v1517
    %v2453 = vunpack.c.l.b16 %v1518
    %v2454 = vunpack.c.h.b16 %v1518
    %v2455 = vunpack.c.l.b16 %v1519
    %v2456 = vunpack.c.h.b16 %v1519
    %v2457 = vunpack.c.l.b16 %v1520
    %v2458 = vunpack.c.h.b16 %v1520
    %v2459 = vunpack.c.l.b16 %v1521
    %v2460 = vunpack.c.h.b16 %v1521
    %v2461 = vunpack.c.l.b16 %v1522
    %v2462 = vunpack.c.h.b16 %v1522
    %v2463 = vunpack.c.l.b16 %v1523
    %v2464 = vunpack.c.h.b16 %v1523
    %v2465 = vunpack.c.l.b16 %v1524
    %v2466 = vunpack.c.h.b16 %v1524
    %v2467 = vunpack.c.l.b16 %v1525
    %v2468 = vunpack.c.h.b16 %v1525
    %v2469 = vunpack.c.l.b16 %v1526
    %v2470 = vunpack.c.h.b16 %v1526
    %v2471 = vunpack.c.l.b16 %v1527
    %v2472 = vunpack.c.h.b16 %v1527
    %v2473 = vunpack.c.l.b16 %v1528
    %v2474 = vunpack.c.h.b16 %v1528
    %v2475 = vunpack.c.l.b16 %v1529
    %v2476 = vunpack.c.h.b16 %v1529
    %v2477 = vunpack.c.l.b16 %v1530
    %v2478 = vunpack.c.h.b16 %v1530
    %v2479 = vunpack.c.l.b16 %v1531
    %v2480 = vunpack.c.h.b16 %v1531
    %v2481 = vunpack.c.l.b16 %v1532
    %v2482 = vunpack.c.h.b16 %v1532
    %v2483 = vunpack.c.l.b16 %v1533
    %v2484 = vunpack.c.h.b16 %v1533
    %v2485 = vunpack.c.l.b16 %v1534
    %v2486 = vunpack.c.h.b16 %v1534
    %v2487 = vunpack.c.l.b16 %v1535
    %v2488 = vunpack.c.h.b16 %v1535
    %v2489 = vunpack.c.l.b16 %v1536
    %v2490 = vunpack.c.h.b16 %v1536
    %v2491 = vunpack.c.l.b16 %v1537
    %v2492 = vunpack.c.h.b16 %v1537
    %v2493 = vunpack.c.l.b16 %v1538
    %v2494 = vunpack.c.h.b16 %v1538
    %v2495 = vunpack.c.l.b16 %v1539
    %v2496 = vunpack.c.h.b16 %v1539
    %v2497 = vunpack.c.l.b16 %v1540
    %v2498 = vunpack.c.h.b16 %v1540
    %v2499 = vunpack.c.l.b16 %v1541
    %v2500 = vunpack.c.h.b16 %v1541
    %v2501 = vunpack.c.l.b16 %v1542
    %v2502 = vunpack.c.h.b16 %v1542
    %v2503 = vunpack.c.l.b16 %v1543
    %v2504 = vunpack.c.h.b16 %v1543
    %v2505 = vunpack.c.l.b16 %v1544
    %v2506 = vunpack.c.h.b16 %v1544
    %v2507 = vunpack.c.l.b16 %v1545
    %v2508 = vunpack.c.h.b16 %v1545
    %v2509 = vunpack.c.l.b16 %v1546
    %v2510 = vunpack.c.h.b16 %v1546
    %v2511 = vunpack.c.l.b16 %v1547
    %v2512 = vunpack.c.h.b16 %v1547
    %v2513 = vunpack.c.l.b16 %v1548
    %v2514 = vunpack.c.h.b16 %v1548
    %v2515 = vunpack.c.l.b16 %v1549
    %v2516 = vunpack.c.h.b16 %v1549
    %v2517 = vunpack.c.l.b16 %v1550
    %v2518 = vunpack.c.h.b16 %v1550
    %v2519 = vunpack.c.l.b16 %v1551
    %v2520 = vunpack.c.h.b16 %v1551
    %v2521 = vunpack.c.l.b16 %v1552
    %v2522 = vunpack.c.h.b16 %v1552
    %v2523 = vunpack.c.l.b16 %v1553
    %v2524 = vunpack.c.h.b16 %v1553
    %v2525 = vunpack.c.l.b16 %v1554
    %v2526 = vunpack.c.h.b16 %v1554
    %v2527 = vunpack.c.l.b16 %v1555
    %v2528 = vunpack.c.h.b16 %v1555
    %v2529 = vunpack.c.l.b16 %v1556
    %v2530 = vunpack.c.h.b16 %v1556
    %v2531 = vunpack.c.l.b16 %v1557
    %v2532 = vunpack.c.h.b16 %v1557
    %v2533 = vunpack.c.l.b16 %v1558
    %v2534 = vunpack.c.h.b16 %v1558
    %v2535 = vunpack.c.l.b16 %v1559
    %v2536 = vunpack.c.h.b16 %v1559
    %v2537 = vunpack.c.l.b16 %v1560
    %v2538 = vunpack.c.h.b16 %v1560
    %v2539 = vunpack.c.l.b16 %v1561
    %v2540 = vunpack.c.h.b16 %v1561
    %v2541 = vunpack.c.l.b16 %v1562
    %v2542 = vunpack.c.h.b16 %v1562
    %v2543 = vunpack.c.l.b16 %v1563
    %v2544 = vunpack.c.h.b16 %v1563
    %v2545 = vunpack.c.l.b16 %v1564
    %v2546 = vunpack.c.h.b16 %v1564
    %v2547 = vunpack.c.l.b16 %v1565
    %v2548 = vunpack.c.h.b16 %v1565
    %v2549 = vunpack.c.l.b16 %v1566
    %v2550 = vunpack.c.h.b16 %v1566
    %v2551 = vunpack.c.l.b16 %v1567
    %v2552 = vunpack.c.h.b16 %v1567
    %v2553 = vunpack.c.l.b16 %v1568
    %v2554 = vunpack.c.h.b16 %v1568
    %v2555 = vunpack.c.l.b16 %v1569
    %v2556 = vunpack.c.h.b16 %v1569
    %v2557 = vunpack.c.l.b16 %v1570
    %v2558 = vunpack.c.h.b16 %v1570
    %v2559 = vunpack.c.l.b16 %v1571
    %v2560 = vunpack.c.h.b16 %v1571
    %v2561 = vunpack.c.l.b16 %v1572
    %v2562 = vunpack.c.h.b16 %v1572
    %v2563 = vunpack.c.l.b16 %v1573
    %v2564 = vunpack.c.h.b16 %v1573
    %v2565 = vunpack.c.l.b16 %v1574
    %v2566 = vunpack.c.h.b16 %v1574
    %v2567 = vunpack.c.l.b16 %v1575
    %v2568 = vunpack.c.h.b16 %v1575
    %v2569 = vunpack.c.l.b16 %v1576
    %v2570 = vunpack.c.h.b16 %v1576
    %v2571 = vunpack.c.l.b16 %v1577
    %v2572 = vunpack.c.h.b16 %v1577
    %v2573 = vunpack.c.l.b16 %v1578
    %v2574 = vunpack.c.h.b16 %v1578
    %v2575 = vunpack.c.l.b16 %v1579
    %v2576 = vunpack.c.h.b16 %v1579
    %v2577 = vunpack.c.l.b16 %v1580
    %v2578 = vunpack.c.h.b16 %v1580
    %v2579 = vunpack.c.l.b16 %v1581
    %v2580 = vunpack.c.h.b16 %v1581
    %v2581 = vunpack.c.l.b16 %v1582
    %v2582 = vunpack.c.h.b16 %v1582
    %v2583 = vunpack.c.l.b16 %v1583
    %v2584 = vunpack.c.h.b16 %v1583
    %v2585 = vunpack.c.l.b16 %v1584
    %v2586 = vunpack.c.h.b16 %v1584
    %v2587 = vunpack.c.l.b16 %v1585
    %v2588 = vunpack.c.h.b16 %v1585
    %v2589 = vunpack.c.l.b16 %v1586
    %v2590 = vunpack.c.h.b16 %v1586
    %v2591 = vunpack.c.l.b16 %v1587
    %v2592 = vunpack.c.h.b16 %v1587
    %v2593 = vunpack.c.l.b16 %v1588
    %v2594 = vunpack.c.h.b16 %v1588
    %v2595 = vunpack.c.l.b16 %v1589
    %v2596 = vunpack.c.h.b16 %v1589
    %v2597 = vunpack.c.l.b16 %v1590
    %v2598 = vunpack.c.h.b16 %v1590
    %v2599 = vunpack.c.l.b16 %v1591
    %v2600 = vunpack.c.h.b16 %v1591
    %v2601 = vunpack.c.l.b16 %v1592
    %v2602 = vunpack.c.h.b16 %v1592
    %v2603 = vunpack.c.l.b16 %v1593
    %v2604 = vunpack.c.h.b16 %v1593
    %v2605 = vunpack.c.l.b16 %v1594
    %v2606 = vunpack.c.h.b16 %v1594
    %v2607 = vunpack.c.l.b16 %v1595
    %v2608 = vunpack.c.h.b16 %v1595
    %v2609 = vunpack.c.l.b16 %v1596
    %v2610 = vunpack.c.h.b16 %v1596
    %v2611 = vunpack.c.l.b16 %v1597
    %v2612 = vunpack.c.h.b16 %v1597
    %v2613 = vunpack.c.l.b16 %v1598
    %v2614 = vunpack.c.h.b16 %v1598
    %v2615 = vunpack.c.l.b16 %v1599
    %v2616 = vunpack.c.h.b16 %v1599
    %v2617 = vunpack.c.l.b16 %v1600
    %v2618 = vunpack.c.h.b16 %v1600
    %v2619 = vunpack.c.l.b16 %v1601
    %v2620 = vunpack.c.h.b16 %v1601
    %v2621 = vunpack.c.l.b16 %v1602
    %v2622 = vunpack.c.h.b16 %v1602
    %v2623 = vunpack.c.l.b16 %v1603
    %v2624 = vunpack.c.h.b16 %v1603
    %v2625 = vunpack.c.l.b16 %v1604
    %v2626 = vunpack.c.h.b16 %v1604
    %v2627 = vunpack.c.l.b16 %v1605
    %v2628 = vunpack.c.h.b16 %v1605
    %v2629 = vunpack.c.l.b16 %v1606
    %v2630 = vunpack.c.h.b16 %v1606
    %v2631 = vunpack.c.l.b16 %v1607
    %v2632 = vunpack.c.h.b16 %v1607
    %v2633 = vunpack.c.l.b16 %v1608
    %v2634 = vunpack.c.h.b16 %v1608
    %v2635 = vunpack.c.l.b16 %v1609
    %v2636 = vunpack.c.h.b16 %v1609
    %v2637 = vunpack.c.l.b16 %v1610
    %v2638 = vunpack.c.h.b16 %v1610
    %v2639 = vunpack.c.l.b16 %v1611
    %v2640 = vunpack.c.h.b16 %v1611
    %v2641 = vunpack.c.l.b16 %v1612
    %v2642 = vunpack.c.h.b16 %v1612
    %v2643 = vunpack.c.l.b16 %v1613
    %v2644 = vunpack.c.h.b16 %v1613
    %v2645 = vunpack.c.l.b16 %v1614
    %v2646 = vunpack.c.h.b16 %v1614
    %v2647 = vunpack.c.l.b16 %v1615
    %v2648 = vunpack.c.h.b16 %v1615
    %v2649 = vunpack.c.l.b16 %v1616
    %v2650 = vunpack.c.h.b16 %v1616
    %v2651 = vunpack.c.l.b16 %v1617
    %v2652 = vunpack.c.h.b16 %v1617
    %v2653 = vunpack.c.l.b16 %v1618
    %v2654 = vunpack.c.h.b16 %v1618
    %v2655 = vunpack.c.l.b16 %v1619
    %v2656 = vunpack.c.h.b16 %v1619
    %v2657 = vunpack.c.l.b16 %v1620
    %v2658 = vunpack.c.h.b16 %v1620
    %v2659 = vunpack.c.l.b16 %v1621
    %v2660 = vunpack.c.h.b16 %v1621
    %v2661 = vunpack.c.l.b16 %v1622
    %v2662 = vunpack.c.h.b16 %v1622
    %v2663 = vunpack.c.l.b16 %v1623
    %v2664 = vunpack.c.h.b16 %v1623
    %v2665 = vunpack.c.l.b16 %v1624
    %v2666 = vunpack.c.h.b16 %v1624
    %v2667 = vunpack.c.l.b16 %v1625
    %v2668 = vunpack.c.h.b16 %v1625
    %v2669 = vunpack.c.l.b16 %v1626
    %v2670 = vunpack.c.h.b16 %v1626
    %v2671 = vunpack.c.l.b16 %v1627
    %v2672 = vunpack.c.h.b16 %v1627
    %v2673 = vunpack.c.l.b16 %v1628
    %v2674 = vunpack.c.h.b16 %v1628
    %v2675 = vunpack.c.l.b16 %v1629
    %v2676 = vunpack.c.h.b16 %v1629
    %v2677 = vunpack.c.l.b16 %v1630
    %v2678 = vunpack.c.h.b16 %v1630
    %v2679 = vunpack.c.l.b16 %v1631
    %v2680 = vunpack.c.h.b16 %v1631
    %v2681 = vunpack.c.l.b16 %v1632
    %v2682 = vunpack.c.h.b16 %v1632
    %v2683 = vunpack.c.l.b16 %v1633
    %v2684 = vunpack.c.h.b16 %v1633
    %v2685 = vunpack.c.l.b16 %v1634
    %v2686 = vunpack.c.h.b16 %v1634
    %v2687 = vunpack.c.l.b16 %v1635
    %v2688 = vunpack.c.h.b16 %v1635
    %v2689 = vunpack.c.l.b16 %v1636
    %v2690 = vunpack.c.h.b16 %v1636
    %v2691 = vunpack.c.l.b16 %v1637
    %v2692 = vunpack.c.h.b16 %v1637
    %v2693 = vunpack.c.l.b16 %v1638
    %v2694 = vunpack.c.h.b16 %v1638
    %v2695 = vunpack.c.l.b16 %v1639
    %v2696 = vunpack.c.h.b16 %v1639
    %v2697 = vunpack.c.l.b16 %v1640
    %v2698 = vunpack.c.h.b16 %v1640
    %v2699 = vunpack.c.l.b16 %v1641
    %v2700 = vunpack.c.h.b16 %v1641
    %v2701 = vunpack.c.l.b16 %v1642
    %v2702 = vunpack.c.h.b16 %v1642
    %v2703 = vunpack.c.l.b16 %v1643
    %v2704 = vunpack.c.h.b16 %v1643
    %v2705 = vunpack.c.l.b16 %v1644
    %v2706 = vunpack.c.h.b16 %v1644
    %v2707 = vunpack.c.l.b16 %v1645
    %v2708 = vunpack.c.h.b16 %v1645
    %v2709 = vunpack.c.l.b16 %v1646
    %v2710 = vunpack.c.h.b16 %v1646
    %v2711 = vunpack.c.l.b16 %v1647
    %v2712 = vunpack.c.h.b16 %v1647
    %v2713 = vunpack.c.l.b16 %v1648
    %v2714 = vunpack.c.h.b16 %v1648
    %v2715 = vunpack.c.l.b16 %v1649
    %v2716 = vunpack.c.h.b16 %v1649
    %v2717 = vunpack.c.l.b16 %v1650
    %v2718 = vunpack.c.h.b16 %v1650
    %v2719 = vunpack.c.l.b16 %v1651
    %v2720 = vunpack.c.h.b16 %v1651
    %v2721 = vunpack.c.l.b16 %v1652
    %v2722 = vunpack.c.h.b16 %v1652
    %v2723 = vunpack.c.l.b16 %v1653
    %v2724 = vunpack.c.h.b16 %v1653
    %v2725 = vunpack.c.l.b16 %v1654
    %v2726 = vunpack.c.h.b16 %v1654
    %v2727 = vunpack.c.l.b16 %v1655
    %v2728 = vunpack.c.h.b16 %v1655
    %v2729 = vunpack.c.l.b16 %v1656
    %v2730 = vunpack.c.h.b16 %v1656
    %v2731 = vunpack.c.l.b16 %v1657
    %v2732 = vunpack.c.h.b16 %v1657
    %v2733 = vunpack.c.l.b16 %v1658
    %v2734 = vunpack.c.h.b16 %v1658
    %v2735 = vunpack.c.l.b16 %v1659
    %v2736 = vunpack.c.h.b16 %v1659
    %v2737 = vunpack.c.l.b16 %v1660
    %v2738 = vunpack.c.h.b16 %v1660
    %v2739 = vunpack.c.l.b16 %v1661
    %v2740 = vunpack.c.h.b16 %v1661
    %v2741 = vunpack.c.l.b16 %v1662
    %v2742 = vunpack.c.h.b16 %v1662
    %v2743 = vunpack.c.l.b16 %v1663
    %v2744 = vunpack.c.h.b16 %v1663
    %v2745 = vunpack.c.l.b16 %v1664
    %v2746 = vunpack.c.h.b16 %v1664
    %v2747 = vunpack.c.l.b16 %v1665
    %v2748 = vunpack.c.h.b16 %v1665
    %v2749 = vunpack.c.l.b16 %v1666
    %v2750 = vunpack.c.h.b16 %v1666
    %v2751 = vunpack.c.l.b16 %v1667
    %v2752 = vunpack.c.h.b16 %v1667
    %v2753 = vunpack.c.l.b16 %v1668
    %v2754 = vunpack.c.h.b16 %v1668
    %v2755 = vunpack.c.l.b16 %v1669
    %v2756 = vunpack.c.h.b16 %v1669
    %v2757 = vunpack.c.l.b16 %v1670
    %v2758 = vunpack.c.h.b16 %v1670
    %v2759 = vunpack.c.l.b16 %v1671
    %v2760 = vunpack.c.h.b16 %v1671
    %v2761 = vunpack.c.l.b16 %v1672
    %v2762 = vunpack.c.h.b16 %v1672
    %v2763 = vunpack.c.l.b16 %v1673
    %v2764 = vunpack.c.h.b16 %v1673
    %v2765 = vunpack.c.l.b16 %v1674
    %v2766 = vunpack.c.h.b16 %v1674
    %v2767 = vunpack.c.l.b16 %v1675
    %v2768 = vunpack.c.h.b16 %v1675
    %v2769 = vunpack.c.l.b16 %v1676
    %v2770 = vunpack.c.h.b16 %v1676
    %v2771 = vunpack.c.l.b16 %v1677
    %v2772 = vunpack.c.h.b16 %v1677
    %v2773 = vunpack.c.l.b16 %v1678
    %v2774 = vunpack.c.h.b16 %v1678
    %v2775 = vunpack.c.l.b16 %v1679
    %v2776 = vunpack.c.h.b16 %v1679
    %v2777 = vunpack.c.l.b16 %v1680
    %v2778 = vunpack.c.h.b16 %v1680
    %v2779 = vunpack.c.l.b16 %v1681
    %v2780 = vunpack.c.h.b16 %v1681
    %v2781 = vunpack.c.l.b16 %v1682
    %v2782 = vunpack.c.h.b16 %v1682
    %v2783 = vunpack.c.l.b16 %v1683
    %v2784 = vunpack.c.h.b16 %v1683
    %v2785 = vunpack.c.l.b16 %v1684
    %v2786 = vunpack.c.h.b16 %v1684
    %v2787 = vunpack.c.l.b16 %v1685
    %v2788 = vunpack.c.h.b16 %v1685
    %v2789 = vunpack.c.l.b16 %v1686
    %v2790 = vunpack.c.h.b16 %v1686
    %v2791 = vunpack.c.l.b16 %v1687
    %v2792 = vunpack.c.h.b16 %v1687
    %v2793 = vunpack.c.l.b16 %v1688
    %v2794 = vunpack.c.h.b16 %v1688
    %v2795 = vunpack.c.l.b16 %v1689
    %v2796 = vunpack.c.h.b16 %v1689
    %v2797 = vunpack.c.l.b16 %v1690
    %v2798 = vunpack.c.h.b16 %v1690
    %v2799 = vunpack.c.l.b16 %v1691
    %v2800 = vunpack.c.h.b16 %v1691
    %v2801 = vunpack.c.l.b16 %v1692
    %v2802 = vunpack.c.h.b16 %v1692
    %v2803 = vunpack.c.l.b16 %v1693
    %v2804 = vunpack.c.h.b16 %v1693
    %v2805 = vunpack.c.l.b16 %v1694
    %v2806 = vunpack.c.h.b16 %v1694
    %v2807 = vunpack.c.l.b16 %v1695
    %v2808 = vunpack.c.h.b16 %v1695
    %v2809 = vunpack.c.l.b16 %v1696
    %v2810 = vunpack.c.h.b16 %v1696
    %v2811 = vunpack.c.l.b16 %v1697
    %v2812 = vunpack.c.h.b16 %v1697
    %v2813 = vunpack.c.l.b16 %v1698
    %v2814 = vunpack.c.h.b16 %v1698
    %v2815 = vunpack.c.l.b16 %v1699
    %v2816 = vunpack.c.h.b16 %v1699
    %v2817 = vunpack.c.l.b16 %v1700
    %v2818 = vunpack.c.h.b16 %v1700
    %v2819 = vunpack.c.l.b16 %v1701
    %v2820 = vunpack.c.h.b16 %v1701
    %v2821 = vunpack.c.l.b16 %v1702
    %v2822 = vunpack.c.h.b16 %v1702
    %v2823 = vunpack.c.l.b16 %v1703
    %v2824 = vunpack.c.h.b16 %v1703
    %v2825 = vunpack.c.l.b16 %v1704
    %v2826 = vunpack.c.h.b16 %v1704
    %v2827 = vunpack.c.l.b16 %v1705
    %v2828 = vunpack.c.h.b16 %v1705
    %v2829 = vunpack.c.l.b16 %v1706
    %v2830 = vunpack.c.h.b16 %v1706
    %v2831 = vunpack.c.l.b16 %v1707
    %v2832 = vunpack.c.h.b16 %v1707
    %v2833 = vunpack.c.l.b16 %v1708
    %v2834 = vunpack.c.h.b16 %v1708
    %v2835 = vunpack.c.l.b16 %v1709
    %v2836 = vunpack.c.h.b16 %v1709
    %v2837 = vunpack.c.l.b16 %v1710
    %v2838 = vunpack.c.h.b16 %v1710
    %v2839 = vunpack.c.l.b16 %v1711
    %v2840 = vunpack.c.h.b16 %v1711
    %v2841 = vunpack.c.l.b16 %v1712
    %v2842 = vunpack.c.h.b16 %v1712
    %v2843 = vunpack.c.l.b16 %v1713
    %v2844 = vunpack.c.h.b16 %v1713
    %v2845 = vunpack.c.l.b16 %v1714
    %v2846 = vunpack.c.h.b16 %v1714
    %v2847 = vunpack.c.l.b16 %v1715
    %v2848 = vunpack.c.h.b16 %v1715
    %v2849 = vunpack.c.l.b16 %v1716
    %v2850 = vunpack.c.h.b16 %v1716
    %v2851 = vunpack.c.l.b16 %v1717
    %v2852 = vunpack.c.h.b16 %v1717
    %v2853 = vunpack.c.l.b16 %v1718
    %v2854 = vunpack.c.h.b16 %v1718
    %v2855 = vunpack.c.l.b16 %v1719
    %v2856 = vunpack.c.h.b16 %v1719
    %v2857 = vunpack.c.l.b16 %v1720
    %v2858 = vunpack.c.h.b16 %v1720
    %v2859 = vunpack.c.l.b16 %v1721
    %v2860 = vunpack.c.h.b16 %v1721
    %v2861 = vunpack.c.l.b16 %v1722
    %v2862 = vunpack.c.h.b16 %v1722
    %v2863 = vunpack.c.l.b16 %v1723
    %v2864 = vunpack.c.h.b16 %v1723
    %v2865 = vunpack.c.l.b16 %v1724
    %v2866 = vunpack.c.h.b16 %v1724
    %v2867 = vunpack.c.l.b16 %v1725
    %v2868 = vunpack.c.h.b16 %v1725
    %v2869 = vunpack.c.l.b16 %v1726
    %v2870 = vunpack.c.h.b16 %v1726
    %v2871 = vunpack.c.l.b16 %v1727
    %v2872 = vunpack.c.h.b16 %v1727
    %v2873 = vunpack.c.l.b16 %v1728
    %v2874 = vunpack.c.h.b16 %v1728
    %v2875 = vunpack.c.l.b16 %v1729
    %v2876 = vunpack.c.h.b16 %v1729
    %v2877 = vunpack.c.l.b16 %v1730
    %v2878 = vunpack.c.h.b16 %v1730
    %v2879 = vunpack.c.l.b16 %v1731
    %v2880 = vunpack.c.h.b16 %v1731
    %v2881 = vunpack.c.l.b16 %v1732
    %v2882 = vunpack.c.h.b16 %v1732
    %v2883 = vunpack.c.l.b16 %v1733
    %v2884 = vunpack.c.h.b16 %v1733
    %v2885 = vunpack.c.l.b16 %v1734
    %v2886 = vunpack.c.h.b16 %v1734
    %v2887 = vpack.c.b16 %v2131, %v2119
    %v2888 = vpack.c.b16 %v2132, %v2120
    %v2889 = vpack.c.b16 %v2133, %v2121
    %v2890 = vpack.c.b16 %v2134, %v2122
    %v2891 = vpack.c.b16 %v2135, %v2123
    %v2892 = vpack.c.b16 %v2136, %v2124
    %v2893 = vpack.c.b16 %v2137, %v2125
    %v2894 = vpack.c.b16 %v2138, %v2126
    %v2895 = vpack.c.b16 %v2139, %v2127
    %v2896 = vpack.c.b16 %v2140, %v2128
    %v2897 = vpack.c.b16 %v2141, %v2129
    %v2898 = vpack.c.b16 %v2142, %v2130
    %v2899 = vpack.c.b16 %v2155, %v2143
    %v2900 = vpack.c.b16 %v2156, %v2144
    %v2901 = vpack.c.b16 %v2157, %v2145
    %v2902 = vpack.c.b16 %v2158, %v2146
    %v2903 = vpack.c.b16 %v2159, %v2147
    %v2904 = vpack.c.b16 %v2160, %v2148
    %v2905 = vpack.c.b16 %v2161, %v2149
    %v2906 = vpack.c.b16 %v2162, %v2150
    %v2907 = vpack.c.b16 %v2163, %v2151
    %v2908 = vpack.c.b16 %v2164, %v2152
    %v2909 = vpack.c.b16 %v2165, %v2153
    %v2910 = vpack.c.b16 %v2166, %v2154
    %v2911 = vpack.c.b16 %v2179, %v2167
    %v2912 = vpack.c.b16 %v2180, %v2168
    %v2913 = vpack.c.b16 %v2181, %v2169
    %v2914 = vpack.c.b16 %v2182, %v2170
    %v2915 = vpack.c.b16 %v2183, %v2171
    %v2916 = vpack.c.b16 %v2184, %v2172
    %v2917 = vpack.c.b16 %v2185, %v2173
    %v2918 = vpack.c.b16 %v2186, %v2174
    %v2919 = vpack.c.b16 %v2187, %v2175
    %v2920 = vpack.c.b16 %v2188, %v2176
    %v2921 = vpack.c.b16 %v2189, %v2177
    %v2922 = vpack.c.b16 %v2190, %v2178
    %v2923 = vpack.c.b16 %v2203, %v2191
    %v2924 = vpack.c.b16 %v2204, %v2192
    %v2925 = vpack.c.b16 %v2205, %v2193
    %v2926 = vpack.c.b16 %v2206, %v2194
    %v2927 = vpack.c.b16 %v2207, %v2195
    %v2928 = vpack.c.b16 %v2208, %v2196
    %v2929 = vpack.c.b16 %v2209, %v2197
    %v2930 = vpack.c.b16 %v2210, %v2198
    %v2931 = vpack.c.b16 %v2211, %v2199
    %v2932 = vpack.c.b16 %v2212, %v2200
    %v2933 = vpack.c.b16 %v2213, %v2201
    %v2934 = vpack.c.b16 %v2214, %v2202
    %v2935 = vpack.c.b16 %v2227, %v2215
    %v2936 = vpack.c.b16 %v2228, %v2216
    %v2937 = vpack.c.b16 %v2229, %v2217
    %v2938 = vpack.c.b16 %v2230, %v2218
    %v2939 = vpack.c.b16 %v2231, %v2219
    %v2940 = vpack.c.b16 %v2232, %v2220
    %v2941 = vpack.c.b16 %v2233, %v2221
    %v2942 = vpack.c.b16 %v2234, %v2222
    %v2943 = vpack.c.b16 %v2235, %v2223
    %v2944 = vpack.c.b16 %v2236, %v2224
    %v2945 = vpack.c.b16 %v2237, %v2225
    %v2946 = vpack.c.b16 %v2238, %v2226
    %v2947 = vpack.c.b16 %v2251, %v2239
    %v2948 = vpack.c.b16 %v2252, %v2240
    %v2949 = vpack.c.b16 %v2253, %v2241
    %v2950 = vpack.c.b16 %v2254, %v2242
    %v2951 = vpack.c.b16 %v2255, %v2243
    %v2952 = vpack.c.b16 %v2256, %v2244
    %v2953 = vpack.c.b16 %v2257, %v2245
    %v2954 = vpack.c.b16 %v2258, %v2246
    %v2955 = vpack.c.b16 %v2259, %v2247
    %v2956 = vpack.c.b16 %v2260, %v2248
    %v2957 = vpack.c.b16 %v2261, %v2249
    %v2958 = vpack.c.b16 %v2262, %v2250
    %v2959 = vpack.c.b16 %v2275, %v2263
    %v2960 = vpack.c.b16 %v2276, %v2264
    %v2961 = vpack.c.b16 %v2277, %v2265
    %v2962 = vpack.c.b16 %v2278, %v2266
    %v2963 = vpack.c.b16 %v2279, %v2267
    %v2964 = vpack.c.b16 %v2280, %v2268
    %v2965 = vpack.c.b16 %v2281, %v2269
    %v2966 = vpack.c.b16 %v2282, %v2270
    %v2967 = vpack.c.b16 %v2283, %v2271
    %v2968 = vpack.c.b16 %v2284, %v2272
    %v2969 = vpack.c.b16 %v2285, %v2273
    %v2970 = vpack.c.b16 %v2286, %v2274
    %v2971 = vpack.c.b16 %v2299, %v2287
    %v2972 = vpack.c.b16 %v2300, %v2288
    %v2973 = vpack.c.b16 %v2301, %v2289
    %v2974 = vpack.c.b16 %v2302, %v2290
    %v2975 = vpack.c.b16 %v2303, %v2291
    %v2976 = vpack.c.b16 %v2304, %v2292
    %v2977 = vpack.c.b16 %v2305, %v2293
    %v2978 = vpack.c.b16 %v2306, %v2294
    %v2979 = vpack.c.b16 %v2307, %v2295
    %v2980 = vpack.c.b16 %v2308, %v2296
    %v2981 = vpack.c.b16 %v2309, %v2297
    %v2982 = vpack.c.b16 %v2310, %v2298
    %v2983 = vpack.c.b16 %v2323, %v2311
    %v2984 = vpack.c.b16 %v2324, %v2312
    %v2985 = vpack.c.b16 %v2325, %v2313
    %v2986 = vpack.c.b16 %v2326, %v2314
    %v2987 = vpack.c.b16 %v2327, %v2315
    %v2988 = vpack.c.b16 %v2328, %v2316
    %v2989 = vpack.c.b16 %v2329, %v2317
    %v2990 = vpack.c.b16 %v2330, %v2318
    %v2991 = vpack.c.b16 %v2331, %v2319
    %v2992 = vpack.c.b16 %v2332, %v2320
    %v2993 = vpack.c.b16 %v2333, %v2321
    %v2994 = vpack.c.b16 %v2334, %v2322
    %v2995 = vpack.c.b16 %v2347, %v2335
    %v2996 = vpack.c.b16 %v2348, %v2336
    %v2997 = vpack.c.b16 %v2349, %v2337
    %v2998 = vpack.c.b16 %v2350, %v2338
    %v2999 = vpack.c.b16 %v2351, %v2339
    %v3000 = vpack.c.b16 %v2352, %v2340
    %v3001 = vpack.c.b16 %v2353, %v2341
    %v3002 = vpack.c.b16 %v2354, %v2342
    %v3003 = vpack.c.b16 %v2355, %v2343
    %v3004 = vpack.c.b16 %v2356, %v2344
    %v3005 = vpack.c.b16 %v2357, %v2345
    %v3006 = vpack.c.b16 %v2358, %v2346
    %v3007 = vpack.c.b16 %v2371, %v2359
    %v3008 = vpack.c.b16 %v2372, %v2360
    %v3009 = vpack.c.b16 %v2373, %v2361
    %v3010 = vpack.c.b16 %v2374, %v2362
    %v3011 = vpack.c.b16 %v2375, %v2363
    %v3012 = vpack.c.b16 %v2376, %v2364
    %v3013 = vpack.c.b16 %v2377, %v2365
    %v3014 = vpack.c.b16 %v2378, %v2366
    %v3015 = vpack.c.b16 %v2379, %v2367
    %v3016 = vpack.c.b16 %v2380, %v2368
    %v3017 = vpack.c.b16 %v2381, %v2369
    %v3018 = vpack.c.b16 %v2382, %v2370
    %v3019 = vpack.c.b16 %v2395, %v2383
    %v3020 = vpack.c.b16 %v2396, %v2384
    %v3021 = vpack.c.b16 %v2397, %v2385
    %v3022 = vpack.c.b16 %v2398, %v2386
    %v3023 = vpack.c.b16 %v2399, %v2387
    %v3024 = vpack.c.b16 %v2400, %v2388
    %v3025 = vpack.c.b16 %v2401, %v2389
    %v3026 = vpack.c.b16 %v2402, %v2390
    %v3027 = vpack.c.b16 %v2403, %v2391
    %v3028 = vpack.c.b16 %v2404, %v2392
    %v3029 = vpack.c.b16 %v2405, %v2393
    %v3030 = vpack.c.b16 %v2406, %v2394
    %v3031 = vpack.c.b16 %v2419, %v2407
    %v3032 = vpack.c.b16 %v2420, %v2408
    %v3033 = vpack.c.b16 %v2421, %v2409
    %v3034 = vpack.c.b16 %v2422, %v2410
    %v3035 = vpack.c.b16 %v2423, %v2411
    %v3036 = vpack.c.b16 %v2424, %v2412
    %v3037 = vpack.c.b16 %v2425, %v2413
    %v3038 = vpack.c.b16 %v2426, %v2414
    %v3039 = vpack.c.b16 %v2427, %v2415
    %v3040 = vpack.c.b16 %v2428, %v2416
    %v3041 = vpack.c.b16 %v2429, %v2417
    %v3042 = vpack.c.b16 %v2430, %v2418
    %v3043 = vpack.c.b16 %v2443, %v2431
    %v3044 = vpack.c.b16 %v2444, %v2432
    %v3045 = vpack.c.b16 %v2445, %v2433
    %v3046 = vpack.c.b16 %v2446, %v2434
    %v3047 = vpack.c.b16 %v2447, %v2435
    %v3048 = vpack.c.b16 %v2448, %v2436
    %v3049 = vpack.c.b16 %v2449, %v2437
    %v3050 = vpack.c.b16 %v2450, %v2438
    %v3051 = vpack.c.b16 %v2451, %v2439
    %v3052 = vpack.c.b16 %v2452, %v2440
    %v3053 = vpack.c.b16 %v2453, %v2441
    %v3054 = vpack.c.b16 %v2454, %v2442
    %v3055 = vpack.c.b16 %v2467, %v2455
    %v3056 = vpack.c.b16 %v2468, %v2456
    %v3057 = vpack.c.b16 %v2469, %v2457
    %v3058 = vpack.c.b16 %v2470, %v2458
    %v3059 = vpack.c.b16 %v2471, %v2459
    %v3060 = vpack.c.b16 %v2472, %v2460
    %v3061 = vpack.c.b16 %v2473, %v2461
    %v3062 = vpack.c.b16 %v2474, %v2462
    %v3063 = vpack.c.b16 %v2475, %v2463
    %v3064 = vpack.c.b16 %v2476, %v2464
    %v3065 = vpack.c.b16 %v2477, %v2465
    %v3066 = vpack.c.b16 %v2478, %v2466
    %v3067 = vpack.c.b16 %v2491, %v2479
    %v3068 = vpack.c.b16 %v2492, %v2480
    %v3069 = vpack.c.b16 %v2493, %v2481
    %v3070 = vpack.c.b16 %v2494, %v2482
    %v3071 = vpack.c.b16 %v2495, %v2483
    %v3072 = vpack.c.b16 %v2496, %v2484
    %v3073 = vpack.c.b16 %v2497, %v2485
    %v3074 = vpack.c.b16 %v2498, %v2486
    %v3075 = vpack.c.b16 %v2499, %v2487
    %v3076 = vpack.c.b16 %v2500, %v2488
    %v3077 = vpack.c.b16 %v2501, %v2489
    %v3078 = vpack.c.b16 %v2502, %v2490
    %v3079 = vpack.c.b16 %v2515, %v2503
    %v3080 = vpack.c.b16 %v2516, %v2504
    %v3081 = vpack.c.b16 %v2517, %v2505
    %v3082 = vpack.c.b16 %v2518, %v2506
    %v3083 = vpack.c.b16 %v2519, %v2507
    %v3084 = vpack.c.b16 %v2520, %v2508
    %v3085 = vpack.c.b16 %v2521, %v2509
    %v3086 = vpack.c.b16 %v2522, %v2510
    %v3087 = vpack.c.b16 %v2523, %v2511
    %v3088 = vpack.c.b16 %v2524, %v2512
    %v3089 = vpack.c.b16 %v2525, %v2513
    %v3090 = vpack.c.b16 %v2526, %v2514
    %v3091 = vpack.c.b16 %v2539, %v2527
    %v3092 = vpack.c.b16 %v2540, %v2528
    %v3093 = vpack.c.b16 %v2541, %v2529
    %v3094 = vpack.c.b16 %v2542, %v2530
    %v3095 = vpack.c.b16 %v2543, %v2531
    %v3096 = vpack.c.b16 %v2544, %v2532
    %v3097 = vpack.c.b16 %v2545, %v2533
    %v3098 = vpack.c.b16 %v2546, %v2534
    %v3099 = vpack.c.b16 %v2547, %v2535
    %v3100 = vpack.c.b16 %v2548, %v2536
    %v3101 = vpack.c.b16 %v2549, %v2537
    %v3102 = vpack.c.b16 %v2550, %v2538
    %v3103 = vpack.c.b16 %v2563, %v2551
    %v3104 = vpack.c.b16 %v2564, %v2552
    %v3105 = vpack.c.b16 %v2565, %v2553
    %v3106 = vpack.c.b16 %v2566, %v2554
    %v3107 = vpack.c.b16 %v2567, %v2555
    %v3108 = vpack.c.b16 %v2568, %v2556
    %v3109 = vpack.c.b16 %v2569, %v2557
    %v3110 = vpack.c.b16 %v2570, %v2558
    %v3111 = vpack.c.b16 %v2571, %v2559
    %v3112 = vpack.c.b16 %v2572, %v2560
    %v3113 = vpack.c.b16 %v2573, %v2561
    %v3114 = vpack.c.b16 %v2574, %v2562
    %v3115 = vpack.c.b16 %v2587, %v2575
    %v3116 = vpack.c.b16 %v2588, %v2576
    %v3117 = vpack.c.b16 %v2589, %v2577
    %v3118 = vpack.c.b16 %v2590, %v2578
    %v3119 = vpack.c.b16 %v2591, %v2579
    %v3120 = vpack.c.b16 %v2592, %v2580
    %v3121 = vpack.c.b16 %v2593, %v2581
    %v3122 = vpack.c.b16 %v2594, %v2582
    %v3123 = vpack.c.b16 %v2595, %v2583
    %v3124 = vpack.c.b16 %v2596, %v2584
    %v3125 = vpack.c.b16 %v2597, %v2585
    %v3126 = vpack.c.b16 %v2598, %v2586
    %v3127 = vpack.c.b16 %v2611, %v2599
    %v3128 = vpack.c.b16 %v2612, %v2600
    %v3129 = vpack.c.b16 %v2613, %v2601
    %v3130 = vpack.c.b16 %v2614, %v2602
    %v3131 = vpack.c.b16 %v2615, %v2603
    %v3132 = vpack.c.b16 %v2616, %v2604
    %v3133 = vpack.c.b16 %v2617, %v2605
    %v3134 = vpack.c.b16 %v2618, %v2606
    %v3135 = vpack.c.b16 %v2619, %v2607
    %v3136 = vpack.c.b16 %v2620, %v2608
    %v3137 = vpack.c.b16 %v2621, %v2609
    %v3138 = vpack.c.b16 %v2622, %v2610
    %v3139 = vpack.c.b16 %v2635, %v2623
    %v3140 = vpack.c.b16 %v2636, %v2624
    %v3141 = vpack.c.b16 %v2637, %v2625
    %v3142 = vpack.c.b16 %v2638, %v2626
    %v3143 = vpack.c.b16 %v2639, %v2627
    %v3144 = vpack.c.b16 %v2640, %v2628
    %v3145 = vpack.c.b16 %v2641, %v2629
    %v3146 = vpack.c.b16 %v2642, %v2630
    %v3147 = vpack.c.b16 %v2643, %v2631
    %v3148 = vpack.c.b16 %v2644, %v2632
    %v3149 = vpack.c.b16 %v2645, %v2633
    %v3150 = vpack.c.b16 %v2646, %v2634
    %v3151 = vpack.c.b16 %v2659, %v2647
    %v3152 = vpack.c.b16 %v2660, %v2648
    %v3153 = vpack.c.b16 %v2661, %v2649
    %v3154 = vpack.c.b16 %v2662, %v2650
    %v3155 = vpack.c.b16 %v2663, %v2651
    %v3156 = vpack.c.b16 %v2664, %v2652
    %v3157 = vpack.c.b16 %v2665, %v2653
    %v3158 = vpack.c.b16 %v2666, %v2654
    %v3159 = vpack.c.b16 %v2667, %v2655
    %v3160 = vpack.c.b16 %v2668, %v2656
    %v3161 = vpack.c.b16 %v2669, %v2657
    %v3162 = vpack.c.b16 %v2670, %v2658
    %v3163 = vpack.c.b16 %v2683, %v2671
    %v3164 = vpack.c.b16 %v2684, %v2672
    %v3165 = vpack.c.b16 %v2685, %v2673
    %v3166 = vpack.c.b16 %v2686, %v2674
    %v3167 = vpack.c.b16 %v2687, %v2675
    %v3168 = vpack.c.b16 %v2688, %v2676
    %v3169 = vpack.c.b16 %v2689, %v2677
    %v3170 = vpack.c.b16 %v2690, %v2678
    %v3171 = vpack.c.b16 %v2691, %v2679
    %v3172 = vpack.c.b16 %v2692, %v2680
    %v3173 = vpack.c.b16 %v2693, %v2681
    %v3174 = vpack.c.b16 %v2694, %v2682
    %v3175 = vpack.c.b16 %v2707, %v2695
    %v3176 = vpack.c.b16 %v2708, %v2696
    %v3177 = vpack.c.b16 %v2709, %v2697
    %v3178 = vpack.c.b16 %v2710, %v2698
    %v3179 = vpack.c.b16 %v2711, %v2699
    %v3180 = vpack.c.b16 %v2712, %v2700
    %v3181 = vpack.c.b16 %v2713, %v2701
    %v3182 = vpack.c.b16 %v2714, %v2702
    %v3183 = vpack.c.b16 %v2715, %v2703
    %v3184 = vpack.c.b16 %v2716, %v2704
    %v3185 = vpack.c.b16 %v2717, %v2705
    %v3186 = vpack.c.b16 %v2718, %v2706
    %v3187 = vpack.c.b16 %v2731, %v2719
    %v3188 = vpack.c.b16 %v2732, %v2720
    %v3189 = vpack.c.b16 %v2733, %v2721
    %v3190 = vpack.c.b16 %v2734, %v2722
    %v3191 = vpack.c.b16 %v2735, %v2723
    %v3192 = vpack.c.b16 %v2736, %v2724
    %v3193 = vpack.c.b16 %v2737, %v2725
    %v3194 = vpack.c.b16 %v2738, %v2726
    %v3195 = vpack.c.b16 %v2739, %v2727
    %v3196 = vpack.c.b16 %v2740, %v2728
    %v3197 = vpack.c.b16 %v2741, %v2729
    %v3198 = vpack.c.b16 %v2742, %v2730
    %v3199 = vpack.c.b16 %v2755, %v2743
    %v3200 = vpack.c.b16 %v2756, %v2744
    %v3201 = vpack.c.b16 %v2757, %v2745
    %v3202 = vpack.c.b16 %v2758, %v2746
    %v3203 = vpack.c.b16 %v2759, %v2747
    %v3204 = vpack.c.b16 %v2760, %v2748
    %v3205 = vpack.c.b16 %v2761, %v2749
    %v3206 = vpack.c.b16 %v2762, %v2750
    %v3207 = vpack.c.b16 %v2763, %v2751
    %v3208 = vpack.c.b16 %v2764, %v2752
    %v3209 = vpack.c.b16 %v2765, %v2753
    %v3210 = vpack.c.b16 %v2766, %v2754
    %v3211 = vpack.c.b16 %v2779, %v2767
    %v3212 = vpack.c.b16 %v2780, %v2768
    %v3213 = vpack.c.b16 %v2781, %v2769
    %v3214 = vpack.c.b16 %v2782, %v2770
    %v3215 = vpack.c.b16 %v2783, %v2771
    %v3216 = vpack.c.b16 %v2784, %v2772
    %v3217 = vpack.c.b16 %v2785, %v2773
    %v3218 = vpack.c.b16 %v2786, %v2774
    %v3219 = vpack.c.b16 %v2787, %v2775
    %v3220 = vpack.c.b16 %v2788, %v2776
    %v3221 = vpack.c.b16 %v2789, %v2777
    %v3222 = vpack.c.b16 %v2790, %v2778
    %v3223 = vpack.c.b16 %v2803, %v2791
    %v3224 = vpack.c.b16 %v2804, %v2792
    %v3225 = vpack.c.b16 %v2805, %v2793
    %v3226 = vpack.c.b16 %v2806, %v2794
    %v3227 = vpack.c.b16 %v2807, %v2795
    %v3228 = vpack.c.b16 %v2808, %v2796
    %v3229 = vpack.c.b16 %v2809, %v2797
    %v3230 = vpack.c.b16 %v2810, %v2798
    %v3231 = vpack.c.b16 %v2811, %v2799
    %v3232 = vpack.c.b16 %v2812, %v2800
    %v3233 = vpack.c.b16 %v2813, %v2801
    %v3234 = vpack.c.b16 %v2814, %v2802
    %v3235 = vpack.c.b16 %v2827, %v2815
    %v3236 = vpack.c.b16 %v2828, %v2816
    %v3237 = vpack.c.b16 %v2829, %v2817
    %v3238 = vpack.c.b16 %v2830, %v2818
    %v3239 = vpack.c.b16 %v2831, %v2819
    %v3240 = vpack.c.b16 %v2832, %v2820
    %v3241 = vpack.c.b16 %v2833, %v2821
    %v3242 = vpack.c.b16 %v2834, %v2822
    %v3243 = vpack.c.b16 %v2835, %v2823
    %v3244 = vpack.c.b16 %v2836, %v2824
    %v3245 = vpack.c.b16 %v2837, %v2825
    %v3246 = vpack.c.b16 %v2838, %v2826
    %v3247 = vpack.c.b16 %v2851, %v2839
    %v3248 = vpack.c.b16 %v2852, %v2840
    %v3249 = vpack.c.b16 %v2853, %v2841
    %v3250 = vpack.c.b16 %v2854, %v2842
    %v3251 = vpack.c.b16 %v2855, %v2843
    %v3252 = vpack.c.b16 %v2856, %v2844
    %v3253 = vpack.c.b16 %v2857, %v2845
    %v3254 = vpack.c.b16 %v2858, %v2846
    %v3255 = vpack.c.b16 %v2859, %v2847
    %v3256 = vpack.c.b16 %v2860, %v2848
    %v3257 = vpack.c.b16 %v2861, %v2849
    %v3258 = vpack.c.b16 %v2862, %v2850
    %v3259 = vpack.c.b16 %v2875, %v2863
    %v3260 = vpack.c.b16 %v2876, %v2864
    %v3261 = vpack.c.b16 %v2877, %v2865
    %v3262 = vpack.c.b16 %v2878, %v2866
    %v3263 = vpack.c.b16 %v2879, %v2867
    %v3264 = vpack.c.b16 %v2880, %v2868
    %v3265 = vpack.c.b16 %v2881, %v2869
    %v3266 = vpack.c.b16 %v2882, %v2870
    %v3267 = vpack.c.b16 %v2883, %v2871
    %v3268 = vpack.c.b16 %v2884, %v2872
    %v3269 = vpack.c.b16 %v2885, %v2873
    %v3270 = vpack.c.b16 %v2886, %v2874
    %3655 = vmatprep.subr.bf16.mxu0 %v2972
    %3656 = vmatpush1.bf16.msra.mxu0 %v2971
    %3657 = vmatprep.subr.bf16.mxu0 %v2960
    %3658 = vmatpush1.bf16.msra.mxu0 %v2959
    %3659 = vmatprep.subr.bf16.mxu0 %v2948
    %3660 = vmatpush1.bf16.msra.mxu0 %v2947
    %3661 = vmatprep.subr.bf16.mxu0 %v2936
    %3662 = vmatpush1.bf16.msra.mxu0 %v2935
    %3663 = vmatprep.subr.bf16.mxu0 %v2924
    %3664 = vmatpush1.bf16.msra.mxu0 %v2923
    %3665 = vmatprep.subr.bf16.mxu0 %v2912
    %3666 = vmatpush1.bf16.msra.mxu0 %v2911
    %3667 = vmatprep.subr.bf16.mxu0 %v2900
    %3668 = vmatpush1.bf16.msra.mxu0 %v2899
    %3669 = vmatprep.subr.bf16.mxu0 %v2888
    %3670 = vmatpush1.bf16.msra.mxu0 %v2887
    %3671 = vmatprep.subr.bf16.mxu0 %v3068
    %3672 = vmatpush2.bf16.msra.mxu0 %v3067
    %3673 = vmatprep.subr.bf16.mxu0 %v3056
    %3674 = vmatpush2.bf16.msra.mxu0 %v3055
    %3675 = vmatprep.subr.bf16.mxu0 %v3044
    %3676 = vmatpush2.bf16.msra.mxu0 %v3043
    %3677 = vmatprep.subr.bf16.mxu0 %v3032
    %3678 = vmatpush2.bf16.msra.mxu0 %v3031
    %3679 = vmatprep.subr.bf16.mxu0 %v3020
    %3680 = vmatpush2.bf16.msra.mxu0 %v3019
    %3681 = vmatprep.subr.bf16.mxu0 %v3008
    %3682 = vmatpush2.bf16.msra.mxu0 %v3007
    %3683 = vmatprep.subr.bf16.mxu0 %v2996
    %3684 = vmatpush2.bf16.msra.mxu0 %v2995
    %3685 = vmatprep.subr.bf16.mxu0 %v2984
    %3686 = vmatpush2.bf16.msra.mxu0 %v2983
    %3687 = vmatprep.mubr.bf16.mxu0 %v1344
    %3688 = vmatmul.mubr.bf16.gmra.mxu0 %v1343
    %v3689 = vpop.f32.mrf.mxu0
    %v3690 = vadd.f32 0.0, %v3689
    %v3691 = vpop.f32.mrf.mxu0
    %v3692 = vadd.f32 0.0, %v3691
    %v3693 = vpop.f32.mrf.mxu0
    %v3694 = vadd.f32 0.0, %v3693
    %v3695 = vpop.f32.mrf.mxu0
    %v3696 = vadd.f32 0.0, %v3695
    %3697 = vmatprep.mubr.bf16.mxu0 %v1348
    %3698 = vmatmul.mubr.bf16.gmra.mxu0 %v1347
    %v3699 = vpop.f32.mrf.mxu0
    %v3700 = vadd.f32 0.0, %v3699
    %v3701 = vpop.f32.mrf.mxu0
    %v3702 = vadd.f32 0.0, %v3701
    %v3703 = vpop.f32.mrf.mxu0
    %v3704 = vadd.f32 0.0, %v3703
    %v3705 = vpop.f32.mrf.mxu0
    %v3706 = vadd.f32 0.0, %v3705
    %3707 = vdwg.mxu0
    %3708 = vmatprep.subr.bf16.mxu0 %v3164
    %3709 = vmatpush1.bf16.msra.mxu0 %v3163
    %3710 = vmatprep.subr.bf16.mxu0 %v3152
    %3711 = vmatpush1.bf16.msra.mxu0 %v3151
    %3712 = vmatprep.subr.bf16.mxu0 %v3140
    %3713 = vmatpush1.bf16.msra.mxu0 %v3139
    %3714 = vmatprep.subr.bf16.mxu0 %v3128
    %3715 = vmatpush1.bf16.msra.mxu0 %v3127
    %3716 = vmatprep.subr.bf16.mxu0 %v3116
    %3717 = vmatpush1.bf16.msra.mxu0 %v3115
    %3718 = vmatprep.subr.bf16.mxu0 %v3104
    %3719 = vmatpush1.bf16.msra.mxu0 %v3103
    %3720 = vmatprep.subr.bf16.mxu0 %v3092
    %3721 = vmatpush1.bf16.msra.mxu0 %v3091
    %3722 = vmatprep.subr.bf16.mxu0 %v3080
    %3723 = vmatpush1.bf16.msra.mxu0 %v3079
    %3724 = vmatprep.subr.bf16.mxu0 %v3260
    %3725 = vmatpush2.bf16.msra.mxu0 %v3259
    %3726 = vmatprep.subr.bf16.mxu0 %v3248
    %3727 = vmatpush2.bf16.msra.mxu0 %v3247
    %3728 = vmatprep.subr.bf16.mxu0 %v3236
    %3729 = vmatpush2.bf16.msra.mxu0 %v3235
    %3730 = vmatprep.subr.bf16.mxu0 %v3224
    %3731 = vmatpush2.bf16.msra.mxu0 %v3223
    %3732 = vmatprep.subr.bf16.mxu0 %v3212
    %3733 = vmatpush2.bf16.msra.mxu0 %v3211
    %3734 = vmatprep.subr.bf16.mxu0 %v3200
    %3735 = vmatpush2.bf16.msra.mxu0 %v3199
    %3736 = vmatprep.subr.bf16.mxu0 %v3188
    %3737 = vmatpush2.bf16.msra.mxu0 %v3187
    %3738 = vmatprep.subr.bf16.mxu0 %v3176
    %3739 = vmatpush2.bf16.msra.mxu0 %v3175
    %3740 = vmatprep.mubr.bf16.mxu0 %v1346
    %3741 = vmatmul.mubr.bf16.gmra.mxu0 %v1345
    %v3742 = vpop.f32.mrf.mxu0
    %v3743 = vadd.f32 %v3690, %v3742
    %v3744 = vpop.f32.mrf.mxu0
    %v3745 = vadd.f32 %v3692, %v3744
    %v3746 = vpop.f32.mrf.mxu0
    %v3747 = vadd.f32 %v3694, %v3746
    %v3748 = vpop.f32.mrf.mxu0
    %v3749 = vadd.f32 %v3696, %v3748
    %3750 = vmatprep.mubr.bf16.mxu0 %v1350
    %3751 = vmatmul.mubr.bf16.gmra.mxu0 %v1349
    %v3752 = vpop.f32.mrf.mxu0
    %v3753 = vadd.f32 %v3700, %v3752
    %v3754 = vpop.f32.mrf.mxu0
    %v3755 = vadd.f32 %v3702, %v3754
    %v3756 = vpop.f32.mrf.mxu0
    %v3757 = vadd.f32 %v3704, %v3756
    %v3758 = vpop.f32.mrf.mxu0
    %v3759 = vadd.f32 %v3706, %v3758
    %3760 = vdwg.mxu0
    %3761 = vmatprep.subr.bf16.mxu0 %v2974
    %3762 = vmatpush1.bf16.msra.mxu0 %v2973
    %3763 = vmatprep.subr.bf16.mxu0 %v2962
    %3764 = vmatpush1.bf16.msra.mxu0 %v2961
    %3765 = vmatprep.subr.bf16.mxu0 %v2950
    %3766 = vmatpush1.bf16.msra.mxu0 %v2949
    %3767 = vmatprep.subr.bf16.mxu0 %v2938
    %3768 = vmatpush1.bf16.msra.mxu0 %v2937
    %3769 = vmatprep.subr.bf16.mxu0 %v2926
    %3770 = vmatpush1.bf16.msra.mxu0 %v2925
    %3771 = vmatprep.subr.bf16.mxu0 %v2914
    %3772 = vmatpush1.bf16.msra.mxu0 %v2913
    %3773 = vmatprep.subr.bf16.mxu0 %v2902
    %3774 = vmatpush1.bf16.msra.mxu0 %v2901
    %3775 = vmatprep.subr.bf16.mxu0 %v2890
    %3776 = vmatpush1.bf16.msra.mxu0 %v2889
    %3777 = vmatprep.subr.bf16.mxu0 %v3070
    %3778 = vmatpush2.bf16.msra.mxu0 %v3069
    %3779 = vmatprep.subr.bf16.mxu0 %v3058
    %3780 = vmatpush2.bf16.msra.mxu0 %v3057
    %3781 = vmatprep.subr.bf16.mxu0 %v3046
    %3782 = vmatpush2.bf16.msra.mxu0 %v3045
    %3783 = vmatprep.subr.bf16.mxu0 %v3034
    %3784 = vmatpush2.bf16.msra.mxu0 %v3033
    %3785 = vmatprep.subr.bf16.mxu0 %v3022
    %3786 = vmatpush2.bf16.msra.mxu0 %v3021
    %3787 = vmatprep.subr.bf16.mxu0 %v3010
    %3788 = vmatpush2.bf16.msra.mxu0 %v3009
    %3789 = vmatprep.subr.bf16.mxu0 %v2998
    %3790 = vmatpush2.bf16.msra.mxu0 %v2997
    %3791 = vmatprep.subr.bf16.mxu0 %v2986
    %3792 = vmatpush2.bf16.msra.mxu0 %v2985
    %3793 = vmatprep.mubr.bf16.mxu0 %v1344
    %3794 = vmatmul.mubr.bf16.gmra.mxu0 %v1343
    %v3795 = vpop.f32.mrf.mxu0
    %v3796 = vadd.f32 0.0, %v3795
    %v3797 = vpop.f32.mrf.mxu0
    %v3798 = vadd.f32 0.0, %v3797
    %v3799 = vpop.f32.mrf.mxu0
    %v3800 = vadd.f32 0.0, %v3799
    %v3801 = vpop.f32.mrf.mxu0
    %v3802 = vadd.f32 0.0, %v3801
    %3803 = vmatprep.mubr.bf16.mxu0 %v1348
    %3804 = vmatmul.mubr.bf16.gmra.mxu0 %v1347
    %v3805 = vpop.f32.mrf.mxu0
    %v3806 = vadd.f32 0.0, %v3805
    %v3807 = vpop.f32.mrf.mxu0
    %v3808 = vadd.f32 0.0, %v3807
    %v3809 = vpop.f32.mrf.mxu0
    %v3810 = vadd.f32 0.0, %v3809
    %v3811 = vpop.f32.mrf.mxu0
    %v3812 = vadd.f32 0.0, %v3811
    %3813 = vdwg.mxu0
    %3814 = vmatprep.subr.bf16.mxu0 %v3166
    %3815 = vmatpush1.bf16.msra.mxu0 %v3165
    %3816 = vmatprep.subr.bf16.mxu0 %v3154
    %3817 = vmatpush1.bf16.msra.mxu0 %v3153
    %3818 = vmatprep.subr.bf16.mxu0 %v3142
    %3819 = vmatpush1.bf16.msra.mxu0 %v3141
    %3820 = vmatprep.subr.bf16.mxu0 %v3130
    %3821 = vmatpush1.bf16.msra.mxu0 %v3129
    %3822 = vmatprep.subr.bf16.mxu0 %v3118
    %3823 = vmatpush1.bf16.msra.mxu0 %v3117
    %3824 = vmatprep.subr.bf16.mxu0 %v3106
    %3825 = vmatpush1.bf16.msra.mxu0 %v3105
    %3826 = vmatprep.subr.bf16.mxu0 %v3094
    %3827 = vmatpush1.bf16.msra.mxu0 %v3093
    %3828 = vmatprep.subr.bf16.mxu0 %v3082
    %3829 = vmatpush1.bf16.msra.mxu0 %v3081
    %3830 = vmatprep.subr.bf16.mxu0 %v3262
    %3831 = vmatpush2.bf16.msra.mxu0 %v3261
    %3832 = vmatprep.subr.bf16.mxu0 %v3250
    %3833 = vmatpush2.bf16.msra.mxu0 %v3249
    %3834 = vmatprep.subr.bf16.mxu0 %v3238
    %3835 = vmatpush2.bf16.msra.mxu0 %v3237
    %3836 = vmatprep.subr.bf16.mxu0 %v3226
    %3837 = vmatpush2.bf16.msra.mxu0 %v3225
    %3838 = vmatprep.subr.bf16.mxu0 %v3214
    %3839 = vmatpush2.bf16.msra.mxu0 %v3213
    %3840 = vmatprep.subr.bf16.mxu0 %v3202
    %3841 = vmatpush2.bf16.msra.mxu0 %v3201
    %3842 = vmatprep.subr.bf16.mxu0 %v3190
    %3843 = vmatpush2.bf16.msra.mxu0 %v3189
    %3844 = vmatprep.subr.bf16.mxu0 %v3178
    %3845 = vmatpush2.bf16.msra.mxu0 %v3177
    %3846 = vmatprep.mubr.bf16.mxu0 %v1346
    %3847 = vmatmul.mubr.bf16.gmra.mxu0 %v1345
    %v3848 = vpop.f32.mrf.mxu0
    %v3849 = vadd.f32 %v3796, %v3848
    %v3850 = vpop.f32.mrf.mxu0
    %v3851 = vadd.f32 %v3798, %v3850
    %v3852 = vpop.f32.mrf.mxu0
    %v3853 = vadd.f32 %v3800, %v3852
    %v3854 = vpop.f32.mrf.mxu0
    %v3855 = vadd.f32 %v3802, %v3854
    %3856 = vmatprep.mubr.bf16.mxu0 %v1350
    %3857 = vmatmul.mubr.bf16.gmra.mxu0 %v1349
    %v3858 = vpop.f32.mrf.mxu0
    %v3859 = vadd.f32 %v3806, %v3858
    %v3860 = vpop.f32.mrf.mxu0
    %v3861 = vadd.f32 %v3808, %v3860
    %v3862 = vpop.f32.mrf.mxu0
    %v3863 = vadd.f32 %v3810, %v3862
    %v3864 = vpop.f32.mrf.mxu0
    %v3865 = vadd.f32 %v3812, %v3864
    %3866 = vdwg.mxu0
    %3867 = vmatprep.subr.bf16.mxu0 %v2976
    %3868 = vmatpush1.bf16.msra.mxu0 %v2975
    %3869 = vmatprep.subr.bf16.mxu0 %v2964
    %3870 = vmatpush1.bf16.msra.mxu0 %v2963
    %3871 = vmatprep.subr.bf16.mxu0 %v2952
    %3872 = vmatpush1.bf16.msra.mxu0 %v2951
    %3873 = vmatprep.subr.bf16.mxu0 %v2940
    %3874 = vmatpush1.bf16.msra.mxu0 %v2939
    %3875 = vmatprep.subr.bf16.mxu0 %v2928
    %3876 = vmatpush1.bf16.msra.mxu0 %v2927
    %3877 = vmatprep.subr.bf16.mxu0 %v2916
    %3878 = vmatpush1.bf16.msra.mxu0 %v2915
    %3879 = vmatprep.subr.bf16.mxu0 %v2904
    %3880 = vmatpush1.bf16.msra.mxu0 %v2903
    %3881 = vmatprep.subr.bf16.mxu0 %v2892
    %3882 = vmatpush1.bf16.msra.mxu0 %v2891
    %3883 = vmatprep.subr.bf16.mxu0 %v3072
    %3884 = vmatpush2.bf16.msra.mxu0 %v3071
    %3885 = vmatprep.subr.bf16.mxu0 %v3060
    %3886 = vmatpush2.bf16.msra.mxu0 %v3059
    %3887 = vmatprep.subr.bf16.mxu0 %v3048
    %3888 = vmatpush2.bf16.msra.mxu0 %v3047
    %3889 = vmatprep.subr.bf16.mxu0 %v3036
    %3890 = vmatpush2.bf16.msra.mxu0 %v3035
    %3891 = vmatprep.subr.bf16.mxu0 %v3024
    %3892 = vmatpush2.bf16.msra.mxu0 %v3023
    %3893 = vmatprep.subr.bf16.mxu0 %v3012
    %3894 = vmatpush2.bf16.msra.mxu0 %v3011
    %3895 = vmatprep.subr.bf16.mxu0 %v3000
    %3896 = vmatpush2.bf16.msra.mxu0 %v2999
    %3897 = vmatprep.subr.bf16.mxu0 %v2988
    %3898 = vmatpush2.bf16.msra.mxu0 %v2987
    %3899 = vmatprep.mubr.bf16.mxu0 %v1344
    %3900 = vmatmul.mubr.bf16.gmra.mxu0 %v1343
    %v3901 = vpop.f32.mrf.mxu0
    %v3902 = vadd.f32 0.0, %v3901
    %v3903 = vpop.f32.mrf.mxu0
    %v3904 = vadd.f32 0.0, %v3903
    %v3905 = vpop.f32.mrf.mxu0
    %v3906 = vadd.f32 0.0, %v3905
    %v3907 = vpop.f32.mrf.mxu0
    %v3908 = vadd.f32 0.0, %v3907
    %3909 = vmatprep.mubr.bf16.mxu0 %v1348
    %3910 = vmatmul.mubr.bf16.gmra.mxu0 %v1347
    %v3911 = vpop.f32.mrf.mxu0
    %v3912 = vadd.f32 0.0, %v3911
    %v3913 = vpop.f32.mrf.mxu0
    %v3914 = vadd.f32 0.0, %v3913
    %v3915 = vpop.f32.mrf.mxu0
    %v3916 = vadd.f32 0.0, %v3915
    %v3917 = vpop.f32.mrf.mxu0
    %v3918 = vadd.f32 0.0, %v3917
    %3919 = vdwg.mxu0
    %3920 = vmatprep.subr.bf16.mxu0 %v3168
    %3921 = vmatpush1.bf16.msra.mxu0 %v3167
    %3922 = vmatprep.subr.bf16.mxu0 %v3156
    %3923 = vmatpush1.bf16.msra.mxu0 %v3155
    %3924 = vmatprep.subr.bf16.mxu0 %v3144
    %3925 = vmatpush1.bf16.msra.mxu0 %v3143
    %3926 = vmatprep.subr.bf16.mxu0 %v3132
    %3927 = vmatpush1.bf16.msra.mxu0 %v3131
    %3928 = vmatprep.subr.bf16.mxu0 %v3120
    %3929 = vmatpush1.bf16.msra.mxu0 %v3119
    %3930 = vmatprep.subr.bf16.mxu0 %v3108
    %3931 = vmatpush1.bf16.msra.mxu0 %v3107
    %3932 = vmatprep.subr.bf16.mxu0 %v3096
    %3933 = vmatpush1.bf16.msra.mxu0 %v3095
    %3934 = vmatprep.subr.bf16.mxu0 %v3084
    %3935 = vmatpush1.bf16.msra.mxu0 %v3083
    %3936 = vmatprep.subr.bf16.mxu0 %v3264
    %3937 = vmatpush2.bf16.msra.mxu0 %v3263
    %3938 = vmatprep.subr.bf16.mxu0 %v3252
    %3939 = vmatpush2.bf16.msra.mxu0 %v3251
    %3940 = vmatprep.subr.bf16.mxu0 %v3240
    %3941 = vmatpush2.bf16.msra.mxu0 %v3239
    %3942 = vmatprep.subr.bf16.mxu0 %v3228
    %3943 = vmatpush2.bf16.msra.mxu0 %v3227
    %3944 = vmatprep.subr.bf16.mxu0 %v3216
    %3945 = vmatpush2.bf16.msra.mxu0 %v3215
    %3946 = vmatprep.subr.bf16.mxu0 %v3204
    %3947 = vmatpush2.bf16.msra.mxu0 %v3203
    %3948 = vmatprep.subr.bf16.mxu0 %v3192
    %3949 = vmatpush2.bf16.msra.mxu0 %v3191
    %3950 = vmatprep.subr.bf16.mxu0 %v3180
    %3951 = vmatpush2.bf16.msra.mxu0 %v3179
    %3952 = vmatprep.mubr.bf16.mxu0 %v1346
    %3953 = vmatmul.mubr.bf16.gmra.mxu0 %v1345
    %v3954 = vpop.f32.mrf.mxu0
    %v3955 = vadd.f32 %v3902, %v3954
    %v3956 = vpop.f32.mrf.mxu0
    %v3957 = vadd.f32 %v3904, %v3956
    %v3958 = vpop.f32.mrf.mxu0
    %v3959 = vadd.f32 %v3906, %v3958
    %v3960 = vpop.f32.mrf.mxu0
    %v3961 = vadd.f32 %v3908, %v3960
    %3962 = vmatprep.mubr.bf16.mxu0 %v1350
    %3963 = vmatmul.mubr.bf16.gmra.mxu0 %v1349
    %v3964 = vpop.f32.mrf.mxu0
    %v3965 = vadd.f32 %v3912, %v3964
    %v3966 = vpop.f32.mrf.mxu0
    %v3967 = vadd.f32 %v3914, %v3966
    %v3968 = vpop.f32.mrf.mxu0
    %v3969 = vadd.f32 %v3916, %v3968
    %v3970 = vpop.f32.mrf.mxu0
    %v3971 = vadd.f32 %v3918, %v3970
    %3972 = vdwg.mxu0
    %3973 = vmatprep.subr.bf16.mxu0 %v2978
    %3974 = vmatpush1.bf16.msra.mxu0 %v2977
    %3975 = vmatprep.subr.bf16.mxu0 %v2966
    %3976 = vmatpush1.bf16.msra.mxu0 %v2965
    %3977 = vmatprep.subr.bf16.mxu0 %v2954
    %3978 = vmatpush1.bf16.msra.mxu0 %v2953
    %3979 = vmatprep.subr.bf16.mxu0 %v2942
    %3980 = vmatpush1.bf16.msra.mxu0 %v2941
    %3981 = vmatprep.subr.bf16.mxu0 %v2930
    %3982 = vmatpush1.bf16.msra.mxu0 %v2929
    %3983 = vmatprep.subr.bf16.mxu0 %v2918
    %3984 = vmatpush1.bf16.msra.mxu0 %v2917
    %3985 = vmatprep.subr.bf16.mxu0 %v2906
    %3986 = vmatpush1.bf16.msra.mxu0 %v2905
    %3987 = vmatprep.subr.bf16.mxu0 %v2894
    %3988 = vmatpush1.bf16.msra.mxu0 %v2893
    %3989 = vmatprep.subr.bf16.mxu0 %v3074
    %3990 = vmatpush2.bf16.msra.mxu0 %v3073
    %3991 = vmatprep.subr.bf16.mxu0 %v3062
    %3992 = vmatpush2.bf16.msra.mxu0 %v3061
    %3993 = vmatprep.subr.bf16.mxu0 %v3050
    %3994 = vmatpush2.bf16.msra.mxu0 %v3049
    %3995 = vmatprep.subr.bf16.mxu0 %v3038
    %3996 = vmatpush2.bf16.msra.mxu0 %v3037
    %3997 = vmatprep.subr.bf16.mxu0 %v3026
    %3998 = vmatpush2.bf16.msra.mxu0 %v3025
    %3999 = vmatprep.subr.bf16.mxu0 %v3014
    %4000 = vmatpush2.bf16.msra.mxu0 %v3013
    %4001 = vmatprep.subr.bf16.mxu0 %v3002
    %4002 = vmatpush2.bf16.msra.mxu0 %v3001
    %4003 = vmatprep.subr.bf16.mxu0 %v2990
    %4004 = vmatpush2.bf16.msra.mxu0 %v2989
    %4005 = vmatprep.mubr.bf16.mxu0 %v1344
    %4006 = vmatmul.mubr.bf16.gmra.mxu0 %v1343
    %v4007 = vpop.f32.mrf.mxu0
    %v4008 = vadd.f32 0.0, %v4007
    %v4009 = vpop.f32.mrf.mxu0
    %v4010 = vadd.f32 0.0, %v4009
    %v4011 = vpop.f32.mrf.mxu0
    %v4012 = vadd.f32 0.0, %v4011
    %v4013 = vpop.f32.mrf.mxu0
    %v4014 = vadd.f32 0.0, %v4013
    %4015 = vmatprep.mubr.bf16.mxu0 %v1348
    %4016 = vmatmul.mubr.bf16.gmra.mxu0 %v1347
    %v4017 = vpop.f32.mrf.mxu0
    %v4018 = vadd.f32 0.0, %v4017
    %v4019 = vpop.f32.mrf.mxu0
    %v4020 = vadd.f32 0.0, %v4019
    %v4021 = vpop.f32.mrf.mxu0
    %v4022 = vadd.f32 0.0, %v4021
    %v4023 = vpop.f32.mrf.mxu0
    %v4024 = vadd.f32 0.0, %v4023
    %4025 = vdwg.mxu0
    %4026 = vmatprep.subr.bf16.mxu0 %v3170
    %4027 = vmatpush1.bf16.msra.mxu0 %v3169
    %4028 = vmatprep.subr.bf16.mxu0 %v3158
    %4029 = vmatpush1.bf16.msra.mxu0 %v3157
    %4030 = vmatprep.subr.bf16.mxu0 %v3146
    %4031 = vmatpush1.bf16.msra.mxu0 %v3145
    %4032 = vmatprep.subr.bf16.mxu0 %v3134
    %4033 = vmatpush1.bf16.msra.mxu0 %v3133
    %4034 = vmatprep.subr.bf16.mxu0 %v3122
    %4035 = vmatpush1.bf16.msra.mxu0 %v3121
    %4036 = vmatprep.subr.bf16.mxu0 %v3110
    %4037 = vmatpush1.bf16.msra.mxu0 %v3109
    %4038 = vmatprep.subr.bf16.mxu0 %v3098
    %4039 = vmatpush1.bf16.msra.mxu0 %v3097
    %4040 = vmatprep.subr.bf16.mxu0 %v3086
    %4041 = vmatpush1.bf16.msra.mxu0 %v3085
    %4042 = vmatprep.subr.bf16.mxu0 %v3266
    %4043 = vmatpush2.bf16.msra.mxu0 %v3265
    %4044 = vmatprep.subr.bf16.mxu0 %v3254
    %4045 = vmatpush2.bf16.msra.mxu0 %v3253
    %4046 = vmatprep.subr.bf16.mxu0 %v3242
    %4047 = vmatpush2.bf16.msra.mxu0 %v3241
    %4048 = vmatprep.subr.bf16.mxu0 %v3230
    %4049 = vmatpush2.bf16.msra.mxu0 %v3229
    %4050 = vmatprep.subr.bf16.mxu0 %v3218
    %4051 = vmatpush2.bf16.msra.mxu0 %v3217
    %4052 = vmatprep.subr.bf16.mxu0 %v3206
    %4053 = vmatpush2.bf16.msra.mxu0 %v3205
    %4054 = vmatprep.subr.bf16.mxu0 %v3194
    %4055 = vmatpush2.bf16.msra.mxu0 %v3193
    %4056 = vmatprep.subr.bf16.mxu0 %v3182
    %4057 = vmatpush2.bf16.msra.mxu0 %v3181
    %4058 = vmatprep.mubr.bf16.mxu0 %v1346
    %4059 = vmatmul.mubr.bf16.gmra.mxu0 %v1345
    %v4060 = vpop.f32.mrf.mxu0
    %v4061 = vadd.f32 %v4008, %v4060
    %v4062 = vpop.f32.mrf.mxu0
    %v4063 = vadd.f32 %v4010, %v4062
    %v4064 = vpop.f32.mrf.mxu0
    %v4065 = vadd.f32 %v4012, %v4064
    %v4066 = vpop.f32.mrf.mxu0
    %v4067 = vadd.f32 %v4014, %v4066
    %4068 = vmatprep.mubr.bf16.mxu0 %v1350
    %4069 = vmatmul.mubr.bf16.gmra.mxu0 %v1349
    %v4070 = vpop.f32.mrf.mxu0
    %v4071 = vadd.f32 %v4018, %v4070
    %v4072 = vpop.f32.mrf.mxu0
    %v4073 = vadd.f32 %v4020, %v4072
    %v4074 = vpop.f32.mrf.mxu0
    %v4075 = vadd.f32 %v4022, %v4074
    %v4076 = vpop.f32.mrf.mxu0
    %v4077 = vadd.f32 %v4024, %v4076
    %4078 = vdwg.mxu0
    %4079 = vmatprep.subr.bf16.mxu0 %v2980
    %4080 = vmatpush1.bf16.msra.mxu0 %v2979
    %4081 = vmatprep.subr.bf16.mxu0 %v2968
    %4082 = vmatpush1.bf16.msra.mxu0 %v2967
    %4083 = vmatprep.subr.bf16.mxu0 %v2956
    %4084 = vmatpush1.bf16.msra.mxu0 %v2955
    %4085 = vmatprep.subr.bf16.mxu0 %v2944
    %4086 = vmatpush1.bf16.msra.mxu0 %v2943
    %4087 = vmatprep.subr.bf16.mxu0 %v2932
    %4088 = vmatpush1.bf16.msra.mxu0 %v2931
    %4089 = vmatprep.subr.bf16.mxu0 %v2920
    %4090 = vmatpush1.bf16.msra.mxu0 %v2919
    %4091 = vmatprep.subr.bf16.mxu0 %v2908
    %4092 = vmatpush1.bf16.msra.mxu0 %v2907
    %4093 = vmatprep.subr.bf16.mxu0 %v2896
    %4094 = vmatpush1.bf16.msra.mxu0 %v2895
    %4095 = vmatprep.subr.bf16.mxu0 %v3076
    %4096 = vmatpush2.bf16.msra.mxu0 %v3075
    %4097 = vmatprep.subr.bf16.mxu0 %v3064
    %4098 = vmatpush2.bf16.msra.mxu0 %v3063
    %4099 = vmatprep.subr.bf16.mxu0 %v3052
    %4100 = vmatpush2.bf16.msra.mxu0 %v3051
    %4101 = vmatprep.subr.bf16.mxu0 %v3040
    %4102 = vmatpush2.bf16.msra.mxu0 %v3039
    %4103 = vmatprep.subr.bf16.mxu0 %v3028
    %4104 = vmatpush2.bf16.msra.mxu0 %v3027
    %4105 = vmatprep.subr.bf16.mxu0 %v3016
    %4106 = vmatpush2.bf16.msra.mxu0 %v3015
    %4107 = vmatprep.subr.bf16.mxu0 %v3004
    %4108 = vmatpush2.bf16.msra.mxu0 %v3003
    %4109 = vmatprep.subr.bf16.mxu0 %v2992
    %4110 = vmatpush2.bf16.msra.mxu0 %v2991
    %4111 = vmatprep.mubr.bf16.mxu0 %v1344
    %4112 = vmatmul.mubr.bf16.gmra.mxu0 %v1343
    %v4113 = vpop.f32.mrf.mxu0
    %v4114 = vadd.f32 0.0, %v4113
    %v4115 = vpop.f32.mrf.mxu0
    %v4116 = vadd.f32 0.0, %v4115
    %v4117 = vpop.f32.mrf.mxu0
    %v4118 = vadd.f32 0.0, %v4117
    %v4119 = vpop.f32.mrf.mxu0
    %v4120 = vadd.f32 0.0, %v4119
    %4121 = vmatprep.mubr.bf16.mxu0 %v1348
    %4122 = vmatmul.mubr.bf16.gmra.mxu0 %v1347
    %v4123 = vpop.f32.mrf.mxu0
    %v4124 = vadd.f32 0.0, %v4123
    %v4125 = vpop.f32.mrf.mxu0
    %v4126 = vadd.f32 0.0, %v4125
    %v4127 = vpop.f32.mrf.mxu0
    %v4128 = vadd.f32 0.0, %v4127
    %v4129 = vpop.f32.mrf.mxu0
    %v4130 = vadd.f32 0.0, %v4129
    %4131 = vdwg.mxu0
    %4132 = vmatprep.subr.bf16.mxu0 %v3172
    %4133 = vmatpush1.bf16.msra.mxu0 %v3171
    %4134 = vmatprep.subr.bf16.mxu0 %v3160
    %4135 = vmatpush1.bf16.msra.mxu0 %v3159
    %4136 = vmatprep.subr.bf16.mxu0 %v3148
    %4137 = vmatpush1.bf16.msra.mxu0 %v3147
    %4138 = vmatprep.subr.bf16.mxu0 %v3136
    %4139 = vmatpush1.bf16.msra.mxu0 %v3135
    %4140 = vmatprep.subr.bf16.mxu0 %v3124
    %4141 = vmatpush1.bf16.msra.mxu0 %v3123
    %4142 = vmatprep.subr.bf16.mxu0 %v3112
    %4143 = vmatpush1.bf16.msra.mxu0 %v3111
    %4144 = vmatprep.subr.bf16.mxu0 %v3100
    %4145 = vmatpush1.bf16.msra.mxu0 %v3099
    %4146 = vmatprep.subr.bf16.mxu0 %v3088
    %4147 = vmatpush1.bf16.msra.mxu0 %v3087
    %4148 = vmatprep.subr.bf16.mxu0 %v3268
    %4149 = vmatpush2.bf16.msra.mxu0 %v3267
    %4150 = vmatprep.subr.bf16.mxu0 %v3256
    %4151 = vmatpush2.bf16.msra.mxu0 %v3255
    %4152 = vmatprep.subr.bf16.mxu0 %v3244
    %4153 = vmatpush2.bf16.msra.mxu0 %v3243
    %4154 = vmatprep.subr.bf16.mxu0 %v3232
    %4155 = vmatpush2.bf16.msra.mxu0 %v3231
    %4156 = vmatprep.subr.bf16.mxu0 %v3220
    %4157 = vmatpush2.bf16.msra.mxu0 %v3219
    %4158 = vmatprep.subr.bf16.mxu0 %v3208
    %4159 = vmatpush2.bf16.msra.mxu0 %v3207
    %4160 = vmatprep.subr.bf16.mxu0 %v3196
    %4161 = vmatpush2.bf16.msra.mxu0 %v3195
    %4162 = vmatprep.subr.bf16.mxu0 %v3184
    %4163 = vmatpush2.bf16.msra.mxu0 %v3183
    %4164 = vmatprep.mubr.bf16.mxu0 %v1346
    %4165 = vmatmul.mubr.bf16.gmra.mxu0 %v1345
    %v4166 = vpop.f32.mrf.mxu0
    %v4167 = vadd.f32 %v4114, %v4166
    %v4168 = vpop.f32.mrf.mxu0
    %v4169 = vadd.f32 %v4116, %v4168
    %v4170 = vpop.f32.mrf.mxu0
    %v4171 = vadd.f32 %v4118, %v4170
    %v4172 = vpop.f32.mrf.mxu0
    %v4173 = vadd.f32 %v4120, %v4172
    %4174 = vmatprep.mubr.bf16.mxu0 %v1350
    %4175 = vmatmul.mubr.bf16.gmra.mxu0 %v1349
    %v4176 = vpop.f32.mrf.mxu0
    %v4177 = vadd.f32 %v4124, %v4176
    %v4178 = vpop.f32.mrf.mxu0
    %v4179 = vadd.f32 %v4126, %v4178
    %v4180 = vpop.f32.mrf.mxu0
    %v4181 = vadd.f32 %v4128, %v4180
    %v4182 = vpop.f32.mrf.mxu0
    %v4183 = vadd.f32 %v4130, %v4182
    %4184 = vdwg.mxu0
    %4185 = vmatprep.subr.bf16.mxu0 %v2982
    %4186 = vmatpush1.bf16.msra.mxu0 %v2981
    %4187 = vmatprep.subr.bf16.mxu0 %v2970
    %4188 = vmatpush1.bf16.msra.mxu0 %v2969
    %4189 = vmatprep.subr.bf16.mxu0 %v2958
    %4190 = vmatpush1.bf16.msra.mxu0 %v2957
    %4191 = vmatprep.subr.bf16.mxu0 %v2946
    %4192 = vmatpush1.bf16.msra.mxu0 %v2945
    %4193 = vmatprep.subr.bf16.mxu0 %v2934
    %4194 = vmatpush1.bf16.msra.mxu0 %v2933
    %4195 = vmatprep.subr.bf16.mxu0 %v2922
    %4196 = vmatpush1.bf16.msra.mxu0 %v2921
    %4197 = vmatprep.subr.bf16.mxu0 %v2910
    %4198 = vmatpush1.bf16.msra.mxu0 %v2909
    %4199 = vmatprep.subr.bf16.mxu0 %v2898
    %4200 = vmatpush1.bf16.msra.mxu0 %v2897
    %4201 = vmatprep.subr.bf16.mxu0 %v3078
    %4202 = vmatpush2.bf16.msra.mxu0 %v3077
    %4203 = vmatprep.subr.bf16.mxu0 %v3066
    %4204 = vmatpush2.bf16.msra.mxu0 %v3065
    %4205 = vmatprep.subr.bf16.mxu0 %v3054
    %4206 = vmatpush2.bf16.msra.mxu0 %v3053
    %4207 = vmatprep.subr.bf16.mxu0 %v3042
    %4208 = vmatpush2.bf16.msra.mxu0 %v3041
    %4209 = vmatprep.subr.bf16.mxu0 %v3030
    %4210 = vmatpush2.bf16.msra.mxu0 %v3029
    %4211 = vmatprep.subr.bf16.mxu0 %v3018
    %4212 = vmatpush2.bf16.msra.mxu0 %v3017
    %4213 = vmatprep.subr.bf16.mxu0 %v3006
    %4214 = vmatpush2.bf16.msra.mxu0 %v3005
    %4215 = vmatprep.subr.bf16.mxu0 %v2994
    %4216 = vmatpush2.bf16.msra.mxu0 %v2993
    %4217 = vmatprep.mubr.bf16.mxu0 %v1344
    %4218 = vmatmul.mubr.bf16.gmra.mxu0 %v1343
    %v4219 = vpop.f32.mrf.mxu0
    %v4220 = vadd.f32 0.0, %v4219
    %v4221 = vpop.f32.mrf.mxu0
    %v4222 = vadd.f32 0.0, %v4221
    %v4223 = vpop.f32.mrf.mxu0
    %v4224 = vadd.f32 0.0, %v4223
    %v4225 = vpop.f32.mrf.mxu0
    %v4226 = vadd.f32 0.0, %v4225
    %4227 = vmatprep.mubr.bf16.mxu0 %v1348
    %4228 = vmatmul.mubr.bf16.gmra.mxu0 %v1347
    %v4229 = vpop.f32.mrf.mxu0
    %v4230 = vadd.f32 0.0, %v4229
    %v4231 = vpop.f32.mrf.mxu0
    %v4232 = vadd.f32 0.0, %v4231
    %v4233 = vpop.f32.mrf.mxu0
    %v4234 = vadd.f32 0.0, %v4233
    %v4235 = vpop.f32.mrf.mxu0
    %v4236 = vadd.f32 0.0, %v4235
    %4237 = vdwg.mxu0
    %4238 = vmatprep.subr.bf16.mxu0 %v3174
    %4239 = vmatpush1.bf16.msra.mxu0 %v3173
    %4240 = vmatprep.subr.bf16.mxu0 %v3162
    %4241 = vmatpush1.bf16.msra.mxu0 %v3161
    %4242 = vmatprep.subr.bf16.mxu0 %v3150
    %4243 = vmatpush1.bf16.msra.mxu0 %v3149
    %4244 = vmatprep.subr.bf16.mxu0 %v3138
    %4245 = vmatpush1.bf16.msra.mxu0 %v3137
    %4246 = vmatprep.subr.bf16.mxu0 %v3126
    %4247 = vmatpush1.bf16.msra.mxu0 %v3125
    %4248 = vmatprep.subr.bf16.mxu0 %v3114
    %4249 = vmatpush1.bf16.msra.mxu0 %v3113
    %4250 = vmatprep.subr.bf16.mxu0 %v3102
    %4251 = vmatpush1.bf16.msra.mxu0 %v3101
    %4252 = vmatprep.subr.bf16.mxu0 %v3090
    %4253 = vmatpush1.bf16.msra.mxu0 %v3089
    %4254 = vmatprep.subr.bf16.mxu0 %v3270
    %4255 = vmatpush2.bf16.msra.mxu0 %v3269
    %4256 = vmatprep.subr.bf16.mxu0 %v3258
    %4257 = vmatpush2.bf16.msra.mxu0 %v3257
    %4258 = vmatprep.subr.bf16.mxu0 %v3246
    %4259 = vmatpush2.bf16.msra.mxu0 %v3245
    %4260 = vmatprep.subr.bf16.mxu0 %v3234
    %4261 = vmatpush2.bf16.msra.mxu0 %v3233
    %4262 = vmatprep.subr.bf16.mxu0 %v3222
    %4263 = vmatpush2.bf16.msra.mxu0 %v3221
    %4264 = vmatprep.subr.bf16.mxu0 %v3210
    %4265 = vmatpush2.bf16.msra.mxu0 %v3209
    %4266 = vmatprep.subr.bf16.mxu0 %v3198
    %4267 = vmatpush2.bf16.msra.mxu0 %v3197
    %4268 = vmatprep.subr.bf16.mxu0 %v3186
    %4269 = vmatpush2.bf16.msra.mxu0 %v3185
    %4270 = vmatprep.mubr.bf16.mxu0 %v1346
    %4271 = vmatmul.mubr.bf16.gmra.mxu0 %v1345
    %v4272 = vpop.f32.mrf.mxu0
    %v4273 = vadd.f32 %v4220, %v4272
    %v4274 = vpop.f32.mrf.mxu0
    %v4275 = vadd.f32 %v4222, %v4274
    %v4276 = vpop.f32.mrf.mxu0
    %v4277 = vadd.f32 %v4224, %v4276
    %v4278 = vpop.f32.mrf.mxu0
    %v4279 = vadd.f32 %v4226, %v4278
    %4280 = vmatprep.mubr.bf16.mxu0 %v1350
    %4281 = vmatmul.mubr.bf16.gmra.mxu0 %v1349
    %v4282 = vpop.f32.mrf.mxu0
    %v4283 = vadd.f32 %v4230, %v4282
    %v4284 = vpop.f32.mrf.mxu0
    %v4285 = vadd.f32 %v4232, %v4284
    %v4286 = vpop.f32.mrf.mxu0
    %v4287 = vadd.f32 %v4234, %v4286
    %v4288 = vpop.f32.mrf.mxu0
    %v4289 = vadd.f32 %v4236, %v4288
    %4290 = vdwg.mxu0
    %v4291 = vld [vmem:[%s3] sm:$0xff]
    %v4292 = vld [vmem:[%s3 + $0x8] sm:$0xff]
    %v4293 = vld [vmem:[%s3 + $0x10] sm:$0xff]
    %v4294 = vld [vmem:[%s3 + $0x18] sm:$0xff]
    %v4295 = vld [vmem:[%s3 + $0x20] sm:$0xff]
    %v4296 = vld [vmem:[%s3 + $0x28] sm:$0xff]
    %v4297 = vld [vmem:[%s3 + $0x30] sm:$0xff]
    %s4298 = scalar_lea.vmem %s3, 56
    %v4299 = vld [vmem:[%s4298] sm:$0xff]
    %v4300 = vld [vmem:[%s4298 + $0x8] sm:$0xff]
    %v4301 = vld [vmem:[%s4298 + $0x10] sm:$0xff]
    %v4302 = vld [vmem:[%s4298 + $0x18] sm:$0xff]
    %v4303 = vld [vmem:[%s4298 + $0x20] sm:$0xff]
    %v4304 = vld [vmem:[%s4298 + $0x28] sm:$0xff]
    %v4305 = vld [vmem:[%s4298 + $0x30] sm:$0xff]
    %vm4306 = vcmask 261120
    %v4308 = vsel %vm4306, %v4299, 0
    %v4311 = vsel %vm4306, %v4300, 0
    %v4314 = vsel %vm4306, %v4301, 0
    %v4317 = vsel %vm4306, %v4302, 0
    %v4320 = vsel %vm4306, %v4303, 0
    %v4323 = vsel %vm4306, %v4304, 0
    %v4326 = vsel %vm4306, %v4305, 0
    %4328 = vmatprep.subr.mxu0 0.0
    %4329 = vmatpush1.msra.mxu0 0.0
    %4330 = vmatprep.subr.mxu0 0.0
    %4331 = vmatpush1.msra.mxu0 0.0
    %4332 = vmatprep.subr.mxu0 0.0
    %4333 = vmatpush1.msra.mxu0 0.0
    %4334 = vmatprep.subr.mxu0 0.0
    %4335 = vmatpush1.msra.mxu0 0.0
    %4336 = vmatprep.subr.mxu0 0.0
    %4337 = vmatpush1.msra.mxu0 0.0
    %4338 = vmatprep.subr.mxu0 0.0
    %4339 = vmatpush1.msra.mxu0 0.0
    %4340 = vmatprep.subr.mxu0 0.0
    %4341 = vmatpush1.msra.mxu0 0.0
    %4342 = vmatprep.subr.mxu0 0.0
    %4343 = vmatpush1.msra.mxu0 0.0
    %4344 = vmatprep.subr.mxu0 0.0
    %4345 = vmatpush1.msra.mxu0 0.0
    %4346 = vmatprep.subr.mxu0 0.0
    %4347 = vmatpush1.msra.mxu0 0.0
    %4348 = vmatprep.subr.mxu0 0.0
    %4349 = vmatpush1.msra.mxu0 0.0
    %4350 = vmatprep.subr.mxu0 0.0
    %4351 = vmatpush1.msra.mxu0 0.0
    %4352 = vmatprep.subr.mxu0 %v3971
    %4353 = vmatpush1.msra.mxu0 %v3969
    %4354 = vmatprep.subr.mxu0 %v3967
    %4355 = vmatpush1.msra.mxu0 %v3965
    %4356 = vmatprep.subr.mxu0 %v3961
    %4357 = vmatpush1.msra.mxu0 %v3959
    %4358 = vmatprep.subr.mxu0 %v3957
    %4359 = vmatpush1.msra.mxu0 %v3955
    %4360 = vmatprep.subr.mxu0 0.0
    %4361 = vmatpush2.msra.mxu0 0.0
    %4362 = vmatprep.subr.mxu0 0.0
    %4363 = vmatpush2.msra.mxu0 0.0
    %4364 = vmatprep.subr.mxu0 0.0
    %4365 = vmatpush2.msra.mxu0 0.0
    %4366 = vmatprep.subr.mxu0 0.0
    %4367 = vmatpush2.msra.mxu0 0.0
    %4368 = vmatprep.subr.mxu0 0.0
    %4369 = vmatpush2.msra.mxu0 0.0
    %4370 = vmatprep.subr.mxu0 0.0
    %4371 = vmatpush2.msra.mxu0 0.0
    %4372 = vmatprep.subr.mxu0 0.0
    %4373 = vmatpush2.msra.mxu0 0.0
    %4374 = vmatprep.subr.mxu0 0.0
    %4375 = vmatpush2.msra.mxu0 0.0
    %4376 = vmatprep.subr.mxu0 0.0
    %4377 = vmatpush2.msra.mxu0 0.0
    %4378 = vmatprep.subr.mxu0 0.0
    %4379 = vmatpush2.msra.mxu0 0.0
    %4380 = vmatprep.subr.mxu0 0.0
    %4381 = vmatpush2.msra.mxu0 0.0
    %4382 = vmatprep.subr.mxu0 0.0
    %4383 = vmatpush2.msra.mxu0 0.0
    %4384 = vmatprep.subr.mxu0 0.0
    %4385 = vmatpush2.msra.mxu0 0.0
    %4386 = vmatprep.subr.mxu0 0.0
    %4387 = vmatpush2.msra.mxu0 0.0
    %4388 = vmatprep.subr.mxu0 0.0
    %4389 = vmatpush2.msra.mxu0 0.0
    %4390 = vmatprep.subr.mxu0 0.0
    %4391 = vmatpush2.msra.mxu0 0.0
    %4392 = vmatprep.mubr.f32.mxu0 0.0
    %4393 = vmatmul.mubr.f32.gmra.mxu0 %v4308
    %v4394 = vpop.f32.mrf.mxu0
    %v4395 = vadd.f32 0.0, %v4394
    %v4396 = vpop.f32.mrf.mxu0
    %v4397 = vadd.f32 0.0, %v4396
    %4398 = vmatprep.mubr.f32.mxu0 0.0
    %4399 = vmatmul.mubr.f32.gmra.mxu0 %v4311
    %v4400 = vpop.f32.mrf.mxu0
    %v4401 = vadd.f32 0.0, %v4400
    %v4402 = vpop.f32.mrf.mxu0
    %v4403 = vadd.f32 0.0, %v4402
    %4404 = vmatprep.mubr.f32.mxu0 0.0
    %4405 = vmatmul.mubr.f32.gmra.mxu0 %v4314
    %v4406 = vpop.f32.mrf.mxu0
    %v4407 = vadd.f32 0.0, %v4406
    %v4408 = vpop.f32.mrf.mxu0
    %v4409 = vadd.f32 0.0, %v4408
    %4410 = vmatprep.mubr.f32.mxu0 0.0
    %4411 = vmatmul.mubr.f32.gmra.mxu0 %v4317
    %v4412 = vpop.f32.mrf.mxu0
    %v4413 = vadd.f32 0.0, %v4412
    %v4414 = vpop.f32.mrf.mxu0
    %v4415 = vadd.f32 0.0, %v4414
    %4416 = vmatprep.mubr.f32.mxu0 0.0
    %4417 = vmatmul.mubr.f32.gmra.mxu0 %v4320
    %v4418 = vpop.f32.mrf.mxu0
    %v4419 = vadd.f32 0.0, %v4418
    %v4420 = vpop.f32.mrf.mxu0
    %v4421 = vadd.f32 0.0, %v4420
    %4422 = vmatprep.mubr.f32.mxu0 0.0
    %4423 = vmatmul.mubr.f32.gmra.mxu0 %v4323
    %v4424 = vpop.f32.mrf.mxu0
    %v4425 = vadd.f32 0.0, %v4424
    %v4426 = vpop.f32.mrf.mxu0
    %v4427 = vadd.f32 0.0, %v4426
    %4428 = vmatprep.mubr.f32.mxu0 0.0
    %4429 = vmatmul.mubr.f32.gmra.mxu0 %v4326
    %v4430 = vpop.f32.mrf.mxu0
    %v4431 = vadd.f32 0.0, %v4430
    %v4432 = vpop.f32.mrf.mxu0
    %v4433 = vadd.f32 0.0, %v4432
    %4434 = vdwg.mxu0
    %4435 = vmatprep.subr.mxu0 0.0
    %4436 = vmatpush1.msra.mxu0 0.0
    %4437 = vmatprep.subr.mxu0 0.0
    %4438 = vmatpush1.msra.mxu0 0.0
    %4439 = vmatprep.subr.mxu0 0.0
    %4440 = vmatpush1.msra.mxu0 0.0
    %4441 = vmatprep.subr.mxu0 0.0
    %4442 = vmatpush1.msra.mxu0 0.0
    %4443 = vmatprep.subr.mxu0 0.0
    %4444 = vmatpush1.msra.mxu0 0.0
    %4445 = vmatprep.subr.mxu0 0.0
    %4446 = vmatpush1.msra.mxu0 0.0
    %4447 = vmatprep.subr.mxu0 0.0
    %4448 = vmatpush1.msra.mxu0 0.0
    %4449 = vmatprep.subr.mxu0 0.0
    %4450 = vmatpush1.msra.mxu0 0.0
    %4451 = vmatprep.subr.mxu0 0.0
    %4452 = vmatpush1.msra.mxu0 0.0
    %4453 = vmatprep.subr.mxu0 0.0
    %4454 = vmatpush1.msra.mxu0 0.0
    %4455 = vmatprep.subr.mxu0 0.0
    %4456 = vmatpush1.msra.mxu0 0.0
    %4457 = vmatprep.subr.mxu0 0.0
    %4458 = vmatpush1.msra.mxu0 0.0
    %4459 = vmatprep.subr.mxu0 %v4077
    %4460 = vmatpush1.msra.mxu0 %v4075
    %4461 = vmatprep.subr.mxu0 %v4073
    %4462 = vmatpush1.msra.mxu0 %v4071
    %4463 = vmatprep.subr.mxu0 %v4067
    %4464 = vmatpush1.msra.mxu0 %v4065
    %4465 = vmatprep.subr.mxu0 %v4063
    %4466 = vmatpush1.msra.mxu0 %v4061
    %4467 = vmatprep.subr.mxu0 0.0
    %4468 = vmatpush2.msra.mxu0 0.0
    %4469 = vmatprep.subr.mxu0 0.0
    %4470 = vmatpush2.msra.mxu0 0.0
    %4471 = vmatprep.subr.mxu0 0.0
    %4472 = vmatpush2.msra.mxu0 0.0
    %4473 = vmatprep.subr.mxu0 0.0
    %4474 = vmatpush2.msra.mxu0 0.0
    %4475 = vmatprep.subr.mxu0 0.0
    %4476 = vmatpush2.msra.mxu0 0.0
    %4477 = vmatprep.subr.mxu0 0.0
    %4478 = vmatpush2.msra.mxu0 0.0
    %4479 = vmatprep.subr.mxu0 0.0
    %4480 = vmatpush2.msra.mxu0 0.0
    %4481 = vmatprep.subr.mxu0 0.0
    %4482 = vmatpush2.msra.mxu0 0.0
    %4483 = vmatprep.subr.mxu0 0.0
    %4484 = vmatpush2.msra.mxu0 0.0
    %4485 = vmatprep.subr.mxu0 0.0
    %4486 = vmatpush2.msra.mxu0 0.0
    %4487 = vmatprep.subr.mxu0 0.0
    %4488 = vmatpush2.msra.mxu0 0.0
    %4489 = vmatprep.subr.mxu0 0.0
    %4490 = vmatpush2.msra.mxu0 0.0
    %4491 = vmatprep.subr.mxu0 0.0
    %4492 = vmatpush2.msra.mxu0 0.0
    %4493 = vmatprep.subr.mxu0 0.0
    %4494 = vmatpush2.msra.mxu0 0.0
    %4495 = vmatprep.subr.mxu0 0.0
    %4496 = vmatpush2.msra.mxu0 0.0
    %4497 = vmatprep.subr.mxu0 0.0
    %4498 = vmatpush2.msra.mxu0 0.0
    %4499 = vmatprep.mubr.f32.mxu0 0.0
    %4500 = vmatmul.mubr.f32.gmra.mxu0 %v4308
    %v4501 = vpop.f32.mrf.mxu0
    %v4502 = vadd.f32 0.0, %v4501
    %v4503 = vpop.f32.mrf.mxu0
    %v4504 = vadd.f32 0.0, %v4503
    %4505 = vmatprep.mubr.f32.mxu0 0.0
    %4506 = vmatmul.mubr.f32.gmra.mxu0 %v4311
    %v4507 = vpop.f32.mrf.mxu0
    %v4508 = vadd.f32 0.0, %v4507
    %v4509 = vpop.f32.mrf.mxu0
    %v4510 = vadd.f32 0.0, %v4509
    %4511 = vmatprep.mubr.f32.mxu0 0.0
    %4512 = vmatmul.mubr.f32.gmra.mxu0 %v4314
    %v4513 = vpop.f32.mrf.mxu0
    %v4514 = vadd.f32 0.0, %v4513
    %v4515 = vpop.f32.mrf.mxu0
    %v4516 = vadd.f32 0.0, %v4515
    %4517 = vmatprep.mubr.f32.mxu0 0.0
    %4518 = vmatmul.mubr.f32.gmra.mxu0 %v4317
    %v4519 = vpop.f32.mrf.mxu0
    %v4520 = vadd.f32 0.0, %v4519
    %v4521 = vpop.f32.mrf.mxu0
    %v4522 = vadd.f32 0.0, %v4521
    %4523 = vmatprep.mubr.f32.mxu0 0.0
    %4524 = vmatmul.mubr.f32.gmra.mxu0 %v4320
    %v4525 = vpop.f32.mrf.mxu0
    %v4526 = vadd.f32 0.0, %v4525
    %v4527 = vpop.f32.mrf.mxu0
    %v4528 = vadd.f32 0.0, %v4527
    %4529 = vmatprep.mubr.f32.mxu0 0.0
    %4530 = vmatmul.mubr.f32.gmra.mxu0 %v4323
    %v4531 = vpop.f32.mrf.mxu0
    %v4532 = vadd.f32 0.0, %v4531
    %v4533 = vpop.f32.mrf.mxu0
    %v4534 = vadd.f32 0.0, %v4533
    %4535 = vmatprep.mubr.f32.mxu0 0.0
    %4536 = vmatmul.mubr.f32.gmra.mxu0 %v4326
    %v4537 = vpop.f32.mrf.mxu0
    %v4538 = vadd.f32 0.0, %v4537
    %v4539 = vpop.f32.mrf.mxu0
    %v4540 = vadd.f32 0.0, %v4539
    %4541 = vdwg.mxu0
    %v4543 = vsel %vm4306, %v4291, 0
    %v4546 = vsel %vm4306, %v4292, 0
    %v4549 = vsel %vm4306, %v4293, 0
    %v4552 = vsel %vm4306, %v4294, 0
    %v4555 = vsel %vm4306, %v4295, 0
    %v4558 = vsel %vm4306, %v4296, 0
    %v4561 = vsel %vm4306, %v4297, 0
    %4563 = vmatprep.subr.mxu0 0.0
    %4564 = vmatpush1.msra.mxu0 0.0
    %4565 = vmatprep.subr.mxu0 0.0
    %4566 = vmatpush1.msra.mxu0 0.0
    %4567 = vmatprep.subr.mxu0 0.0
    %4568 = vmatpush1.msra.mxu0 0.0
    %4569 = vmatprep.subr.mxu0 0.0
    %4570 = vmatpush1.msra.mxu0 0.0
    %4571 = vmatprep.subr.mxu0 0.0
    %4572 = vmatpush1.msra.mxu0 0.0
    %4573 = vmatprep.subr.mxu0 0.0
    %4574 = vmatpush1.msra.mxu0 0.0
    %4575 = vmatprep.subr.mxu0 0.0
    %4576 = vmatpush1.msra.mxu0 0.0
    %4577 = vmatprep.subr.mxu0 0.0
    %4578 = vmatpush1.msra.mxu0 0.0
    %4579 = vmatprep.subr.mxu0 0.0
    %4580 = vmatpush1.msra.mxu0 0.0
    %4581 = vmatprep.subr.mxu0 0.0
    %4582 = vmatpush1.msra.mxu0 0.0
    %4583 = vmatprep.subr.mxu0 0.0
    %4584 = vmatpush1.msra.mxu0 0.0
    %4585 = vmatprep.subr.mxu0 0.0
    %4586 = vmatpush1.msra.mxu0 0.0
    %4587 = vmatprep.subr.mxu0 %v3759
    %4588 = vmatpush1.msra.mxu0 %v3757
    %4589 = vmatprep.subr.mxu0 %v3755
    %4590 = vmatpush1.msra.mxu0 %v3753
    %4591 = vmatprep.subr.mxu0 %v3749
    %4592 = vmatpush1.msra.mxu0 %v3747
    %4593 = vmatprep.subr.mxu0 %v3745
    %4594 = vmatpush1.msra.mxu0 %v3743
    %4595 = vmatprep.subr.mxu0 0.0
    %4596 = vmatpush2.msra.mxu0 0.0
    %4597 = vmatprep.subr.mxu0 0.0
    %4598 = vmatpush2.msra.mxu0 0.0
    %4599 = vmatprep.subr.mxu0 0.0
    %4600 = vmatpush2.msra.mxu0 0.0
    %4601 = vmatprep.subr.mxu0 0.0
    %4602 = vmatpush2.msra.mxu0 0.0
    %4603 = vmatprep.subr.mxu0 0.0
    %4604 = vmatpush2.msra.mxu0 0.0
    %4605 = vmatprep.subr.mxu0 0.0
    %4606 = vmatpush2.msra.mxu0 0.0
    %4607 = vmatprep.subr.mxu0 0.0
    %4608 = vmatpush2.msra.mxu0 0.0
    %4609 = vmatprep.subr.mxu0 0.0
    %4610 = vmatpush2.msra.mxu0 0.0
    %4611 = vmatprep.subr.mxu0 0.0
    %4612 = vmatpush2.msra.mxu0 0.0
    %4613 = vmatprep.subr.mxu0 0.0
    %4614 = vmatpush2.msra.mxu0 0.0
    %4615 = vmatprep.subr.mxu0 0.0
    %4616 = vmatpush2.msra.mxu0 0.0
    %4617 = vmatprep.subr.mxu0 0.0
    %4618 = vmatpush2.msra.mxu0 0.0
    %4619 = vmatprep.subr.mxu0 0.0
    %4620 = vmatpush2.msra.mxu0 0.0
    %4621 = vmatprep.subr.mxu0 0.0
    %4622 = vmatpush2.msra.mxu0 0.0
    %4623 = vmatprep.subr.mxu0 0.0
    %4624 = vmatpush2.msra.mxu0 0.0
    %4625 = vmatprep.subr.mxu0 0.0
    %4626 = vmatpush2.msra.mxu0 0.0
    %4627 = vmatprep.mubr.f32.mxu0 0.0
    %4628 = vmatmul.mubr.f32.gmra.mxu0 %v4543
    %v4629 = vpop.f32.mrf.mxu0
    %v4630 = vadd.f32 %v4395, %v4629
    %v4631 = vpop.f32.mrf.mxu0
    %v4632 = vadd.f32 %v4397, %v4631
    %4633 = vmatprep.mubr.f32.mxu0 0.0
    %4634 = vmatmul.mubr.f32.gmra.mxu0 %v4546
    %v4635 = vpop.f32.mrf.mxu0
    %v4636 = vadd.f32 %v4401, %v4635
    %v4637 = vpop.f32.mrf.mxu0
    %v4638 = vadd.f32 %v4403, %v4637
    %4639 = vmatprep.mubr.f32.mxu0 0.0
    %4640 = vmatmul.mubr.f32.gmra.mxu0 %v4549
    %v4641 = vpop.f32.mrf.mxu0
    %v4642 = vadd.f32 %v4407, %v4641
    %v4643 = vpop.f32.mrf.mxu0
    %v4644 = vadd.f32 %v4409, %v4643
    %4645 = vmatprep.mubr.f32.mxu0 0.0
    %4646 = vmatmul.mubr.f32.gmra.mxu0 %v4552
    %v4647 = vpop.f32.mrf.mxu0
    %v4648 = vadd.f32 %v4413, %v4647
    %v4649 = vpop.f32.mrf.mxu0
    %v4650 = vadd.f32 %v4415, %v4649
    %4651 = vmatprep.mubr.f32.mxu0 0.0
    %4652 = vmatmul.mubr.f32.gmra.mxu0 %v4555
    %v4653 = vpop.f32.mrf.mxu0
    %v4654 = vadd.f32 %v4419, %v4653
    %v4655 = vpop.f32.mrf.mxu0
    %v4656 = vadd.f32 %v4421, %v4655
    %4657 = vmatprep.mubr.f32.mxu0 0.0
    %4658 = vmatmul.mubr.f32.gmra.mxu0 %v4558
    %v4659 = vpop.f32.mrf.mxu0
    %v4660 = vadd.f32 %v4425, %v4659
    %v4661 = vpop.f32.mrf.mxu0
    %v4662 = vadd.f32 %v4427, %v4661
    %4663 = vmatprep.mubr.f32.mxu0 0.0
    %4664 = vmatmul.mubr.f32.gmra.mxu0 %v4561
    %v4665 = vpop.f32.mrf.mxu0
    %v4666 = vadd.f32 %v4431, %v4665
    %v4667 = vpop.f32.mrf.mxu0
    %v4668 = vadd.f32 %v4433, %v4667
    %4669 = vdwg.mxu0
    %4670 = vmatprep.subr.mxu0 0.0
    %4671 = vmatpush1.msra.mxu0 0.0
    %4672 = vmatprep.subr.mxu0 0.0
    %4673 = vmatpush1.msra.mxu0 0.0
    %4674 = vmatprep.subr.mxu0 0.0
    %4675 = vmatpush1.msra.mxu0 0.0
    %4676 = vmatprep.subr.mxu0 0.0
    %4677 = vmatpush1.msra.mxu0 0.0
    %4678 = vmatprep.subr.mxu0 0.0
    %4679 = vmatpush1.msra.mxu0 0.0
    %4680 = vmatprep.subr.mxu0 0.0
    %4681 = vmatpush1.msra.mxu0 0.0
    %4682 = vmatprep.subr.mxu0 0.0
    %4683 = vmatpush1.msra.mxu0 0.0
    %4684 = vmatprep.subr.mxu0 0.0
    %4685 = vmatpush1.msra.mxu0 0.0
    %4686 = vmatprep.subr.mxu0 0.0
    %4687 = vmatpush1.msra.mxu0 0.0
    %4688 = vmatprep.subr.mxu0 0.0
    %4689 = vmatpush1.msra.mxu0 0.0
    %4690 = vmatprep.subr.mxu0 0.0
    %4691 = vmatpush1.msra.mxu0 0.0
    %4692 = vmatprep.subr.mxu0 0.0
    %4693 = vmatpush1.msra.mxu0 0.0
    %4694 = vmatprep.subr.mxu0 %v3865
    %4695 = vmatpush1.msra.mxu0 %v3863
    %4696 = vmatprep.subr.mxu0 %v3861
    %4697 = vmatpush1.msra.mxu0 %v3859
    %4698 = vmatprep.subr.mxu0 %v3855
    %4699 = vmatpush1.msra.mxu0 %v3853
    %4700 = vmatprep.subr.mxu0 %v3851
    %4701 = vmatpush1.msra.mxu0 %v3849
    %4702 = vmatprep.subr.mxu0 0.0
    %4703 = vmatpush2.msra.mxu0 0.0
    %4704 = vmatprep.subr.mxu0 0.0
    %4705 = vmatpush2.msra.mxu0 0.0
    %4706 = vmatprep.subr.mxu0 0.0
    %4707 = vmatpush2.msra.mxu0 0.0
    %4708 = vmatprep.subr.mxu0 0.0
    %4709 = vmatpush2.msra.mxu0 0.0
    %4710 = vmatprep.subr.mxu0 0.0
    %4711 = vmatpush2.msra.mxu0 0.0
    %4712 = vmatprep.subr.mxu0 0.0
    %4713 = vmatpush2.msra.mxu0 0.0
    %4714 = vmatprep.subr.mxu0 0.0
    %4715 = vmatpush2.msra.mxu0 0.0
    %4716 = vmatprep.subr.mxu0 0.0
    %4717 = vmatpush2.msra.mxu0 0.0
    %4718 = vmatprep.subr.mxu0 0.0
    %4719 = vmatpush2.msra.mxu0 0.0
    %4720 = vmatprep.subr.mxu0 0.0
    %4721 = vmatpush2.msra.mxu0 0.0
    %4722 = vmatprep.subr.mxu0 0.0
    %4723 = vmatpush2.msra.mxu0 0.0
    %4724 = vmatprep.subr.mxu0 0.0
    %4725 = vmatpush2.msra.mxu0 0.0
    %4726 = vmatprep.subr.mxu0 0.0
    %4727 = vmatpush2.msra.mxu0 0.0
    %4728 = vmatprep.subr.mxu0 0.0
    %4729 = vmatpush2.msra.mxu0 0.0
    %4730 = vmatprep.subr.mxu0 0.0
    %4731 = vmatpush2.msra.mxu0 0.0
    %4732 = vmatprep.subr.mxu0 0.0
    %4733 = vmatpush2.msra.mxu0 0.0
    %4734 = vmatprep.mubr.f32.mxu0 0.0
    %4735 = vmatmul.mubr.f32.gmra.mxu0 %v4543
    %v4736 = vpop.f32.mrf.mxu0
    %v4737 = vadd.f32 %v4502, %v4736
    %v4738 = vpop.f32.mrf.mxu0
    %v4739 = vadd.f32 %v4504, %v4738
    %4740 = vmatprep.mubr.f32.mxu0 0.0
    %4741 = vmatmul.mubr.f32.gmra.mxu0 %v4546
    %v4742 = vpop.f32.mrf.mxu0
    %v4743 = vadd.f32 %v4508, %v4742
    %v4744 = vpop.f32.mrf.mxu0
    %v4745 = vadd.f32 %v4510, %v4744
    %4746 = vmatprep.mubr.f32.mxu0 0.0
    %4747 = vmatmul.mubr.f32.gmra.mxu0 %v4549
    %v4748 = vpop.f32.mrf.mxu0
    %v4749 = vadd.f32 %v4514, %v4748
    %v4750 = vpop.f32.mrf.mxu0
    %v4751 = vadd.f32 %v4516, %v4750
    %4752 = vmatprep.mubr.f32.mxu0 0.0
    %4753 = vmatmul.mubr.f32.gmra.mxu0 %v4552
    %v4754 = vpop.f32.mrf.mxu0
    %v4755 = vadd.f32 %v4520, %v4754
    %v4756 = vpop.f32.mrf.mxu0
    %v4757 = vadd.f32 %v4522, %v4756
    %4758 = vmatprep.mubr.f32.mxu0 0.0
    %4759 = vmatmul.mubr.f32.gmra.mxu0 %v4555
    %v4760 = vpop.f32.mrf.mxu0
    %v4761 = vadd.f32 %v4526, %v4760
    %v4762 = vpop.f32.mrf.mxu0
    %v4763 = vadd.f32 %v4528, %v4762
    %4764 = vmatprep.mubr.f32.mxu0 0.0
    %4765 = vmatmul.mubr.f32.gmra.mxu0 %v4558
    %v4766 = vpop.f32.mrf.mxu0
    %v4767 = vadd.f32 %v4532, %v4766
    %v4768 = vpop.f32.mrf.mxu0
    %v4769 = vadd.f32 %v4534, %v4768
    %4770 = vmatprep.mubr.f32.mxu0 0.0
    %4771 = vmatmul.mubr.f32.gmra.mxu0 %v4561
    %v4772 = vpop.f32.mrf.mxu0
    %v4773 = vadd.f32 %v4538, %v4772
    %v4774 = vpop.f32.mrf.mxu0
    %v4775 = vadd.f32 %v4540, %v4774
    %4776 = vdwg.mxu0
    %s4777 = scalar_lea.vmem %s3, 112
    %v4778 = vld [vmem:[%s4777] sm:$0xff]
    %v4779 = vld [vmem:[%s4777 + $0x8] sm:$0xff]
    %v4780 = vld [vmem:[%s4777 + $0x10] sm:$0xff]
    %v4781 = vld [vmem:[%s4777 + $0x18] sm:$0xff]
    %v4782 = vld [vmem:[%s4777 + $0x20] sm:$0xff]
    %v4783 = vld [vmem:[%s4777 + $0x28] sm:$0xff]
    %v4784 = vld [vmem:[%s4777 + $0x30] sm:$0xff]
    %v4786 = vsel %vm4306, %v4778, 0
    %v4789 = vsel %vm4306, %v4779, 0
    %v4792 = vsel %vm4306, %v4780, 0
    %v4795 = vsel %vm4306, %v4781, 0
    %v4798 = vsel %vm4306, %v4782, 0
    %v4801 = vsel %vm4306, %v4783, 0
    %v4804 = vsel %vm4306, %v4784, 0
    %4806 = vmatprep.subr.mxu0 0.0
    %4807 = vmatpush1.msra.mxu0 0.0
    %4808 = vmatprep.subr.mxu0 0.0
    %4809 = vmatpush1.msra.mxu0 0.0
    %4810 = vmatprep.subr.mxu0 0.0
    %4811 = vmatpush1.msra.mxu0 0.0
    %4812 = vmatprep.subr.mxu0 0.0
    %4813 = vmatpush1.msra.mxu0 0.0
    %4814 = vmatprep.subr.mxu0 0.0
    %4815 = vmatpush1.msra.mxu0 0.0
    %4816 = vmatprep.subr.mxu0 0.0
    %4817 = vmatpush1.msra.mxu0 0.0
    %4818 = vmatprep.subr.mxu0 0.0
    %4819 = vmatpush1.msra.mxu0 0.0
    %4820 = vmatprep.subr.mxu0 0.0
    %4821 = vmatpush1.msra.mxu0 0.0
    %4822 = vmatprep.subr.mxu0 0.0
    %4823 = vmatpush1.msra.mxu0 0.0
    %4824 = vmatprep.subr.mxu0 0.0
    %4825 = vmatpush1.msra.mxu0 0.0
    %4826 = vmatprep.subr.mxu0 0.0
    %4827 = vmatpush1.msra.mxu0 0.0
    %4828 = vmatprep.subr.mxu0 0.0
    %4829 = vmatpush1.msra.mxu0 0.0
    %4830 = vmatprep.subr.mxu0 %v4183
    %4831 = vmatpush1.msra.mxu0 %v4181
    %4832 = vmatprep.subr.mxu0 %v4179
    %4833 = vmatpush1.msra.mxu0 %v4177
    %4834 = vmatprep.subr.mxu0 %v4173
    %4835 = vmatpush1.msra.mxu0 %v4171
    %4836 = vmatprep.subr.mxu0 %v4169
    %4837 = vmatpush1.msra.mxu0 %v4167
    %4838 = vmatprep.subr.mxu0 0.0
    %4839 = vmatpush2.msra.mxu0 0.0
    %4840 = vmatprep.subr.mxu0 0.0
    %4841 = vmatpush2.msra.mxu0 0.0
    %4842 = vmatprep.subr.mxu0 0.0
    %4843 = vmatpush2.msra.mxu0 0.0
    %4844 = vmatprep.subr.mxu0 0.0
    %4845 = vmatpush2.msra.mxu0 0.0
    %4846 = vmatprep.subr.mxu0 0.0
    %4847 = vmatpush2.msra.mxu0 0.0
    %4848 = vmatprep.subr.mxu0 0.0
    %4849 = vmatpush2.msra.mxu0 0.0
    %4850 = vmatprep.subr.mxu0 0.0
    %4851 = vmatpush2.msra.mxu0 0.0
    %4852 = vmatprep.subr.mxu0 0.0
    %4853 = vmatpush2.msra.mxu0 0.0
    %4854 = vmatprep.subr.mxu0 0.0
    %4855 = vmatpush2.msra.mxu0 0.0
    %4856 = vmatprep.subr.mxu0 0.0
    %4857 = vmatpush2.msra.mxu0 0.0
    %4858 = vmatprep.subr.mxu0 0.0
    %4859 = vmatpush2.msra.mxu0 0.0
    %4860 = vmatprep.subr.mxu0 0.0
    %4861 = vmatpush2.msra.mxu0 0.0
    %4862 = vmatprep.subr.mxu0 0.0
    %4863 = vmatpush2.msra.mxu0 0.0
    %4864 = vmatprep.subr.mxu0 0.0
    %4865 = vmatpush2.msra.mxu0 0.0
    %4866 = vmatprep.subr.mxu0 0.0
    %4867 = vmatpush2.msra.mxu0 0.0
    %4868 = vmatprep.subr.mxu0 0.0
    %4869 = vmatpush2.msra.mxu0 0.0
    %4870 = vmatprep.mubr.f32.mxu0 0.0
    %4871 = vmatmul.mubr.f32.gmra.mxu0 %v4786
    %v4872 = vpop.f32.mrf.mxu0
    %v4873 = vadd.f32 0.0, %v4872
    %v4874 = vpop.f32.mrf.mxu0
    %v4875 = vadd.f32 0.0, %v4874
    %4876 = vmatprep.mubr.f32.mxu0 0.0
    %4877 = vmatmul.mubr.f32.gmra.mxu0 %v4789
    %v4878 = vpop.f32.mrf.mxu0
    %v4879 = vadd.f32 0.0, %v4878
    %v4880 = vpop.f32.mrf.mxu0
    %v4881 = vadd.f32 0.0, %v4880
    %4882 = vmatprep.mubr.f32.mxu0 0.0
    %4883 = vmatmul.mubr.f32.gmra.mxu0 %v4792
    %v4884 = vpop.f32.mrf.mxu0
    %v4885 = vadd.f32 0.0, %v4884
    %v4886 = vpop.f32.mrf.mxu0
    %v4887 = vadd.f32 0.0, %v4886
    %4888 = vmatprep.mubr.f32.mxu0 0.0
    %4889 = vmatmul.mubr.f32.gmra.mxu0 %v4795
    %v4890 = vpop.f32.mrf.mxu0
    %v4891 = vadd.f32 0.0, %v4890
    %v4892 = vpop.f32.mrf.mxu0
    %v4893 = vadd.f32 0.0, %v4892
    %4894 = vmatprep.mubr.f32.mxu0 0.0
    %4895 = vmatmul.mubr.f32.gmra.mxu0 %v4798
    %v4896 = vpop.f32.mrf.mxu0
    %v4897 = vadd.f32 0.0, %v4896
    %v4898 = vpop.f32.mrf.mxu0
    %v4899 = vadd.f32 0.0, %v4898
    %4900 = vmatprep.mubr.f32.mxu0 0.0
    %4901 = vmatmul.mubr.f32.gmra.mxu0 %v4801
    %v4902 = vpop.f32.mrf.mxu0
    %v4903 = vadd.f32 0.0, %v4902
    %v4904 = vpop.f32.mrf.mxu0
    %v4905 = vadd.f32 0.0, %v4904
    %4906 = vmatprep.mubr.f32.mxu0 0.0
    %4907 = vmatmul.mubr.f32.gmra.mxu0 %v4804
    %v4908 = vpop.f32.mrf.mxu0
    %v4909 = vadd.f32 0.0, %v4908
    %v4910 = vpop.f32.mrf.mxu0
    %v4911 = vadd.f32 0.0, %v4910
    %4912 = vdwg.mxu0
    %4913 = vmatprep.subr.mxu0 0.0
    %4914 = vmatpush1.msra.mxu0 0.0
    %4915 = vmatprep.subr.mxu0 0.0
    %4916 = vmatpush1.msra.mxu0 0.0
    %4917 = vmatprep.subr.mxu0 0.0
    %4918 = vmatpush1.msra.mxu0 0.0
    %4919 = vmatprep.subr.mxu0 0.0
    %4920 = vmatpush1.msra.mxu0 0.0
    %4921 = vmatprep.subr.mxu0 0.0
    %4922 = vmatpush1.msra.mxu0 0.0
    %4923 = vmatprep.subr.mxu0 0.0
    %4924 = vmatpush1.msra.mxu0 0.0
    %4925 = vmatprep.subr.mxu0 0.0
    %4926 = vmatpush1.msra.mxu0 0.0
    %4927 = vmatprep.subr.mxu0 0.0
    %4928 = vmatpush1.msra.mxu0 0.0
    %4929 = vmatprep.subr.mxu0 0.0
    %4930 = vmatpush1.msra.mxu0 0.0
    %4931 = vmatprep.subr.mxu0 0.0
    %4932 = vmatpush1.msra.mxu0 0.0
    %4933 = vmatprep.subr.mxu0 0.0
    %4934 = vmatpush1.msra.mxu0 0.0
    %4935 = vmatprep.subr.mxu0 0.0
    %4936 = vmatpush1.msra.mxu0 0.0
    %4937 = vmatprep.subr.mxu0 %v4289
    %4938 = vmatpush1.msra.mxu0 %v4287
    %4939 = vmatprep.subr.mxu0 %v4285
    %4940 = vmatpush1.msra.mxu0 %v4283
    %4941 = vmatprep.subr.mxu0 %v4279
    %4942 = vmatpush1.msra.mxu0 %v4277
    %4943 = vmatprep.subr.mxu0 %v4275
    %4944 = vmatpush1.msra.mxu0 %v4273
    %4945 = vmatprep.subr.mxu0 0.0
    %4946 = vmatpush2.msra.mxu0 0.0
    %4947 = vmatprep.subr.mxu0 0.0
    %4948 = vmatpush2.msra.mxu0 0.0
    %4949 = vmatprep.subr.mxu0 0.0
    %4950 = vmatpush2.msra.mxu0 0.0
    %4951 = vmatprep.subr.mxu0 0.0
    %4952 = vmatpush2.msra.mxu0 0.0
    %4953 = vmatprep.subr.mxu0 0.0
    %4954 = vmatpush2.msra.mxu0 0.0
    %4955 = vmatprep.subr.mxu0 0.0
    %4956 = vmatpush2.msra.mxu0 0.0
    %4957 = vmatprep.subr.mxu0 0.0
    %4958 = vmatpush2.msra.mxu0 0.0
    %4959 = vmatprep.subr.mxu0 0.0
    %4960 = vmatpush2.msra.mxu0 0.0
    %4961 = vmatprep.subr.mxu0 0.0
    %4962 = vmatpush2.msra.mxu0 0.0
    %4963 = vmatprep.subr.mxu0 0.0
    %4964 = vmatpush2.msra.mxu0 0.0
    %4965 = vmatprep.subr.mxu0 0.0
    %4966 = vmatpush2.msra.mxu0 0.0
    %4967 = vmatprep.subr.mxu0 0.0
    %4968 = vmatpush2.msra.mxu0 0.0
    %4969 = vmatprep.subr.mxu0 0.0
    %4970 = vmatpush2.msra.mxu0 0.0
    %4971 = vmatprep.subr.mxu0 0.0
    %4972 = vmatpush2.msra.mxu0 0.0
    %4973 = vmatprep.subr.mxu0 0.0
    %4974 = vmatpush2.msra.mxu0 0.0
    %4975 = vmatprep.subr.mxu0 0.0
    %4976 = vmatpush2.msra.mxu0 0.0
    %4977 = vmatprep.mubr.f32.mxu0 0.0
    %4978 = vmatmul.mubr.f32.gmra.mxu0 %v4786
    %v4979 = vpop.f32.mrf.mxu0
    %v4980 = vadd.f32 0.0, %v4979
    %v4981 = vpop.f32.mrf.mxu0
    %v4982 = vadd.f32 0.0, %v4981
    %4983 = vmatprep.mubr.f32.mxu0 0.0
    %4984 = vmatmul.mubr.f32.gmra.mxu0 %v4789
    %v4985 = vpop.f32.mrf.mxu0
    %v4986 = vadd.f32 0.0, %v4985
    %v4987 = vpop.f32.mrf.mxu0
    %v4988 = vadd.f32 0.0, %v4987
    %4989 = vmatprep.mubr.f32.mxu0 0.0
    %4990 = vmatmul.mubr.f32.gmra.mxu0 %v4792
    %v4991 = vpop.f32.mrf.mxu0
    %v4992 = vadd.f32 0.0, %v4991
    %v4993 = vpop.f32.mrf.mxu0
    %v4994 = vadd.f32 0.0, %v4993
    %4995 = vmatprep.mubr.f32.mxu0 0.0
    %4996 = vmatmul.mubr.f32.gmra.mxu0 %v4795
    %v4997 = vpop.f32.mrf.mxu0
    %v4998 = vadd.f32 0.0, %v4997
    %v4999 = vpop.f32.mrf.mxu0
    %v5000 = vadd.f32 0.0, %v4999
    %5001 = vmatprep.mubr.f32.mxu0 0.0
    %5002 = vmatmul.mubr.f32.gmra.mxu0 %v4798
    %v5003 = vpop.f32.mrf.mxu0
    %v5004 = vadd.f32 0.0, %v5003
    %v5005 = vpop.f32.mrf.mxu0
    %v5006 = vadd.f32 0.0, %v5005
    %5007 = vmatprep.mubr.f32.mxu0 0.0
    %5008 = vmatmul.mubr.f32.gmra.mxu0 %v4801
    %v5009 = vpop.f32.mrf.mxu0
    %v5010 = vadd.f32 0.0, %v5009
    %v5011 = vpop.f32.mrf.mxu0
    %v5012 = vadd.f32 0.0, %v5011
    %5013 = vmatprep.mubr.f32.mxu0 0.0
    %5014 = vmatmul.mubr.f32.gmra.mxu0 %v4804
    %v5015 = vpop.f32.mrf.mxu0
    %v5016 = vadd.f32 0.0, %v5015
    %v5017 = vpop.f32.mrf.mxu0
    %v5018 = vadd.f32 0.0, %v5017
    %5019 = vdwg.mxu0
    %v5020 = vadd.f32 %v4630, %v4873
    %v5021 = vadd.f32 %v4632, %v4875
    %v5022 = vadd.f32 %v4737, %v4980
    %v5023 = vadd.f32 %v4739, %v4982
    %v5024 = vadd.f32 %v4636, %v4879
    %v5025 = vadd.f32 %v4638, %v4881
    %v5026 = vadd.f32 %v4743, %v4986
    %v5027 = vadd.f32 %v4745, %v4988
    %v5028 = vadd.f32 %v4642, %v4885
    %v5029 = vadd.f32 %v4644, %v4887
    %v5030 = vadd.f32 %v4749, %v4992
    %v5031 = vadd.f32 %v4751, %v4994
    %v5032 = vadd.f32 %v4648, %v4891
    %v5033 = vadd.f32 %v4650, %v4893
    %v5034 = vadd.f32 %v4755, %v4998
    %v5035 = vadd.f32 %v4757, %v5000
    %v5036 = vadd.f32 %v4654, %v4897
    %v5037 = vadd.f32 %v4656, %v4899
    %v5038 = vadd.f32 %v4761, %v5004
    %v5039 = vadd.f32 %v4763, %v5006
    %v5040 = vadd.f32 %v4660, %v4903
    %v5041 = vadd.f32 %v4662, %v4905
    %v5042 = vadd.f32 %v4767, %v5010
    %v5043 = vadd.f32 %v4769, %v5012
    %v5044 = vadd.f32 %v4666, %v4909
    %v5045 = vadd.f32 %v4668, %v4911
    %v5046 = vadd.f32 %v4773, %v5016
    %v5047 = vadd.f32 %v4775, %v5018
    %v5048 = vmax.f32 %v5020, 0.0
    %v5049 = vmax.f32 %v5021, 0.0
    %v5050 = vmax.f32 %v5022, 0.0
    %v5051 = vmax.f32 %v5023, 0.0
    %v5052 = vmax.f32 %v5024, 0.0
    %v5053 = vmax.f32 %v5025, 0.0
    %v5054 = vmax.f32 %v5026, 0.0
    %v5055 = vmax.f32 %v5027, 0.0
    %v5056 = vmax.f32 %v5028, 0.0
    %v5057 = vmax.f32 %v5029, 0.0
    %v5058 = vmax.f32 %v5030, 0.0
    %v5059 = vmax.f32 %v5031, 0.0
    %v5060 = vmax.f32 %v5032, 0.0
    %v5061 = vmax.f32 %v5033, 0.0
    %v5062 = vmax.f32 %v5034, 0.0
    %v5063 = vmax.f32 %v5035, 0.0
    %v5064 = vmax.f32 %v5036, 0.0
    %v5065 = vmax.f32 %v5037, 0.0
    %v5066 = vmax.f32 %v5038, 0.0
    %v5067 = vmax.f32 %v5039, 0.0
    %v5068 = vmax.f32 %v5040, 0.0
    %v5069 = vmax.f32 %v5041, 0.0
    %v5070 = vmax.f32 %v5042, 0.0
    %v5071 = vmax.f32 %v5043, 0.0
    %v5072 = vmax.f32 %v5044, 0.0
    %v5073 = vmax.f32 %v5045, 0.0
    %v5074 = vmax.f32 %v5046, 0.0
    %v5075 = vmax.f32 %v5047, 0.0
    %v5076 = vpack.c.bf16 %v5052, %v5048
    %v5077 = vpack.c.bf16 %v5053, %v5049
    %v5078 = vpack.c.bf16 %v5054, %v5050
    %v5079 = vpack.c.bf16 %v5055, %v5051
    %v5080 = vpack.c.bf16 %v5060, %v5056
    %v5081 = vpack.c.bf16 %v5061, %v5057
    %v5082 = vpack.c.bf16 %v5062, %v5058
    %v5083 = vpack.c.bf16 %v5063, %v5059
    %v5084 = vpack.c.bf16 %v5068, %v5064
    %v5085 = vpack.c.bf16 %v5069, %v5065
    %v5086 = vpack.c.bf16 %v5070, %v5066
    %v5087 = vpack.c.bf16 %v5071, %v5067
    %v5088 = vpack.c.bf16 %v5072, %v5072
    %v5089 = vpack.c.bf16 %v5073, %v5073
    %v5090 = vpack.c.bf16 %v5074, %v5074
    %v5091 = vpack.c.bf16 %v5075, %v5075
    %v5092 = vld [vmem:[#allocation8] sm:$0xff]
    %v5093 = vld [vmem:[#allocation8 + $0x8] sm:$0xff]
    %v5094 = vld [vmem:[#allocation8 + $0x10] sm:$0xff]
    %v5095 = vld [vmem:[#allocation8 + $0x18] sm:$0xff]
    %v5096 = vld [vmem:[#allocation8 + $0x20] sm:$0xff]
    %v5097 = vld [vmem:[#allocation8 + $0x28] sm:$0xff]
    %v5098 = vld [vmem:[#allocation8 + $0x30] sm:$0xff]
    %v5099 = vld [vmem:[#allocation8 + $0x38] sm:$0xff]
    %v5100 = vld [vmem:[#allocation8 + $0x40] sm:$0xff]
    %v5101 = vld [vmem:[#allocation8 + $0x48] sm:$0xff]
    %v5102 = vld [vmem:[#allocation8 + $0x50] sm:$0xff]
    %v5103 = vld [vmem:[#allocation8 + $0x58] sm:$0xff]
    %v5104 = vld [vmem:[#allocation8 + $0x60] sm:$0xff]
    %v5105 = vld [vmem:[#allocation8 + $0x68] sm:$0xff]
    %v5106 = vld [vmem:[#allocation8 + $0x70] sm:$0xff]
    %v5107 = vld [vmem:[#allocation8 + $0x78] sm:$0xff]
    %v5108 = vld [vmem:[#allocation8 + $0x80] sm:$0xff]
    %v5109 = vld [vmem:[#allocation8 + $0x88] sm:$0xff]
    %v5110 = vld [vmem:[#allocation8 + $0x90] sm:$0xff]
    %v5111 = vld [vmem:[#allocation8 + $0x98] sm:$0xff]
    %v5112 = vld [vmem:[#allocation8 + $0xa0] sm:$0xff]
    %v5113 = vld [vmem:[#allocation8 + $0xa8] sm:$0xff]
    %v5114 = vld [vmem:[#allocation8 + $0xb0] sm:$0xff]
    %v5115 = vld [vmem:[#allocation8 + $0xb8] sm:$0xff]
    %v5116 = vld [vmem:[#allocation8 + $0xc0] sm:$0xff]
    %v5117 = vld [vmem:[#allocation8 + $0xc8] sm:$0xff]
    %v5118 = vld [vmem:[#allocation8 + $0xd0] sm:$0xff]
    %v5119 = vld [vmem:[#allocation8 + $0xd8] sm:$0xff]
    %v5120 = vld [vmem:[#allocation8 + $0xe0] sm:$0xff]
    %v5121 = vld [vmem:[#allocation8 + $0xe8] sm:$0xff]
    %v5122 = vld [vmem:[#allocation8 + $0xf0] sm:$0xff]
    %v5123 = vld [vmem:[#allocation8 + $0xf8] sm:$0xff]
    %v5124 = vld [vmem:[#allocation8 + $0x100] sm:$0xff]
    %v5125 = vld [vmem:[#allocation8 + $0x108] sm:$0xff]
    %v5126 = vld [vmem:[#allocation8 + $0x110] sm:$0xff]
    %v5127 = vld [vmem:[#allocation8 + $0x118] sm:$0xff]
    %v5128 = vld [vmem:[#allocation8 + $0x120] sm:$0xff]
    %v5129 = vld [vmem:[#allocation8 + $0x128] sm:$0xff]
    %v5130 = vld [vmem:[#allocation8 + $0x130] sm:$0xff]
    %v5131 = vld [vmem:[#allocation8 + $0x138] sm:$0xff]
    %v5132 = vld [vmem:[#allocation8 + $0x140] sm:$0xff]
    %v5133 = vld [vmem:[#allocation8 + $0x148] sm:$0xff]
    %v5134 = vld [vmem:[#allocation8 + $0x150] sm:$0xff]
    %v5135 = vld [vmem:[#allocation8 + $0x158] sm:$0xff]
    %v5136 = vld [vmem:[#allocation8 + $0x160] sm:$0xff]
    %v5137 = vld [vmem:[#allocation8 + $0x168] sm:$0xff]
    %v5138 = vld [vmem:[#allocation8 + $0x170] sm:$0xff]
    %v5139 = vld [vmem:[#allocation8 + $0x178] sm:$0xff]
    %v5140 = vld [vmem:[#allocation8 + $0x180] sm:$0xff]
    %v5141 = vld [vmem:[#allocation8 + $0x188] sm:$0xff]
    %v5142 = vld [vmem:[#allocation8 + $0x190] sm:$0xff]
    %v5143 = vld [vmem:[#allocation8 + $0x198] sm:$0xff]
    %v5144 = vld [vmem:[#allocation8 + $0x1a0] sm:$0xff]
    %v5145 = vld [vmem:[#allocation8 + $0x1a8] sm:$0xff]
    %v5146 = vld [vmem:[#allocation8 + $0x1b0] sm:$0xff]
    %v5147 = vld [vmem:[#allocation8 + $0x1b8] sm:$0xff]
    %v5148 = vld [vmem:[#allocation8 + $0x1c0] sm:$0xff]
    %v5149 = vld [vmem:[#allocation8 + $0x1c8] sm:$0xff]
    %v5150 = vld [vmem:[#allocation8 + $0x1d0] sm:$0xff]
    %v5151 = vld [vmem:[#allocation8 + $0x1d8] sm:$0xff]
    %v5152 = vld [vmem:[#allocation8 + $0x1e0] sm:$0xff]
    %v5153 = vld [vmem:[#allocation8 + $0x1e8] sm:$0xff]
    %v5154 = vld [vmem:[#allocation8 + $0x1f0] sm:$0xff]
    %v5155 = vld [vmem:[#allocation8 + $0x1f8] sm:$0xff]
    %v5156 = vld [vmem:[#allocation8 + $0x200] sm:$0xff]
    %v5157 = vld [vmem:[#allocation8 + $0x208] sm:$0xff]
    %v5158 = vld [vmem:[#allocation8 + $0x210] sm:$0xff]
    %v5159 = vld [vmem:[#allocation8 + $0x218] sm:$0xff]
    %v5160 = vld [vmem:[#allocation8 + $0x220] sm:$0xff]
    %v5161 = vld [vmem:[#allocation8 + $0x228] sm:$0xff]
    %v5162 = vld [vmem:[#allocation8 + $0x230] sm:$0xff]
    %v5163 = vld [vmem:[#allocation8 + $0x238] sm:$0xff]
    %v5164 = vld [vmem:[#allocation8 + $0x240] sm:$0xff]
    %v5165 = vld [vmem:[#allocation8 + $0x248] sm:$0xff]
    %v5166 = vld [vmem:[#allocation8 + $0x250] sm:$0xff]
    %v5167 = vld [vmem:[#allocation8 + $0x258] sm:$0xff]
    %v5168 = vld [vmem:[#allocation8 + $0x260] sm:$0xff]
    %v5169 = vld [vmem:[#allocation8 + $0x268] sm:$0xff]
    %v5170 = vld [vmem:[#allocation8 + $0x270] sm:$0xff]
    %v5171 = vld [vmem:[#allocation8 + $0x278] sm:$0xff]
    %v5172 = vld [vmem:[#allocation8 + $0x280] sm:$0xff]
    %v5173 = vld [vmem:[#allocation8 + $0x288] sm:$0xff]
    %v5174 = vld [vmem:[#allocation8 + $0x290] sm:$0xff]
    %v5175 = vld [vmem:[#allocation8 + $0x298] sm:$0xff]
    %v5176 = vld [vmem:[#allocation8 + $0x2a0] sm:$0xff]
    %v5177 = vld [vmem:[#allocation8 + $0x2a8] sm:$0xff]
    %v5178 = vld [vmem:[#allocation8 + $0x2b0] sm:$0xff]
    %v5179 = vld [vmem:[#allocation8 + $0x2b8] sm:$0xff]
    %v5180 = vld [vmem:[#allocation8 + $0x2c0] sm:$0xff]
    %v5181 = vld [vmem:[#allocation8 + $0x2c8] sm:$0xff]
    %v5182 = vld [vmem:[#allocation8 + $0x2d0] sm:$0xff]
    %v5183 = vld [vmem:[#allocation8 + $0x2d8] sm:$0xff]
    %v5184 = vld [vmem:[#allocation8 + $0x2e0] sm:$0xff]
    %v5185 = vld [vmem:[#allocation8 + $0x2e8] sm:$0xff]
    %v5186 = vld [vmem:[#allocation8 + $0x2f0] sm:$0xff]
    %v5187 = vld [vmem:[#allocation8 + $0x2f8] sm:$0xff]
    %v5188 = vld [vmem:[#allocation8 + $0x300] sm:$0xff]
    %v5189 = vld [vmem:[#allocation8 + $0x308] sm:$0xff]
    %v5190 = vld [vmem:[#allocation8 + $0x310] sm:$0xff]
    %v5191 = vld [vmem:[#allocation8 + $0x318] sm:$0xff]
    %v5192 = vld [vmem:[#allocation8 + $0x320] sm:$0xff]
    %v5193 = vld [vmem:[#allocation8 + $0x328] sm:$0xff]
    %v5194 = vld [vmem:[#allocation8 + $0x330] sm:$0xff]
    %v5195 = vld [vmem:[#allocation8 + $0x338] sm:$0xff]
    %v5196 = vld [vmem:[#allocation8 + $0x340] sm:$0xff]
    %v5197 = vld [vmem:[#allocation8 + $0x348] sm:$0xff]
    %v5198 = vld [vmem:[#allocation8 + $0x350] sm:$0xff]
    %v5199 = vld [vmem:[#allocation8 + $0x358] sm:$0xff]
    %v5200 = vld [vmem:[#allocation8 + $0x360] sm:$0xff]
    %v5201 = vld [vmem:[#allocation8 + $0x368] sm:$0xff]
    %v5202 = vld [vmem:[#allocation8 + $0x370] sm:$0xff]
    %v5203 = vld [vmem:[#allocation8 + $0x378] sm:$0xff]
    %v5204 = vld [vmem:[#allocation8 + $0x380] sm:$0xff]
    %v5205 = vld [vmem:[#allocation8 + $0x388] sm:$0xff]
    %v5206 = vld [vmem:[#allocation8 + $0x390] sm:$0xff]
    %v5207 = vld [vmem:[#allocation8 + $0x398] sm:$0xff]
    %v5208 = vld [vmem:[#allocation8 + $0x3a0] sm:$0xff]
    %v5209 = vld [vmem:[#allocation8 + $0x3a8] sm:$0xff]
    %v5210 = vld [vmem:[#allocation8 + $0x3b0] sm:$0xff]
    %v5211 = vld [vmem:[#allocation8 + $0x3b8] sm:$0xff]
    %v5212 = vld [vmem:[#allocation8 + $0x3c0] sm:$0xff]
    %v5213 = vld [vmem:[#allocation8 + $0x3c8] sm:$0xff]
    %v5214 = vld [vmem:[#allocation8 + $0x3d0] sm:$0xff]
    %v5215 = vld [vmem:[#allocation8 + $0x3d8] sm:$0xff]
    %v5216 = vld [vmem:[#allocation8 + $0x3e0] sm:$0xff]
    %v5217 = vld [vmem:[#allocation8 + $0x3e8] sm:$0xff]
    %v5218 = vld [vmem:[#allocation8 + $0x3f0] sm:$0xff]
    %v5219 = vld [vmem:[#allocation8 + $0x3f8] sm:$0xff]
    %v5220 = vld [vmem:[#allocation8 + $0x400] sm:$0xff]
    %v5221 = vld [vmem:[#allocation8 + $0x408] sm:$0xff]
    %v5222 = vld [vmem:[#allocation8 + $0x410] sm:$0xff]
    %v5223 = vld [vmem:[#allocation8 + $0x418] sm:$0xff]
    %v5224 = vld [vmem:[#allocation8 + $0x420] sm:$0xff]
    %v5225 = vld [vmem:[#allocation8 + $0x428] sm:$0xff]
    %v5226 = vld [vmem:[#allocation8 + $0x430] sm:$0xff]
    %v5227 = vld [vmem:[#allocation8 + $0x438] sm:$0xff]
    %v5228 = vld [vmem:[#allocation8 + $0x440] sm:$0xff]
    %v5229 = vld [vmem:[#allocation8 + $0x448] sm:$0xff]
    %v5230 = vld [vmem:[#allocation8 + $0x450] sm:$0xff]
    %v5231 = vld [vmem:[#allocation8 + $0x458] sm:$0xff]
    %v5232 = vld [vmem:[#allocation8 + $0x460] sm:$0xff]
    %v5233 = vld [vmem:[#allocation8 + $0x468] sm:$0xff]
    %v5234 = vld [vmem:[#allocation8 + $0x470] sm:$0xff]
    %v5235 = vld [vmem:[#allocation8 + $0x478] sm:$0xff]
    %v5236 = vld [vmem:[#allocation8 + $0x480] sm:$0xff]
    %v5237 = vld [vmem:[#allocation8 + $0x488] sm:$0xff]
    %v5238 = vld [vmem:[#allocation8 + $0x490] sm:$0xff]
    %v5239 = vld [vmem:[#allocation8 + $0x498] sm:$0xff]
    %v5240 = vld [vmem:[#allocation8 + $0x4a0] sm:$0xff]
    %v5241 = vld [vmem:[#allocation8 + $0x4a8] sm:$0xff]
    %v5242 = vld [vmem:[#allocation8 + $0x4b0] sm:$0xff]
    %v5243 = vld [vmem:[#allocation8 + $0x4b8] sm:$0xff]
    %v5244 = vld [vmem:[#allocation8 + $0x4c0] sm:$0xff]
    %v5245 = vld [vmem:[#allocation8 + $0x4c8] sm:$0xff]
    %v5246 = vld [vmem:[#allocation8 + $0x4d0] sm:$0xff]
    %v5247 = vld [vmem:[#allocation8 + $0x4d8] sm:$0xff]
    %v5248 = vld [vmem:[#allocation8 + $0x4e0] sm:$0xff]
    %v5249 = vld [vmem:[#allocation8 + $0x4e8] sm:$0xff]
    %v5250 = vld [vmem:[#allocation8 + $0x4f0] sm:$0xff]
    %v5251 = vld [vmem:[#allocation8 + $0x4f8] sm:$0xff]
    %v5252 = vld [vmem:[#allocation8 + $0x500] sm:$0xff]
    %v5253 = vld [vmem:[#allocation8 + $0x508] sm:$0xff]
    %v5254 = vld [vmem:[#allocation8 + $0x510] sm:$0xff]
    %v5255 = vld [vmem:[#allocation8 + $0x518] sm:$0xff]
    %v5256 = vld [vmem:[#allocation8 + $0x520] sm:$0xff]
    %v5257 = vld [vmem:[#allocation8 + $0x528] sm:$0xff]
    %v5258 = vld [vmem:[#allocation8 + $0x530] sm:$0xff]
    %v5259 = vld [vmem:[#allocation8 + $0x538] sm:$0xff]
    %v5260 = vld [vmem:[#allocation8 + $0x540] sm:$0xff]
    %v5261 = vld [vmem:[#allocation8 + $0x548] sm:$0xff]
    %v5262 = vld [vmem:[#allocation8 + $0x550] sm:$0xff]
    %v5263 = vld [vmem:[#allocation8 + $0x558] sm:$0xff]
    %v5264 = vld [vmem:[#allocation8 + $0x560] sm:$0xff]
    %v5265 = vld [vmem:[#allocation8 + $0x568] sm:$0xff]
    %v5266 = vld [vmem:[#allocation8 + $0x570] sm:$0xff]
    %v5267 = vld [vmem:[#allocation8 + $0x578] sm:$0xff]
    %v5268 = vld [vmem:[#allocation8 + $0x580] sm:$0xff]
    %v5269 = vld [vmem:[#allocation8 + $0x588] sm:$0xff]
    %v5270 = vld [vmem:[#allocation8 + $0x590] sm:$0xff]
    %v5271 = vld [vmem:[#allocation8 + $0x598] sm:$0xff]
    %v5272 = vld [vmem:[#allocation8 + $0x5a0] sm:$0xff]
    %v5273 = vld [vmem:[#allocation8 + $0x5a8] sm:$0xff]
    %v5274 = vld [vmem:[#allocation8 + $0x5b0] sm:$0xff]
    %v5275 = vld [vmem:[#allocation8 + $0x5b8] sm:$0xff]
    %v5276 = vld [vmem:[#allocation8 + $0x5c0] sm:$0xff]
    %v5277 = vld [vmem:[#allocation8 + $0x5c8] sm:$0xff]
    %v5278 = vld [vmem:[#allocation8 + $0x5d0] sm:$0xff]
    %v5279 = vld [vmem:[#allocation8 + $0x5d8] sm:$0xff]
    %v5280 = vld [vmem:[#allocation8 + $0x5e0] sm:$0xff]
    %v5281 = vld [vmem:[#allocation8 + $0x5e8] sm:$0xff]
    %v5282 = vld [vmem:[#allocation8 + $0x5f0] sm:$0xff]
    %v5283 = vld [vmem:[#allocation8 + $0x5f8] sm:$0xff]
    %v5284 = vld [vmem:[#allocation8 + $0x600] sm:$0xff]
    %v5285 = vld [vmem:[#allocation8 + $0x608] sm:$0xff]
    %v5286 = vld [vmem:[#allocation8 + $0x610] sm:$0xff]
    %v5287 = vld [vmem:[#allocation8 + $0x618] sm:$0xff]
    %v5288 = vld [vmem:[#allocation8 + $0x620] sm:$0xff]
    %v5289 = vld [vmem:[#allocation8 + $0x628] sm:$0xff]
    %v5290 = vld [vmem:[#allocation8 + $0x630] sm:$0xff]
    %v5291 = vld [vmem:[#allocation8 + $0x638] sm:$0xff]
    %v5292 = vld [vmem:[#allocation8 + $0x640] sm:$0xff]
    %v5293 = vld [vmem:[#allocation8 + $0x648] sm:$0xff]
    %v5294 = vld [vmem:[#allocation8 + $0x650] sm:$0xff]
    %v5295 = vld [vmem:[#allocation8 + $0x658] sm:$0xff]
    %v5296 = vld [vmem:[#allocation8 + $0x660] sm:$0xff]
    %v5297 = vld [vmem:[#allocation8 + $0x668] sm:$0xff]
    %v5298 = vld [vmem:[#allocation8 + $0x670] sm:$0xff]
    %v5299 = vld [vmem:[#allocation8 + $0x678] sm:$0xff]
    %v5300 = vld [vmem:[#allocation8 + $0x680] sm:$0xff]
    %v5301 = vld [vmem:[#allocation8 + $0x688] sm:$0xff]
    %v5302 = vld [vmem:[#allocation8 + $0x690] sm:$0xff]
    %v5303 = vld [vmem:[#allocation8 + $0x698] sm:$0xff]
    %v5304 = vld [vmem:[#allocation8 + $0x6a0] sm:$0xff]
    %v5305 = vld [vmem:[#allocation8 + $0x6a8] sm:$0xff]
    %v5306 = vld [vmem:[#allocation8 + $0x6b0] sm:$0xff]
    %v5307 = vld [vmem:[#allocation8 + $0x6b8] sm:$0xff]
    %v5308 = vld [vmem:[#allocation8 + $0x6c0] sm:$0xff]
    %v5309 = vld [vmem:[#allocation8 + $0x6c8] sm:$0xff]
    %v5310 = vld [vmem:[#allocation8 + $0x6d0] sm:$0xff]
    %v5311 = vld [vmem:[#allocation8 + $0x6d8] sm:$0xff]
    %v5312 = vld [vmem:[#allocation8 + $0x6e0] sm:$0xff]
    %v5313 = vld [vmem:[#allocation8 + $0x6e8] sm:$0xff]
    %v5314 = vld [vmem:[#allocation8 + $0x6f0] sm:$0xff]
    %v5315 = vld [vmem:[#allocation8 + $0x6f8] sm:$0xff]
    %v5316 = vld [vmem:[#allocation8 + $0x700] sm:$0xff]
    %v5317 = vld [vmem:[#allocation8 + $0x708] sm:$0xff]
    %v5318 = vld [vmem:[#allocation8 + $0x710] sm:$0xff]
    %v5319 = vld [vmem:[#allocation8 + $0x718] sm:$0xff]
    %v5320 = vld [vmem:[#allocation8 + $0x720] sm:$0xff]
    %v5321 = vld [vmem:[#allocation8 + $0x728] sm:$0xff]
    %v5322 = vld [vmem:[#allocation8 + $0x730] sm:$0xff]
    %v5323 = vld [vmem:[#allocation8 + $0x738] sm:$0xff]
    %v5324 = vld [vmem:[#allocation8 + $0x740] sm:$0xff]
    %v5325 = vld [vmem:[#allocation8 + $0x748] sm:$0xff]
    %v5326 = vld [vmem:[#allocation8 + $0x750] sm:$0xff]
    %v5327 = vld [vmem:[#allocation8 + $0x758] sm:$0xff]
    %v5328 = vld [vmem:[#allocation8 + $0x760] sm:$0xff]
    %v5329 = vld [vmem:[#allocation8 + $0x768] sm:$0xff]
    %v5330 = vld [vmem:[#allocation8 + $0x770] sm:$0xff]
    %v5331 = vld [vmem:[#allocation8 + $0x778] sm:$0xff]
    %v5332 = vld [vmem:[#allocation8 + $0x780] sm:$0xff]
    %v5333 = vld [vmem:[#allocation8 + $0x788] sm:$0xff]
    %v5334 = vld [vmem:[#allocation8 + $0x790] sm:$0xff]
    %v5335 = vld [vmem:[#allocation8 + $0x798] sm:$0xff]
    %v5336 = vld [vmem:[#allocation8 + $0x7a0] sm:$0xff]
    %v5337 = vld [vmem:[#allocation8 + $0x7a8] sm:$0xff]
    %v5338 = vld [vmem:[#allocation8 + $0x7b0] sm:$0xff]
    %v5339 = vld [vmem:[#allocation8 + $0x7b8] sm:$0xff]
    %v5340 = vld [vmem:[#allocation8 + $0x7c0] sm:$0xff]
    %v5341 = vld [vmem:[#allocation8 + $0x7c8] sm:$0xff]
    %v5342 = vld [vmem:[#allocation8 + $0x7d0] sm:$0xff]
    %v5343 = vld [vmem:[#allocation8 + $0x7d8] sm:$0xff]
    %v5344 = vld [vmem:[#allocation8 + $0x7e0] sm:$0xff]
    %v5345 = vld [vmem:[#allocation8 + $0x7e8] sm:$0xff]
    %v5346 = vld [vmem:[#allocation8 + $0x7f0] sm:$0xff]
    %v5347 = vld [vmem:[#allocation8 + $0x7f8] sm:$0xff]
    %v5348 = vld [vmem:[#allocation8 + $0x800] sm:$0xff]
    %v5349 = vld [vmem:[#allocation8 + $0x808] sm:$0xff]
    %v5350 = vld [vmem:[#allocation8 + $0x810] sm:$0xff]
    %v5351 = vld [vmem:[#allocation8 + $0x818] sm:$0xff]
    %v5352 = vld [vmem:[#allocation8 + $0x820] sm:$0xff]
    %v5353 = vld [vmem:[#allocation8 + $0x828] sm:$0xff]
    %v5354 = vld [vmem:[#allocation8 + $0x830] sm:$0xff]
    %v5355 = vld [vmem:[#allocation8 + $0x838] sm:$0xff]
    %v5356 = vld [vmem:[#allocation8 + $0x840] sm:$0xff]
    %v5357 = vld [vmem:[#allocation8 + $0x848] sm:$0xff]
    %v5358 = vld [vmem:[#allocation8 + $0x850] sm:$0xff]
    %v5359 = vld [vmem:[#allocation8 + $0x858] sm:$0xff]
    %v5360 = vld [vmem:[#allocation8 + $0x860] sm:$0xff]
    %v5361 = vld [vmem:[#allocation8 + $0x868] sm:$0xff]
    %v5362 = vld [vmem:[#allocation8 + $0x870] sm:$0xff]
    %v5363 = vld [vmem:[#allocation8 + $0x878] sm:$0xff]
    %v5364 = vld [vmem:[#allocation8 + $0x880] sm:$0xff]
    %v5365 = vld [vmem:[#allocation8 + $0x888] sm:$0xff]
    %v5366 = vld [vmem:[#allocation8 + $0x890] sm:$0xff]
    %v5367 = vld [vmem:[#allocation8 + $0x898] sm:$0xff]
    %v5368 = vld [vmem:[#allocation8 + $0x8a0] sm:$0xff]
    %v5369 = vld [vmem:[#allocation8 + $0x8a8] sm:$0xff]
    %v5370 = vld [vmem:[#allocation8 + $0x8b0] sm:$0xff]
    %v5371 = vld [vmem:[#allocation8 + $0x8b8] sm:$0xff]
    %v5372 = vld [vmem:[#allocation8 + $0x8c0] sm:$0xff]
    %v5373 = vld [vmem:[#allocation8 + $0x8c8] sm:$0xff]
    %v5374 = vld [vmem:[#allocation8 + $0x8d0] sm:$0xff]
    %v5375 = vld [vmem:[#allocation8 + $0x8d8] sm:$0xff]
    %v5376 = vld [vmem:[#allocation8 + $0x8e0] sm:$0xff]
    %v5377 = vld [vmem:[#allocation8 + $0x8e8] sm:$0xff]
    %v5378 = vld [vmem:[#allocation8 + $0x8f0] sm:$0xff]
    %v5379 = vld [vmem:[#allocation8 + $0x8f8] sm:$0xff]
    %v5380 = vld [vmem:[#allocation8 + $0x900] sm:$0xff]
    %v5381 = vld [vmem:[#allocation8 + $0x908] sm:$0xff]
    %v5382 = vld [vmem:[#allocation8 + $0x910] sm:$0xff]
    %v5383 = vld [vmem:[#allocation8 + $0x918] sm:$0xff]
    %v5384 = vld [vmem:[#allocation8 + $0x920] sm:$0xff]
    %v5385 = vld [vmem:[#allocation8 + $0x928] sm:$0xff]
    %v5386 = vld [vmem:[#allocation8 + $0x930] sm:$0xff]
    %v5387 = vld [vmem:[#allocation8 + $0x938] sm:$0xff]
    %v5388 = vld [vmem:[#allocation8 + $0x940] sm:$0xff]
    %v5389 = vld [vmem:[#allocation8 + $0x948] sm:$0xff]
    %v5390 = vld [vmem:[#allocation8 + $0x950] sm:$0xff]
    %v5391 = vld [vmem:[#allocation8 + $0x958] sm:$0xff]
    %v5392 = vld [vmem:[#allocation8 + $0x960] sm:$0xff]
    %v5393 = vld [vmem:[#allocation8 + $0x968] sm:$0xff]
    %v5394 = vld [vmem:[#allocation8 + $0x970] sm:$0xff]
    %v5395 = vld [vmem:[#allocation8 + $0x978] sm:$0xff]
    %v5396 = vld [vmem:[#allocation8 + $0x980] sm:$0xff]
    %v5397 = vld [vmem:[#allocation8 + $0x988] sm:$0xff]
    %v5398 = vld [vmem:[#allocation8 + $0x990] sm:$0xff]
    %v5399 = vld [vmem:[#allocation8 + $0x998] sm:$0xff]
    %v5400 = vld [vmem:[#allocation8 + $0x9a0] sm:$0xff]
    %v5401 = vld [vmem:[#allocation8 + $0x9a8] sm:$0xff]
    %v5402 = vld [vmem:[#allocation8 + $0x9b0] sm:$0xff]
    %v5403 = vld [vmem:[#allocation8 + $0x9b8] sm:$0xff]
    %v5404 = vld [vmem:[#allocation8 + $0x9c0] sm:$0xff]
    %v5405 = vld [vmem:[#allocation8 + $0x9c8] sm:$0xff]
    %v5406 = vld [vmem:[#allocation8 + $0x9d0] sm:$0xff]
    %v5407 = vld [vmem:[#allocation8 + $0x9d8] sm:$0xff]
    %v5408 = vld [vmem:[#allocation8 + $0x9e0] sm:$0xff]
    %v5409 = vld [vmem:[#allocation8 + $0x9e8] sm:$0xff]
    %v5410 = vld [vmem:[#allocation8 + $0x9f0] sm:$0xff]
    %v5411 = vld [vmem:[#allocation8 + $0x9f8] sm:$0xff]
    %v5412 = vld [vmem:[#allocation8 + $0xa00] sm:$0xff]
    %v5413 = vld [vmem:[#allocation8 + $0xa08] sm:$0xff]
    %v5414 = vld [vmem:[#allocation8 + $0xa10] sm:$0xff]
    %v5415 = vld [vmem:[#allocation8 + $0xa18] sm:$0xff]
    %v5416 = vld [vmem:[#allocation8 + $0xa20] sm:$0xff]
    %v5417 = vld [vmem:[#allocation8 + $0xa28] sm:$0xff]
    %v5418 = vld [vmem:[#allocation8 + $0xa30] sm:$0xff]
    %v5419 = vld [vmem:[#allocation8 + $0xa38] sm:$0xff]
    %v5420 = vld [vmem:[#allocation8 + $0xa40] sm:$0xff]
    %v5421 = vld [vmem:[#allocation8 + $0xa48] sm:$0xff]
    %v5422 = vld [vmem:[#allocation8 + $0xa50] sm:$0xff]
    %v5423 = vld [vmem:[#allocation8 + $0xa58] sm:$0xff]
    %v5424 = vld [vmem:[#allocation8 + $0xa60] sm:$0xff]
    %v5425 = vld [vmem:[#allocation8 + $0xa68] sm:$0xff]
    %v5426 = vld [vmem:[#allocation8 + $0xa70] sm:$0xff]
    %v5427 = vld [vmem:[#allocation8 + $0xa78] sm:$0xff]
    %v5428 = vld [vmem:[#allocation8 + $0xa80] sm:$0xff]
    %v5429 = vld [vmem:[#allocation8 + $0xa88] sm:$0xff]
    %v5430 = vld [vmem:[#allocation8 + $0xa90] sm:$0xff]
    %v5431 = vld [vmem:[#allocation8 + $0xa98] sm:$0xff]
    %v5432 = vld [vmem:[#allocation8 + $0xaa0] sm:$0xff]
    %v5433 = vld [vmem:[#allocation8 + $0xaa8] sm:$0xff]
    %v5434 = vld [vmem:[#allocation8 + $0xab0] sm:$0xff]
    %v5435 = vld [vmem:[#allocation8 + $0xab8] sm:$0xff]
    %v5436 = vld [vmem:[#allocation8 + $0xac0] sm:$0xff]
    %v5437 = vld [vmem:[#allocation8 + $0xac8] sm:$0xff]
    %v5438 = vld [vmem:[#allocation8 + $0xad0] sm:$0xff]
    %v5439 = vld [vmem:[#allocation8 + $0xad8] sm:$0xff]
    %v5440 = vld [vmem:[#allocation8 + $0xae0] sm:$0xff]
    %v5441 = vld [vmem:[#allocation8 + $0xae8] sm:$0xff]
    %v5442 = vld [vmem:[#allocation8 + $0xaf0] sm:$0xff]
    %v5443 = vld [vmem:[#allocation8 + $0xaf8] sm:$0xff]
    %v5444 = vld [vmem:[#allocation8 + $0xb00] sm:$0xff]
    %v5445 = vld [vmem:[#allocation8 + $0xb08] sm:$0xff]
    %v5446 = vld [vmem:[#allocation8 + $0xb10] sm:$0xff]
    %v5447 = vld [vmem:[#allocation8 + $0xb18] sm:$0xff]
    %v5448 = vld [vmem:[#allocation8 + $0xb20] sm:$0xff]
    %v5449 = vld [vmem:[#allocation8 + $0xb28] sm:$0xff]
    %v5450 = vld [vmem:[#allocation8 + $0xb30] sm:$0xff]
    %v5451 = vld [vmem:[#allocation8 + $0xb38] sm:$0xff]
    %v5452 = vld [vmem:[#allocation8 + $0xb40] sm:$0xff]
    %v5453 = vld [vmem:[#allocation8 + $0xb48] sm:$0xff]
    %v5454 = vld [vmem:[#allocation8 + $0xb50] sm:$0xff]
    %v5455 = vld [vmem:[#allocation8 + $0xb58] sm:$0xff]
    %v5456 = vld [vmem:[#allocation8 + $0xb60] sm:$0xff]
    %v5457 = vld [vmem:[#allocation8 + $0xb68] sm:$0xff]
    %v5458 = vld [vmem:[#allocation8 + $0xb70] sm:$0xff]
    %v5459 = vld [vmem:[#allocation8 + $0xb78] sm:$0xff]
    %v5460 = vld [vmem:[#allocation8 + $0xb80] sm:$0xff]
    %v5461 = vld [vmem:[#allocation8 + $0xb88] sm:$0xff]
    %v5462 = vld [vmem:[#allocation8 + $0xb90] sm:$0xff]
    %v5463 = vld [vmem:[#allocation8 + $0xb98] sm:$0xff]
    %v5464 = vld [vmem:[#allocation8 + $0xba0] sm:$0xff]
    %v5465 = vld [vmem:[#allocation8 + $0xba8] sm:$0xff]
    %v5466 = vld [vmem:[#allocation8 + $0xbb0] sm:$0xff]
    %v5467 = vld [vmem:[#allocation8 + $0xbb8] sm:$0xff]
    %v5468 = vld [vmem:[#allocation8 + $0xbc0] sm:$0xff]
    %v5469 = vld [vmem:[#allocation8 + $0xbc8] sm:$0xff]
    %v5470 = vld [vmem:[#allocation8 + $0xbd0] sm:$0xff]
    %v5471 = vld [vmem:[#allocation8 + $0xbd8] sm:$0xff]
    %v5472 = vld [vmem:[#allocation8 + $0xbe0] sm:$0xff]
    %v5473 = vld [vmem:[#allocation8 + $0xbe8] sm:$0xff]
    %v5474 = vld [vmem:[#allocation8 + $0xbf0] sm:$0xff]
    %v5475 = vld [vmem:[#allocation8 + $0xbf8] sm:$0xff]
    %v5476 = vld [vmem:[#allocation8 + $0xc00] sm:$0xff]
    %v5477 = vld [vmem:[#allocation8 + $0xc08] sm:$0xff]
    %v5478 = vld [vmem:[#allocation8 + $0xc10] sm:$0xff]
    %v5479 = vld [vmem:[#allocation8 + $0xc18] sm:$0xff]
    %v5480 = vld [vmem:[#allocation8 + $0xc20] sm:$0xff]
    %v5481 = vld [vmem:[#allocation8 + $0xc28] sm:$0xff]
    %v5482 = vld [vmem:[#allocation8 + $0xc30] sm:$0xff]
    %v5483 = vld [vmem:[#allocation8 + $0xc38] sm:$0xff]
    %v5484 = vld [vmem:[#allocation8 + $0xc40] sm:$0xff]
    %v5485 = vld [vmem:[#allocation8 + $0xc48] sm:$0xff]
    %v5486 = vld [vmem:[#allocation8 + $0xc50] sm:$0xff]
    %v5487 = vld [vmem:[#allocation8 + $0xc58] sm:$0xff]
    %v5488 = vld [vmem:[#allocation8 + $0xc60] sm:$0xff]
    %v5489 = vld [vmem:[#allocation8 + $0xc68] sm:$0xff]
    %v5490 = vld [vmem:[#allocation8 + $0xc70] sm:$0xff]
    %v5491 = vld [vmem:[#allocation8 + $0xc78] sm:$0xff]
    %v5492 = vld [vmem:[#allocation8 + $0xc80] sm:$0xff]
    %v5493 = vld [vmem:[#allocation8 + $0xc88] sm:$0xff]
    %v5494 = vld [vmem:[#allocation8 + $0xc90] sm:$0xff]
    %v5495 = vld [vmem:[#allocation8 + $0xc98] sm:$0xff]
    %v5496 = vld [vmem:[#allocation8 + $0xca0] sm:$0xff]
    %v5497 = vld [vmem:[#allocation8 + $0xca8] sm:$0xff]
    %v5498 = vld [vmem:[#allocation8 + $0xcb0] sm:$0xff]
    %v5499 = vld [vmem:[#allocation8 + $0xcb8] sm:$0xff]
    %v5500 = vld [vmem:[#allocation8 + $0xcc0] sm:$0xff]
    %v5501 = vld [vmem:[#allocation8 + $0xcc8] sm:$0xff]
    %v5502 = vld [vmem:[#allocation8 + $0xcd0] sm:$0xff]
    %v5503 = vld [vmem:[#allocation8 + $0xcd8] sm:$0xff]
    %v5504 = vld [vmem:[#allocation8 + $0xce0] sm:$0xff]
    %v5505 = vld [vmem:[#allocation8 + $0xce8] sm:$0xff]
    %v5506 = vld [vmem:[#allocation8 + $0xcf0] sm:$0xff]
    %v5507 = vld [vmem:[#allocation8 + $0xcf8] sm:$0xff]
    %v5508 = vld [vmem:[#allocation8 + $0xd00] sm:$0xff]
    %v5509 = vld [vmem:[#allocation8 + $0xd08] sm:$0xff]
    %v5510 = vld [vmem:[#allocation8 + $0xd10] sm:$0xff]
    %v5511 = vld [vmem:[#allocation8 + $0xd18] sm:$0xff]
    %v5512 = vld [vmem:[#allocation8 + $0xd20] sm:$0xff]
    %v5513 = vld [vmem:[#allocation8 + $0xd28] sm:$0xff]
    %v5514 = vld [vmem:[#allocation8 + $0xd30] sm:$0xff]
    %v5515 = vld [vmem:[#allocation8 + $0xd38] sm:$0xff]
    %v5516 = vld [vmem:[#allocation8 + $0xd40] sm:$0xff]
    %v5517 = vld [vmem:[#allocation8 + $0xd48] sm:$0xff]
    %v5518 = vld [vmem:[#allocation8 + $0xd50] sm:$0xff]
    %v5519 = vld [vmem:[#allocation8 + $0xd58] sm:$0xff]
    %v5520 = vld [vmem:[#allocation8 + $0xd60] sm:$0xff]
    %v5521 = vld [vmem:[#allocation8 + $0xd68] sm:$0xff]
    %v5522 = vld [vmem:[#allocation8 + $0xd70] sm:$0xff]
    %v5523 = vld [vmem:[#allocation8 + $0xd78] sm:$0xff]
    %v5524 = vld [vmem:[#allocation8 + $0xd80] sm:$0xff]
    %v5525 = vld [vmem:[#allocation8 + $0xd88] sm:$0xff]
    %v5526 = vld [vmem:[#allocation8 + $0xd90] sm:$0xff]
    %v5527 = vld [vmem:[#allocation8 + $0xd98] sm:$0xff]
    %v5528 = vld [vmem:[#allocation8 + $0xda0] sm:$0xff]
    %v5529 = vld [vmem:[#allocation8 + $0xda8] sm:$0xff]
    %v5530 = vld [vmem:[#allocation8 + $0xdb0] sm:$0xff]
    %v5531 = vld [vmem:[#allocation8 + $0xdb8] sm:$0xff]
    %v5532 = vld [vmem:[#allocation8 + $0xdc0] sm:$0xff]
    %v5533 = vld [vmem:[#allocation8 + $0xdc8] sm:$0xff]
    %v5534 = vld [vmem:[#allocation8 + $0xdd0] sm:$0xff]
    %v5535 = vld [vmem:[#allocation8 + $0xdd8] sm:$0xff]
    %v5536 = vld [vmem:[#allocation8 + $0xde0] sm:$0xff]
    %v5537 = vld [vmem:[#allocation8 + $0xde8] sm:$0xff]
    %v5538 = vld [vmem:[#allocation8 + $0xdf0] sm:$0xff]
    %v5539 = vld [vmem:[#allocation8 + $0xdf8] sm:$0xff]
    %v5540 = vld [vmem:[#allocation8 + $0xe00] sm:$0xff]
    %v5541 = vld [vmem:[#allocation8 + $0xe08] sm:$0xff]
    %v5542 = vld [vmem:[#allocation8 + $0xe10] sm:$0xff]
    %v5543 = vld [vmem:[#allocation8 + $0xe18] sm:$0xff]
    %v5544 = vld [vmem:[#allocation8 + $0xe20] sm:$0xff]
    %v5545 = vld [vmem:[#allocation8 + $0xe28] sm:$0xff]
    %v5546 = vld [vmem:[#allocation8 + $0xe30] sm:$0xff]
    %v5547 = vld [vmem:[#allocation8 + $0xe38] sm:$0xff]
    %v5548 = vld [vmem:[#allocation8 + $0xe40] sm:$0xff]
    %v5549 = vld [vmem:[#allocation8 + $0xe48] sm:$0xff]
    %v5550 = vld [vmem:[#allocation8 + $0xe50] sm:$0xff]
    %v5551 = vld [vmem:[#allocation8 + $0xe58] sm:$0xff]
    %v5552 = vld [vmem:[#allocation8 + $0xe60] sm:$0xff]
    %v5553 = vld [vmem:[#allocation8 + $0xe68] sm:$0xff]
    %v5554 = vld [vmem:[#allocation8 + $0xe70] sm:$0xff]
    %v5555 = vld [vmem:[#allocation8 + $0xe78] sm:$0xff]
    %v5556 = vld [vmem:[#allocation8 + $0xe80] sm:$0xff]
    %v5557 = vld [vmem:[#allocation8 + $0xe88] sm:$0xff]
    %v5558 = vld [vmem:[#allocation8 + $0xe90] sm:$0xff]
    %v5559 = vld [vmem:[#allocation8 + $0xe98] sm:$0xff]
    %v5560 = vld [vmem:[#allocation8 + $0xea0] sm:$0xff]
    %v5561 = vld [vmem:[#allocation8 + $0xea8] sm:$0xff]
    %v5562 = vld [vmem:[#allocation8 + $0xeb0] sm:$0xff]
    %v5563 = vld [vmem:[#allocation8 + $0xeb8] sm:$0xff]
    %v5564 = vld [vmem:[#allocation8 + $0xec0] sm:$0xff]
    %v5565 = vld [vmem:[#allocation8 + $0xec8] sm:$0xff]
    %v5566 = vld [vmem:[#allocation8 + $0xed0] sm:$0xff]
    %v5567 = vld [vmem:[#allocation8 + $0xed8] sm:$0xff]
    %v5568 = vld [vmem:[#allocation8 + $0xee0] sm:$0xff]
    %v5569 = vld [vmem:[#allocation8 + $0xee8] sm:$0xff]
    %v5570 = vld [vmem:[#allocation8 + $0xef0] sm:$0xff]
    %v5571 = vld [vmem:[#allocation8 + $0xef8] sm:$0xff]
    %v5572 = vld [vmem:[#allocation8 + $0xf00] sm:$0xff]
    %v5573 = vld [vmem:[#allocation8 + $0xf08] sm:$0xff]
    %v5574 = vld [vmem:[#allocation8 + $0xf10] sm:$0xff]
    %v5575 = vld [vmem:[#allocation8 + $0xf18] sm:$0xff]
    %v5576 = vld [vmem:[#allocation8 + $0xf20] sm:$0xff]
    %v5577 = vld [vmem:[#allocation8 + $0xf28] sm:$0xff]
    %v5578 = vld [vmem:[#allocation8 + $0xf30] sm:$0xff]
    %v5579 = vld [vmem:[#allocation8 + $0xf38] sm:$0xff]
    %v5580 = vld [vmem:[#allocation8 + $0xf40] sm:$0xff]
    %v5581 = vld [vmem:[#allocation8 + $0xf48] sm:$0xff]
    %v5582 = vld [vmem:[#allocation8 + $0xf50] sm:$0xff]
    %v5583 = vld [vmem:[#allocation8 + $0xf58] sm:$0xff]
    %v5584 = vld [vmem:[#allocation8 + $0xf60] sm:$0xff]
    %v5585 = vld [vmem:[#allocation8 + $0xf68] sm:$0xff]
    %v5586 = vld [vmem:[#allocation8 + $0xf70] sm:$0xff]
    %v5587 = vld [vmem:[#allocation8 + $0xf78] sm:$0xff]
    %v5588 = vld [vmem:[#allocation8 + $0xf80] sm:$0xff]
    %v5589 = vld [vmem:[#allocation8 + $0xf88] sm:$0xff]
    %v5590 = vld [vmem:[#allocation8 + $0xf90] sm:$0xff]
    %v5591 = vld [vmem:[#allocation8 + $0xf98] sm:$0xff]
    %v5592 = vld [vmem:[#allocation8 + $0xfa0] sm:$0xff]
    %v5593 = vld [vmem:[#allocation8 + $0xfa8] sm:$0xff]
    %v5594 = vld [vmem:[#allocation8 + $0xfb0] sm:$0xff]
    %v5595 = vld [vmem:[#allocation8 + $0xfb8] sm:$0xff]
    %v5596 = vld [vmem:[#allocation8 + $0xfc0] sm:$0xff]
    %v5597 = vld [vmem:[#allocation8 + $0xfc8] sm:$0xff]
    %v5598 = vld [vmem:[#allocation8 + $0xfd0] sm:$0xff]
    %v5599 = vld [vmem:[#allocation8 + $0xfd8] sm:$0xff]
    %v5600 = vld [vmem:[#allocation8 + $0xfe0] sm:$0xff]
    %v5601 = vld [vmem:[#allocation8 + $0xfe8] sm:$0xff]
    %v5602 = vld [vmem:[#allocation8 + $0xff0] sm:$0xff]
    %v5603 = vld [vmem:[#allocation8 + $0xff8] sm:$0xff]
    %v6116 = vunpack.c.l.b16 %v5092
    %v6117 = vunpack.c.h.b16 %v5092
    %v6118 = vunpack.c.l.b16 %v5093
    %v6119 = vunpack.c.h.b16 %v5093
    %v6120 = vunpack.c.l.b16 %v5094
    %v6121 = vunpack.c.h.b16 %v5094
    %v6122 = vunpack.c.l.b16 %v5095
    %v6123 = vunpack.c.h.b16 %v5095
    %v6124 = vunpack.c.l.b16 %v5096
    %v6125 = vunpack.c.h.b16 %v5096
    %v6126 = vunpack.c.l.b16 %v5097
    %v6127 = vunpack.c.h.b16 %v5097
    %v6128 = vunpack.c.l.b16 %v5098
    %v6129 = vunpack.c.h.b16 %v5098
    %v6130 = vunpack.c.l.b16 %v5099
    %v6131 = vunpack.c.h.b16 %v5099
    %v6132 = vunpack.c.l.b16 %v5100
    %v6133 = vunpack.c.h.b16 %v5100
    %v6134 = vunpack.c.l.b16 %v5101
    %v6135 = vunpack.c.h.b16 %v5101
    %v6136 = vunpack.c.l.b16 %v5102
    %v6137 = vunpack.c.h.b16 %v5102
    %v6138 = vunpack.c.l.b16 %v5103
    %v6139 = vunpack.c.h.b16 %v5103
    %v6140 = vunpack.c.l.b16 %v5104
    %v6141 = vunpack.c.h.b16 %v5104
    %v6142 = vunpack.c.l.b16 %v5105
    %v6143 = vunpack.c.h.b16 %v5105
    %v6144 = vunpack.c.l.b16 %v5106
    %v6145 = vunpack.c.h.b16 %v5106
    %v6146 = vunpack.c.l.b16 %v5107
    %v6147 = vunpack.c.h.b16 %v5107
    %v6148 = vunpack.c.l.b16 %v5108
    %v6149 = vunpack.c.h.b16 %v5108
    %v6150 = vunpack.c.l.b16 %v5109
    %v6151 = vunpack.c.h.b16 %v5109
    %v6152 = vunpack.c.l.b16 %v5110
    %v6153 = vunpack.c.h.b16 %v5110
    %v6154 = vunpack.c.l.b16 %v5111
    %v6155 = vunpack.c.h.b16 %v5111
    %v6156 = vunpack.c.l.b16 %v5112
    %v6157 = vunpack.c.h.b16 %v5112
    %v6158 = vunpack.c.l.b16 %v5113
    %v6159 = vunpack.c.h.b16 %v5113
    %v6160 = vunpack.c.l.b16 %v5114
    %v6161 = vunpack.c.h.b16 %v5114
    %v6162 = vunpack.c.l.b16 %v5115
    %v6163 = vunpack.c.h.b16 %v5115
    %v6164 = vunpack.c.l.b16 %v5116
    %v6165 = vunpack.c.h.b16 %v5116
    %v6166 = vunpack.c.l.b16 %v5117
    %v6167 = vunpack.c.h.b16 %v5117
    %v6168 = vunpack.c.l.b16 %v5118
    %v6169 = vunpack.c.h.b16 %v5118
    %v6170 = vunpack.c.l.b16 %v5119
    %v6171 = vunpack.c.h.b16 %v5119
    %v6172 = vunpack.c.l.b16 %v5120
    %v6173 = vunpack.c.h.b16 %v5120
    %v6174 = vunpack.c.l.b16 %v5121
    %v6175 = vunpack.c.h.b16 %v5121
    %v6176 = vunpack.c.l.b16 %v5122
    %v6177 = vunpack.c.h.b16 %v5122
    %v6178 = vunpack.c.l.b16 %v5123
    %v6179 = vunpack.c.h.b16 %v5123
    %v6180 = vunpack.c.l.b16 %v5124
    %v6181 = vunpack.c.h.b16 %v5124
    %v6182 = vunpack.c.l.b16 %v5125
    %v6183 = vunpack.c.h.b16 %v5125
    %v6184 = vunpack.c.l.b16 %v5126
    %v6185 = vunpack.c.h.b16 %v5126
    %v6186 = vunpack.c.l.b16 %v5127
    %v6187 = vunpack.c.h.b16 %v5127
    %v6188 = vunpack.c.l.b16 %v5128
    %v6189 = vunpack.c.h.b16 %v5128
    %v6190 = vunpack.c.l.b16 %v5129
    %v6191 = vunpack.c.h.b16 %v5129
    %v6192 = vunpack.c.l.b16 %v5130
    %v6193 = vunpack.c.h.b16 %v5130
    %v6194 = vunpack.c.l.b16 %v5131
    %v6195 = vunpack.c.h.b16 %v5131
    %v6196 = vunpack.c.l.b16 %v5132
    %v6197 = vunpack.c.h.b16 %v5132
    %v6198 = vunpack.c.l.b16 %v5133
    %v6199 = vunpack.c.h.b16 %v5133
    %v6200 = vunpack.c.l.b16 %v5134
    %v6201 = vunpack.c.h.b16 %v5134
    %v6202 = vunpack.c.l.b16 %v5135
    %v6203 = vunpack.c.h.b16 %v5135
    %v6204 = vunpack.c.l.b16 %v5136
    %v6205 = vunpack.c.h.b16 %v5136
    %v6206 = vunpack.c.l.b16 %v5137
    %v6207 = vunpack.c.h.b16 %v5137
    %v6208 = vunpack.c.l.b16 %v5138
    %v6209 = vunpack.c.h.b16 %v5138
    %v6210 = vunpack.c.l.b16 %v5139
    %v6211 = vunpack.c.h.b16 %v5139
    %v6212 = vunpack.c.l.b16 %v5140
    %v6213 = vunpack.c.h.b16 %v5140
    %v6214 = vunpack.c.l.b16 %v5141
    %v6215 = vunpack.c.h.b16 %v5141
    %v6216 = vunpack.c.l.b16 %v5142
    %v6217 = vunpack.c.h.b16 %v5142
    %v6218 = vunpack.c.l.b16 %v5143
    %v6219 = vunpack.c.h.b16 %v5143
    %v6220 = vunpack.c.l.b16 %v5144
    %v6221 = vunpack.c.h.b16 %v5144
    %v6222 = vunpack.c.l.b16 %v5145
    %v6223 = vunpack.c.h.b16 %v5145
    %v6224 = vunpack.c.l.b16 %v5146
    %v6225 = vunpack.c.h.b16 %v5146
    %v6226 = vunpack.c.l.b16 %v5147
    %v6227 = vunpack.c.h.b16 %v5147
    %v6228 = vunpack.c.l.b16 %v5148
    %v6229 = vunpack.c.h.b16 %v5148
    %v6230 = vunpack.c.l.b16 %v5149
    %v6231 = vunpack.c.h.b16 %v5149
    %v6232 = vunpack.c.l.b16 %v5150
    %v6233 = vunpack.c.h.b16 %v5150
    %v6234 = vunpack.c.l.b16 %v5151
    %v6235 = vunpack.c.h.b16 %v5151
    %v6236 = vunpack.c.l.b16 %v5152
    %v6237 = vunpack.c.h.b16 %v5152
    %v6238 = vunpack.c.l.b16 %v5153
    %v6239 = vunpack.c.h.b16 %v5153
    %v6240 = vunpack.c.l.b16 %v5154
    %v6241 = vunpack.c.h.b16 %v5154
    %v6242 = vunpack.c.l.b16 %v5155
    %v6243 = vunpack.c.h.b16 %v5155
    %v6244 = vunpack.c.l.b16 %v5156
    %v6245 = vunpack.c.h.b16 %v5156
    %v6246 = vunpack.c.l.b16 %v5157
    %v6247 = vunpack.c.h.b16 %v5157
    %v6248 = vunpack.c.l.b16 %v5158
    %v6249 = vunpack.c.h.b16 %v5158
    %v6250 = vunpack.c.l.b16 %v5159
    %v6251 = vunpack.c.h.b16 %v5159
    %v6252 = vunpack.c.l.b16 %v5160
    %v6253 = vunpack.c.h.b16 %v5160
    %v6254 = vunpack.c.l.b16 %v5161
    %v6255 = vunpack.c.h.b16 %v5161
    %v6256 = vunpack.c.l.b16 %v5162
    %v6257 = vunpack.c.h.b16 %v5162
    %v6258 = vunpack.c.l.b16 %v5163
    %v6259 = vunpack.c.h.b16 %v5163
    %v6260 = vunpack.c.l.b16 %v5164
    %v6261 = vunpack.c.h.b16 %v5164
    %v6262 = vunpack.c.l.b16 %v5165
    %v6263 = vunpack.c.h.b16 %v5165
    %v6264 = vunpack.c.l.b16 %v5166
    %v6265 = vunpack.c.h.b16 %v5166
    %v6266 = vunpack.c.l.b16 %v5167
    %v6267 = vunpack.c.h.b16 %v5167
    %v6268 = vunpack.c.l.b16 %v5168
    %v6269 = vunpack.c.h.b16 %v5168
    %v6270 = vunpack.c.l.b16 %v5169
    %v6271 = vunpack.c.h.b16 %v5169
    %v6272 = vunpack.c.l.b16 %v5170
    %v6273 = vunpack.c.h.b16 %v5170
    %v6274 = vunpack.c.l.b16 %v5171
    %v6275 = vunpack.c.h.b16 %v5171
    %v6276 = vunpack.c.l.b16 %v5172
    %v6277 = vunpack.c.h.b16 %v5172
    %v6278 = vunpack.c.l.b16 %v5173
    %v6279 = vunpack.c.h.b16 %v5173
    %v6280 = vunpack.c.l.b16 %v5174
    %v6281 = vunpack.c.h.b16 %v5174
    %v6282 = vunpack.c.l.b16 %v5175
    %v6283 = vunpack.c.h.b16 %v5175
    %v6284 = vunpack.c.l.b16 %v5176
    %v6285 = vunpack.c.h.b16 %v5176
    %v6286 = vunpack.c.l.b16 %v5177
    %v6287 = vunpack.c.h.b16 %v5177
    %v6288 = vunpack.c.l.b16 %v5178
    %v6289 = vunpack.c.h.b16 %v5178
    %v6290 = vunpack.c.l.b16 %v5179
    %v6291 = vunpack.c.h.b16 %v5179
    %v6292 = vunpack.c.l.b16 %v5180
    %v6293 = vunpack.c.h.b16 %v5180
    %v6294 = vunpack.c.l.b16 %v5181
    %v6295 = vunpack.c.h.b16 %v5181
    %v6296 = vunpack.c.l.b16 %v5182
    %v6297 = vunpack.c.h.b16 %v5182
    %v6298 = vunpack.c.l.b16 %v5183
    %v6299 = vunpack.c.h.b16 %v5183
    %v6300 = vunpack.c.l.b16 %v5184
    %v6301 = vunpack.c.h.b16 %v5184
    %v6302 = vunpack.c.l.b16 %v5185
    %v6303 = vunpack.c.h.b16 %v5185
    %v6304 = vunpack.c.l.b16 %v5186
    %v6305 = vunpack.c.h.b16 %v5186
    %v6306 = vunpack.c.l.b16 %v5187
    %v6307 = vunpack.c.h.b16 %v5187
    %v6308 = vunpack.c.l.b16 %v5188
    %v6309 = vunpack.c.h.b16 %v5188
    %v6310 = vunpack.c.l.b16 %v5189
    %v6311 = vunpack.c.h.b16 %v5189
    %v6312 = vunpack.c.l.b16 %v5190
    %v6313 = vunpack.c.h.b16 %v5190
    %v6314 = vunpack.c.l.b16 %v5191
    %v6315 = vunpack.c.h.b16 %v5191
    %v6316 = vunpack.c.l.b16 %v5192
    %v6317 = vunpack.c.h.b16 %v5192
    %v6318 = vunpack.c.l.b16 %v5193
    %v6319 = vunpack.c.h.b16 %v5193
    %v6320 = vunpack.c.l.b16 %v5194
    %v6321 = vunpack.c.h.b16 %v5194
    %v6322 = vunpack.c.l.b16 %v5195
    %v6323 = vunpack.c.h.b16 %v5195
    %v6324 = vunpack.c.l.b16 %v5196
    %v6325 = vunpack.c.h.b16 %v5196
    %v6326 = vunpack.c.l.b16 %v5197
    %v6327 = vunpack.c.h.b16 %v5197
    %v6328 = vunpack.c.l.b16 %v5198
    %v6329 = vunpack.c.h.b16 %v5198
    %v6330 = vunpack.c.l.b16 %v5199
    %v6331 = vunpack.c.h.b16 %v5199
    %v6332 = vunpack.c.l.b16 %v5200
    %v6333 = vunpack.c.h.b16 %v5200
    %v6334 = vunpack.c.l.b16 %v5201
    %v6335 = vunpack.c.h.b16 %v5201
    %v6336 = vunpack.c.l.b16 %v5202
    %v6337 = vunpack.c.h.b16 %v5202
    %v6338 = vunpack.c.l.b16 %v5203
    %v6339 = vunpack.c.h.b16 %v5203
    %v6340 = vunpack.c.l.b16 %v5204
    %v6341 = vunpack.c.h.b16 %v5204
    %v6342 = vunpack.c.l.b16 %v5205
    %v6343 = vunpack.c.h.b16 %v5205
    %v6344 = vunpack.c.l.b16 %v5206
    %v6345 = vunpack.c.h.b16 %v5206
    %v6346 = vunpack.c.l.b16 %v5207
    %v6347 = vunpack.c.h.b16 %v5207
    %v6348 = vunpack.c.l.b16 %v5208
    %v6349 = vunpack.c.h.b16 %v5208
    %v6350 = vunpack.c.l.b16 %v5209
    %v6351 = vunpack.c.h.b16 %v5209
    %v6352 = vunpack.c.l.b16 %v5210
    %v6353 = vunpack.c.h.b16 %v5210
    %v6354 = vunpack.c.l.b16 %v5211
    %v6355 = vunpack.c.h.b16 %v5211
    %v6356 = vunpack.c.l.b16 %v5212
    %v6357 = vunpack.c.h.b16 %v5212
    %v6358 = vunpack.c.l.b16 %v5213
    %v6359 = vunpack.c.h.b16 %v5213
    %v6360 = vunpack.c.l.b16 %v5214
    %v6361 = vunpack.c.h.b16 %v5214
    %v6362 = vunpack.c.l.b16 %v5215
    %v6363 = vunpack.c.h.b16 %v5215
    %v6364 = vunpack.c.l.b16 %v5216
    %v6365 = vunpack.c.h.b16 %v5216
    %v6366 = vunpack.c.l.b16 %v5217
    %v6367 = vunpack.c.h.b16 %v5217
    %v6368 = vunpack.c.l.b16 %v5218
    %v6369 = vunpack.c.h.b16 %v5218
    %v6370 = vunpack.c.l.b16 %v5219
    %v6371 = vunpack.c.h.b16 %v5219
    %v6372 = vunpack.c.l.b16 %v5220
    %v6373 = vunpack.c.h.b16 %v5220
    %v6374 = vunpack.c.l.b16 %v5221
    %v6375 = vunpack.c.h.b16 %v5221
    %v6376 = vunpack.c.l.b16 %v5222
    %v6377 = vunpack.c.h.b16 %v5222
    %v6378 = vunpack.c.l.b16 %v5223
    %v6379 = vunpack.c.h.b16 %v5223
    %v6380 = vunpack.c.l.b16 %v5224
    %v6381 = vunpack.c.h.b16 %v5224
    %v6382 = vunpack.c.l.b16 %v5225
    %v6383 = vunpack.c.h.b16 %v5225
    %v6384 = vunpack.c.l.b16 %v5226
    %v6385 = vunpack.c.h.b16 %v5226
    %v6386 = vunpack.c.l.b16 %v5227
    %v6387 = vunpack.c.h.b16 %v5227
    %v6388 = vunpack.c.l.b16 %v5228
    %v6389 = vunpack.c.h.b16 %v5228
    %v6390 = vunpack.c.l.b16 %v5229
    %v6391 = vunpack.c.h.b16 %v5229
    %v6392 = vunpack.c.l.b16 %v5230
    %v6393 = vunpack.c.h.b16 %v5230
    %v6394 = vunpack.c.l.b16 %v5231
    %v6395 = vunpack.c.h.b16 %v5231
    %v6396 = vunpack.c.l.b16 %v5232
    %v6397 = vunpack.c.h.b16 %v5232
    %v6398 = vunpack.c.l.b16 %v5233
    %v6399 = vunpack.c.h.b16 %v5233
    %v6400 = vunpack.c.l.b16 %v5234
    %v6401 = vunpack.c.h.b16 %v5234
    %v6402 = vunpack.c.l.b16 %v5235
    %v6403 = vunpack.c.h.b16 %v5235
    %v6404 = vunpack.c.l.b16 %v5236
    %v6405 = vunpack.c.h.b16 %v5236
    %v6406 = vunpack.c.l.b16 %v5237
    %v6407 = vunpack.c.h.b16 %v5237
    %v6408 = vunpack.c.l.b16 %v5238
    %v6409 = vunpack.c.h.b16 %v5238
    %v6410 = vunpack.c.l.b16 %v5239
    %v6411 = vunpack.c.h.b16 %v5239
    %v6412 = vunpack.c.l.b16 %v5240
    %v6413 = vunpack.c.h.b16 %v5240
    %v6414 = vunpack.c.l.b16 %v5241
    %v6415 = vunpack.c.h.b16 %v5241
    %v6416 = vunpack.c.l.b16 %v5242
    %v6417 = vunpack.c.h.b16 %v5242
    %v6418 = vunpack.c.l.b16 %v5243
    %v6419 = vunpack.c.h.b16 %v5243
    %v6420 = vunpack.c.l.b16 %v5244
    %v6421 = vunpack.c.h.b16 %v5244
    %v6422 = vunpack.c.l.b16 %v5245
    %v6423 = vunpack.c.h.b16 %v5245
    %v6424 = vunpack.c.l.b16 %v5246
    %v6425 = vunpack.c.h.b16 %v5246
    %v6426 = vunpack.c.l.b16 %v5247
    %v6427 = vunpack.c.h.b16 %v5247
    %v6428 = vunpack.c.l.b16 %v5248
    %v6429 = vunpack.c.h.b16 %v5248
    %v6430 = vunpack.c.l.b16 %v5249
    %v6431 = vunpack.c.h.b16 %v5249
    %v6432 = vunpack.c.l.b16 %v5250
    %v6433 = vunpack.c.h.b16 %v5250
    %v6434 = vunpack.c.l.b16 %v5251
    %v6435 = vunpack.c.h.b16 %v5251
    %v6436 = vunpack.c.l.b16 %v5252
    %v6437 = vunpack.c.h.b16 %v5252
    %v6438 = vunpack.c.l.b16 %v5253
    %v6439 = vunpack.c.h.b16 %v5253
    %v6440 = vunpack.c.l.b16 %v5254
    %v6441 = vunpack.c.h.b16 %v5254
    %v6442 = vunpack.c.l.b16 %v5255
    %v6443 = vunpack.c.h.b16 %v5255
    %v6444 = vunpack.c.l.b16 %v5256
    %v6445 = vunpack.c.h.b16 %v5256
    %v6446 = vunpack.c.l.b16 %v5257
    %v6447 = vunpack.c.h.b16 %v5257
    %v6448 = vunpack.c.l.b16 %v5258
    %v6449 = vunpack.c.h.b16 %v5258
    %v6450 = vunpack.c.l.b16 %v5259
    %v6451 = vunpack.c.h.b16 %v5259
    %v6452 = vunpack.c.l.b16 %v5260
    %v6453 = vunpack.c.h.b16 %v5260
    %v6454 = vunpack.c.l.b16 %v5261
    %v6455 = vunpack.c.h.b16 %v5261
    %v6456 = vunpack.c.l.b16 %v5262
    %v6457 = vunpack.c.h.b16 %v5262
    %v6458 = vunpack.c.l.b16 %v5263
    %v6459 = vunpack.c.h.b16 %v5263
    %v6460 = vunpack.c.l.b16 %v5264
    %v6461 = vunpack.c.h.b16 %v5264
    %v6462 = vunpack.c.l.b16 %v5265
    %v6463 = vunpack.c.h.b16 %v5265
    %v6464 = vunpack.c.l.b16 %v5266
    %v6465 = vunpack.c.h.b16 %v5266
    %v6466 = vunpack.c.l.b16 %v5267
    %v6467 = vunpack.c.h.b16 %v5267
    %v6468 = vunpack.c.l.b16 %v5268
    %v6469 = vunpack.c.h.b16 %v5268
    %v6470 = vunpack.c.l.b16 %v5269
    %v6471 = vunpack.c.h.b16 %v5269
    %v6472 = vunpack.c.l.b16 %v5270
    %v6473 = vunpack.c.h.b16 %v5270
    %v6474 = vunpack.c.l.b16 %v5271
    %v6475 = vunpack.c.h.b16 %v5271
    %v6476 = vunpack.c.l.b16 %v5272
    %v6477 = vunpack.c.h.b16 %v5272
    %v6478 = vunpack.c.l.b16 %v5273
    %v6479 = vunpack.c.h.b16 %v5273
    %v6480 = vunpack.c.l.b16 %v5274
    %v6481 = vunpack.c.h.b16 %v5274
    %v6482 = vunpack.c.l.b16 %v5275
    %v6483 = vunpack.c.h.b16 %v5275
    %v6484 = vunpack.c.l.b16 %v5276
    %v6485 = vunpack.c.h.b16 %v5276
    %v6486 = vunpack.c.l.b16 %v5277
    %v6487 = vunpack.c.h.b16 %v5277
    %v6488 = vunpack.c.l.b16 %v5278
    %v6489 = vunpack.c.h.b16 %v5278
    %v6490 = vunpack.c.l.b16 %v5279
    %v6491 = vunpack.c.h.b16 %v5279
    %v6492 = vunpack.c.l.b16 %v5280
    %v6493 = vunpack.c.h.b16 %v5280
    %v6494 = vunpack.c.l.b16 %v5281
    %v6495 = vunpack.c.h.b16 %v5281
    %v6496 = vunpack.c.l.b16 %v5282
    %v6497 = vunpack.c.h.b16 %v5282
    %v6498 = vunpack.c.l.b16 %v5283
    %v6499 = vunpack.c.h.b16 %v5283
    %v6500 = vunpack.c.l.b16 %v5284
    %v6501 = vunpack.c.h.b16 %v5284
    %v6502 = vunpack.c.l.b16 %v5285
    %v6503 = vunpack.c.h.b16 %v5285
    %v6504 = vunpack.c.l.b16 %v5286
    %v6505 = vunpack.c.h.b16 %v5286
    %v6506 = vunpack.c.l.b16 %v5287
    %v6507 = vunpack.c.h.b16 %v5287
    %v6508 = vunpack.c.l.b16 %v5288
    %v6509 = vunpack.c.h.b16 %v5288
    %v6510 = vunpack.c.l.b16 %v5289
    %v6511 = vunpack.c.h.b16 %v5289
    %v6512 = vunpack.c.l.b16 %v5290
    %v6513 = vunpack.c.h.b16 %v5290
    %v6514 = vunpack.c.l.b16 %v5291
    %v6515 = vunpack.c.h.b16 %v5291
    %v6516 = vunpack.c.l.b16 %v5292
    %v6517 = vunpack.c.h.b16 %v5292
    %v6518 = vunpack.c.l.b16 %v5293
    %v6519 = vunpack.c.h.b16 %v5293
    %v6520 = vunpack.c.l.b16 %v5294
    %v6521 = vunpack.c.h.b16 %v5294
    %v6522 = vunpack.c.l.b16 %v5295
    %v6523 = vunpack.c.h.b16 %v5295
    %v6524 = vunpack.c.l.b16 %v5296
    %v6525 = vunpack.c.h.b16 %v5296
    %v6526 = vunpack.c.l.b16 %v5297
    %v6527 = vunpack.c.h.b16 %v5297
    %v6528 = vunpack.c.l.b16 %v5298
    %v6529 = vunpack.c.h.b16 %v5298
    %v6530 = vunpack.c.l.b16 %v5299
    %v6531 = vunpack.c.h.b16 %v5299
    %v6532 = vunpack.c.l.b16 %v5300
    %v6533 = vunpack.c.h.b16 %v5300
    %v6534 = vunpack.c.l.b16 %v5301
    %v6535 = vunpack.c.h.b16 %v5301
    %v6536 = vunpack.c.l.b16 %v5302
    %v6537 = vunpack.c.h.b16 %v5302
    %v6538 = vunpack.c.l.b16 %v5303
    %v6539 = vunpack.c.h.b16 %v5303
    %v6540 = vunpack.c.l.b16 %v5304
    %v6541 = vunpack.c.h.b16 %v5304
    %v6542 = vunpack.c.l.b16 %v5305
    %v6543 = vunpack.c.h.b16 %v5305
    %v6544 = vunpack.c.l.b16 %v5306
    %v6545 = vunpack.c.h.b16 %v5306
    %v6546 = vunpack.c.l.b16 %v5307
    %v6547 = vunpack.c.h.b16 %v5307
    %v6548 = vunpack.c.l.b16 %v5308
    %v6549 = vunpack.c.h.b16 %v5308
    %v6550 = vunpack.c.l.b16 %v5309
    %v6551 = vunpack.c.h.b16 %v5309
    %v6552 = vunpack.c.l.b16 %v5310
    %v6553 = vunpack.c.h.b16 %v5310
    %v6554 = vunpack.c.l.b16 %v5311
    %v6555 = vunpack.c.h.b16 %v5311
    %v6556 = vunpack.c.l.b16 %v5312
    %v6557 = vunpack.c.h.b16 %v5312
    %v6558 = vunpack.c.l.b16 %v5313
    %v6559 = vunpack.c.h.b16 %v5313
    %v6560 = vunpack.c.l.b16 %v5314
    %v6561 = vunpack.c.h.b16 %v5314
    %v6562 = vunpack.c.l.b16 %v5315
    %v6563 = vunpack.c.h.b16 %v5315
    %v6564 = vunpack.c.l.b16 %v5316
    %v6565 = vunpack.c.h.b16 %v5316
    %v6566 = vunpack.c.l.b16 %v5317
    %v6567 = vunpack.c.h.b16 %v5317
    %v6568 = vunpack.c.l.b16 %v5318
    %v6569 = vunpack.c.h.b16 %v5318
    %v6570 = vunpack.c.l.b16 %v5319
    %v6571 = vunpack.c.h.b16 %v5319
    %v6572 = vunpack.c.l.b16 %v5320
    %v6573 = vunpack.c.h.b16 %v5320
    %v6574 = vunpack.c.l.b16 %v5321
    %v6575 = vunpack.c.h.b16 %v5321
    %v6576 = vunpack.c.l.b16 %v5322
    %v6577 = vunpack.c.h.b16 %v5322
    %v6578 = vunpack.c.l.b16 %v5323
    %v6579 = vunpack.c.h.b16 %v5323
    %v6580 = vunpack.c.l.b16 %v5324
    %v6581 = vunpack.c.h.b16 %v5324
    %v6582 = vunpack.c.l.b16 %v5325
    %v6583 = vunpack.c.h.b16 %v5325
    %v6584 = vunpack.c.l.b16 %v5326
    %v6585 = vunpack.c.h.b16 %v5326
    %v6586 = vunpack.c.l.b16 %v5327
    %v6587 = vunpack.c.h.b16 %v5327
    %v6588 = vunpack.c.l.b16 %v5328
    %v6589 = vunpack.c.h.b16 %v5328
    %v6590 = vunpack.c.l.b16 %v5329
    %v6591 = vunpack.c.h.b16 %v5329
    %v6592 = vunpack.c.l.b16 %v5330
    %v6593 = vunpack.c.h.b16 %v5330
    %v6594 = vunpack.c.l.b16 %v5331
    %v6595 = vunpack.c.h.b16 %v5331
    %v6596 = vunpack.c.l.b16 %v5332
    %v6597 = vunpack.c.h.b16 %v5332
    %v6598 = vunpack.c.l.b16 %v5333
    %v6599 = vunpack.c.h.b16 %v5333
    %v6600 = vunpack.c.l.b16 %v5334
    %v6601 = vunpack.c.h.b16 %v5334
    %v6602 = vunpack.c.l.b16 %v5335
    %v6603 = vunpack.c.h.b16 %v5335
    %v6604 = vunpack.c.l.b16 %v5336
    %v6605 = vunpack.c.h.b16 %v5336
    %v6606 = vunpack.c.l.b16 %v5337
    %v6607 = vunpack.c.h.b16 %v5337
    %v6608 = vunpack.c.l.b16 %v5338
    %v6609 = vunpack.c.h.b16 %v5338
    %v6610 = vunpack.c.l.b16 %v5339
    %v6611 = vunpack.c.h.b16 %v5339
    %v6612 = vunpack.c.l.b16 %v5340
    %v6613 = vunpack.c.h.b16 %v5340
    %v6614 = vunpack.c.l.b16 %v5341
    %v6615 = vunpack.c.h.b16 %v5341
    %v6616 = vunpack.c.l.b16 %v5342
    %v6617 = vunpack.c.h.b16 %v5342
    %v6618 = vunpack.c.l.b16 %v5343
    %v6619 = vunpack.c.h.b16 %v5343
    %v6620 = vunpack.c.l.b16 %v5344
    %v6621 = vunpack.c.h.b16 %v5344
    %v6622 = vunpack.c.l.b16 %v5345
    %v6623 = vunpack.c.h.b16 %v5345
    %v6624 = vunpack.c.l.b16 %v5346
    %v6625 = vunpack.c.h.b16 %v5346
    %v6626 = vunpack.c.l.b16 %v5347
    %v6627 = vunpack.c.h.b16 %v5347
    %v6628 = vunpack.c.l.b16 %v5348
    %v6629 = vunpack.c.h.b16 %v5348
    %v6630 = vunpack.c.l.b16 %v5349
    %v6631 = vunpack.c.h.b16 %v5349
    %v6632 = vunpack.c.l.b16 %v5350
    %v6633 = vunpack.c.h.b16 %v5350
    %v6634 = vunpack.c.l.b16 %v5351
    %v6635 = vunpack.c.h.b16 %v5351
    %v6636 = vunpack.c.l.b16 %v5352
    %v6637 = vunpack.c.h.b16 %v5352
    %v6638 = vunpack.c.l.b16 %v5353
    %v6639 = vunpack.c.h.b16 %v5353
    %v6640 = vunpack.c.l.b16 %v5354
    %v6641 = vunpack.c.h.b16 %v5354
    %v6642 = vunpack.c.l.b16 %v5355
    %v6643 = vunpack.c.h.b16 %v5355
    %v6644 = vunpack.c.l.b16 %v5356
    %v6645 = vunpack.c.h.b16 %v5356
    %v6646 = vunpack.c.l.b16 %v5357
    %v6647 = vunpack.c.h.b16 %v5357
    %v6648 = vunpack.c.l.b16 %v5358
    %v6649 = vunpack.c.h.b16 %v5358
    %v6650 = vunpack.c.l.b16 %v5359
    %v6651 = vunpack.c.h.b16 %v5359
    %v6652 = vunpack.c.l.b16 %v5360
    %v6653 = vunpack.c.h.b16 %v5360
    %v6654 = vunpack.c.l.b16 %v5361
    %v6655 = vunpack.c.h.b16 %v5361
    %v6656 = vunpack.c.l.b16 %v5362
    %v6657 = vunpack.c.h.b16 %v5362
    %v6658 = vunpack.c.l.b16 %v5363
    %v6659 = vunpack.c.h.b16 %v5363
    %v6660 = vunpack.c.l.b16 %v5364
    %v6661 = vunpack.c.h.b16 %v5364
    %v6662 = vunpack.c.l.b16 %v5365
    %v6663 = vunpack.c.h.b16 %v5365
    %v6664 = vunpack.c.l.b16 %v5366
    %v6665 = vunpack.c.h.b16 %v5366
    %v6666 = vunpack.c.l.b16 %v5367
    %v6667 = vunpack.c.h.b16 %v5367
    %v6668 = vunpack.c.l.b16 %v5368
    %v6669 = vunpack.c.h.b16 %v5368
    %v6670 = vunpack.c.l.b16 %v5369
    %v6671 = vunpack.c.h.b16 %v5369
    %v6672 = vunpack.c.l.b16 %v5370
    %v6673 = vunpack.c.h.b16 %v5370
    %v6674 = vunpack.c.l.b16 %v5371
    %v6675 = vunpack.c.h.b16 %v5371
    %v6676 = vunpack.c.l.b16 %v5372
    %v6677 = vunpack.c.h.b16 %v5372
    %v6678 = vunpack.c.l.b16 %v5373
    %v6679 = vunpack.c.h.b16 %v5373
    %v6680 = vunpack.c.l.b16 %v5374
    %v6681 = vunpack.c.h.b16 %v5374
    %v6682 = vunpack.c.l.b16 %v5375
    %v6683 = vunpack.c.h.b16 %v5375
    %v6684 = vunpack.c.l.b16 %v5376
    %v6685 = vunpack.c.h.b16 %v5376
    %v6686 = vunpack.c.l.b16 %v5377
    %v6687 = vunpack.c.h.b16 %v5377
    %v6688 = vunpack.c.l.b16 %v5378
    %v6689 = vunpack.c.h.b16 %v5378
    %v6690 = vunpack.c.l.b16 %v5379
    %v6691 = vunpack.c.h.b16 %v5379
    %v6692 = vunpack.c.l.b16 %v5380
    %v6693 = vunpack.c.h.b16 %v5380
    %v6694 = vunpack.c.l.b16 %v5381
    %v6695 = vunpack.c.h.b16 %v5381
    %v6696 = vunpack.c.l.b16 %v5382
    %v6697 = vunpack.c.h.b16 %v5382
    %v6698 = vunpack.c.l.b16 %v5383
    %v6699 = vunpack.c.h.b16 %v5383
    %v6700 = vunpack.c.l.b16 %v5384
    %v6701 = vunpack.c.h.b16 %v5384
    %v6702 = vunpack.c.l.b16 %v5385
    %v6703 = vunpack.c.h.b16 %v5385
    %v6704 = vunpack.c.l.b16 %v5386
    %v6705 = vunpack.c.h.b16 %v5386
    %v6706 = vunpack.c.l.b16 %v5387
    %v6707 = vunpack.c.h.b16 %v5387
    %v6708 = vunpack.c.l.b16 %v5388
    %v6709 = vunpack.c.h.b16 %v5388
    %v6710 = vunpack.c.l.b16 %v5389
    %v6711 = vunpack.c.h.b16 %v5389
    %v6712 = vunpack.c.l.b16 %v5390
    %v6713 = vunpack.c.h.b16 %v5390
    %v6714 = vunpack.c.l.b16 %v5391
    %v6715 = vunpack.c.h.b16 %v5391
    %v6716 = vunpack.c.l.b16 %v5392
    %v6717 = vunpack.c.h.b16 %v5392
    %v6718 = vunpack.c.l.b16 %v5393
    %v6719 = vunpack.c.h.b16 %v5393
    %v6720 = vunpack.c.l.b16 %v5394
    %v6721 = vunpack.c.h.b16 %v5394
    %v6722 = vunpack.c.l.b16 %v5395
    %v6723 = vunpack.c.h.b16 %v5395
    %v6724 = vunpack.c.l.b16 %v5396
    %v6725 = vunpack.c.h.b16 %v5396
    %v6726 = vunpack.c.l.b16 %v5397
    %v6727 = vunpack.c.h.b16 %v5397
    %v6728 = vunpack.c.l.b16 %v5398
    %v6729 = vunpack.c.h.b16 %v5398
    %v6730 = vunpack.c.l.b16 %v5399
    %v6731 = vunpack.c.h.b16 %v5399
    %v6732 = vunpack.c.l.b16 %v5400
    %v6733 = vunpack.c.h.b16 %v5400
    %v6734 = vunpack.c.l.b16 %v5401
    %v6735 = vunpack.c.h.b16 %v5401
    %v6736 = vunpack.c.l.b16 %v5402
    %v6737 = vunpack.c.h.b16 %v5402
    %v6738 = vunpack.c.l.b16 %v5403
    %v6739 = vunpack.c.h.b16 %v5403
    %v6740 = vunpack.c.l.b16 %v5404
    %v6741 = vunpack.c.h.b16 %v5404
    %v6742 = vunpack.c.l.b16 %v5405
    %v6743 = vunpack.c.h.b16 %v5405
    %v6744 = vunpack.c.l.b16 %v5406
    %v6745 = vunpack.c.h.b16 %v5406
    %v6746 = vunpack.c.l.b16 %v5407
    %v6747 = vunpack.c.h.b16 %v5407
    %v6748 = vunpack.c.l.b16 %v5408
    %v6749 = vunpack.c.h.b16 %v5408
    %v6750 = vunpack.c.l.b16 %v5409
    %v6751 = vunpack.c.h.b16 %v5409
    %v6752 = vunpack.c.l.b16 %v5410
    %v6753 = vunpack.c.h.b16 %v5410
    %v6754 = vunpack.c.l.b16 %v5411
    %v6755 = vunpack.c.h.b16 %v5411
    %v6756 = vunpack.c.l.b16 %v5412
    %v6757 = vunpack.c.h.b16 %v5412
    %v6758 = vunpack.c.l.b16 %v5413
    %v6759 = vunpack.c.h.b16 %v5413
    %v6760 = vunpack.c.l.b16 %v5414
    %v6761 = vunpack.c.h.b16 %v5414
    %v6762 = vunpack.c.l.b16 %v5415
    %v6763 = vunpack.c.h.b16 %v5415
    %v6764 = vunpack.c.l.b16 %v5416
    %v6765 = vunpack.c.h.b16 %v5416
    %v6766 = vunpack.c.l.b16 %v5417
    %v6767 = vunpack.c.h.b16 %v5417
    %v6768 = vunpack.c.l.b16 %v5418
    %v6769 = vunpack.c.h.b16 %v5418
    %v6770 = vunpack.c.l.b16 %v5419
    %v6771 = vunpack.c.h.b16 %v5419
    %v6772 = vunpack.c.l.b16 %v5420
    %v6773 = vunpack.c.h.b16 %v5420
    %v6774 = vunpack.c.l.b16 %v5421
    %v6775 = vunpack.c.h.b16 %v5421
    %v6776 = vunpack.c.l.b16 %v5422
    %v6777 = vunpack.c.h.b16 %v5422
    %v6778 = vunpack.c.l.b16 %v5423
    %v6779 = vunpack.c.h.b16 %v5423
    %v6780 = vunpack.c.l.b16 %v5424
    %v6781 = vunpack.c.h.b16 %v5424
    %v6782 = vunpack.c.l.b16 %v5425
    %v6783 = vunpack.c.h.b16 %v5425
    %v6784 = vunpack.c.l.b16 %v5426
    %v6785 = vunpack.c.h.b16 %v5426
    %v6786 = vunpack.c.l.b16 %v5427
    %v6787 = vunpack.c.h.b16 %v5427
    %v6788 = vunpack.c.l.b16 %v5428
    %v6789 = vunpack.c.h.b16 %v5428
    %v6790 = vunpack.c.l.b16 %v5429
    %v6791 = vunpack.c.h.b16 %v5429
    %v6792 = vunpack.c.l.b16 %v5430
    %v6793 = vunpack.c.h.b16 %v5430
    %v6794 = vunpack.c.l.b16 %v5431
    %v6795 = vunpack.c.h.b16 %v5431
    %v6796 = vunpack.c.l.b16 %v5432
    %v6797 = vunpack.c.h.b16 %v5432
    %v6798 = vunpack.c.l.b16 %v5433
    %v6799 = vunpack.c.h.b16 %v5433
    %v6800 = vunpack.c.l.b16 %v5434
    %v6801 = vunpack.c.h.b16 %v5434
    %v6802 = vunpack.c.l.b16 %v5435
    %v6803 = vunpack.c.h.b16 %v5435
    %v6804 = vunpack.c.l.b16 %v5436
    %v6805 = vunpack.c.h.b16 %v5436
    %v6806 = vunpack.c.l.b16 %v5437
    %v6807 = vunpack.c.h.b16 %v5437
    %v6808 = vunpack.c.l.b16 %v5438
    %v6809 = vunpack.c.h.b16 %v5438
    %v6810 = vunpack.c.l.b16 %v5439
    %v6811 = vunpack.c.h.b16 %v5439
    %v6812 = vunpack.c.l.b16 %v5440
    %v6813 = vunpack.c.h.b16 %v5440
    %v6814 = vunpack.c.l.b16 %v5441
    %v6815 = vunpack.c.h.b16 %v5441
    %v6816 = vunpack.c.l.b16 %v5442
    %v6817 = vunpack.c.h.b16 %v5442
    %v6818 = vunpack.c.l.b16 %v5443
    %v6819 = vunpack.c.h.b16 %v5443
    %v6820 = vunpack.c.l.b16 %v5444
    %v6821 = vunpack.c.h.b16 %v5444
    %v6822 = vunpack.c.l.b16 %v5445
    %v6823 = vunpack.c.h.b16 %v5445
    %v6824 = vunpack.c.l.b16 %v5446
    %v6825 = vunpack.c.h.b16 %v5446
    %v6826 = vunpack.c.l.b16 %v5447
    %v6827 = vunpack.c.h.b16 %v5447
    %v6828 = vunpack.c.l.b16 %v5448
    %v6829 = vunpack.c.h.b16 %v5448
    %v6830 = vunpack.c.l.b16 %v5449
    %v6831 = vunpack.c.h.b16 %v5449
    %v6832 = vunpack.c.l.b16 %v5450
    %v6833 = vunpack.c.h.b16 %v5450
    %v6834 = vunpack.c.l.b16 %v5451
    %v6835 = vunpack.c.h.b16 %v5451
    %v6836 = vunpack.c.l.b16 %v5452
    %v6837 = vunpack.c.h.b16 %v5452
    %v6838 = vunpack.c.l.b16 %v5453
    %v6839 = vunpack.c.h.b16 %v5453
    %v6840 = vunpack.c.l.b16 %v5454
    %v6841 = vunpack.c.h.b16 %v5454
    %v6842 = vunpack.c.l.b16 %v5455
    %v6843 = vunpack.c.h.b16 %v5455
    %v6844 = vunpack.c.l.b16 %v5456
    %v6845 = vunpack.c.h.b16 %v5456
    %v6846 = vunpack.c.l.b16 %v5457
    %v6847 = vunpack.c.h.b16 %v5457
    %v6848 = vunpack.c.l.b16 %v5458
    %v6849 = vunpack.c.h.b16 %v5458
    %v6850 = vunpack.c.l.b16 %v5459
    %v6851 = vunpack.c.h.b16 %v5459
    %v6852 = vunpack.c.l.b16 %v5460
    %v6853 = vunpack.c.h.b16 %v5460
    %v6854 = vunpack.c.l.b16 %v5461
    %v6855 = vunpack.c.h.b16 %v5461
    %v6856 = vunpack.c.l.b16 %v5462
    %v6857 = vunpack.c.h.b16 %v5462
    %v6858 = vunpack.c.l.b16 %v5463
    %v6859 = vunpack.c.h.b16 %v5463
    %v6860 = vunpack.c.l.b16 %v5464
    %v6861 = vunpack.c.h.b16 %v5464
    %v6862 = vunpack.c.l.b16 %v5465
    %v6863 = vunpack.c.h.b16 %v5465
    %v6864 = vunpack.c.l.b16 %v5466
    %v6865 = vunpack.c.h.b16 %v5466
    %v6866 = vunpack.c.l.b16 %v5467
    %v6867 = vunpack.c.h.b16 %v5467
    %v6868 = vunpack.c.l.b16 %v5468
    %v6869 = vunpack.c.h.b16 %v5468
    %v6870 = vunpack.c.l.b16 %v5469
    %v6871 = vunpack.c.h.b16 %v5469
    %v6872 = vunpack.c.l.b16 %v5470
    %v6873 = vunpack.c.h.b16 %v5470
    %v6874 = vunpack.c.l.b16 %v5471
    %v6875 = vunpack.c.h.b16 %v5471
    %v6876 = vunpack.c.l.b16 %v5472
    %v6877 = vunpack.c.h.b16 %v5472
    %v6878 = vunpack.c.l.b16 %v5473
    %v6879 = vunpack.c.h.b16 %v5473
    %v6880 = vunpack.c.l.b16 %v5474
    %v6881 = vunpack.c.h.b16 %v5474
    %v6882 = vunpack.c.l.b16 %v5475
    %v6883 = vunpack.c.h.b16 %v5475
    %v6884 = vunpack.c.l.b16 %v5476
    %v6885 = vunpack.c.h.b16 %v5476
    %v6886 = vunpack.c.l.b16 %v5477
    %v6887 = vunpack.c.h.b16 %v5477
    %v6888 = vunpack.c.l.b16 %v5478
    %v6889 = vunpack.c.h.b16 %v5478
    %v6890 = vunpack.c.l.b16 %v5479
    %v6891 = vunpack.c.h.b16 %v5479
    %v6892 = vunpack.c.l.b16 %v5480
    %v6893 = vunpack.c.h.b16 %v5480
    %v6894 = vunpack.c.l.b16 %v5481
    %v6895 = vunpack.c.h.b16 %v5481
    %v6896 = vunpack.c.l.b16 %v5482
    %v6897 = vunpack.c.h.b16 %v5482
    %v6898 = vunpack.c.l.b16 %v5483
    %v6899 = vunpack.c.h.b16 %v5483
    %v6900 = vunpack.c.l.b16 %v5484
    %v6901 = vunpack.c.h.b16 %v5484
    %v6902 = vunpack.c.l.b16 %v5485
    %v6903 = vunpack.c.h.b16 %v5485
    %v6904 = vunpack.c.l.b16 %v5486
    %v6905 = vunpack.c.h.b16 %v5486
    %v6906 = vunpack.c.l.b16 %v5487
    %v6907 = vunpack.c.h.b16 %v5487
    %v6908 = vunpack.c.l.b16 %v5488
    %v6909 = vunpack.c.h.b16 %v5488
    %v6910 = vunpack.c.l.b16 %v5489
    %v6911 = vunpack.c.h.b16 %v5489
    %v6912 = vunpack.c.l.b16 %v5490
    %v6913 = vunpack.c.h.b16 %v5490
    %v6914 = vunpack.c.l.b16 %v5491
    %v6915 = vunpack.c.h.b16 %v5491
    %v6916 = vunpack.c.l.b16 %v5492
    %v6917 = vunpack.c.h.b16 %v5492
    %v6918 = vunpack.c.l.b16 %v5493
    %v6919 = vunpack.c.h.b16 %v5493
    %v6920 = vunpack.c.l.b16 %v5494
    %v6921 = vunpack.c.h.b16 %v5494
    %v6922 = vunpack.c.l.b16 %v5495
    %v6923 = vunpack.c.h.b16 %v5495
    %v6924 = vunpack.c.l.b16 %v5496
    %v6925 = vunpack.c.h.b16 %v5496
    %v6926 = vunpack.c.l.b16 %v5497
    %v6927 = vunpack.c.h.b16 %v5497
    %v6928 = vunpack.c.l.b16 %v5498
    %v6929 = vunpack.c.h.b16 %v5498
    %v6930 = vunpack.c.l.b16 %v5499
    %v6931 = vunpack.c.h.b16 %v5499
    %v6932 = vunpack.c.l.b16 %v5500
    %v6933 = vunpack.c.h.b16 %v5500
    %v6934 = vunpack.c.l.b16 %v5501
    %v6935 = vunpack.c.h.b16 %v5501
    %v6936 = vunpack.c.l.b16 %v5502
    %v6937 = vunpack.c.h.b16 %v5502
    %v6938 = vunpack.c.l.b16 %v5503
    %v6939 = vunpack.c.h.b16 %v5503
    %v6940 = vunpack.c.l.b16 %v5504
    %v6941 = vunpack.c.h.b16 %v5504
    %v6942 = vunpack.c.l.b16 %v5505
    %v6943 = vunpack.c.h.b16 %v5505
    %v6944 = vunpack.c.l.b16 %v5506
    %v6945 = vunpack.c.h.b16 %v5506
    %v6946 = vunpack.c.l.b16 %v5507
    %v6947 = vunpack.c.h.b16 %v5507
    %v6948 = vunpack.c.l.b16 %v5508
    %v6949 = vunpack.c.h.b16 %v5508
    %v6950 = vunpack.c.l.b16 %v5509
    %v6951 = vunpack.c.h.b16 %v5509
    %v6952 = vunpack.c.l.b16 %v5510
    %v6953 = vunpack.c.h.b16 %v5510
    %v6954 = vunpack.c.l.b16 %v5511
    %v6955 = vunpack.c.h.b16 %v5511
    %v6956 = vunpack.c.l.b16 %v5512
    %v6957 = vunpack.c.h.b16 %v5512
    %v6958 = vunpack.c.l.b16 %v5513
    %v6959 = vunpack.c.h.b16 %v5513
    %v6960 = vunpack.c.l.b16 %v5514
    %v6961 = vunpack.c.h.b16 %v5514
    %v6962 = vunpack.c.l.b16 %v5515
    %v6963 = vunpack.c.h.b16 %v5515
    %v6964 = vunpack.c.l.b16 %v5516
    %v6965 = vunpack.c.h.b16 %v5516
    %v6966 = vunpack.c.l.b16 %v5517
    %v6967 = vunpack.c.h.b16 %v5517
    %v6968 = vunpack.c.l.b16 %v5518
    %v6969 = vunpack.c.h.b16 %v5518
    %v6970 = vunpack.c.l.b16 %v5519
    %v6971 = vunpack.c.h.b16 %v5519
    %v6972 = vunpack.c.l.b16 %v5520
    %v6973 = vunpack.c.h.b16 %v5520
    %v6974 = vunpack.c.l.b16 %v5521
    %v6975 = vunpack.c.h.b16 %v5521
    %v6976 = vunpack.c.l.b16 %v5522
    %v6977 = vunpack.c.h.b16 %v5522
    %v6978 = vunpack.c.l.b16 %v5523
    %v6979 = vunpack.c.h.b16 %v5523
    %v6980 = vunpack.c.l.b16 %v5524
    %v6981 = vunpack.c.h.b16 %v5524
    %v6982 = vunpack.c.l.b16 %v5525
    %v6983 = vunpack.c.h.b16 %v5525
    %v6984 = vunpack.c.l.b16 %v5526
    %v6985 = vunpack.c.h.b16 %v5526
    %v6986 = vunpack.c.l.b16 %v5527
    %v6987 = vunpack.c.h.b16 %v5527
    %v6988 = vunpack.c.l.b16 %v5528
    %v6989 = vunpack.c.h.b16 %v5528
    %v6990 = vunpack.c.l.b16 %v5529
    %v6991 = vunpack.c.h.b16 %v5529
    %v6992 = vunpack.c.l.b16 %v5530
    %v6993 = vunpack.c.h.b16 %v5530
    %v6994 = vunpack.c.l.b16 %v5531
    %v6995 = vunpack.c.h.b16 %v5531
    %v6996 = vunpack.c.l.b16 %v5532
    %v6997 = vunpack.c.h.b16 %v5532
    %v6998 = vunpack.c.l.b16 %v5533
    %v6999 = vunpack.c.h.b16 %v5533
    %v7000 = vunpack.c.l.b16 %v5534
    %v7001 = vunpack.c.h.b16 %v5534
    %v7002 = vunpack.c.l.b16 %v5535
    %v7003 = vunpack.c.h.b16 %v5535
    %v7004 = vunpack.c.l.b16 %v5536
    %v7005 = vunpack.c.h.b16 %v5536
    %v7006 = vunpack.c.l.b16 %v5537
    %v7007 = vunpack.c.h.b16 %v5537
    %v7008 = vunpack.c.l.b16 %v5538
    %v7009 = vunpack.c.h.b16 %v5538
    %v7010 = vunpack.c.l.b16 %v5539
    %v7011 = vunpack.c.h.b16 %v5539
    %v7012 = vunpack.c.l.b16 %v5540
    %v7013 = vunpack.c.h.b16 %v5540
    %v7014 = vunpack.c.l.b16 %v5541
    %v7015 = vunpack.c.h.b16 %v5541
    %v7016 = vunpack.c.l.b16 %v5542
    %v7017 = vunpack.c.h.b16 %v5542
    %v7018 = vunpack.c.l.b16 %v5543
    %v7019 = vunpack.c.h.b16 %v5543
    %v7020 = vunpack.c.l.b16 %v5544
    %v7021 = vunpack.c.h.b16 %v5544
    %v7022 = vunpack.c.l.b16 %v5545
    %v7023 = vunpack.c.h.b16 %v5545
    %v7024 = vunpack.c.l.b16 %v5546
    %v7025 = vunpack.c.h.b16 %v5546
    %v7026 = vunpack.c.l.b16 %v5547
    %v7027 = vunpack.c.h.b16 %v5547
    %v7028 = vunpack.c.l.b16 %v5548
    %v7029 = vunpack.c.h.b16 %v5548
    %v7030 = vunpack.c.l.b16 %v5549
    %v7031 = vunpack.c.h.b16 %v5549
    %v7032 = vunpack.c.l.b16 %v5550
    %v7033 = vunpack.c.h.b16 %v5550
    %v7034 = vunpack.c.l.b16 %v5551
    %v7035 = vunpack.c.h.b16 %v5551
    %v7036 = vunpack.c.l.b16 %v5552
    %v7037 = vunpack.c.h.b16 %v5552
    %v7038 = vunpack.c.l.b16 %v5553
    %v7039 = vunpack.c.h.b16 %v5553
    %v7040 = vunpack.c.l.b16 %v5554
    %v7041 = vunpack.c.h.b16 %v5554
    %v7042 = vunpack.c.l.b16 %v5555
    %v7043 = vunpack.c.h.b16 %v5555
    %v7044 = vunpack.c.l.b16 %v5556
    %v7045 = vunpack.c.h.b16 %v5556
    %v7046 = vunpack.c.l.b16 %v5557
    %v7047 = vunpack.c.h.b16 %v5557
    %v7048 = vunpack.c.l.b16 %v5558
    %v7049 = vunpack.c.h.b16 %v5558
    %v7050 = vunpack.c.l.b16 %v5559
    %v7051 = vunpack.c.h.b16 %v5559
    %v7052 = vunpack.c.l.b16 %v5560
    %v7053 = vunpack.c.h.b16 %v5560
    %v7054 = vunpack.c.l.b16 %v5561
    %v7055 = vunpack.c.h.b16 %v5561
    %v7056 = vunpack.c.l.b16 %v5562
    %v7057 = vunpack.c.h.b16 %v5562
    %v7058 = vunpack.c.l.b16 %v5563
    %v7059 = vunpack.c.h.b16 %v5563
    %v7060 = vunpack.c.l.b16 %v5564
    %v7061 = vunpack.c.h.b16 %v5564
    %v7062 = vunpack.c.l.b16 %v5565
    %v7063 = vunpack.c.h.b16 %v5565
    %v7064 = vunpack.c.l.b16 %v5566
    %v7065 = vunpack.c.h.b16 %v5566
    %v7066 = vunpack.c.l.b16 %v5567
    %v7067 = vunpack.c.h.b16 %v5567
    %v7068 = vunpack.c.l.b16 %v5568
    %v7069 = vunpack.c.h.b16 %v5568
    %v7070 = vunpack.c.l.b16 %v5569
    %v7071 = vunpack.c.h.b16 %v5569
    %v7072 = vunpack.c.l.b16 %v5570
    %v7073 = vunpack.c.h.b16 %v5570
    %v7074 = vunpack.c.l.b16 %v5571
    %v7075 = vunpack.c.h.b16 %v5571
    %v7076 = vunpack.c.l.b16 %v5572
    %v7077 = vunpack.c.h.b16 %v5572
    %v7078 = vunpack.c.l.b16 %v5573
    %v7079 = vunpack.c.h.b16 %v5573
    %v7080 = vunpack.c.l.b16 %v5574
    %v7081 = vunpack.c.h.b16 %v5574
    %v7082 = vunpack.c.l.b16 %v5575
    %v7083 = vunpack.c.h.b16 %v5575
    %v7084 = vunpack.c.l.b16 %v5576
    %v7085 = vunpack.c.h.b16 %v5576
    %v7086 = vunpack.c.l.b16 %v5577
    %v7087 = vunpack.c.h.b16 %v5577
    %v7088 = vunpack.c.l.b16 %v5578
    %v7089 = vunpack.c.h.b16 %v5578
    %v7090 = vunpack.c.l.b16 %v5579
    %v7091 = vunpack.c.h.b16 %v5579
    %v7092 = vunpack.c.l.b16 %v5580
    %v7093 = vunpack.c.h.b16 %v5580
    %v7094 = vunpack.c.l.b16 %v5581
    %v7095 = vunpack.c.h.b16 %v5581
    %v7096 = vunpack.c.l.b16 %v5582
    %v7097 = vunpack.c.h.b16 %v5582
    %v7098 = vunpack.c.l.b16 %v5583
    %v7099 = vunpack.c.h.b16 %v5583
    %v7100 = vunpack.c.l.b16 %v5584
    %v7101 = vunpack.c.h.b16 %v5584
    %v7102 = vunpack.c.l.b16 %v5585
    %v7103 = vunpack.c.h.b16 %v5585
    %v7104 = vunpack.c.l.b16 %v5586
    %v7105 = vunpack.c.h.b16 %v5586
    %v7106 = vunpack.c.l.b16 %v5587
    %v7107 = vunpack.c.h.b16 %v5587
    %v7108 = vunpack.c.l.b16 %v5588
    %v7109 = vunpack.c.h.b16 %v5588
    %v7110 = vunpack.c.l.b16 %v5589
    %v7111 = vunpack.c.h.b16 %v5589
    %v7112 = vunpack.c.l.b16 %v5590
    %v7113 = vunpack.c.h.b16 %v5590
    %v7114 = vunpack.c.l.b16 %v5591
    %v7115 = vunpack.c.h.b16 %v5591
    %v7116 = vunpack.c.l.b16 %v5592
    %v7117 = vunpack.c.h.b16 %v5592
    %v7118 = vunpack.c.l.b16 %v5593
    %v7119 = vunpack.c.h.b16 %v5593
    %v7120 = vunpack.c.l.b16 %v5594
    %v7121 = vunpack.c.h.b16 %v5594
    %v7122 = vunpack.c.l.b16 %v5595
    %v7123 = vunpack.c.h.b16 %v5595
    %v7124 = vunpack.c.l.b16 %v5596
    %v7125 = vunpack.c.h.b16 %v5596
    %v7126 = vunpack.c.l.b16 %v5597
    %v7127 = vunpack.c.h.b16 %v5597
    %v7128 = vunpack.c.l.b16 %v5598
    %v7129 = vunpack.c.h.b16 %v5598
    %v7130 = vunpack.c.l.b16 %v5599
    %v7131 = vunpack.c.h.b16 %v5599
    %v7132 = vunpack.c.l.b16 %v5600
    %v7133 = vunpack.c.h.b16 %v5600
    %v7134 = vunpack.c.l.b16 %v5601
    %v7135 = vunpack.c.h.b16 %v5601
    %v7136 = vunpack.c.l.b16 %v5602
    %v7137 = vunpack.c.h.b16 %v5602
    %v7138 = vunpack.c.l.b16 %v5603
    %v7139 = vunpack.c.h.b16 %v5603
    %v7140 = vpack.c.b16 %v6132, %v6116
    %v7141 = vpack.c.b16 %v6133, %v6117
    %v7142 = vpack.c.b16 %v6134, %v6118
    %v7143 = vpack.c.b16 %v6135, %v6119
    %v7144 = vpack.c.b16 %v6136, %v6120
    %v7145 = vpack.c.b16 %v6137, %v6121
    %v7146 = vpack.c.b16 %v6138, %v6122
    %v7147 = vpack.c.b16 %v6139, %v6123
    %v7148 = vpack.c.b16 %v6140, %v6124
    %v7149 = vpack.c.b16 %v6141, %v6125
    %v7150 = vpack.c.b16 %v6142, %v6126
    %v7151 = vpack.c.b16 %v6143, %v6127
    %v7152 = vpack.c.b16 %v6144, %v6128
    %v7153 = vpack.c.b16 %v6145, %v6129
    %v7154 = vpack.c.b16 %v6146, %v6130
    %v7155 = vpack.c.b16 %v6147, %v6131
    %v7156 = vpack.c.b16 %v6164, %v6148
    %v7157 = vpack.c.b16 %v6165, %v6149
    %v7158 = vpack.c.b16 %v6166, %v6150
    %v7159 = vpack.c.b16 %v6167, %v6151
    %v7160 = vpack.c.b16 %v6168, %v6152
    %v7161 = vpack.c.b16 %v6169, %v6153
    %v7162 = vpack.c.b16 %v6170, %v6154
    %v7163 = vpack.c.b16 %v6171, %v6155
    %v7164 = vpack.c.b16 %v6172, %v6156
    %v7165 = vpack.c.b16 %v6173, %v6157
    %v7166 = vpack.c.b16 %v6174, %v6158
    %v7167 = vpack.c.b16 %v6175, %v6159
    %v7168 = vpack.c.b16 %v6176, %v6160
    %v7169 = vpack.c.b16 %v6177, %v6161
    %v7170 = vpack.c.b16 %v6178, %v6162
    %v7171 = vpack.c.b16 %v6179, %v6163
    %v7172 = vpack.c.b16 %v6196, %v6180
    %v7173 = vpack.c.b16 %v6197, %v6181
    %v7174 = vpack.c.b16 %v6198, %v6182
    %v7175 = vpack.c.b16 %v6199, %v6183
    %v7176 = vpack.c.b16 %v6200, %v6184
    %v7177 = vpack.c.b16 %v6201, %v6185
    %v7178 = vpack.c.b16 %v6202, %v6186
    %v7179 = vpack.c.b16 %v6203, %v6187
    %v7180 = vpack.c.b16 %v6204, %v6188
    %v7181 = vpack.c.b16 %v6205, %v6189
    %v7182 = vpack.c.b16 %v6206, %v6190
    %v7183 = vpack.c.b16 %v6207, %v6191
    %v7184 = vpack.c.b16 %v6208, %v6192
    %v7185 = vpack.c.b16 %v6209, %v6193
    %v7186 = vpack.c.b16 %v6210, %v6194
    %v7187 = vpack.c.b16 %v6211, %v6195
    %v7188 = vpack.c.b16 %v6228, %v6212
    %v7189 = vpack.c.b16 %v6229, %v6213
    %v7190 = vpack.c.b16 %v6230, %v6214
    %v7191 = vpack.c.b16 %v6231, %v6215
    %v7192 = vpack.c.b16 %v6232, %v6216
    %v7193 = vpack.c.b16 %v6233, %v6217
    %v7194 = vpack.c.b16 %v6234, %v6218
    %v7195 = vpack.c.b16 %v6235, %v6219
    %v7196 = vpack.c.b16 %v6236, %v6220
    %v7197 = vpack.c.b16 %v6237, %v6221
    %v7198 = vpack.c.b16 %v6238, %v6222
    %v7199 = vpack.c.b16 %v6239, %v6223
    %v7200 = vpack.c.b16 %v6240, %v6224
    %v7201 = vpack.c.b16 %v6241, %v6225
    %v7202 = vpack.c.b16 %v6242, %v6226
    %v7203 = vpack.c.b16 %v6243, %v6227
    %v7204 = vpack.c.b16 %v6260, %v6244
    %v7205 = vpack.c.b16 %v6261, %v6245
    %v7206 = vpack.c.b16 %v6262, %v6246
    %v7207 = vpack.c.b16 %v6263, %v6247
    %v7208 = vpack.c.b16 %v6264, %v6248
    %v7209 = vpack.c.b16 %v6265, %v6249
    %v7210 = vpack.c.b16 %v6266, %v6250
    %v7211 = vpack.c.b16 %v6267, %v6251
    %v7212 = vpack.c.b16 %v6268, %v6252
    %v7213 = vpack.c.b16 %v6269, %v6253
    %v7214 = vpack.c.b16 %v6270, %v6254
    %v7215 = vpack.c.b16 %v6271, %v6255
    %v7216 = vpack.c.b16 %v6272, %v6256
    %v7217 = vpack.c.b16 %v6273, %v6257
    %v7218 = vpack.c.b16 %v6274, %v6258
    %v7219 = vpack.c.b16 %v6275, %v6259
    %v7220 = vpack.c.b16 %v6292, %v6276
    %v7221 = vpack.c.b16 %v6293, %v6277
    %v7222 = vpack.c.b16 %v6294, %v6278
    %v7223 = vpack.c.b16 %v6295, %v6279
    %v7224 = vpack.c.b16 %v6296, %v6280
    %v7225 = vpack.c.b16 %v6297, %v6281
    %v7226 = vpack.c.b16 %v6298, %v6282
    %v7227 = vpack.c.b16 %v6299, %v6283
    %v7228 = vpack.c.b16 %v6300, %v6284
    %v7229 = vpack.c.b16 %v6301, %v6285
    %v7230 = vpack.c.b16 %v6302, %v6286
    %v7231 = vpack.c.b16 %v6303, %v6287
    %v7232 = vpack.c.b16 %v6304, %v6288
    %v7233 = vpack.c.b16 %v6305, %v6289
    %v7234 = vpack.c.b16 %v6306, %v6290
    %v7235 = vpack.c.b16 %v6307, %v6291
    %v7236 = vpack.c.b16 %v6324, %v6308
    %v7237 = vpack.c.b16 %v6325, %v6309
    %v7238 = vpack.c.b16 %v6326, %v6310
    %v7239 = vpack.c.b16 %v6327, %v6311
    %v7240 = vpack.c.b16 %v6328, %v6312
    %v7241 = vpack.c.b16 %v6329, %v6313
    %v7242 = vpack.c.b16 %v6330, %v6314
    %v7243 = vpack.c.b16 %v6331, %v6315
    %v7244 = vpack.c.b16 %v6332, %v6316
    %v7245 = vpack.c.b16 %v6333, %v6317
    %v7246 = vpack.c.b16 %v6334, %v6318
    %v7247 = vpack.c.b16 %v6335, %v6319
    %v7248 = vpack.c.b16 %v6336, %v6320
    %v7249 = vpack.c.b16 %v6337, %v6321
    %v7250 = vpack.c.b16 %v6338, %v6322
    %v7251 = vpack.c.b16 %v6339, %v6323
    %v7252 = vpack.c.b16 %v6356, %v6340
    %v7253 = vpack.c.b16 %v6357, %v6341
    %v7254 = vpack.c.b16 %v6358, %v6342
    %v7255 = vpack.c.b16 %v6359, %v6343
    %v7256 = vpack.c.b16 %v6360, %v6344
    %v7257 = vpack.c.b16 %v6361, %v6345
    %v7258 = vpack.c.b16 %v6362, %v6346
    %v7259 = vpack.c.b16 %v6363, %v6347
    %v7260 = vpack.c.b16 %v6364, %v6348
    %v7261 = vpack.c.b16 %v6365, %v6349
    %v7262 = vpack.c.b16 %v6366, %v6350
    %v7263 = vpack.c.b16 %v6367, %v6351
    %v7264 = vpack.c.b16 %v6368, %v6352
    %v7265 = vpack.c.b16 %v6369, %v6353
    %v7266 = vpack.c.b16 %v6370, %v6354
    %v7267 = vpack.c.b16 %v6371, %v6355
    %v7268 = vpack.c.b16 %v6388, %v6372
    %v7269 = vpack.c.b16 %v6389, %v6373
    %v7270 = vpack.c.b16 %v6390, %v6374
    %v7271 = vpack.c.b16 %v6391, %v6375
    %v7272 = vpack.c.b16 %v6392, %v6376
    %v7273 = vpack.c.b16 %v6393, %v6377
    %v7274 = vpack.c.b16 %v6394, %v6378
    %v7275 = vpack.c.b16 %v6395, %v6379
    %v7276 = vpack.c.b16 %v6396, %v6380
    %v7277 = vpack.c.b16 %v6397, %v6381
    %v7278 = vpack.c.b16 %v6398, %v6382
    %v7279 = vpack.c.b16 %v6399, %v6383
    %v7280 = vpack.c.b16 %v6400, %v6384
    %v7281 = vpack.c.b16 %v6401, %v6385
    %v7282 = vpack.c.b16 %v6402, %v6386
    %v7283 = vpack.c.b16 %v6403, %v6387
    %v7284 = vpack.c.b16 %v6420, %v6404
    %v7285 = vpack.c.b16 %v6421, %v6405
    %v7286 = vpack.c.b16 %v6422, %v6406
    %v7287 = vpack.c.b16 %v6423, %v6407
    %v7288 = vpack.c.b16 %v6424, %v6408
    %v7289 = vpack.c.b16 %v6425, %v6409
    %v7290 = vpack.c.b16 %v6426, %v6410
    %v7291 = vpack.c.b16 %v6427, %v6411
    %v7292 = vpack.c.b16 %v6428, %v6412
    %v7293 = vpack.c.b16 %v6429, %v6413
    %v7294 = vpack.c.b16 %v6430, %v6414
    %v7295 = vpack.c.b16 %v6431, %v6415
    %v7296 = vpack.c.b16 %v6432, %v6416
    %v7297 = vpack.c.b16 %v6433, %v6417
    %v7298 = vpack.c.b16 %v6434, %v6418
    %v7299 = vpack.c.b16 %v6435, %v6419
    %v7300 = vpack.c.b16 %v6452, %v6436
    %v7301 = vpack.c.b16 %v6453, %v6437
    %v7302 = vpack.c.b16 %v6454, %v6438
    %v7303 = vpack.c.b16 %v6455, %v6439
    %v7304 = vpack.c.b16 %v6456, %v6440
    %v7305 = vpack.c.b16 %v6457, %v6441
    %v7306 = vpack.c.b16 %v6458, %v6442
    %v7307 = vpack.c.b16 %v6459, %v6443
    %v7308 = vpack.c.b16 %v6460, %v6444
    %v7309 = vpack.c.b16 %v6461, %v6445
    %v7310 = vpack.c.b16 %v6462, %v6446
    %v7311 = vpack.c.b16 %v6463, %v6447
    %v7312 = vpack.c.b16 %v6464, %v6448
    %v7313 = vpack.c.b16 %v6465, %v6449
    %v7314 = vpack.c.b16 %v6466, %v6450
    %v7315 = vpack.c.b16 %v6467, %v6451
    %v7316 = vpack.c.b16 %v6484, %v6468
    %v7317 = vpack.c.b16 %v6485, %v6469
    %v7318 = vpack.c.b16 %v6486, %v6470
    %v7319 = vpack.c.b16 %v6487, %v6471
    %v7320 = vpack.c.b16 %v6488, %v6472
    %v7321 = vpack.c.b16 %v6489, %v6473
    %v7322 = vpack.c.b16 %v6490, %v6474
    %v7323 = vpack.c.b16 %v6491, %v6475
    %v7324 = vpack.c.b16 %v6492, %v6476
    %v7325 = vpack.c.b16 %v6493, %v6477
    %v7326 = vpack.c.b16 %v6494, %v6478
    %v7327 = vpack.c.b16 %v6495, %v6479
    %v7328 = vpack.c.b16 %v6496, %v6480
    %v7329 = vpack.c.b16 %v6497, %v6481
    %v7330 = vpack.c.b16 %v6498, %v6482
    %v7331 = vpack.c.b16 %v6499, %v6483
    %v7332 = vpack.c.b16 %v6516, %v6500
    %v7333 = vpack.c.b16 %v6517, %v6501
    %v7334 = vpack.c.b16 %v6518, %v6502
    %v7335 = vpack.c.b16 %v6519, %v6503
    %v7336 = vpack.c.b16 %v6520, %v6504
    %v7337 = vpack.c.b16 %v6521, %v6505
    %v7338 = vpack.c.b16 %v6522, %v6506
    %v7339 = vpack.c.b16 %v6523, %v6507
    %v7340 = vpack.c.b16 %v6524, %v6508
    %v7341 = vpack.c.b16 %v6525, %v6509
    %v7342 = vpack.c.b16 %v6526, %v6510
    %v7343 = vpack.c.b16 %v6527, %v6511
    %v7344 = vpack.c.b16 %v6528, %v6512
    %v7345 = vpack.c.b16 %v6529, %v6513
    %v7346 = vpack.c.b16 %v6530, %v6514
    %v7347 = vpack.c.b16 %v6531, %v6515
    %v7348 = vpack.c.b16 %v6548, %v6532
    %v7349 = vpack.c.b16 %v6549, %v6533
    %v7350 = vpack.c.b16 %v6550, %v6534
    %v7351 = vpack.c.b16 %v6551, %v6535
    %v7352 = vpack.c.b16 %v6552, %v6536
    %v7353 = vpack.c.b16 %v6553, %v6537
    %v7354 = vpack.c.b16 %v6554, %v6538
    %v7355 = vpack.c.b16 %v6555, %v6539
    %v7356 = vpack.c.b16 %v6556, %v6540
    %v7357 = vpack.c.b16 %v6557, %v6541
    %v7358 = vpack.c.b16 %v6558, %v6542
    %v7359 = vpack.c.b16 %v6559, %v6543
    %v7360 = vpack.c.b16 %v6560, %v6544
    %v7361 = vpack.c.b16 %v6561, %v6545
    %v7362 = vpack.c.b16 %v6562, %v6546
    %v7363 = vpack.c.b16 %v6563, %v6547
    %v7364 = vpack.c.b16 %v6580, %v6564
    %v7365 = vpack.c.b16 %v6581, %v6565
    %v7366 = vpack.c.b16 %v6582, %v6566
    %v7367 = vpack.c.b16 %v6583, %v6567
    %v7368 = vpack.c.b16 %v6584, %v6568
    %v7369 = vpack.c.b16 %v6585, %v6569
    %v7370 = vpack.c.b16 %v6586, %v6570
    %v7371 = vpack.c.b16 %v6587, %v6571
    %v7372 = vpack.c.b16 %v6588, %v6572
    %v7373 = vpack.c.b16 %v6589, %v6573
    %v7374 = vpack.c.b16 %v6590, %v6574
    %v7375 = vpack.c.b16 %v6591, %v6575
    %v7376 = vpack.c.b16 %v6592, %v6576
    %v7377 = vpack.c.b16 %v6593, %v6577
    %v7378 = vpack.c.b16 %v6594, %v6578
    %v7379 = vpack.c.b16 %v6595, %v6579
    %v7380 = vpack.c.b16 %v6612, %v6596
    %v7381 = vpack.c.b16 %v6613, %v6597
    %v7382 = vpack.c.b16 %v6614, %v6598
    %v7383 = vpack.c.b16 %v6615, %v6599
    %v7384 = vpack.c.b16 %v6616, %v6600
    %v7385 = vpack.c.b16 %v6617, %v6601
    %v7386 = vpack.c.b16 %v6618, %v6602
    %v7387 = vpack.c.b16 %v6619, %v6603
    %v7388 = vpack.c.b16 %v6620, %v6604
    %v7389 = vpack.c.b16 %v6621, %v6605
    %v7390 = vpack.c.b16 %v6622, %v6606
    %v7391 = vpack.c.b16 %v6623, %v6607
    %v7392 = vpack.c.b16 %v6624, %v6608
    %v7393 = vpack.c.b16 %v6625, %v6609
    %v7394 = vpack.c.b16 %v6626, %v6610
    %v7395 = vpack.c.b16 %v6627, %v6611
    %v7396 = vpack.c.b16 %v6644, %v6628
    %v7397 = vpack.c.b16 %v6645, %v6629
    %v7398 = vpack.c.b16 %v6646, %v6630
    %v7399 = vpack.c.b16 %v6647, %v6631
    %v7400 = vpack.c.b16 %v6648, %v6632
    %v7401 = vpack.c.b16 %v6649, %v6633
    %v7402 = vpack.c.b16 %v6650, %v6634
    %v7403 = vpack.c.b16 %v6651, %v6635
    %v7404 = vpack.c.b16 %v6652, %v6636
    %v7405 = vpack.c.b16 %v6653, %v6637
    %v7406 = vpack.c.b16 %v6654, %v6638
    %v7407 = vpack.c.b16 %v6655, %v6639
    %v7408 = vpack.c.b16 %v6656, %v6640
    %v7409 = vpack.c.b16 %v6657, %v6641
    %v7410 = vpack.c.b16 %v6658, %v6642
    %v7411 = vpack.c.b16 %v6659, %v6643
    %v7412 = vpack.c.b16 %v6676, %v6660
    %v7413 = vpack.c.b16 %v6677, %v6661
    %v7414 = vpack.c.b16 %v6678, %v6662
    %v7415 = vpack.c.b16 %v6679, %v6663
    %v7416 = vpack.c.b16 %v6680, %v6664
    %v7417 = vpack.c.b16 %v6681, %v6665
    %v7418 = vpack.c.b16 %v6682, %v6666
    %v7419 = vpack.c.b16 %v6683, %v6667
    %v7420 = vpack.c.b16 %v6684, %v6668
    %v7421 = vpack.c.b16 %v6685, %v6669
    %v7422 = vpack.c.b16 %v6686, %v6670
    %v7423 = vpack.c.b16 %v6687, %v6671
    %v7424 = vpack.c.b16 %v6688, %v6672
    %v7425 = vpack.c.b16 %v6689, %v6673
    %v7426 = vpack.c.b16 %v6690, %v6674
    %v7427 = vpack.c.b16 %v6691, %v6675
    %v7428 = vpack.c.b16 %v6708, %v6692
    %v7429 = vpack.c.b16 %v6709, %v6693
    %v7430 = vpack.c.b16 %v6710, %v6694
    %v7431 = vpack.c.b16 %v6711, %v6695
    %v7432 = vpack.c.b16 %v6712, %v6696
    %v7433 = vpack.c.b16 %v6713, %v6697
    %v7434 = vpack.c.b16 %v6714, %v6698
    %v7435 = vpack.c.b16 %v6715, %v6699
    %v7436 = vpack.c.b16 %v6716, %v6700
    %v7437 = vpack.c.b16 %v6717, %v6701
    %v7438 = vpack.c.b16 %v6718, %v6702
    %v7439 = vpack.c.b16 %v6719, %v6703
    %v7440 = vpack.c.b16 %v6720, %v6704
    %v7441 = vpack.c.b16 %v6721, %v6705
    %v7442 = vpack.c.b16 %v6722, %v6706
    %v7443 = vpack.c.b16 %v6723, %v6707
    %v7444 = vpack.c.b16 %v6740, %v6724
    %v7445 = vpack.c.b16 %v6741, %v6725
    %v7446 = vpack.c.b16 %v6742, %v6726
    %v7447 = vpack.c.b16 %v6743, %v6727
    %v7448 = vpack.c.b16 %v6744, %v6728
    %v7449 = vpack.c.b16 %v6745, %v6729
    %v7450 = vpack.c.b16 %v6746, %v6730
    %v7451 = vpack.c.b16 %v6747, %v6731
    %v7452 = vpack.c.b16 %v6748, %v6732
    %v7453 = vpack.c.b16 %v6749, %v6733
    %v7454 = vpack.c.b16 %v6750, %v6734
    %v7455 = vpack.c.b16 %v6751, %v6735
    %v7456 = vpack.c.b16 %v6752, %v6736
    %v7457 = vpack.c.b16 %v6753, %v6737
    %v7458 = vpack.c.b16 %v6754, %v6738
    %v7459 = vpack.c.b16 %v6755, %v6739
    %v7460 = vpack.c.b16 %v6772, %v6756
    %v7461 = vpack.c.b16 %v6773, %v6757
    %v7462 = vpack.c.b16 %v6774, %v6758
    %v7463 = vpack.c.b16 %v6775, %v6759
    %v7464 = vpack.c.b16 %v6776, %v6760
    %v7465 = vpack.c.b16 %v6777, %v6761
    %v7466 = vpack.c.b16 %v6778, %v6762
    %v7467 = vpack.c.b16 %v6779, %v6763
    %v7468 = vpack.c.b16 %v6780, %v6764
    %v7469 = vpack.c.b16 %v6781, %v6765
    %v7470 = vpack.c.b16 %v6782, %v6766
    %v7471 = vpack.c.b16 %v6783, %v6767
    %v7472 = vpack.c.b16 %v6784, %v6768
    %v7473 = vpack.c.b16 %v6785, %v6769
    %v7474 = vpack.c.b16 %v6786, %v6770
    %v7475 = vpack.c.b16 %v6787, %v6771
    %v7476 = vpack.c.b16 %v6804, %v6788
    %v7477 = vpack.c.b16 %v6805, %v6789
    %v7478 = vpack.c.b16 %v6806, %v6790
    %v7479 = vpack.c.b16 %v6807, %v6791
    %v7480 = vpack.c.b16 %v6808, %v6792
    %v7481 = vpack.c.b16 %v6809, %v6793
    %v7482 = vpack.c.b16 %v6810, %v6794
    %v7483 = vpack.c.b16 %v6811, %v6795
    %v7484 = vpack.c.b16 %v6812, %v6796
    %v7485 = vpack.c.b16 %v6813, %v6797
    %v7486 = vpack.c.b16 %v6814, %v6798
    %v7487 = vpack.c.b16 %v6815, %v6799
    %v7488 = vpack.c.b16 %v6816, %v6800
    %v7489 = vpack.c.b16 %v6817, %v6801
    %v7490 = vpack.c.b16 %v6818, %v6802
    %v7491 = vpack.c.b16 %v6819, %v6803
    %v7492 = vpack.c.b16 %v6836, %v6820
    %v7493 = vpack.c.b16 %v6837, %v6821
    %v7494 = vpack.c.b16 %v6838, %v6822
    %v7495 = vpack.c.b16 %v6839, %v6823
    %v7496 = vpack.c.b16 %v6840, %v6824
    %v7497 = vpack.c.b16 %v6841, %v6825
    %v7498 = vpack.c.b16 %v6842, %v6826
    %v7499 = vpack.c.b16 %v6843, %v6827
    %v7500 = vpack.c.b16 %v6844, %v6828
    %v7501 = vpack.c.b16 %v6845, %v6829
    %v7502 = vpack.c.b16 %v6846, %v6830
    %v7503 = vpack.c.b16 %v6847, %v6831
    %v7504 = vpack.c.b16 %v6848, %v6832
    %v7505 = vpack.c.b16 %v6849, %v6833
    %v7506 = vpack.c.b16 %v6850, %v6834
    %v7507 = vpack.c.b16 %v6851, %v6835
    %v7508 = vpack.c.b16 %v6868, %v6852
    %v7509 = vpack.c.b16 %v6869, %v6853
    %v7510 = vpack.c.b16 %v6870, %v6854
    %v7511 = vpack.c.b16 %v6871, %v6855
    %v7512 = vpack.c.b16 %v6872, %v6856
    %v7513 = vpack.c.b16 %v6873, %v6857
    %v7514 = vpack.c.b16 %v6874, %v6858
    %v7515 = vpack.c.b16 %v6875, %v6859
    %v7516 = vpack.c.b16 %v6876, %v6860
    %v7517 = vpack.c.b16 %v6877, %v6861
    %v7518 = vpack.c.b16 %v6878, %v6862
    %v7519 = vpack.c.b16 %v6879, %v6863
    %v7520 = vpack.c.b16 %v6880, %v6864
    %v7521 = vpack.c.b16 %v6881, %v6865
    %v7522 = vpack.c.b16 %v6882, %v6866
    %v7523 = vpack.c.b16 %v6883, %v6867
    %v7524 = vpack.c.b16 %v6900, %v6884
    %v7525 = vpack.c.b16 %v6901, %v6885
    %v7526 = vpack.c.b16 %v6902, %v6886
    %v7527 = vpack.c.b16 %v6903, %v6887
    %v7528 = vpack.c.b16 %v6904, %v6888
    %v7529 = vpack.c.b16 %v6905, %v6889
    %v7530 = vpack.c.b16 %v6906, %v6890
    %v7531 = vpack.c.b16 %v6907, %v6891
    %v7532 = vpack.c.b16 %v6908, %v6892
    %v7533 = vpack.c.b16 %v6909, %v6893
    %v7534 = vpack.c.b16 %v6910, %v6894
    %v7535 = vpack.c.b16 %v6911, %v6895
    %v7536 = vpack.c.b16 %v6912, %v6896
    %v7537 = vpack.c.b16 %v6913, %v6897
    %v7538 = vpack.c.b16 %v6914, %v6898
    %v7539 = vpack.c.b16 %v6915, %v6899
    %v7540 = vpack.c.b16 %v6932, %v6916
    %v7541 = vpack.c.b16 %v6933, %v6917
    %v7542 = vpack.c.b16 %v6934, %v6918
    %v7543 = vpack.c.b16 %v6935, %v6919
    %v7544 = vpack.c.b16 %v6936, %v6920
    %v7545 = vpack.c.b16 %v6937, %v6921
    %v7546 = vpack.c.b16 %v6938, %v6922
    %v7547 = vpack.c.b16 %v6939, %v6923
    %v7548 = vpack.c.b16 %v6940, %v6924
    %v7549 = vpack.c.b16 %v6941, %v6925
    %v7550 = vpack.c.b16 %v6942, %v6926
    %v7551 = vpack.c.b16 %v6943, %v6927
    %v7552 = vpack.c.b16 %v6944, %v6928
    %v7553 = vpack.c.b16 %v6945, %v6929
    %v7554 = vpack.c.b16 %v6946, %v6930
    %v7555 = vpack.c.b16 %v6947, %v6931
    %v7556 = vpack.c.b16 %v6964, %v6948
    %v7557 = vpack.c.b16 %v6965, %v6949
    %v7558 = vpack.c.b16 %v6966, %v6950
    %v7559 = vpack.c.b16 %v6967, %v6951
    %v7560 = vpack.c.b16 %v6968, %v6952
    %v7561 = vpack.c.b16 %v6969, %v6953
    %v7562 = vpack.c.b16 %v6970, %v6954
    %v7563 = vpack.c.b16 %v6971, %v6955
    %v7564 = vpack.c.b16 %v6972, %v6956
    %v7565 = vpack.c.b16 %v6973, %v6957
    %v7566 = vpack.c.b16 %v6974, %v6958
    %v7567 = vpack.c.b16 %v6975, %v6959
    %v7568 = vpack.c.b16 %v6976, %v6960
    %v7569 = vpack.c.b16 %v6977, %v6961
    %v7570 = vpack.c.b16 %v6978, %v6962
    %v7571 = vpack.c.b16 %v6979, %v6963
    %v7572 = vpack.c.b16 %v6996, %v6980
    %v7573 = vpack.c.b16 %v6997, %v6981
    %v7574 = vpack.c.b16 %v6998, %v6982
    %v7575 = vpack.c.b16 %v6999, %v6983
    %v7576 = vpack.c.b16 %v7000, %v6984
    %v7577 = vpack.c.b16 %v7001, %v6985
    %v7578 = vpack.c.b16 %v7002, %v6986
    %v7579 = vpack.c.b16 %v7003, %v6987
    %v7580 = vpack.c.b16 %v7004, %v6988
    %v7581 = vpack.c.b16 %v7005, %v6989
    %v7582 = vpack.c.b16 %v7006, %v6990
    %v7583 = vpack.c.b16 %v7007, %v6991
    %v7584 = vpack.c.b16 %v7008, %v6992
    %v7585 = vpack.c.b16 %v7009, %v6993
    %v7586 = vpack.c.b16 %v7010, %v6994
    %v7587 = vpack.c.b16 %v7011, %v6995
    %v7588 = vpack.c.b16 %v7028, %v7012
    %v7589 = vpack.c.b16 %v7029, %v7013
    %v7590 = vpack.c.b16 %v7030, %v7014
    %v7591 = vpack.c.b16 %v7031, %v7015
    %v7592 = vpack.c.b16 %v7032, %v7016
    %v7593 = vpack.c.b16 %v7033, %v7017
    %v7594 = vpack.c.b16 %v7034, %v7018
    %v7595 = vpack.c.b16 %v7035, %v7019
    %v7596 = vpack.c.b16 %v7036, %v7020
    %v7597 = vpack.c.b16 %v7037, %v7021
    %v7598 = vpack.c.b16 %v7038, %v7022
    %v7599 = vpack.c.b16 %v7039, %v7023
    %v7600 = vpack.c.b16 %v7040, %v7024
    %v7601 = vpack.c.b16 %v7041, %v7025
    %v7602 = vpack.c.b16 %v7042, %v7026
    %v7603 = vpack.c.b16 %v7043, %v7027
    %v7604 = vpack.c.b16 %v7060, %v7044
    %v7605 = vpack.c.b16 %v7061, %v7045
    %v7606 = vpack.c.b16 %v7062, %v7046
    %v7607 = vpack.c.b16 %v7063, %v7047
    %v7608 = vpack.c.b16 %v7064, %v7048
    %v7609 = vpack.c.b16 %v7065, %v7049
    %v7610 = vpack.c.b16 %v7066, %v7050
    %v7611 = vpack.c.b16 %v7067, %v7051
    %v7612 = vpack.c.b16 %v7068, %v7052
    %v7613 = vpack.c.b16 %v7069, %v7053
    %v7614 = vpack.c.b16 %v7070, %v7054
    %v7615 = vpack.c.b16 %v7071, %v7055
    %v7616 = vpack.c.b16 %v7072, %v7056
    %v7617 = vpack.c.b16 %v7073, %v7057
    %v7618 = vpack.c.b16 %v7074, %v7058
    %v7619 = vpack.c.b16 %v7075, %v7059
    %v7620 = vpack.c.b16 %v7092, %v7076
    %v7621 = vpack.c.b16 %v7093, %v7077
    %v7622 = vpack.c.b16 %v7094, %v7078
    %v7623 = vpack.c.b16 %v7095, %v7079
    %v7624 = vpack.c.b16 %v7096, %v7080
    %v7625 = vpack.c.b16 %v7097, %v7081
    %v7626 = vpack.c.b16 %v7098, %v7082
    %v7627 = vpack.c.b16 %v7099, %v7083
    %v7628 = vpack.c.b16 %v7100, %v7084
    %v7629 = vpack.c.b16 %v7101, %v7085
    %v7630 = vpack.c.b16 %v7102, %v7086
    %v7631 = vpack.c.b16 %v7103, %v7087
    %v7632 = vpack.c.b16 %v7104, %v7088
    %v7633 = vpack.c.b16 %v7105, %v7089
    %v7634 = vpack.c.b16 %v7106, %v7090
    %v7635 = vpack.c.b16 %v7107, %v7091
    %v7636 = vpack.c.b16 %v7124, %v7108
    %v7637 = vpack.c.b16 %v7125, %v7109
    %v7638 = vpack.c.b16 %v7126, %v7110
    %v7639 = vpack.c.b16 %v7127, %v7111
    %v7640 = vpack.c.b16 %v7128, %v7112
    %v7641 = vpack.c.b16 %v7129, %v7113
    %v7642 = vpack.c.b16 %v7130, %v7114
    %v7643 = vpack.c.b16 %v7131, %v7115
    %v7644 = vpack.c.b16 %v7132, %v7116
    %v7645 = vpack.c.b16 %v7133, %v7117
    %v7646 = vpack.c.b16 %v7134, %v7118
    %v7647 = vpack.c.b16 %v7135, %v7119
    %v7648 = vpack.c.b16 %v7136, %v7120
    %v7649 = vpack.c.b16 %v7137, %v7121
    %v7650 = vpack.c.b16 %v7138, %v7122
    %v7651 = vpack.c.b16 %v7139, %v7123
    %8164 = vmatprep.subr.bf16.mxu0 %v7253
    %8165 = vmatpush1.bf16.msra.mxu0 %v7252
    %8166 = vmatprep.subr.bf16.mxu0 %v7237
    %8167 = vmatpush1.bf16.msra.mxu0 %v7236
    %8168 = vmatprep.subr.bf16.mxu0 %v7221
    %8169 = vmatpush1.bf16.msra.mxu0 %v7220
    %8170 = vmatprep.subr.bf16.mxu0 %v7205
    %8171 = vmatpush1.bf16.msra.mxu0 %v7204
    %8172 = vmatprep.subr.bf16.mxu0 %v7189
    %8173 = vmatpush1.bf16.msra.mxu0 %v7188
    %8174 = vmatprep.subr.bf16.mxu0 %v7173
    %8175 = vmatpush1.bf16.msra.mxu0 %v7172
    %8176 = vmatprep.subr.bf16.mxu0 %v7157
    %8177 = vmatpush1.bf16.msra.mxu0 %v7156
    %8178 = vmatprep.subr.bf16.mxu0 %v7141
    %8179 = vmatpush1.bf16.msra.mxu0 %v7140
    %8180 = vmatprep.subr.bf16.mxu0 %v7381
    %8181 = vmatpush2.bf16.msra.mxu0 %v7380
    %8182 = vmatprep.subr.bf16.mxu0 %v7365
    %8183 = vmatpush2.bf16.msra.mxu0 %v7364
    %8184 = vmatprep.subr.bf16.mxu0 %v7349
    %8185 = vmatpush2.bf16.msra.mxu0 %v7348
    %8186 = vmatprep.subr.bf16.mxu0 %v7333
    %8187 = vmatpush2.bf16.msra.mxu0 %v7332
    %8188 = vmatprep.subr.bf16.mxu0 %v7317
    %8189 = vmatpush2.bf16.msra.mxu0 %v7316
    %8190 = vmatprep.subr.bf16.mxu0 %v7301
    %8191 = vmatpush2.bf16.msra.mxu0 %v7300
    %8192 = vmatprep.subr.bf16.mxu0 %v7285
    %8193 = vmatpush2.bf16.msra.mxu0 %v7284
    %8194 = vmatprep.subr.bf16.mxu0 %v7269
    %8195 = vmatpush2.bf16.msra.mxu0 %v7268
    %8196 = vmatprep.mubr.bf16.mxu0 %v5077
    %8197 = vmatmul.mubr.bf16.gmra.mxu0 %v5076
    %v8198 = vpop.f32.mrf.mxu0
    %v8199 = vadd.f32 0.0, %v8198
    %v8200 = vpop.f32.mrf.mxu0
    %v8201 = vadd.f32 0.0, %v8200
    %v8202 = vpop.f32.mrf.mxu0
    %v8203 = vadd.f32 0.0, %v8202
    %v8204 = vpop.f32.mrf.mxu0
    %v8205 = vadd.f32 0.0, %v8204
    %8206 = vmatprep.mubr.bf16.mxu0 %v5081
    %8207 = vmatmul.mubr.bf16.gmra.mxu0 %v5080
    %v8208 = vpop.f32.mrf.mxu0
    %v8209 = vadd.f32 0.0, %v8208
    %v8210 = vpop.f32.mrf.mxu0
    %v8211 = vadd.f32 0.0, %v8210
    %v8212 = vpop.f32.mrf.mxu0
    %v8213 = vadd.f32 0.0, %v8212
    %v8214 = vpop.f32.mrf.mxu0
    %v8215 = vadd.f32 0.0, %v8214
    %8216 = vmatprep.mubr.bf16.mxu0 %v5085
    %8217 = vmatmul.mubr.bf16.gmra.mxu0 %v5084
    %v8218 = vpop.f32.mrf.mxu0
    %v8219 = vadd.f32 0.0, %v8218
    %v8220 = vpop.f32.mrf.mxu0
    %v8221 = vadd.f32 0.0, %v8220
    %v8222 = vpop.f32.mrf.mxu0
    %v8223 = vadd.f32 0.0, %v8222
    %v8224 = vpop.f32.mrf.mxu0
    %v8225 = vadd.f32 0.0, %v8224
    %8226 = vmatprep.mubr.bf16.mxu0 %v5089
    %8227 = vmatmul.mubr.bf16.gmra.mxu0 %v5088
    %v8228 = vpop.f32.mrf.mxu0
    %v8229 = vadd.f32 0.0, %v8228
    %v8230 = vpop.f32.mrf.mxu0
    %v8231 = vadd.f32 0.0, %v8230
    %v8232 = vpop.f32.mrf.mxu0
    %v8233 = vpop.f32.mrf.mxu0
    %8234 = vdwg.mxu0
    %8235 = vmatprep.subr.bf16.mxu0 %v7509
    %8236 = vmatpush1.bf16.msra.mxu0 %v7508
    %8237 = vmatprep.subr.bf16.mxu0 %v7493
    %8238 = vmatpush1.bf16.msra.mxu0 %v7492
    %8239 = vmatprep.subr.bf16.mxu0 %v7477
    %8240 = vmatpush1.bf16.msra.mxu0 %v7476
    %8241 = vmatprep.subr.bf16.mxu0 %v7461
    %8242 = vmatpush1.bf16.msra.mxu0 %v7460
    %8243 = vmatprep.subr.bf16.mxu0 %v7445
    %8244 = vmatpush1.bf16.msra.mxu0 %v7444
    %8245 = vmatprep.subr.bf16.mxu0 %v7429
    %8246 = vmatpush1.bf16.msra.mxu0 %v7428
    %8247 = vmatprep.subr.bf16.mxu0 %v7413
    %8248 = vmatpush1.bf16.msra.mxu0 %v7412
    %8249 = vmatprep.subr.bf16.mxu0 %v7397
    %8250 = vmatpush1.bf16.msra.mxu0 %v7396
    %8251 = vmatprep.subr.bf16.mxu0 %v7637
    %8252 = vmatpush2.bf16.msra.mxu0 %v7636
    %8253 = vmatprep.subr.bf16.mxu0 %v7621
    %8254 = vmatpush2.bf16.msra.mxu0 %v7620
    %8255 = vmatprep.subr.bf16.mxu0 %v7605
    %8256 = vmatpush2.bf16.msra.mxu0 %v7604
    %8257 = vmatprep.subr.bf16.mxu0 %v7589
    %8258 = vmatpush2.bf16.msra.mxu0 %v7588
    %8259 = vmatprep.subr.bf16.mxu0 %v7573
    %8260 = vmatpush2.bf16.msra.mxu0 %v7572
    %8261 = vmatprep.subr.bf16.mxu0 %v7557
    %8262 = vmatpush2.bf16.msra.mxu0 %v7556
    %8263 = vmatprep.subr.bf16.mxu0 %v7541
    %8264 = vmatpush2.bf16.msra.mxu0 %v7540
    %8265 = vmatprep.subr.bf16.mxu0 %v7525
    %8266 = vmatpush2.bf16.msra.mxu0 %v7524
    %8267 = vmatprep.mubr.bf16.mxu0 %v5079
    %8268 = vmatmul.mubr.bf16.gmra.mxu0 %v5078
    %v8269 = vpop.f32.mrf.mxu0
    %v8270 = vadd.f32 %v8199, %v8269
    %v8271 = vpop.f32.mrf.mxu0
    %v8272 = vadd.f32 %v8201, %v8271
    %v8273 = vpop.f32.mrf.mxu0
    %v8274 = vadd.f32 %v8203, %v8273
    %v8275 = vpop.f32.mrf.mxu0
    %v8276 = vadd.f32 %v8205, %v8275
    %8277 = vmatprep.mubr.bf16.mxu0 %v5083
    %8278 = vmatmul.mubr.bf16.gmra.mxu0 %v5082
    %v8279 = vpop.f32.mrf.mxu0
    %v8280 = vadd.f32 %v8209, %v8279
    %v8281 = vpop.f32.mrf.mxu0
    %v8282 = vadd.f32 %v8211, %v8281
    %v8283 = vpop.f32.mrf.mxu0
    %v8284 = vadd.f32 %v8213, %v8283
    %v8285 = vpop.f32.mrf.mxu0
    %v8286 = vadd.f32 %v8215, %v8285
    %8287 = vmatprep.mubr.bf16.mxu0 %v5087
    %8288 = vmatmul.mubr.bf16.gmra.mxu0 %v5086
    %v8289 = vpop.f32.mrf.mxu0
    %v8290 = vadd.f32 %v8219, %v8289
    %v8291 = vpop.f32.mrf.mxu0
    %v8292 = vadd.f32 %v8221, %v8291
    %v8293 = vpop.f32.mrf.mxu0
    %v8294 = vadd.f32 %v8223, %v8293
    %v8295 = vpop.f32.mrf.mxu0
    %v8296 = vadd.f32 %v8225, %v8295
    %8297 = vmatprep.mubr.bf16.mxu0 %v5091
    %8298 = vmatmul.mubr.bf16.gmra.mxu0 %v5090
    %v8299 = vpop.f32.mrf.mxu0
    %v8300 = vadd.f32 %v8229, %v8299
    %v8301 = vpop.f32.mrf.mxu0
    %v8302 = vadd.f32 %v8231, %v8301
    %v8303 = vpop.f32.mrf.mxu0
    %v8304 = vpop.f32.mrf.mxu0
    %8305 = vdwg.mxu0
    %8306 = vmatprep.subr.bf16.mxu0 %v7255
    %8307 = vmatpush1.bf16.msra.mxu0 %v7254
    %8308 = vmatprep.subr.bf16.mxu0 %v7239
    %8309 = vmatpush1.bf16.msra.mxu0 %v7238
    %8310 = vmatprep.subr.bf16.mxu0 %v7223
    %8311 = vmatpush1.bf16.msra.mxu0 %v7222
    %8312 = vmatprep.subr.bf16.mxu0 %v7207
    %8313 = vmatpush1.bf16.msra.mxu0 %v7206
    %8314 = vmatprep.subr.bf16.mxu0 %v7191
    %8315 = vmatpush1.bf16.msra.mxu0 %v7190
    %8316 = vmatprep.subr.bf16.mxu0 %v7175
    %8317 = vmatpush1.bf16.msra.mxu0 %v7174
    %8318 = vmatprep.subr.bf16.mxu0 %v7159
    %8319 = vmatpush1.bf16.msra.mxu0 %v7158
    %8320 = vmatprep.subr.bf16.mxu0 %v7143
    %8321 = vmatpush1.bf16.msra.mxu0 %v7142
    %8322 = vmatprep.subr.bf16.mxu0 %v7383
    %8323 = vmatpush2.bf16.msra.mxu0 %v7382
    %8324 = vmatprep.subr.bf16.mxu0 %v7367
    %8325 = vmatpush2.bf16.msra.mxu0 %v7366
    %8326 = vmatprep.subr.bf16.mxu0 %v7351
    %8327 = vmatpush2.bf16.msra.mxu0 %v7350
    %8328 = vmatprep.subr.bf16.mxu0 %v7335
    %8329 = vmatpush2.bf16.msra.mxu0 %v7334
    %8330 = vmatprep.subr.bf16.mxu0 %v7319
    %8331 = vmatpush2.bf16.msra.mxu0 %v7318
    %8332 = vmatprep.subr.bf16.mxu0 %v7303
    %8333 = vmatpush2.bf16.msra.mxu0 %v7302
    %8334 = vmatprep.subr.bf16.mxu0 %v7287
    %8335 = vmatpush2.bf16.msra.mxu0 %v7286
    %8336 = vmatprep.subr.bf16.mxu0 %v7271
    %8337 = vmatpush2.bf16.msra.mxu0 %v7270
    %8338 = vmatprep.mubr.bf16.mxu0 %v5077
    %8339 = vmatmul.mubr.bf16.gmra.mxu0 %v5076
    %v8340 = vpop.f32.mrf.mxu0
    %v8341 = vadd.f32 0.0, %v8340
    %v8342 = vpop.f32.mrf.mxu0
    %v8343 = vadd.f32 0.0, %v8342
    %v8344 = vpop.f32.mrf.mxu0
    %v8345 = vadd.f32 0.0, %v8344
    %v8346 = vpop.f32.mrf.mxu0
    %v8347 = vadd.f32 0.0, %v8346
    %8348 = vmatprep.mubr.bf16.mxu0 %v5081
    %8349 = vmatmul.mubr.bf16.gmra.mxu0 %v5080
    %v8350 = vpop.f32.mrf.mxu0
    %v8351 = vadd.f32 0.0, %v8350
    %v8352 = vpop.f32.mrf.mxu0
    %v8353 = vadd.f32 0.0, %v8352
    %v8354 = vpop.f32.mrf.mxu0
    %v8355 = vadd.f32 0.0, %v8354
    %v8356 = vpop.f32.mrf.mxu0
    %v8357 = vadd.f32 0.0, %v8356
    %8358 = vmatprep.mubr.bf16.mxu0 %v5085
    %8359 = vmatmul.mubr.bf16.gmra.mxu0 %v5084
    %v8360 = vpop.f32.mrf.mxu0
    %v8361 = vadd.f32 0.0, %v8360
    %v8362 = vpop.f32.mrf.mxu0
    %v8363 = vadd.f32 0.0, %v8362
    %v8364 = vpop.f32.mrf.mxu0
    %v8365 = vadd.f32 0.0, %v8364
    %v8366 = vpop.f32.mrf.mxu0
    %v8367 = vadd.f32 0.0, %v8366
    %8368 = vmatprep.mubr.bf16.mxu0 %v5089
    %8369 = vmatmul.mubr.bf16.gmra.mxu0 %v5088
    %v8370 = vpop.f32.mrf.mxu0
    %v8371 = vadd.f32 0.0, %v8370
    %v8372 = vpop.f32.mrf.mxu0
    %v8373 = vadd.f32 0.0, %v8372
    %v8374 = vpop.f32.mrf.mxu0
    %v8375 = vpop.f32.mrf.mxu0
    %8376 = vdwg.mxu0
    %8377 = vmatprep.subr.bf16.mxu0 %v7511
    %8378 = vmatpush1.bf16.msra.mxu0 %v7510
    %8379 = vmatprep.subr.bf16.mxu0 %v7495
    %8380 = vmatpush1.bf16.msra.mxu0 %v7494
    %8381 = vmatprep.subr.bf16.mxu0 %v7479
    %8382 = vmatpush1.bf16.msra.mxu0 %v7478
    %8383 = vmatprep.subr.bf16.mxu0 %v7463
    %8384 = vmatpush1.bf16.msra.mxu0 %v7462
    %8385 = vmatprep.subr.bf16.mxu0 %v7447
    %8386 = vmatpush1.bf16.msra.mxu0 %v7446
    %8387 = vmatprep.subr.bf16.mxu0 %v7431
    %8388 = vmatpush1.bf16.msra.mxu0 %v7430
    %8389 = vmatprep.subr.bf16.mxu0 %v7415
    %8390 = vmatpush1.bf16.msra.mxu0 %v7414
    %8391 = vmatprep.subr.bf16.mxu0 %v7399
    %8392 = vmatpush1.bf16.msra.mxu0 %v7398
    %8393 = vmatprep.subr.bf16.mxu0 %v7639
    %8394 = vmatpush2.bf16.msra.mxu0 %v7638
    %8395 = vmatprep.subr.bf16.mxu0 %v7623
    %8396 = vmatpush2.bf16.msra.mxu0 %v7622
    %8397 = vmatprep.subr.bf16.mxu0 %v7607
    %8398 = vmatpush2.bf16.msra.mxu0 %v7606
    %8399 = vmatprep.subr.bf16.mxu0 %v7591
    %8400 = vmatpush2.bf16.msra.mxu0 %v7590
    %8401 = vmatprep.subr.bf16.mxu0 %v7575
    %8402 = vmatpush2.bf16.msra.mxu0 %v7574
    %8403 = vmatprep.subr.bf16.mxu0 %v7559
    %8404 = vmatpush2.bf16.msra.mxu0 %v7558
    %8405 = vmatprep.subr.bf16.mxu0 %v7543
    %8406 = vmatpush2.bf16.msra.mxu0 %v7542
    %8407 = vmatprep.subr.bf16.mxu0 %v7527
    %8408 = vmatpush2.bf16.msra.mxu0 %v7526
    %8409 = vmatprep.mubr.bf16.mxu0 %v5079
    %8410 = vmatmul.mubr.bf16.gmra.mxu0 %v5078
    %v8411 = vpop.f32.mrf.mxu0
    %v8412 = vadd.f32 %v8341, %v8411
    %v8413 = vpop.f32.mrf.mxu0
    %v8414 = vadd.f32 %v8343, %v8413
    %v8415 = vpop.f32.mrf.mxu0
    %v8416 = vadd.f32 %v8345, %v8415
    %v8417 = vpop.f32.mrf.mxu0
    %v8418 = vadd.f32 %v8347, %v8417
    %8419 = vmatprep.mubr.bf16.mxu0 %v5083
    %8420 = vmatmul.mubr.bf16.gmra.mxu0 %v5082
    %v8421 = vpop.f32.mrf.mxu0
    %v8422 = vadd.f32 %v8351, %v8421
    %v8423 = vpop.f32.mrf.mxu0
    %v8424 = vadd.f32 %v8353, %v8423
    %v8425 = vpop.f32.mrf.mxu0
    %v8426 = vadd.f32 %v8355, %v8425
    %v8427 = vpop.f32.mrf.mxu0
    %v8428 = vadd.f32 %v8357, %v8427
    %8429 = vmatprep.mubr.bf16.mxu0 %v5087
    %8430 = vmatmul.mubr.bf16.gmra.mxu0 %v5086
    %v8431 = vpop.f32.mrf.mxu0
    %v8432 = vadd.f32 %v8361, %v8431
    %v8433 = vpop.f32.mrf.mxu0
    %v8434 = vadd.f32 %v8363, %v8433
    %v8435 = vpop.f32.mrf.mxu0
    %v8436 = vadd.f32 %v8365, %v8435
    %v8437 = vpop.f32.mrf.mxu0
    %v8438 = vadd.f32 %v8367, %v8437
    %8439 = vmatprep.mubr.bf16.mxu0 %v5091
    %8440 = vmatmul.mubr.bf16.gmra.mxu0 %v5090
    %v8441 = vpop.f32.mrf.mxu0
    %v8442 = vadd.f32 %v8371, %v8441
    %v8443 = vpop.f32.mrf.mxu0
    %v8444 = vadd.f32 %v8373, %v8443
    %v8445 = vpop.f32.mrf.mxu0
    %v8446 = vpop.f32.mrf.mxu0
    %8447 = vdwg.mxu0
    %8448 = vmatprep.subr.bf16.mxu0 %v7257
    %8449 = vmatpush1.bf16.msra.mxu0 %v7256
    %8450 = vmatprep.subr.bf16.mxu0 %v7241
    %8451 = vmatpush1.bf16.msra.mxu0 %v7240
    %8452 = vmatprep.subr.bf16.mxu0 %v7225
    %8453 = vmatpush1.bf16.msra.mxu0 %v7224
    %8454 = vmatprep.subr.bf16.mxu0 %v7209
    %8455 = vmatpush1.bf16.msra.mxu0 %v7208
    %8456 = vmatprep.subr.bf16.mxu0 %v7193
    %8457 = vmatpush1.bf16.msra.mxu0 %v7192
    %8458 = vmatprep.subr.bf16.mxu0 %v7177
    %8459 = vmatpush1.bf16.msra.mxu0 %v7176
    %8460 = vmatprep.subr.bf16.mxu0 %v7161
    %8461 = vmatpush1.bf16.msra.mxu0 %v7160
    %8462 = vmatprep.subr.bf16.mxu0 %v7145
    %8463 = vmatpush1.bf16.msra.mxu0 %v7144
    %8464 = vmatprep.subr.bf16.mxu0 %v7385
    %8465 = vmatpush2.bf16.msra.mxu0 %v7384
    %8466 = vmatprep.subr.bf16.mxu0 %v7369
    %8467 = vmatpush2.bf16.msra.mxu0 %v7368
    %8468 = vmatprep.subr.bf16.mxu0 %v7353
    %8469 = vmatpush2.bf16.msra.mxu0 %v7352
    %8470 = vmatprep.subr.bf16.mxu0 %v7337
    %8471 = vmatpush2.bf16.msra.mxu0 %v7336
    %8472 = vmatprep.subr.bf16.mxu0 %v7321
    %8473 = vmatpush2.bf16.msra.mxu0 %v7320
    %8474 = vmatprep.subr.bf16.mxu0 %v7305
    %8475 = vmatpush2.bf16.msra.mxu0 %v7304
    %8476 = vmatprep.subr.bf16.mxu0 %v7289
    %8477 = vmatpush2.bf16.msra.mxu0 %v7288
    %8478 = vmatprep.subr.bf16.mxu0 %v7273
    %8479 = vmatpush2.bf16.msra.mxu0 %v7272
    %8480 = vmatprep.mubr.bf16.mxu0 %v5077
    %8481 = vmatmul.mubr.bf16.gmra.mxu0 %v5076
    %v8482 = vpop.f32.mrf.mxu0
    %v8483 = vadd.f32 0.0, %v8482
    %v8484 = vpop.f32.mrf.mxu0
    %v8485 = vadd.f32 0.0, %v8484
    %v8486 = vpop.f32.mrf.mxu0
    %v8487 = vadd.f32 0.0, %v8486
    %v8488 = vpop.f32.mrf.mxu0
    %v8489 = vadd.f32 0.0, %v8488
    %8490 = vmatprep.mubr.bf16.mxu0 %v5081
    %8491 = vmatmul.mubr.bf16.gmra.mxu0 %v5080
    %v8492 = vpop.f32.mrf.mxu0
    %v8493 = vadd.f32 0.0, %v8492
    %v8494 = vpop.f32.mrf.mxu0
    %v8495 = vadd.f32 0.0, %v8494
    %v8496 = vpop.f32.mrf.mxu0
    %v8497 = vadd.f32 0.0, %v8496
    %v8498 = vpop.f32.mrf.mxu0
    %v8499 = vadd.f32 0.0, %v8498
    %8500 = vmatprep.mubr.bf16.mxu0 %v5085
    %8501 = vmatmul.mubr.bf16.gmra.mxu0 %v5084
    %v8502 = vpop.f32.mrf.mxu0
    %v8503 = vadd.f32 0.0, %v8502
    %v8504 = vpop.f32.mrf.mxu0
    %v8505 = vadd.f32 0.0, %v8504
    %v8506 = vpop.f32.mrf.mxu0
    %v8507 = vadd.f32 0.0, %v8506
    %v8508 = vpop.f32.mrf.mxu0
    %v8509 = vadd.f32 0.0, %v8508
    %8510 = vmatprep.mubr.bf16.mxu0 %v5089
    %8511 = vmatmul.mubr.bf16.gmra.mxu0 %v5088
    %v8512 = vpop.f32.mrf.mxu0
    %v8513 = vadd.f32 0.0, %v8512
    %v8514 = vpop.f32.mrf.mxu0
    %v8515 = vadd.f32 0.0, %v8514
    %v8516 = vpop.f32.mrf.mxu0
    %v8517 = vpop.f32.mrf.mxu0
    %8518 = vdwg.mxu0
    %8519 = vmatprep.subr.bf16.mxu0 %v7513
    %8520 = vmatpush1.bf16.msra.mxu0 %v7512
    %8521 = vmatprep.subr.bf16.mxu0 %v7497
    %8522 = vmatpush1.bf16.msra.mxu0 %v7496
    %8523 = vmatprep.subr.bf16.mxu0 %v7481
    %8524 = vmatpush1.bf16.msra.mxu0 %v7480
    %8525 = vmatprep.subr.bf16.mxu0 %v7465
    %8526 = vmatpush1.bf16.msra.mxu0 %v7464
    %8527 = vmatprep.subr.bf16.mxu0 %v7449
    %8528 = vmatpush1.bf16.msra.mxu0 %v7448
    %8529 = vmatprep.subr.bf16.mxu0 %v7433
    %8530 = vmatpush1.bf16.msra.mxu0 %v7432
    %8531 = vmatprep.subr.bf16.mxu0 %v7417
    %8532 = vmatpush1.bf16.msra.mxu0 %v7416
    %8533 = vmatprep.subr.bf16.mxu0 %v7401
    %8534 = vmatpush1.bf16.msra.mxu0 %v7400
    %8535 = vmatprep.subr.bf16.mxu0 %v7641
    %8536 = vmatpush2.bf16.msra.mxu0 %v7640
    %8537 = vmatprep.subr.bf16.mxu0 %v7625
    %8538 = vmatpush2.bf16.msra.mxu0 %v7624
    %8539 = vmatprep.subr.bf16.mxu0 %v7609
    %8540 = vmatpush2.bf16.msra.mxu0 %v7608
    %8541 = vmatprep.subr.bf16.mxu0 %v7593
    %8542 = vmatpush2.bf16.msra.mxu0 %v7592
    %8543 = vmatprep.subr.bf16.mxu0 %v7577
    %8544 = vmatpush2.bf16.msra.mxu0 %v7576
    %8545 = vmatprep.subr.bf16.mxu0 %v7561
    %8546 = vmatpush2.bf16.msra.mxu0 %v7560
    %8547 = vmatprep.subr.bf16.mxu0 %v7545
    %8548 = vmatpush2.bf16.msra.mxu0 %v7544
    %8549 = vmatprep.subr.bf16.mxu0 %v7529
    %8550 = vmatpush2.bf16.msra.mxu0 %v7528
    %8551 = vmatprep.mubr.bf16.mxu0 %v5079
    %8552 = vmatmul.mubr.bf16.gmra.mxu0 %v5078
    %v8553 = vpop.f32.mrf.mxu0
    %v8554 = vadd.f32 %v8483, %v8553
    %v8555 = vpop.f32.mrf.mxu0
    %v8556 = vadd.f32 %v8485, %v8555
    %v8557 = vpop.f32.mrf.mxu0
    %v8558 = vadd.f32 %v8487, %v8557
    %v8559 = vpop.f32.mrf.mxu0
    %v8560 = vadd.f32 %v8489, %v8559
    %8561 = vmatprep.mubr.bf16.mxu0 %v5083
    %8562 = vmatmul.mubr.bf16.gmra.mxu0 %v5082
    %v8563 = vpop.f32.mrf.mxu0
    %v8564 = vadd.f32 %v8493, %v8563
    %v8565 = vpop.f32.mrf.mxu0
    %v8566 = vadd.f32 %v8495, %v8565
    %v8567 = vpop.f32.mrf.mxu0
    %v8568 = vadd.f32 %v8497, %v8567
    %v8569 = vpop.f32.mrf.mxu0
    %v8570 = vadd.f32 %v8499, %v8569
    %8571 = vmatprep.mubr.bf16.mxu0 %v5087
    %8572 = vmatmul.mubr.bf16.gmra.mxu0 %v5086
    %v8573 = vpop.f32.mrf.mxu0
    %v8574 = vadd.f32 %v8503, %v8573
    %v8575 = vpop.f32.mrf.mxu0
    %v8576 = vadd.f32 %v8505, %v8575
    %v8577 = vpop.f32.mrf.mxu0
    %v8578 = vadd.f32 %v8507, %v8577
    %v8579 = vpop.f32.mrf.mxu0
    %v8580 = vadd.f32 %v8509, %v8579
    %8581 = vmatprep.mubr.bf16.mxu0 %v5091
    %8582 = vmatmul.mubr.bf16.gmra.mxu0 %v5090
    %v8583 = vpop.f32.mrf.mxu0
    %v8584 = vadd.f32 %v8513, %v8583
    %v8585 = vpop.f32.mrf.mxu0
    %v8586 = vadd.f32 %v8515, %v8585
    %v8587 = vpop.f32.mrf.mxu0
    %v8588 = vpop.f32.mrf.mxu0
    %8589 = vdwg.mxu0
    %8590 = vmatprep.subr.bf16.mxu0 %v7259
    %8591 = vmatpush1.bf16.msra.mxu0 %v7258
    %8592 = vmatprep.subr.bf16.mxu0 %v7243
    %8593 = vmatpush1.bf16.msra.mxu0 %v7242
    %8594 = vmatprep.subr.bf16.mxu0 %v7227
    %8595 = vmatpush1.bf16.msra.mxu0 %v7226
    %8596 = vmatprep.subr.bf16.mxu0 %v7211
    %8597 = vmatpush1.bf16.msra.mxu0 %v7210
    %8598 = vmatprep.subr.bf16.mxu0 %v7195
    %8599 = vmatpush1.bf16.msra.mxu0 %v7194
    %8600 = vmatprep.subr.bf16.mxu0 %v7179
    %8601 = vmatpush1.bf16.msra.mxu0 %v7178
    %8602 = vmatprep.subr.bf16.mxu0 %v7163
    %8603 = vmatpush1.bf16.msra.mxu0 %v7162
    %8604 = vmatprep.subr.bf16.mxu0 %v7147
    %8605 = vmatpush1.bf16.msra.mxu0 %v7146
    %8606 = vmatprep.subr.bf16.mxu0 %v7387
    %8607 = vmatpush2.bf16.msra.mxu0 %v7386
    %8608 = vmatprep.subr.bf16.mxu0 %v7371
    %8609 = vmatpush2.bf16.msra.mxu0 %v7370
    %8610 = vmatprep.subr.bf16.mxu0 %v7355
    %8611 = vmatpush2.bf16.msra.mxu0 %v7354
    %8612 = vmatprep.subr.bf16.mxu0 %v7339
    %8613 = vmatpush2.bf16.msra.mxu0 %v7338
    %8614 = vmatprep.subr.bf16.mxu0 %v7323
    %8615 = vmatpush2.bf16.msra.mxu0 %v7322
    %8616 = vmatprep.subr.bf16.mxu0 %v7307
    %8617 = vmatpush2.bf16.msra.mxu0 %v7306
    %8618 = vmatprep.subr.bf16.mxu0 %v7291
    %8619 = vmatpush2.bf16.msra.mxu0 %v7290
    %8620 = vmatprep.subr.bf16.mxu0 %v7275
    %8621 = vmatpush2.bf16.msra.mxu0 %v7274
    %8622 = vmatprep.mubr.bf16.mxu0 %v5077
    %8623 = vmatmul.mubr.bf16.gmra.mxu0 %v5076
    %v8624 = vpop.f32.mrf.mxu0
    %v8625 = vadd.f32 0.0, %v8624
    %v8626 = vpop.f32.mrf.mxu0
    %v8627 = vadd.f32 0.0, %v8626
    %v8628 = vpop.f32.mrf.mxu0
    %v8629 = vadd.f32 0.0, %v8628
    %v8630 = vpop.f32.mrf.mxu0
    %v8631 = vadd.f32 0.0, %v8630
    %8632 = vmatprep.mubr.bf16.mxu0 %v5081
    %8633 = vmatmul.mubr.bf16.gmra.mxu0 %v5080
    %v8634 = vpop.f32.mrf.mxu0
    %v8635 = vadd.f32 0.0, %v8634
    %v8636 = vpop.f32.mrf.mxu0
    %v8637 = vadd.f32 0.0, %v8636
    %v8638 = vpop.f32.mrf.mxu0
    %v8639 = vadd.f32 0.0, %v8638
    %v8640 = vpop.f32.mrf.mxu0
    %v8641 = vadd.f32 0.0, %v8640
    %8642 = vmatprep.mubr.bf16.mxu0 %v5085
    %8643 = vmatmul.mubr.bf16.gmra.mxu0 %v5084
    %v8644 = vpop.f32.mrf.mxu0
    %v8645 = vadd.f32 0.0, %v8644
    %v8646 = vpop.f32.mrf.mxu0
    %v8647 = vadd.f32 0.0, %v8646
    %v8648 = vpop.f32.mrf.mxu0
    %v8649 = vadd.f32 0.0, %v8648
    %v8650 = vpop.f32.mrf.mxu0
    %v8651 = vadd.f32 0.0, %v8650
    %8652 = vmatprep.mubr.bf16.mxu0 %v5089
    %8653 = vmatmul.mubr.bf16.gmra.mxu0 %v5088
    %v8654 = vpop.f32.mrf.mxu0
    %v8655 = vadd.f32 0.0, %v8654
    %v8656 = vpop.f32.mrf.mxu0
    %v8657 = vadd.f32 0.0, %v8656
    %v8658 = vpop.f32.mrf.mxu0
    %v8659 = vpop.f32.mrf.mxu0
    %8660 = vdwg.mxu0
    %8661 = vmatprep.subr.bf16.mxu0 %v7515
    %8662 = vmatpush1.bf16.msra.mxu0 %v7514
    %8663 = vmatprep.subr.bf16.mxu0 %v7499
    %8664 = vmatpush1.bf16.msra.mxu0 %v7498
    %8665 = vmatprep.subr.bf16.mxu0 %v7483
    %8666 = vmatpush1.bf16.msra.mxu0 %v7482
    %8667 = vmatprep.subr.bf16.mxu0 %v7467
    %8668 = vmatpush1.bf16.msra.mxu0 %v7466
    %8669 = vmatprep.subr.bf16.mxu0 %v7451
    %8670 = vmatpush1.bf16.msra.mxu0 %v7450
    %8671 = vmatprep.subr.bf16.mxu0 %v7435
    %8672 = vmatpush1.bf16.msra.mxu0 %v7434
    %8673 = vmatprep.subr.bf16.mxu0 %v7419
    %8674 = vmatpush1.bf16.msra.mxu0 %v7418
    %8675 = vmatprep.subr.bf16.mxu0 %v7403
    %8676 = vmatpush1.bf16.msra.mxu0 %v7402
    %8677 = vmatprep.subr.bf16.mxu0 %v7643
    %8678 = vmatpush2.bf16.msra.mxu0 %v7642
    %8679 = vmatprep.subr.bf16.mxu0 %v7627
    %8680 = vmatpush2.bf16.msra.mxu0 %v7626
    %8681 = vmatprep.subr.bf16.mxu0 %v7611
    %8682 = vmatpush2.bf16.msra.mxu0 %v7610
    %8683 = vmatprep.subr.bf16.mxu0 %v7595
    %8684 = vmatpush2.bf16.msra.mxu0 %v7594
    %8685 = vmatprep.subr.bf16.mxu0 %v7579
    %8686 = vmatpush2.bf16.msra.mxu0 %v7578
    %8687 = vmatprep.subr.bf16.mxu0 %v7563
    %8688 = vmatpush2.bf16.msra.mxu0 %v7562
    %8689 = vmatprep.subr.bf16.mxu0 %v7547
    %8690 = vmatpush2.bf16.msra.mxu0 %v7546
    %8691 = vmatprep.subr.bf16.mxu0 %v7531
    %8692 = vmatpush2.bf16.msra.mxu0 %v7530
    %8693 = vmatprep.mubr.bf16.mxu0 %v5079
    %8694 = vmatmul.mubr.bf16.gmra.mxu0 %v5078
    %v8695 = vpop.f32.mrf.mxu0
    %v8696 = vadd.f32 %v8625, %v8695
    %v8697 = vpop.f32.mrf.mxu0
    %v8698 = vadd.f32 %v8627, %v8697
    %v8699 = vpop.f32.mrf.mxu0
    %v8700 = vadd.f32 %v8629, %v8699
    %v8701 = vpop.f32.mrf.mxu0
    %v8702 = vadd.f32 %v8631, %v8701
    %8703 = vmatprep.mubr.bf16.mxu0 %v5083
    %8704 = vmatmul.mubr.bf16.gmra.mxu0 %v5082
    %v8705 = vpop.f32.mrf.mxu0
    %v8706 = vadd.f32 %v8635, %v8705
    %v8707 = vpop.f32.mrf.mxu0
    %v8708 = vadd.f32 %v8637, %v8707
    %v8709 = vpop.f32.mrf.mxu0
    %v8710 = vadd.f32 %v8639, %v8709
    %v8711 = vpop.f32.mrf.mxu0
    %v8712 = vadd.f32 %v8641, %v8711
    %8713 = vmatprep.mubr.bf16.mxu0 %v5087
    %8714 = vmatmul.mubr.bf16.gmra.mxu0 %v5086
    %v8715 = vpop.f32.mrf.mxu0
    %v8716 = vadd.f32 %v8645, %v8715
    %v8717 = vpop.f32.mrf.mxu0
    %v8718 = vadd.f32 %v8647, %v8717
    %v8719 = vpop.f32.mrf.mxu0
    %v8720 = vadd.f32 %v8649, %v8719
    %v8721 = vpop.f32.mrf.mxu0
    %v8722 = vadd.f32 %v8651, %v8721
    %8723 = vmatprep.mubr.bf16.mxu0 %v5091
    %8724 = vmatmul.mubr.bf16.gmra.mxu0 %v5090
    %v8725 = vpop.f32.mrf.mxu0
    %v8726 = vadd.f32 %v8655, %v8725
    %v8727 = vpop.f32.mrf.mxu0
    %v8728 = vadd.f32 %v8657, %v8727
    %v8729 = vpop.f32.mrf.mxu0
    %v8730 = vpop.f32.mrf.mxu0
    %8731 = vdwg.mxu0
    %8732 = vmatprep.subr.bf16.mxu0 %v7261
    %8733 = vmatpush1.bf16.msra.mxu0 %v7260
    %8734 = vmatprep.subr.bf16.mxu0 %v7245
    %8735 = vmatpush1.bf16.msra.mxu0 %v7244
    %8736 = vmatprep.subr.bf16.mxu0 %v7229
    %8737 = vmatpush1.bf16.msra.mxu0 %v7228
    %8738 = vmatprep.subr.bf16.mxu0 %v7213
    %8739 = vmatpush1.bf16.msra.mxu0 %v7212
    %8740 = vmatprep.subr.bf16.mxu0 %v7197
    %8741 = vmatpush1.bf16.msra.mxu0 %v7196
    %8742 = vmatprep.subr.bf16.mxu0 %v7181
    %8743 = vmatpush1.bf16.msra.mxu0 %v7180
    %8744 = vmatprep.subr.bf16.mxu0 %v7165
    %8745 = vmatpush1.bf16.msra.mxu0 %v7164
    %8746 = vmatprep.subr.bf16.mxu0 %v7149
    %8747 = vmatpush1.bf16.msra.mxu0 %v7148
    %8748 = vmatprep.subr.bf16.mxu0 %v7389
    %8749 = vmatpush2.bf16.msra.mxu0 %v7388
    %8750 = vmatprep.subr.bf16.mxu0 %v7373
    %8751 = vmatpush2.bf16.msra.mxu0 %v7372
    %8752 = vmatprep.subr.bf16.mxu0 %v7357
    %8753 = vmatpush2.bf16.msra.mxu0 %v7356
    %8754 = vmatprep.subr.bf16.mxu0 %v7341
    %8755 = vmatpush2.bf16.msra.mxu0 %v7340
    %8756 = vmatprep.subr.bf16.mxu0 %v7325
    %8757 = vmatpush2.bf16.msra.mxu0 %v7324
    %8758 = vmatprep.subr.bf16.mxu0 %v7309
    %8759 = vmatpush2.bf16.msra.mxu0 %v7308
    %8760 = vmatprep.subr.bf16.mxu0 %v7293
    %8761 = vmatpush2.bf16.msra.mxu0 %v7292
    %8762 = vmatprep.subr.bf16.mxu0 %v7277
    %8763 = vmatpush2.bf16.msra.mxu0 %v7276
    %8764 = vmatprep.mubr.bf16.mxu0 %v5077
    %8765 = vmatmul.mubr.bf16.gmra.mxu0 %v5076
    %v8766 = vpop.f32.mrf.mxu0
    %v8767 = vadd.f32 0.0, %v8766
    %v8768 = vpop.f32.mrf.mxu0
    %v8769 = vadd.f32 0.0, %v8768
    %v8770 = vpop.f32.mrf.mxu0
    %v8771 = vadd.f32 0.0, %v8770
    %v8772 = vpop.f32.mrf.mxu0
    %v8773 = vadd.f32 0.0, %v8772
    %8774 = vmatprep.mubr.bf16.mxu0 %v5081
    %8775 = vmatmul.mubr.bf16.gmra.mxu0 %v5080
    %v8776 = vpop.f32.mrf.mxu0
    %v8777 = vadd.f32 0.0, %v8776
    %v8778 = vpop.f32.mrf.mxu0
    %v8779 = vadd.f32 0.0, %v8778
    %v8780 = vpop.f32.mrf.mxu0
    %v8781 = vadd.f32 0.0, %v8780
    %v8782 = vpop.f32.mrf.mxu0
    %v8783 = vadd.f32 0.0, %v8782
    %8784 = vmatprep.mubr.bf16.mxu0 %v5085
    %8785 = vmatmul.mubr.bf16.gmra.mxu0 %v5084
    %v8786 = vpop.f32.mrf.mxu0
    %v8787 = vadd.f32 0.0, %v8786
    %v8788 = vpop.f32.mrf.mxu0
    %v8789 = vadd.f32 0.0, %v8788
    %v8790 = vpop.f32.mrf.mxu0
    %v8791 = vadd.f32 0.0, %v8790
    %v8792 = vpop.f32.mrf.mxu0
    %v8793 = vadd.f32 0.0, %v8792
    %8794 = vmatprep.mubr.bf16.mxu0 %v5089
    %8795 = vmatmul.mubr.bf16.gmra.mxu0 %v5088
    %v8796 = vpop.f32.mrf.mxu0
    %v8797 = vadd.f32 0.0, %v8796
    %v8798 = vpop.f32.mrf.mxu0
    %v8799 = vadd.f32 0.0, %v8798
    %v8800 = vpop.f32.mrf.mxu0
    %v8801 = vpop.f32.mrf.mxu0
    %8802 = vdwg.mxu0
    %8803 = vmatprep.subr.bf16.mxu0 %v7517
    %8804 = vmatpush1.bf16.msra.mxu0 %v7516
    %8805 = vmatprep.subr.bf16.mxu0 %v7501
    %8806 = vmatpush1.bf16.msra.mxu0 %v7500
    %8807 = vmatprep.subr.bf16.mxu0 %v7485
    %8808 = vmatpush1.bf16.msra.mxu0 %v7484
    %8809 = vmatprep.subr.bf16.mxu0 %v7469
    %8810 = vmatpush1.bf16.msra.mxu0 %v7468
    %8811 = vmatprep.subr.bf16.mxu0 %v7453
    %8812 = vmatpush1.bf16.msra.mxu0 %v7452
    %8813 = vmatprep.subr.bf16.mxu0 %v7437
    %8814 = vmatpush1.bf16.msra.mxu0 %v7436
    %8815 = vmatprep.subr.bf16.mxu0 %v7421
    %8816 = vmatpush1.bf16.msra.mxu0 %v7420
    %8817 = vmatprep.subr.bf16.mxu0 %v7405
    %8818 = vmatpush1.bf16.msra.mxu0 %v7404
    %8819 = vmatprep.subr.bf16.mxu0 %v7645
    %8820 = vmatpush2.bf16.msra.mxu0 %v7644
    %8821 = vmatprep.subr.bf16.mxu0 %v7629
    %8822 = vmatpush2.bf16.msra.mxu0 %v7628
    %8823 = vmatprep.subr.bf16.mxu0 %v7613
    %8824 = vmatpush2.bf16.msra.mxu0 %v7612
    %8825 = vmatprep.subr.bf16.mxu0 %v7597
    %8826 = vmatpush2.bf16.msra.mxu0 %v7596
    %8827 = vmatprep.subr.bf16.mxu0 %v7581
    %8828 = vmatpush2.bf16.msra.mxu0 %v7580
    %8829 = vmatprep.subr.bf16.mxu0 %v7565
    %8830 = vmatpush2.bf16.msra.mxu0 %v7564
    %8831 = vmatprep.subr.bf16.mxu0 %v7549
    %8832 = vmatpush2.bf16.msra.mxu0 %v7548
    %8833 = vmatprep.subr.bf16.mxu0 %v7533
    %8834 = vmatpush2.bf16.msra.mxu0 %v7532
    %8835 = vmatprep.mubr.bf16.mxu0 %v5079
    %8836 = vmatmul.mubr.bf16.gmra.mxu0 %v5078
    %v8837 = vpop.f32.mrf.mxu0
    %v8838 = vadd.f32 %v8767, %v8837
    %v8839 = vpop.f32.mrf.mxu0
    %v8840 = vadd.f32 %v8769, %v8839
    %v8841 = vpop.f32.mrf.mxu0
    %v8842 = vadd.f32 %v8771, %v8841
    %v8843 = vpop.f32.mrf.mxu0
    %v8844 = vadd.f32 %v8773, %v8843
    %8845 = vmatprep.mubr.bf16.mxu0 %v5083
    %8846 = vmatmul.mubr.bf16.gmra.mxu0 %v5082
    %v8847 = vpop.f32.mrf.mxu0
    %v8848 = vadd.f32 %v8777, %v8847
    %v8849 = vpop.f32.mrf.mxu0
    %v8850 = vadd.f32 %v8779, %v8849
    %v8851 = vpop.f32.mrf.mxu0
    %v8852 = vadd.f32 %v8781, %v8851
    %v8853 = vpop.f32.mrf.mxu0
    %v8854 = vadd.f32 %v8783, %v8853
    %8855 = vmatprep.mubr.bf16.mxu0 %v5087
    %8856 = vmatmul.mubr.bf16.gmra.mxu0 %v5086
    %v8857 = vpop.f32.mrf.mxu0
    %v8858 = vadd.f32 %v8787, %v8857
    %v8859 = vpop.f32.mrf.mxu0
    %v8860 = vadd.f32 %v8789, %v8859
    %v8861 = vpop.f32.mrf.mxu0
    %v8862 = vadd.f32 %v8791, %v8861
    %v8863 = vpop.f32.mrf.mxu0
    %v8864 = vadd.f32 %v8793, %v8863
    %8865 = vmatprep.mubr.bf16.mxu0 %v5091
    %8866 = vmatmul.mubr.bf16.gmra.mxu0 %v5090
    %v8867 = vpop.f32.mrf.mxu0
    %v8868 = vadd.f32 %v8797, %v8867
    %v8869 = vpop.f32.mrf.mxu0
    %v8870 = vadd.f32 %v8799, %v8869
    %v8871 = vpop.f32.mrf.mxu0
    %v8872 = vpop.f32.mrf.mxu0
    %8873 = vdwg.mxu0
    %8874 = vmatprep.subr.bf16.mxu0 %v7263
    %8875 = vmatpush1.bf16.msra.mxu0 %v7262
    %8876 = vmatprep.subr.bf16.mxu0 %v7247
    %8877 = vmatpush1.bf16.msra.mxu0 %v7246
    %8878 = vmatprep.subr.bf16.mxu0 %v7231
    %8879 = vmatpush1.bf16.msra.mxu0 %v7230
    %8880 = vmatprep.subr.bf16.mxu0 %v7215
    %8881 = vmatpush1.bf16.msra.mxu0 %v7214
    %8882 = vmatprep.subr.bf16.mxu0 %v7199
    %8883 = vmatpush1.bf16.msra.mxu0 %v7198
    %8884 = vmatprep.subr.bf16.mxu0 %v7183
    %8885 = vmatpush1.bf16.msra.mxu0 %v7182
    %8886 = vmatprep.subr.bf16.mxu0 %v7167
    %8887 = vmatpush1.bf16.msra.mxu0 %v7166
    %8888 = vmatprep.subr.bf16.mxu0 %v7151
    %8889 = vmatpush1.bf16.msra.mxu0 %v7150
    %8890 = vmatprep.subr.bf16.mxu0 %v7391
    %8891 = vmatpush2.bf16.msra.mxu0 %v7390
    %8892 = vmatprep.subr.bf16.mxu0 %v7375
    %8893 = vmatpush2.bf16.msra.mxu0 %v7374
    %8894 = vmatprep.subr.bf16.mxu0 %v7359
    %8895 = vmatpush2.bf16.msra.mxu0 %v7358
    %8896 = vmatprep.subr.bf16.mxu0 %v7343
    %8897 = vmatpush2.bf16.msra.mxu0 %v7342
    %8898 = vmatprep.subr.bf16.mxu0 %v7327
    %8899 = vmatpush2.bf16.msra.mxu0 %v7326
    %8900 = vmatprep.subr.bf16.mxu0 %v7311
    %8901 = vmatpush2.bf16.msra.mxu0 %v7310
    %8902 = vmatprep.subr.bf16.mxu0 %v7295
    %8903 = vmatpush2.bf16.msra.mxu0 %v7294
    %8904 = vmatprep.subr.bf16.mxu0 %v7279
    %8905 = vmatpush2.bf16.msra.mxu0 %v7278
    %8906 = vmatprep.mubr.bf16.mxu0 %v5077
    %8907 = vmatmul.mubr.bf16.gmra.mxu0 %v5076
    %v8908 = vpop.f32.mrf.mxu0
    %v8909 = vadd.f32 0.0, %v8908
    %v8910 = vpop.f32.mrf.mxu0
    %v8911 = vadd.f32 0.0, %v8910
    %v8912 = vpop.f32.mrf.mxu0
    %v8913 = vadd.f32 0.0, %v8912
    %v8914 = vpop.f32.mrf.mxu0
    %v8915 = vadd.f32 0.0, %v8914
    %8916 = vmatprep.mubr.bf16.mxu0 %v5081
    %8917 = vmatmul.mubr.bf16.gmra.mxu0 %v5080
    %v8918 = vpop.f32.mrf.mxu0
    %v8919 = vadd.f32 0.0, %v8918
    %v8920 = vpop.f32.mrf.mxu0
    %v8921 = vadd.f32 0.0, %v8920
    %v8922 = vpop.f32.mrf.mxu0
    %v8923 = vadd.f32 0.0, %v8922
    %v8924 = vpop.f32.mrf.mxu0
    %v8925 = vadd.f32 0.0, %v8924
    %8926 = vmatprep.mubr.bf16.mxu0 %v5085
    %8927 = vmatmul.mubr.bf16.gmra.mxu0 %v5084
    %v8928 = vpop.f32.mrf.mxu0
    %v8929 = vadd.f32 0.0, %v8928
    %v8930 = vpop.f32.mrf.mxu0
    %v8931 = vadd.f32 0.0, %v8930
    %v8932 = vpop.f32.mrf.mxu0
    %v8933 = vadd.f32 0.0, %v8932
    %v8934 = vpop.f32.mrf.mxu0
    %v8935 = vadd.f32 0.0, %v8934
    %8936 = vmatprep.mubr.bf16.mxu0 %v5089
    %8937 = vmatmul.mubr.bf16.gmra.mxu0 %v5088
    %v8938 = vpop.f32.mrf.mxu0
    %v8939 = vadd.f32 0.0, %v8938
    %v8940 = vpop.f32.mrf.mxu0
    %v8941 = vadd.f32 0.0, %v8940
    %v8942 = vpop.f32.mrf.mxu0
    %v8943 = vpop.f32.mrf.mxu0
    %8944 = vdwg.mxu0
    %8945 = vmatprep.subr.bf16.mxu0 %v7519
    %8946 = vmatpush1.bf16.msra.mxu0 %v7518
    %8947 = vmatprep.subr.bf16.mxu0 %v7503
    %8948 = vmatpush1.bf16.msra.mxu0 %v7502
    %8949 = vmatprep.subr.bf16.mxu0 %v7487
    %8950 = vmatpush1.bf16.msra.mxu0 %v7486
    %8951 = vmatprep.subr.bf16.mxu0 %v7471
    %8952 = vmatpush1.bf16.msra.mxu0 %v7470
    %8953 = vmatprep.subr.bf16.mxu0 %v7455
    %8954 = vmatpush1.bf16.msra.mxu0 %v7454
    %8955 = vmatprep.subr.bf16.mxu0 %v7439
    %8956 = vmatpush1.bf16.msra.mxu0 %v7438
    %8957 = vmatprep.subr.bf16.mxu0 %v7423
    %8958 = vmatpush1.bf16.msra.mxu0 %v7422
    %8959 = vmatprep.subr.bf16.mxu0 %v7407
    %8960 = vmatpush1.bf16.msra.mxu0 %v7406
    %8961 = vmatprep.subr.bf16.mxu0 %v7647
    %8962 = vmatpush2.bf16.msra.mxu0 %v7646
    %8963 = vmatprep.subr.bf16.mxu0 %v7631
    %8964 = vmatpush2.bf16.msra.mxu0 %v7630
    %8965 = vmatprep.subr.bf16.mxu0 %v7615
    %8966 = vmatpush2.bf16.msra.mxu0 %v7614
    %8967 = vmatprep.subr.bf16.mxu0 %v7599
    %8968 = vmatpush2.bf16.msra.mxu0 %v7598
    %8969 = vmatprep.subr.bf16.mxu0 %v7583
    %8970 = vmatpush2.bf16.msra.mxu0 %v7582
    %8971 = vmatprep.subr.bf16.mxu0 %v7567
    %8972 = vmatpush2.bf16.msra.mxu0 %v7566
    %8973 = vmatprep.subr.bf16.mxu0 %v7551
    %8974 = vmatpush2.bf16.msra.mxu0 %v7550
    %8975 = vmatprep.subr.bf16.mxu0 %v7535
    %8976 = vmatpush2.bf16.msra.mxu0 %v7534
    %8977 = vmatprep.mubr.bf16.mxu0 %v5079
    %8978 = vmatmul.mubr.bf16.gmra.mxu0 %v5078
    %v8979 = vpop.f32.mrf.mxu0
    %v8980 = vadd.f32 %v8909, %v8979
    %v8981 = vpop.f32.mrf.mxu0
    %v8982 = vadd.f32 %v8911, %v8981
    %v8983 = vpop.f32.mrf.mxu0
    %v8984 = vadd.f32 %v8913, %v8983
    %v8985 = vpop.f32.mrf.mxu0
    %v8986 = vadd.f32 %v8915, %v8985
    %8987 = vmatprep.mubr.bf16.mxu0 %v5083
    %8988 = vmatmul.mubr.bf16.gmra.mxu0 %v5082
    %v8989 = vpop.f32.mrf.mxu0
    %v8990 = vadd.f32 %v8919, %v8989
    %v8991 = vpop.f32.mrf.mxu0
    %v8992 = vadd.f32 %v8921, %v8991
    %v8993 = vpop.f32.mrf.mxu0
    %v8994 = vadd.f32 %v8923, %v8993
    %v8995 = vpop.f32.mrf.mxu0
    %v8996 = vadd.f32 %v8925, %v8995
    %8997 = vmatprep.mubr.bf16.mxu0 %v5087
    %8998 = vmatmul.mubr.bf16.gmra.mxu0 %v5086
    %v8999 = vpop.f32.mrf.mxu0
    %v9000 = vadd.f32 %v8929, %v8999
    %v9001 = vpop.f32.mrf.mxu0
    %v9002 = vadd.f32 %v8931, %v9001
    %v9003 = vpop.f32.mrf.mxu0
    %v9004 = vadd.f32 %v8933, %v9003
    %v9005 = vpop.f32.mrf.mxu0
    %v9006 = vadd.f32 %v8935, %v9005
    %9007 = vmatprep.mubr.bf16.mxu0 %v5091
    %9008 = vmatmul.mubr.bf16.gmra.mxu0 %v5090
    %v9009 = vpop.f32.mrf.mxu0
    %v9010 = vadd.f32 %v8939, %v9009
    %v9011 = vpop.f32.mrf.mxu0
    %v9012 = vadd.f32 %v8941, %v9011
    %v9013 = vpop.f32.mrf.mxu0
    %v9014 = vpop.f32.mrf.mxu0
    %9015 = vdwg.mxu0
    %9016 = vmatprep.subr.bf16.mxu0 %v7265
    %9017 = vmatpush1.bf16.msra.mxu0 %v7264
    %9018 = vmatprep.subr.bf16.mxu0 %v7249
    %9019 = vmatpush1.bf16.msra.mxu0 %v7248
    %9020 = vmatprep.subr.bf16.mxu0 %v7233
    %9021 = vmatpush1.bf16.msra.mxu0 %v7232
    %9022 = vmatprep.subr.bf16.mxu0 %v7217
    %9023 = vmatpush1.bf16.msra.mxu0 %v7216
    %9024 = vmatprep.subr.bf16.mxu0 %v7201
    %9025 = vmatpush1.bf16.msra.mxu0 %v7200
    %9026 = vmatprep.subr.bf16.mxu0 %v7185
    %9027 = vmatpush1.bf16.msra.mxu0 %v7184
    %9028 = vmatprep.subr.bf16.mxu0 %v7169
    %9029 = vmatpush1.bf16.msra.mxu0 %v7168
    %9030 = vmatprep.subr.bf16.mxu0 %v7153
    %9031 = vmatpush1.bf16.msra.mxu0 %v7152
    %9032 = vmatprep.subr.bf16.mxu0 %v7393
    %9033 = vmatpush2.bf16.msra.mxu0 %v7392
    %9034 = vmatprep.subr.bf16.mxu0 %v7377
    %9035 = vmatpush2.bf16.msra.mxu0 %v7376
    %9036 = vmatprep.subr.bf16.mxu0 %v7361
    %9037 = vmatpush2.bf16.msra.mxu0 %v7360
    %9038 = vmatprep.subr.bf16.mxu0 %v7345
    %9039 = vmatpush2.bf16.msra.mxu0 %v7344
    %9040 = vmatprep.subr.bf16.mxu0 %v7329
    %9041 = vmatpush2.bf16.msra.mxu0 %v7328
    %9042 = vmatprep.subr.bf16.mxu0 %v7313
    %9043 = vmatpush2.bf16.msra.mxu0 %v7312
    %9044 = vmatprep.subr.bf16.mxu0 %v7297
    %9045 = vmatpush2.bf16.msra.mxu0 %v7296
    %9046 = vmatprep.subr.bf16.mxu0 %v7281
    %9047 = vmatpush2.bf16.msra.mxu0 %v7280
    %9048 = vmatprep.mubr.bf16.mxu0 %v5077
    %9049 = vmatmul.mubr.bf16.gmra.mxu0 %v5076
    %v9050 = vpop.f32.mrf.mxu0
    %v9051 = vadd.f32 0.0, %v9050
    %v9052 = vpop.f32.mrf.mxu0
    %v9053 = vadd.f32 0.0, %v9052
    %v9054 = vpop.f32.mrf.mxu0
    %v9055 = vadd.f32 0.0, %v9054
    %v9056 = vpop.f32.mrf.mxu0
    %v9057 = vadd.f32 0.0, %v9056
    %9058 = vmatprep.mubr.bf16.mxu0 %v5081
    %9059 = vmatmul.mubr.bf16.gmra.mxu0 %v5080
    %v9060 = vpop.f32.mrf.mxu0
    %v9061 = vadd.f32 0.0, %v9060
    %v9062 = vpop.f32.mrf.mxu0
    %v9063 = vadd.f32 0.0, %v9062
    %v9064 = vpop.f32.mrf.mxu0
    %v9065 = vadd.f32 0.0, %v9064
    %v9066 = vpop.f32.mrf.mxu0
    %v9067 = vadd.f32 0.0, %v9066
    %9068 = vmatprep.mubr.bf16.mxu0 %v5085
    %9069 = vmatmul.mubr.bf16.gmra.mxu0 %v5084
    %v9070 = vpop.f32.mrf.mxu0
    %v9071 = vadd.f32 0.0, %v9070
    %v9072 = vpop.f32.mrf.mxu0
    %v9073 = vadd.f32 0.0, %v9072
    %v9074 = vpop.f32.mrf.mxu0
    %v9075 = vadd.f32 0.0, %v9074
    %v9076 = vpop.f32.mrf.mxu0
    %v9077 = vadd.f32 0.0, %v9076
    %9078 = vmatprep.mubr.bf16.mxu0 %v5089
    %9079 = vmatmul.mubr.bf16.gmra.mxu0 %v5088
    %v9080 = vpop.f32.mrf.mxu0
    %v9081 = vadd.f32 0.0, %v9080
    %v9082 = vpop.f32.mrf.mxu0
    %v9083 = vadd.f32 0.0, %v9082
    %v9084 = vpop.f32.mrf.mxu0
    %v9085 = vpop.f32.mrf.mxu0
    %9086 = vdwg.mxu0
    %9087 = vmatprep.subr.bf16.mxu0 %v7521
    %9088 = vmatpush1.bf16.msra.mxu0 %v7520
    %9089 = vmatprep.subr.bf16.mxu0 %v7505
    %9090 = vmatpush1.bf16.msra.mxu0 %v7504
    %9091 = vmatprep.subr.bf16.mxu0 %v7489
    %9092 = vmatpush1.bf16.msra.mxu0 %v7488
    %9093 = vmatprep.subr.bf16.mxu0 %v7473
    %9094 = vmatpush1.bf16.msra.mxu0 %v7472
    %9095 = vmatprep.subr.bf16.mxu0 %v7457
    %9096 = vmatpush1.bf16.msra.mxu0 %v7456
    %9097 = vmatprep.subr.bf16.mxu0 %v7441
    %9098 = vmatpush1.bf16.msra.mxu0 %v7440
    %9099 = vmatprep.subr.bf16.mxu0 %v7425
    %9100 = vmatpush1.bf16.msra.mxu0 %v7424
    %9101 = vmatprep.subr.bf16.mxu0 %v7409
    %9102 = vmatpush1.bf16.msra.mxu0 %v7408
    %9103 = vmatprep.subr.bf16.mxu0 %v7649
    %9104 = vmatpush2.bf16.msra.mxu0 %v7648
    %9105 = vmatprep.subr.bf16.mxu0 %v7633
    %9106 = vmatpush2.bf16.msra.mxu0 %v7632
    %9107 = vmatprep.subr.bf16.mxu0 %v7617
    %9108 = vmatpush2.bf16.msra.mxu0 %v7616
    %9109 = vmatprep.subr.bf16.mxu0 %v7601
    %9110 = vmatpush2.bf16.msra.mxu0 %v7600
    %9111 = vmatprep.subr.bf16.mxu0 %v7585
    %9112 = vmatpush2.bf16.msra.mxu0 %v7584
    %9113 = vmatprep.subr.bf16.mxu0 %v7569
    %9114 = vmatpush2.bf16.msra.mxu0 %v7568
    %9115 = vmatprep.subr.bf16.mxu0 %v7553
    %9116 = vmatpush2.bf16.msra.mxu0 %v7552
    %9117 = vmatprep.subr.bf16.mxu0 %v7537
    %9118 = vmatpush2.bf16.msra.mxu0 %v7536
    %9119 = vmatprep.mubr.bf16.mxu0 %v5079
    %9120 = vmatmul.mubr.bf16.gmra.mxu0 %v5078
    %v9121 = vpop.f32.mrf.mxu0
    %v9122 = vadd.f32 %v9051, %v9121
    %v9123 = vpop.f32.mrf.mxu0
    %v9124 = vadd.f32 %v9053, %v9123
    %v9125 = vpop.f32.mrf.mxu0
    %v9126 = vadd.f32 %v9055, %v9125
    %v9127 = vpop.f32.mrf.mxu0
    %v9128 = vadd.f32 %v9057, %v9127
    %9129 = vmatprep.mubr.bf16.mxu0 %v5083
    %9130 = vmatmul.mubr.bf16.gmra.mxu0 %v5082
    %v9131 = vpop.f32.mrf.mxu0
    %v9132 = vadd.f32 %v9061, %v9131
    %v9133 = vpop.f32.mrf.mxu0
    %v9134 = vadd.f32 %v9063, %v9133
    %v9135 = vpop.f32.mrf.mxu0
    %v9136 = vadd.f32 %v9065, %v9135
    %v9137 = vpop.f32.mrf.mxu0
    %v9138 = vadd.f32 %v9067, %v9137
    %9139 = vmatprep.mubr.bf16.mxu0 %v5087
    %9140 = vmatmul.mubr.bf16.gmra.mxu0 %v5086
    %v9141 = vpop.f32.mrf.mxu0
    %v9142 = vadd.f32 %v9071, %v9141
    %v9143 = vpop.f32.mrf.mxu0
    %v9144 = vadd.f32 %v9073, %v9143
    %v9145 = vpop.f32.mrf.mxu0
    %v9146 = vadd.f32 %v9075, %v9145
    %v9147 = vpop.f32.mrf.mxu0
    %v9148 = vadd.f32 %v9077, %v9147
    %9149 = vmatprep.mubr.bf16.mxu0 %v5091
    %9150 = vmatmul.mubr.bf16.gmra.mxu0 %v5090
    %v9151 = vpop.f32.mrf.mxu0
    %v9152 = vadd.f32 %v9081, %v9151
    %v9153 = vpop.f32.mrf.mxu0
    %v9154 = vadd.f32 %v9083, %v9153
    %v9155 = vpop.f32.mrf.mxu0
    %v9156 = vpop.f32.mrf.mxu0
    %9157 = vdwg.mxu0
    %9158 = vmatprep.subr.bf16.mxu0 %v7267
    %9159 = vmatpush1.bf16.msra.mxu0 %v7266
    %9160 = vmatprep.subr.bf16.mxu0 %v7251
    %9161 = vmatpush1.bf16.msra.mxu0 %v7250
    %9162 = vmatprep.subr.bf16.mxu0 %v7235
    %9163 = vmatpush1.bf16.msra.mxu0 %v7234
    %9164 = vmatprep.subr.bf16.mxu0 %v7219
    %9165 = vmatpush1.bf16.msra.mxu0 %v7218
    %9166 = vmatprep.subr.bf16.mxu0 %v7203
    %9167 = vmatpush1.bf16.msra.mxu0 %v7202
    %9168 = vmatprep.subr.bf16.mxu0 %v7187
    %9169 = vmatpush1.bf16.msra.mxu0 %v7186
    %9170 = vmatprep.subr.bf16.mxu0 %v7171
    %9171 = vmatpush1.bf16.msra.mxu0 %v7170
    %9172 = vmatprep.subr.bf16.mxu0 %v7155
    %9173 = vmatpush1.bf16.msra.mxu0 %v7154
    %9174 = vmatprep.subr.bf16.mxu0 %v7395
    %9175 = vmatpush2.bf16.msra.mxu0 %v7394
    %9176 = vmatprep.subr.bf16.mxu0 %v7379
    %9177 = vmatpush2.bf16.msra.mxu0 %v7378
    %9178 = vmatprep.subr.bf16.mxu0 %v7363
    %9179 = vmatpush2.bf16.msra.mxu0 %v7362
    %9180 = vmatprep.subr.bf16.mxu0 %v7347
    %9181 = vmatpush2.bf16.msra.mxu0 %v7346
    %9182 = vmatprep.subr.bf16.mxu0 %v7331
    %9183 = vmatpush2.bf16.msra.mxu0 %v7330
    %9184 = vmatprep.subr.bf16.mxu0 %v7315
    %9185 = vmatpush2.bf16.msra.mxu0 %v7314
    %9186 = vmatprep.subr.bf16.mxu0 %v7299
    %9187 = vmatpush2.bf16.msra.mxu0 %v7298
    %9188 = vmatprep.subr.bf16.mxu0 %v7283
    %9189 = vmatpush2.bf16.msra.mxu0 %v7282
    %9190 = vmatprep.mubr.bf16.mxu0 %v5077
    %9191 = vmatmul.mubr.bf16.gmra.mxu0 %v5076
    %v9192 = vpop.f32.mrf.mxu0
    %v9193 = vadd.f32 0.0, %v9192
    %v9194 = vpop.f32.mrf.mxu0
    %v9195 = vadd.f32 0.0, %v9194
    %v9196 = vpop.f32.mrf.mxu0
    %v9197 = vadd.f32 0.0, %v9196
    %v9198 = vpop.f32.mrf.mxu0
    %v9199 = vadd.f32 0.0, %v9198
    %9200 = vmatprep.mubr.bf16.mxu0 %v5081
    %9201 = vmatmul.mubr.bf16.gmra.mxu0 %v5080
    %v9202 = vpop.f32.mrf.mxu0
    %v9203 = vadd.f32 0.0, %v9202
    %v9204 = vpop.f32.mrf.mxu0
    %v9205 = vadd.f32 0.0, %v9204
    %v9206 = vpop.f32.mrf.mxu0
    %v9207 = vadd.f32 0.0, %v9206
    %v9208 = vpop.f32.mrf.mxu0
    %v9209 = vadd.f32 0.0, %v9208
    %9210 = vmatprep.mubr.bf16.mxu0 %v5085
    %9211 = vmatmul.mubr.bf16.gmra.mxu0 %v5084
    %v9212 = vpop.f32.mrf.mxu0
    %v9213 = vadd.f32 0.0, %v9212
    %v9214 = vpop.f32.mrf.mxu0
    %v9215 = vadd.f32 0.0, %v9214
    %v9216 = vpop.f32.mrf.mxu0
    %v9217 = vadd.f32 0.0, %v9216
    %v9218 = vpop.f32.mrf.mxu0
    %v9219 = vadd.f32 0.0, %v9218
    %9220 = vmatprep.mubr.bf16.mxu0 %v5089
    %9221 = vmatmul.mubr.bf16.gmra.mxu0 %v5088
    %v9222 = vpop.f32.mrf.mxu0
    %v9223 = vadd.f32 0.0, %v9222
    %v9224 = vpop.f32.mrf.mxu0
    %v9225 = vadd.f32 0.0, %v9224
    %v9226 = vpop.f32.mrf.mxu0
    %v9227 = vpop.f32.mrf.mxu0
    %9228 = vdwg.mxu0
    %9229 = vmatprep.subr.bf16.mxu0 %v7523
    %9230 = vmatpush1.bf16.msra.mxu0 %v7522
    %9231 = vmatprep.subr.bf16.mxu0 %v7507
    %9232 = vmatpush1.bf16.msra.mxu0 %v7506
    %9233 = vmatprep.subr.bf16.mxu0 %v7491
    %9234 = vmatpush1.bf16.msra.mxu0 %v7490
    %9235 = vmatprep.subr.bf16.mxu0 %v7475
    %9236 = vmatpush1.bf16.msra.mxu0 %v7474
    %9237 = vmatprep.subr.bf16.mxu0 %v7459
    %9238 = vmatpush1.bf16.msra.mxu0 %v7458
    %9239 = vmatprep.subr.bf16.mxu0 %v7443
    %9240 = vmatpush1.bf16.msra.mxu0 %v7442
    %9241 = vmatprep.subr.bf16.mxu0 %v7427
    %9242 = vmatpush1.bf16.msra.mxu0 %v7426
    %9243 = vmatprep.subr.bf16.mxu0 %v7411
    %9244 = vmatpush1.bf16.msra.mxu0 %v7410
    %9245 = vmatprep.subr.bf16.mxu0 %v7651
    %9246 = vmatpush2.bf16.msra.mxu0 %v7650
    %9247 = vmatprep.subr.bf16.mxu0 %v7635
    %9248 = vmatpush2.bf16.msra.mxu0 %v7634
    %9249 = vmatprep.subr.bf16.mxu0 %v7619
    %9250 = vmatpush2.bf16.msra.mxu0 %v7618
    %9251 = vmatprep.subr.bf16.mxu0 %v7603
    %9252 = vmatpush2.bf16.msra.mxu0 %v7602
    %9253 = vmatprep.subr.bf16.mxu0 %v7587
    %9254 = vmatpush2.bf16.msra.mxu0 %v7586
    %9255 = vmatprep.subr.bf16.mxu0 %v7571
    %9256 = vmatpush2.bf16.msra.mxu0 %v7570
    %9257 = vmatprep.subr.bf16.mxu0 %v7555
    %9258 = vmatpush2.bf16.msra.mxu0 %v7554
    %9259 = vmatprep.subr.bf16.mxu0 %v7539
    %9260 = vmatpush2.bf16.msra.mxu0 %v7538
    %9261 = vmatprep.mubr.bf16.mxu0 %v5079
    %9262 = vmatmul.mubr.bf16.gmra.mxu0 %v5078
    %v9263 = vpop.f32.mrf.mxu0
    %v9264 = vadd.f32 %v9193, %v9263
    %v9265 = vpop.f32.mrf.mxu0
    %v9266 = vadd.f32 %v9195, %v9265
    %v9267 = vpop.f32.mrf.mxu0
    %v9268 = vadd.f32 %v9197, %v9267
    %v9269 = vpop.f32.mrf.mxu0
    %v9270 = vadd.f32 %v9199, %v9269
    %9271 = vmatprep.mubr.bf16.mxu0 %v5083
    %9272 = vmatmul.mubr.bf16.gmra.mxu0 %v5082
    %v9273 = vpop.f32.mrf.mxu0
    %v9274 = vadd.f32 %v9203, %v9273
    %v9275 = vpop.f32.mrf.mxu0
    %v9276 = vadd.f32 %v9205, %v9275
    %v9277 = vpop.f32.mrf.mxu0
    %v9278 = vadd.f32 %v9207, %v9277
    %v9279 = vpop.f32.mrf.mxu0
    %v9280 = vadd.f32 %v9209, %v9279
    %9281 = vmatprep.mubr.bf16.mxu0 %v5087
    %9282 = vmatmul.mubr.bf16.gmra.mxu0 %v5086
    %v9283 = vpop.f32.mrf.mxu0
    %v9284 = vadd.f32 %v9213, %v9283
    %v9285 = vpop.f32.mrf.mxu0
    %v9286 = vadd.f32 %v9215, %v9285
    %v9287 = vpop.f32.mrf.mxu0
    %v9288 = vadd.f32 %v9217, %v9287
    %v9289 = vpop.f32.mrf.mxu0
    %v9290 = vadd.f32 %v9219, %v9289
    %9291 = vmatprep.mubr.bf16.mxu0 %v5091
    %9292 = vmatmul.mubr.bf16.gmra.mxu0 %v5090
    %v9293 = vpop.f32.mrf.mxu0
    %v9294 = vadd.f32 %v9223, %v9293
    %v9295 = vpop.f32.mrf.mxu0
    %v9296 = vadd.f32 %v9225, %v9295
    %v9297 = vpop.f32.mrf.mxu0
    %v9298 = vpop.f32.mrf.mxu0
    %9299 = vdwg.mxu0
    %v9300 = vld [vmem:[%s5] sm:$0xff]
    %v9301 = vld [vmem:[%s5 + $0x8] sm:$0xff]
    %v9302 = vld [vmem:[%s5 + $0x10] sm:$0xff]
    %v9303 = vld [vmem:[%s5 + $0x18] sm:$0xff]
    %v9304 = vld [vmem:[%s5 + $0x20] sm:$0xff]
    %v9305 = vld [vmem:[%s5 + $0x28] sm:$0xff]
    %v9306 = vld [vmem:[%s5 + $0x30] sm:$0xff]
    %v9307 = vld [vmem:[%s5 + $0x38] sm:$0xff]
    %v9308 = vld [vmem:[%s5 + $0x40] sm:$0xff]
    %v9309 = vld [vmem:[%s5 + $0x48] sm:$0xff]
    %v9310 = vld [vmem:[%s5 + $0x50] sm:$0xff]
    %v9311 = vld [vmem:[%s5 + $0x58] sm:$0xff]
    %v9312 = vld [vmem:[%s5 + $0x60] sm:$0xff]
    %v9313 = vld [vmem:[%s5 + $0x68] sm:$0xff]
    %s9314 = scalar_lea.vmem %s5, 112
    %v9315 = vld [vmem:[%s9314] sm:$0xff]
    %v9316 = vld [vmem:[%s9314 + $0x8] sm:$0xff]
    %v9317 = vld [vmem:[%s9314 + $0x10] sm:$0xff]
    %v9318 = vld [vmem:[%s9314 + $0x18] sm:$0xff]
    %v9319 = vld [vmem:[%s9314 + $0x20] sm:$0xff]
    %v9320 = vld [vmem:[%s9314 + $0x28] sm:$0xff]
    %v9321 = vld [vmem:[%s9314 + $0x30] sm:$0xff]
    %v9322 = vld [vmem:[%s9314 + $0x38] sm:$0xff]
    %v9323 = vld [vmem:[%s9314 + $0x40] sm:$0xff]
    %v9324 = vld [vmem:[%s9314 + $0x48] sm:$0xff]
    %v9325 = vld [vmem:[%s9314 + $0x50] sm:$0xff]
    %v9326 = vld [vmem:[%s9314 + $0x58] sm:$0xff]
    %v9327 = vld [vmem:[%s9314 + $0x60] sm:$0xff]
    %v9328 = vld [vmem:[%s9314 + $0x68] sm:$0xff]
    %vm9329 = vcmask 457728
    %v9331 = vsel %vm9329, %v9315, 0
    %v9334 = vsel %vm9329, %v9316, 0
    %v9337 = vsel %vm9329, %v9317, 0
    %v9340 = vsel %vm9329, %v9318, 0
    %v9343 = vsel %vm9329, %v9319, 0
    %v9346 = vsel %vm9329, %v9320, 0
    %v9349 = vsel %vm9329, %v9321, 0
    %v9352 = vsel %vm9329, %v9322, 0
    %v9355 = vsel %vm9329, %v9323, 0
    %v9358 = vsel %vm9329, %v9324, 0
    %v9361 = vsel %vm9329, %v9325, 0
    %v9364 = vsel %vm9329, %v9326, 0
    %v9367 = vsel %vm9329, %v9327, 0
    %v9370 = vsel %vm9329, %v9328, 0
    %9372 = vmatprep.subr.mxu0 0.0
    %9373 = vmatpush1.msra.mxu0 0.0
    %9374 = vmatprep.subr.mxu0 0.0
    %9375 = vmatpush1.msra.mxu0 0.0
    %9376 = vmatprep.subr.mxu0 0.0
    %9377 = vmatpush1.msra.mxu0 0.0
    %9378 = vmatprep.subr.mxu0 0.0
    %9379 = vmatpush1.msra.mxu0 0.0
    %9380 = vmatprep.subr.mxu0 0.0
    %9381 = vmatpush1.msra.mxu0 0.0
    %9382 = vmatprep.subr.mxu0 0.0
    %9383 = vmatpush1.msra.mxu0 0.0
    %9384 = vmatprep.subr.mxu0 0.0
    %9385 = vmatpush1.msra.mxu0 0.0
    %9386 = vmatprep.subr.mxu0 0.0
    %9387 = vmatpush1.msra.mxu0 0.0
    %9388 = vmatprep.subr.mxu0 0.0
    %9389 = vmatpush1.msra.mxu0 0.0
    %9390 = vmatprep.subr.mxu0 %v8586
    %9391 = vmatpush1.msra.mxu0 %v8584
    %9392 = vmatprep.subr.mxu0 %v8580
    %9393 = vmatpush1.msra.mxu0 %v8578
    %9394 = vmatprep.subr.mxu0 %v8576
    %9395 = vmatpush1.msra.mxu0 %v8574
    %9396 = vmatprep.subr.mxu0 %v8570
    %9397 = vmatpush1.msra.mxu0 %v8568
    %9398 = vmatprep.subr.mxu0 %v8566
    %9399 = vmatpush1.msra.mxu0 %v8564
    %9400 = vmatprep.subr.mxu0 %v8560
    %9401 = vmatpush1.msra.mxu0 %v8558
    %9402 = vmatprep.subr.mxu0 %v8556
    %9403 = vmatpush1.msra.mxu0 %v8554
    %9404 = vmatprep.subr.mxu0 0.0
    %9405 = vmatpush2.msra.mxu0 0.0
    %9406 = vmatprep.subr.mxu0 0.0
    %9407 = vmatpush2.msra.mxu0 0.0
    %9408 = vmatprep.subr.mxu0 0.0
    %9409 = vmatpush2.msra.mxu0 0.0
    %9410 = vmatprep.subr.mxu0 0.0
    %9411 = vmatpush2.msra.mxu0 0.0
    %9412 = vmatprep.subr.mxu0 0.0
    %9413 = vmatpush2.msra.mxu0 0.0
    %9414 = vmatprep.subr.mxu0 0.0
    %9415 = vmatpush2.msra.mxu0 0.0
    %9416 = vmatprep.subr.mxu0 0.0
    %9417 = vmatpush2.msra.mxu0 0.0
    %9418 = vmatprep.subr.mxu0 0.0
    %9419 = vmatpush2.msra.mxu0 0.0
    %9420 = vmatprep.subr.mxu0 0.0
    %9421 = vmatpush2.msra.mxu0 0.0
    %9422 = vmatprep.subr.mxu0 0.0
    %9423 = vmatpush2.msra.mxu0 0.0
    %9424 = vmatprep.subr.mxu0 0.0
    %9425 = vmatpush2.msra.mxu0 0.0
    %9426 = vmatprep.subr.mxu0 0.0
    %9427 = vmatpush2.msra.mxu0 0.0
    %9428 = vmatprep.subr.mxu0 0.0
    %9429 = vmatpush2.msra.mxu0 0.0
    %9430 = vmatprep.subr.mxu0 0.0
    %9431 = vmatpush2.msra.mxu0 0.0
    %9432 = vmatprep.subr.mxu0 0.0
    %9433 = vmatpush2.msra.mxu0 0.0
    %9434 = vmatprep.subr.mxu0 0.0
    %9435 = vmatpush2.msra.mxu0 0.0
    %9436 = vmatprep.mubr.f32.mxu0 0.0
    %9437 = vmatmul.mubr.f32.gmra.mxu0 %v9331
    %v9438 = vpop.f32.mrf.mxu0
    %v9439 = vadd.f32 0.0, %v9438
    %v9440 = vpop.f32.mrf.mxu0
    %v9441 = vadd.f32 0.0, %v9440
    %9442 = vmatprep.mubr.f32.mxu0 0.0
    %9443 = vmatmul.mubr.f32.gmra.mxu0 %v9334
    %v9444 = vpop.f32.mrf.mxu0
    %v9445 = vadd.f32 0.0, %v9444
    %v9446 = vpop.f32.mrf.mxu0
    %v9447 = vadd.f32 0.0, %v9446
    %9448 = vmatprep.mubr.f32.mxu0 0.0
    %9449 = vmatmul.mubr.f32.gmra.mxu0 %v9337
    %v9450 = vpop.f32.mrf.mxu0
    %v9451 = vadd.f32 0.0, %v9450
    %v9452 = vpop.f32.mrf.mxu0
    %v9453 = vadd.f32 0.0, %v9452
    %9454 = vmatprep.mubr.f32.mxu0 0.0
    %9455 = vmatmul.mubr.f32.gmra.mxu0 %v9340
    %v9456 = vpop.f32.mrf.mxu0
    %v9457 = vadd.f32 0.0, %v9456
    %v9458 = vpop.f32.mrf.mxu0
    %v9459 = vadd.f32 0.0, %v9458
    %9460 = vmatprep.mubr.f32.mxu0 0.0
    %9461 = vmatmul.mubr.f32.gmra.mxu0 %v9343
    %v9462 = vpop.f32.mrf.mxu0
    %v9463 = vadd.f32 0.0, %v9462
    %v9464 = vpop.f32.mrf.mxu0
    %v9465 = vadd.f32 0.0, %v9464
    %9466 = vmatprep.mubr.f32.mxu0 0.0
    %9467 = vmatmul.mubr.f32.gmra.mxu0 %v9346
    %v9468 = vpop.f32.mrf.mxu0
    %v9469 = vadd.f32 0.0, %v9468
    %v9470 = vpop.f32.mrf.mxu0
    %v9471 = vadd.f32 0.0, %v9470
    %9472 = vmatprep.mubr.f32.mxu0 0.0
    %9473 = vmatmul.mubr.f32.gmra.mxu0 %v9349
    %v9474 = vpop.f32.mrf.mxu0
    %v9475 = vadd.f32 0.0, %v9474
    %v9476 = vpop.f32.mrf.mxu0
    %v9477 = vadd.f32 0.0, %v9476
    %9478 = vmatprep.mubr.f32.mxu0 0.0
    %9479 = vmatmul.mubr.f32.gmra.mxu0 %v9352
    %v9480 = vpop.f32.mrf.mxu0
    %v9481 = vadd.f32 0.0, %v9480
    %v9482 = vpop.f32.mrf.mxu0
    %v9483 = vadd.f32 0.0, %v9482
    %9484 = vmatprep.mubr.f32.mxu0 0.0
    %9485 = vmatmul.mubr.f32.gmra.mxu0 %v9355
    %v9486 = vpop.f32.mrf.mxu0
    %v9487 = vadd.f32 0.0, %v9486
    %v9488 = vpop.f32.mrf.mxu0
    %v9489 = vadd.f32 0.0, %v9488
    %9490 = vmatprep.mubr.f32.mxu0 0.0
    %9491 = vmatmul.mubr.f32.gmra.mxu0 %v9358
    %v9492 = vpop.f32.mrf.mxu0
    %v9493 = vadd.f32 0.0, %v9492
    %v9494 = vpop.f32.mrf.mxu0
    %v9495 = vadd.f32 0.0, %v9494
    %9496 = vmatprep.mubr.f32.mxu0 0.0
    %9497 = vmatmul.mubr.f32.gmra.mxu0 %v9361
    %v9498 = vpop.f32.mrf.mxu0
    %v9499 = vadd.f32 0.0, %v9498
    %v9500 = vpop.f32.mrf.mxu0
    %v9501 = vadd.f32 0.0, %v9500
    %9502 = vmatprep.mubr.f32.mxu0 0.0
    %9503 = vmatmul.mubr.f32.gmra.mxu0 %v9364
    %v9504 = vpop.f32.mrf.mxu0
    %v9505 = vadd.f32 0.0, %v9504
    %v9506 = vpop.f32.mrf.mxu0
    %v9507 = vadd.f32 0.0, %v9506
    %9508 = vmatprep.mubr.f32.mxu0 0.0
    %9509 = vmatmul.mubr.f32.gmra.mxu0 %v9367
    %v9510 = vpop.f32.mrf.mxu0
    %v9511 = vadd.f32 0.0, %v9510
    %v9512 = vpop.f32.mrf.mxu0
    %v9513 = vadd.f32 0.0, %v9512
    %9514 = vmatprep.mubr.f32.mxu0 0.0
    %9515 = vmatmul.mubr.f32.gmra.mxu0 %v9370
    %v9516 = vpop.f32.mrf.mxu0
    %v9517 = vadd.f32 0.0, %v9516
    %v9518 = vpop.f32.mrf.mxu0
    %v9519 = vadd.f32 0.0, %v9518
    %9520 = vdwg.mxu0
    %9521 = vmatprep.subr.mxu0 0.0
    %9522 = vmatpush1.msra.mxu0 0.0
    %9523 = vmatprep.subr.mxu0 0.0
    %9524 = vmatpush1.msra.mxu0 0.0
    %9525 = vmatprep.subr.mxu0 0.0
    %9526 = vmatpush1.msra.mxu0 0.0
    %9527 = vmatprep.subr.mxu0 0.0
    %9528 = vmatpush1.msra.mxu0 0.0
    %9529 = vmatprep.subr.mxu0 0.0
    %9530 = vmatpush1.msra.mxu0 0.0
    %9531 = vmatprep.subr.mxu0 0.0
    %9532 = vmatpush1.msra.mxu0 0.0
    %9533 = vmatprep.subr.mxu0 0.0
    %9534 = vmatpush1.msra.mxu0 0.0
    %9535 = vmatprep.subr.mxu0 0.0
    %9536 = vmatpush1.msra.mxu0 0.0
    %9537 = vmatprep.subr.mxu0 0.0
    %9538 = vmatpush1.msra.mxu0 0.0
    %9539 = vmatprep.subr.mxu0 %v8728
    %9540 = vmatpush1.msra.mxu0 %v8726
    %9541 = vmatprep.subr.mxu0 %v8722
    %9542 = vmatpush1.msra.mxu0 %v8720
    %9543 = vmatprep.subr.mxu0 %v8718
    %9544 = vmatpush1.msra.mxu0 %v8716
    %9545 = vmatprep.subr.mxu0 %v8712
    %9546 = vmatpush1.msra.mxu0 %v8710
    %9547 = vmatprep.subr.mxu0 %v8708
    %9548 = vmatpush1.msra.mxu0 %v8706
    %9549 = vmatprep.subr.mxu0 %v8702
    %9550 = vmatpush1.msra.mxu0 %v8700
    %9551 = vmatprep.subr.mxu0 %v8698
    %9552 = vmatpush1.msra.mxu0 %v8696
    %9553 = vmatprep.subr.mxu0 0.0
    %9554 = vmatpush2.msra.mxu0 0.0
    %9555 = vmatprep.subr.mxu0 0.0
    %9556 = vmatpush2.msra.mxu0 0.0
    %9557 = vmatprep.subr.mxu0 0.0
    %9558 = vmatpush2.msra.mxu0 0.0
    %9559 = vmatprep.subr.mxu0 0.0
    %9560 = vmatpush2.msra.mxu0 0.0
    %9561 = vmatprep.subr.mxu0 0.0
    %9562 = vmatpush2.msra.mxu0 0.0
    %9563 = vmatprep.subr.mxu0 0.0
    %9564 = vmatpush2.msra.mxu0 0.0
    %9565 = vmatprep.subr.mxu0 0.0
    %9566 = vmatpush2.msra.mxu0 0.0
    %9567 = vmatprep.subr.mxu0 0.0
    %9568 = vmatpush2.msra.mxu0 0.0
    %9569 = vmatprep.subr.mxu0 0.0
    %9570 = vmatpush2.msra.mxu0 0.0
    %9571 = vmatprep.subr.mxu0 0.0
    %9572 = vmatpush2.msra.mxu0 0.0
    %9573 = vmatprep.subr.mxu0 0.0
    %9574 = vmatpush2.msra.mxu0 0.0
    %9575 = vmatprep.subr.mxu0 0.0
    %9576 = vmatpush2.msra.mxu0 0.0
    %9577 = vmatprep.subr.mxu0 0.0
    %9578 = vmatpush2.msra.mxu0 0.0
    %9579 = vmatprep.subr.mxu0 0.0
    %9580 = vmatpush2.msra.mxu0 0.0
    %9581 = vmatprep.subr.mxu0 0.0
    %9582 = vmatpush2.msra.mxu0 0.0
    %9583 = vmatprep.subr.mxu0 0.0
    %9584 = vmatpush2.msra.mxu0 0.0
    %9585 = vmatprep.mubr.f32.mxu0 0.0
    %9586 = vmatmul.mubr.f32.gmra.mxu0 %v9331
    %v9587 = vpop.f32.mrf.mxu0
    %v9588 = vadd.f32 0.0, %v9587
    %v9589 = vpop.f32.mrf.mxu0
    %v9590 = vadd.f32 0.0, %v9589
    %9591 = vmatprep.mubr.f32.mxu0 0.0
    %9592 = vmatmul.mubr.f32.gmra.mxu0 %v9334
    %v9593 = vpop.f32.mrf.mxu0
    %v9594 = vadd.f32 0.0, %v9593
    %v9595 = vpop.f32.mrf.mxu0
    %v9596 = vadd.f32 0.0, %v9595
    %9597 = vmatprep.mubr.f32.mxu0 0.0
    %9598 = vmatmul.mubr.f32.gmra.mxu0 %v9337
    %v9599 = vpop.f32.mrf.mxu0
    %v9600 = vadd.f32 0.0, %v9599
    %v9601 = vpop.f32.mrf.mxu0
    %v9602 = vadd.f32 0.0, %v9601
    %9603 = vmatprep.mubr.f32.mxu0 0.0
    %9604 = vmatmul.mubr.f32.gmra.mxu0 %v9340
    %v9605 = vpop.f32.mrf.mxu0
    %v9606 = vadd.f32 0.0, %v9605
    %v9607 = vpop.f32.mrf.mxu0
    %v9608 = vadd.f32 0.0, %v9607
    %9609 = vmatprep.mubr.f32.mxu0 0.0
    %9610 = vmatmul.mubr.f32.gmra.mxu0 %v9343
    %v9611 = vpop.f32.mrf.mxu0
    %v9612 = vadd.f32 0.0, %v9611
    %v9613 = vpop.f32.mrf.mxu0
    %v9614 = vadd.f32 0.0, %v9613
    %9615 = vmatprep.mubr.f32.mxu0 0.0
    %9616 = vmatmul.mubr.f32.gmra.mxu0 %v9346
    %v9617 = vpop.f32.mrf.mxu0
    %v9618 = vadd.f32 0.0, %v9617
    %v9619 = vpop.f32.mrf.mxu0
    %v9620 = vadd.f32 0.0, %v9619
    %9621 = vmatprep.mubr.f32.mxu0 0.0
    %9622 = vmatmul.mubr.f32.gmra.mxu0 %v9349
    %v9623 = vpop.f32.mrf.mxu0
    %v9624 = vadd.f32 0.0, %v9623
    %v9625 = vpop.f32.mrf.mxu0
    %v9626 = vadd.f32 0.0, %v9625
    %9627 = vmatprep.mubr.f32.mxu0 0.0
    %9628 = vmatmul.mubr.f32.gmra.mxu0 %v9352
    %v9629 = vpop.f32.mrf.mxu0
    %v9630 = vadd.f32 0.0, %v9629
    %v9631 = vpop.f32.mrf.mxu0
    %v9632 = vadd.f32 0.0, %v9631
    %9633 = vmatprep.mubr.f32.mxu0 0.0
    %9634 = vmatmul.mubr.f32.gmra.mxu0 %v9355
    %v9635 = vpop.f32.mrf.mxu0
    %v9636 = vadd.f32 0.0, %v9635
    %v9637 = vpop.f32.mrf.mxu0
    %v9638 = vadd.f32 0.0, %v9637
    %9639 = vmatprep.mubr.f32.mxu0 0.0
    %9640 = vmatmul.mubr.f32.gmra.mxu0 %v9358
    %v9641 = vpop.f32.mrf.mxu0
    %v9642 = vadd.f32 0.0, %v9641
    %v9643 = vpop.f32.mrf.mxu0
    %v9644 = vadd.f32 0.0, %v9643
    %9645 = vmatprep.mubr.f32.mxu0 0.0
    %9646 = vmatmul.mubr.f32.gmra.mxu0 %v9361
    %v9647 = vpop.f32.mrf.mxu0
    %v9648 = vadd.f32 0.0, %v9647
    %v9649 = vpop.f32.mrf.mxu0
    %v9650 = vadd.f32 0.0, %v9649
    %9651 = vmatprep.mubr.f32.mxu0 0.0
    %9652 = vmatmul.mubr.f32.gmra.mxu0 %v9364
    %v9653 = vpop.f32.mrf.mxu0
    %v9654 = vadd.f32 0.0, %v9653
    %v9655 = vpop.f32.mrf.mxu0
    %v9656 = vadd.f32 0.0, %v9655
    %9657 = vmatprep.mubr.f32.mxu0 0.0
    %9658 = vmatmul.mubr.f32.gmra.mxu0 %v9367
    %v9659 = vpop.f32.mrf.mxu0
    %v9660 = vadd.f32 0.0, %v9659
    %v9661 = vpop.f32.mrf.mxu0
    %v9662 = vadd.f32 0.0, %v9661
    %9663 = vmatprep.mubr.f32.mxu0 0.0
    %9664 = vmatmul.mubr.f32.gmra.mxu0 %v9370
    %v9665 = vpop.f32.mrf.mxu0
    %v9666 = vadd.f32 0.0, %v9665
    %v9667 = vpop.f32.mrf.mxu0
    %v9668 = vadd.f32 0.0, %v9667
    %9669 = vdwg.mxu0
    %v9671 = vsel %vm9329, %v9300, 0
    %v9674 = vsel %vm9329, %v9301, 0
    %v9677 = vsel %vm9329, %v9302, 0
    %v9680 = vsel %vm9329, %v9303, 0
    %v9683 = vsel %vm9329, %v9304, 0
    %v9686 = vsel %vm9329, %v9305, 0
    %v9689 = vsel %vm9329, %v9306, 0
    %v9692 = vsel %vm9329, %v9307, 0
    %v9695 = vsel %vm9329, %v9308, 0
    %v9698 = vsel %vm9329, %v9309, 0
    %v9701 = vsel %vm9329, %v9310, 0
    %v9704 = vsel %vm9329, %v9311, 0
    %v9707 = vsel %vm9329, %v9312, 0
    %v9710 = vsel %vm9329, %v9313, 0
    %9712 = vmatprep.subr.mxu0 0.0
    %9713 = vmatpush1.msra.mxu0 0.0
    %9714 = vmatprep.subr.mxu0 0.0
    %9715 = vmatpush1.msra.mxu0 0.0
    %9716 = vmatprep.subr.mxu0 0.0
    %9717 = vmatpush1.msra.mxu0 0.0
    %9718 = vmatprep.subr.mxu0 0.0
    %9719 = vmatpush1.msra.mxu0 0.0
    %9720 = vmatprep.subr.mxu0 0.0
    %9721 = vmatpush1.msra.mxu0 0.0
    %9722 = vmatprep.subr.mxu0 0.0
    %9723 = vmatpush1.msra.mxu0 0.0
    %9724 = vmatprep.subr.mxu0 0.0
    %9725 = vmatpush1.msra.mxu0 0.0
    %9726 = vmatprep.subr.mxu0 0.0
    %9727 = vmatpush1.msra.mxu0 0.0
    %9728 = vmatprep.subr.mxu0 0.0
    %9729 = vmatpush1.msra.mxu0 0.0
    %9730 = vmatprep.subr.mxu0 %v8302
    %9731 = vmatpush1.msra.mxu0 %v8300
    %9732 = vmatprep.subr.mxu0 %v8296
    %9733 = vmatpush1.msra.mxu0 %v8294
    %9734 = vmatprep.subr.mxu0 %v8292
    %9735 = vmatpush1.msra.mxu0 %v8290
    %9736 = vmatprep.subr.mxu0 %v8286
    %9737 = vmatpush1.msra.mxu0 %v8284
    %9738 = vmatprep.subr.mxu0 %v8282
    %9739 = vmatpush1.msra.mxu0 %v8280
    %9740 = vmatprep.subr.mxu0 %v8276
    %9741 = vmatpush1.msra.mxu0 %v8274
    %9742 = vmatprep.subr.mxu0 %v8272
    %9743 = vmatpush1.msra.mxu0 %v8270
    %9744 = vmatprep.subr.mxu0 0.0
    %9745 = vmatpush2.msra.mxu0 0.0
    %9746 = vmatprep.subr.mxu0 0.0
    %9747 = vmatpush2.msra.mxu0 0.0
    %9748 = vmatprep.subr.mxu0 0.0
    %9749 = vmatpush2.msra.mxu0 0.0
    %9750 = vmatprep.subr.mxu0 0.0
    %9751 = vmatpush2.msra.mxu0 0.0
    %9752 = vmatprep.subr.mxu0 0.0
    %9753 = vmatpush2.msra.mxu0 0.0
    %9754 = vmatprep.subr.mxu0 0.0
    %9755 = vmatpush2.msra.mxu0 0.0
    %9756 = vmatprep.subr.mxu0 0.0
    %9757 = vmatpush2.msra.mxu0 0.0
    %9758 = vmatprep.subr.mxu0 0.0
    %9759 = vmatpush2.msra.mxu0 0.0
    %9760 = vmatprep.subr.mxu0 0.0
    %9761 = vmatpush2.msra.mxu0 0.0
    %9762 = vmatprep.subr.mxu0 0.0
    %9763 = vmatpush2.msra.mxu0 0.0
    %9764 = vmatprep.subr.mxu0 0.0
    %9765 = vmatpush2.msra.mxu0 0.0
    %9766 = vmatprep.subr.mxu0 0.0
    %9767 = vmatpush2.msra.mxu0 0.0
    %9768 = vmatprep.subr.mxu0 0.0
    %9769 = vmatpush2.msra.mxu0 0.0
    %9770 = vmatprep.subr.mxu0 0.0
    %9771 = vmatpush2.msra.mxu0 0.0
    %9772 = vmatprep.subr.mxu0 0.0
    %9773 = vmatpush2.msra.mxu0 0.0
    %9774 = vmatprep.subr.mxu0 0.0
    %9775 = vmatpush2.msra.mxu0 0.0
    %9776 = vmatprep.mubr.f32.mxu0 0.0
    %9777 = vmatmul.mubr.f32.gmra.mxu0 %v9671
    %v9778 = vpop.f32.mrf.mxu0
    %v9779 = vadd.f32 %v9439, %v9778
    %v9780 = vpop.f32.mrf.mxu0
    %v9781 = vadd.f32 %v9441, %v9780
    %9782 = vmatprep.mubr.f32.mxu0 0.0
    %9783 = vmatmul.mubr.f32.gmra.mxu0 %v9674
    %v9784 = vpop.f32.mrf.mxu0
    %v9785 = vadd.f32 %v9445, %v9784
    %v9786 = vpop.f32.mrf.mxu0
    %v9787 = vadd.f32 %v9447, %v9786
    %9788 = vmatprep.mubr.f32.mxu0 0.0
    %9789 = vmatmul.mubr.f32.gmra.mxu0 %v9677
    %v9790 = vpop.f32.mrf.mxu0
    %v9791 = vadd.f32 %v9451, %v9790
    %v9792 = vpop.f32.mrf.mxu0
    %v9793 = vadd.f32 %v9453, %v9792
    %9794 = vmatprep.mubr.f32.mxu0 0.0
    %9795 = vmatmul.mubr.f32.gmra.mxu0 %v9680
    %v9796 = vpop.f32.mrf.mxu0
    %v9797 = vadd.f32 %v9457, %v9796
    %v9798 = vpop.f32.mrf.mxu0
    %v9799 = vadd.f32 %v9459, %v9798
    %9800 = vmatprep.mubr.f32.mxu0 0.0
    %9801 = vmatmul.mubr.f32.gmra.mxu0 %v9683
    %v9802 = vpop.f32.mrf.mxu0
    %v9803 = vadd.f32 %v9463, %v9802
    %v9804 = vpop.f32.mrf.mxu0
    %v9805 = vadd.f32 %v9465, %v9804
    %9806 = vmatprep.mubr.f32.mxu0 0.0
    %9807 = vmatmul.mubr.f32.gmra.mxu0 %v9686
    %v9808 = vpop.f32.mrf.mxu0
    %v9809 = vadd.f32 %v9469, %v9808
    %v9810 = vpop.f32.mrf.mxu0
    %v9811 = vadd.f32 %v9471, %v9810
    %9812 = vmatprep.mubr.f32.mxu0 0.0
    %9813 = vmatmul.mubr.f32.gmra.mxu0 %v9689
    %v9814 = vpop.f32.mrf.mxu0
    %v9815 = vadd.f32 %v9475, %v9814
    %v9816 = vpop.f32.mrf.mxu0
    %v9817 = vadd.f32 %v9477, %v9816
    %9818 = vmatprep.mubr.f32.mxu0 0.0
    %9819 = vmatmul.mubr.f32.gmra.mxu0 %v9692
    %v9820 = vpop.f32.mrf.mxu0
    %v9821 = vadd.f32 %v9481, %v9820
    %v9822 = vpop.f32.mrf.mxu0
    %v9823 = vadd.f32 %v9483, %v9822
    %9824 = vmatprep.mubr.f32.mxu0 0.0
    %9825 = vmatmul.mubr.f32.gmra.mxu0 %v9695
    %v9826 = vpop.f32.mrf.mxu0
    %v9827 = vadd.f32 %v9487, %v9826
    %v9828 = vpop.f32.mrf.mxu0
    %v9829 = vadd.f32 %v9489, %v9828
    %9830 = vmatprep.mubr.f32.mxu0 0.0
    %9831 = vmatmul.mubr.f32.gmra.mxu0 %v9698
    %v9832 = vpop.f32.mrf.mxu0
    %v9833 = vadd.f32 %v9493, %v9832
    %v9834 = vpop.f32.mrf.mxu0
    %v9835 = vadd.f32 %v9495, %v9834
    %9836 = vmatprep.mubr.f32.mxu0 0.0
    %9837 = vmatmul.mubr.f32.gmra.mxu0 %v9701
    %v9838 = vpop.f32.mrf.mxu0
    %v9839 = vadd.f32 %v9499, %v9838
    %v9840 = vpop.f32.mrf.mxu0
    %v9841 = vadd.f32 %v9501, %v9840
    %9842 = vmatprep.mubr.f32.mxu0 0.0
    %9843 = vmatmul.mubr.f32.gmra.mxu0 %v9704
    %v9844 = vpop.f32.mrf.mxu0
    %v9845 = vadd.f32 %v9505, %v9844
    %v9846 = vpop.f32.mrf.mxu0
    %v9847 = vadd.f32 %v9507, %v9846
    %9848 = vmatprep.mubr.f32.mxu0 0.0
    %9849 = vmatmul.mubr.f32.gmra.mxu0 %v9707
    %v9850 = vpop.f32.mrf.mxu0
    %v9851 = vadd.f32 %v9511, %v9850
    %v9852 = vpop.f32.mrf.mxu0
    %v9853 = vadd.f32 %v9513, %v9852
    %9854 = vmatprep.mubr.f32.mxu0 0.0
    %9855 = vmatmul.mubr.f32.gmra.mxu0 %v9710
    %v9856 = vpop.f32.mrf.mxu0
    %v9857 = vadd.f32 %v9517, %v9856
    %v9858 = vpop.f32.mrf.mxu0
    %v9859 = vadd.f32 %v9519, %v9858
    %9860 = vdwg.mxu0
    %9861 = vmatprep.subr.mxu0 0.0
    %9862 = vmatpush1.msra.mxu0 0.0
    %9863 = vmatprep.subr.mxu0 0.0
    %9864 = vmatpush1.msra.mxu0 0.0
    %9865 = vmatprep.subr.mxu0 0.0
    %9866 = vmatpush1.msra.mxu0 0.0
    %9867 = vmatprep.subr.mxu0 0.0
    %9868 = vmatpush1.msra.mxu0 0.0
    %9869 = vmatprep.subr.mxu0 0.0
    %9870 = vmatpush1.msra.mxu0 0.0
    %9871 = vmatprep.subr.mxu0 0.0
    %9872 = vmatpush1.msra.mxu0 0.0
    %9873 = vmatprep.subr.mxu0 0.0
    %9874 = vmatpush1.msra.mxu0 0.0
    %9875 = vmatprep.subr.mxu0 0.0
    %9876 = vmatpush1.msra.mxu0 0.0
    %9877 = vmatprep.subr.mxu0 0.0
    %9878 = vmatpush1.msra.mxu0 0.0
    %9879 = vmatprep.subr.mxu0 %v8444
    %9880 = vmatpush1.msra.mxu0 %v8442
    %9881 = vmatprep.subr.mxu0 %v8438
    %9882 = vmatpush1.msra.mxu0 %v8436
    %9883 = vmatprep.subr.mxu0 %v8434
    %9884 = vmatpush1.msra.mxu0 %v8432
    %9885 = vmatprep.subr.mxu0 %v8428
    %9886 = vmatpush1.msra.mxu0 %v8426
    %9887 = vmatprep.subr.mxu0 %v8424
    %9888 = vmatpush1.msra.mxu0 %v8422
    %9889 = vmatprep.subr.mxu0 %v8418
    %9890 = vmatpush1.msra.mxu0 %v8416
    %9891 = vmatprep.subr.mxu0 %v8414
    %9892 = vmatpush1.msra.mxu0 %v8412
    %9893 = vmatprep.subr.mxu0 0.0
    %9894 = vmatpush2.msra.mxu0 0.0
    %9895 = vmatprep.subr.mxu0 0.0
    %9896 = vmatpush2.msra.mxu0 0.0
    %9897 = vmatprep.subr.mxu0 0.0
    %9898 = vmatpush2.msra.mxu0 0.0
    %9899 = vmatprep.subr.mxu0 0.0
    %9900 = vmatpush2.msra.mxu0 0.0
    %9901 = vmatprep.subr.mxu0 0.0
    %9902 = vmatpush2.msra.mxu0 0.0
    %9903 = vmatprep.subr.mxu0 0.0
    %9904 = vmatpush2.msra.mxu0 0.0
    %9905 = vmatprep.subr.mxu0 0.0
    %9906 = vmatpush2.msra.mxu0 0.0
    %9907 = vmatprep.subr.mxu0 0.0
    %9908 = vmatpush2.msra.mxu0 0.0
    %9909 = vmatprep.subr.mxu0 0.0
    %9910 = vmatpush2.msra.mxu0 0.0
    %9911 = vmatprep.subr.mxu0 0.0
    %9912 = vmatpush2.msra.mxu0 0.0
    %9913 = vmatprep.subr.mxu0 0.0
    %9914 = vmatpush2.msra.mxu0 0.0
    %9915 = vmatprep.subr.mxu0 0.0
    %9916 = vmatpush2.msra.mxu0 0.0
    %9917 = vmatprep.subr.mxu0 0.0
    %9918 = vmatpush2.msra.mxu0 0.0
    %9919 = vmatprep.subr.mxu0 0.0
    %9920 = vmatpush2.msra.mxu0 0.0
    %9921 = vmatprep.subr.mxu0 0.0
    %9922 = vmatpush2.msra.mxu0 0.0
    %9923 = vmatprep.subr.mxu0 0.0
    %9924 = vmatpush2.msra.mxu0 0.0
    %9925 = vmatprep.mubr.f32.mxu0 0.0
    %9926 = vmatmul.mubr.f32.gmra.mxu0 %v9671
    %v9927 = vpop.f32.mrf.mxu0
    %v9928 = vadd.f32 %v9588, %v9927
    %v9929 = vpop.f32.mrf.mxu0
    %v9930 = vadd.f32 %v9590, %v9929
    %9931 = vmatprep.mubr.f32.mxu0 0.0
    %9932 = vmatmul.mubr.f32.gmra.mxu0 %v9674
    %v9933 = vpop.f32.mrf.mxu0
    %v9934 = vadd.f32 %v9594, %v9933
    %v9935 = vpop.f32.mrf.mxu0
    %v9936 = vadd.f32 %v9596, %v9935
    %9937 = vmatprep.mubr.f32.mxu0 0.0
    %9938 = vmatmul.mubr.f32.gmra.mxu0 %v9677
    %v9939 = vpop.f32.mrf.mxu0
    %v9940 = vadd.f32 %v9600, %v9939
    %v9941 = vpop.f32.mrf.mxu0
    %v9942 = vadd.f32 %v9602, %v9941
    %9943 = vmatprep.mubr.f32.mxu0 0.0
    %9944 = vmatmul.mubr.f32.gmra.mxu0 %v9680
    %v9945 = vpop.f32.mrf.mxu0
    %v9946 = vadd.f32 %v9606, %v9945
    %v9947 = vpop.f32.mrf.mxu0
    %v9948 = vadd.f32 %v9608, %v9947
    %9949 = vmatprep.mubr.f32.mxu0 0.0
    %9950 = vmatmul.mubr.f32.gmra.mxu0 %v9683
    %v9951 = vpop.f32.mrf.mxu0
    %v9952 = vadd.f32 %v9612, %v9951
    %v9953 = vpop.f32.mrf.mxu0
    %v9954 = vadd.f32 %v9614, %v9953
    %9955 = vmatprep.mubr.f32.mxu0 0.0
    %9956 = vmatmul.mubr.f32.gmra.mxu0 %v9686
    %v9957 = vpop.f32.mrf.mxu0
    %v9958 = vadd.f32 %v9618, %v9957
    %v9959 = vpop.f32.mrf.mxu0
    %v9960 = vadd.f32 %v9620, %v9959
    %9961 = vmatprep.mubr.f32.mxu0 0.0
    %9962 = vmatmul.mubr.f32.gmra.mxu0 %v9689
    %v9963 = vpop.f32.mrf.mxu0
    %v9964 = vadd.f32 %v9624, %v9963
    %v9965 = vpop.f32.mrf.mxu0
    %v9966 = vadd.f32 %v9626, %v9965
    %9967 = vmatprep.mubr.f32.mxu0 0.0
    %9968 = vmatmul.mubr.f32.gmra.mxu0 %v9692
    %v9969 = vpop.f32.mrf.mxu0
    %v9970 = vadd.f32 %v9630, %v9969
    %v9971 = vpop.f32.mrf.mxu0
    %v9972 = vadd.f32 %v9632, %v9971
    %9973 = vmatprep.mubr.f32.mxu0 0.0
    %9974 = vmatmul.mubr.f32.gmra.mxu0 %v9695
    %v9975 = vpop.f32.mrf.mxu0
    %v9976 = vadd.f32 %v9636, %v9975
    %v9977 = vpop.f32.mrf.mxu0
    %v9978 = vadd.f32 %v9638, %v9977
    %9979 = vmatprep.mubr.f32.mxu0 0.0
    %9980 = vmatmul.mubr.f32.gmra.mxu0 %v9698
    %v9981 = vpop.f32.mrf.mxu0
    %v9982 = vadd.f32 %v9642, %v9981
    %v9983 = vpop.f32.mrf.mxu0
    %v9984 = vadd.f32 %v9644, %v9983
    %9985 = vmatprep.mubr.f32.mxu0 0.0
    %9986 = vmatmul.mubr.f32.gmra.mxu0 %v9701
    %v9987 = vpop.f32.mrf.mxu0
    %v9988 = vadd.f32 %v9648, %v9987
    %v9989 = vpop.f32.mrf.mxu0
    %v9990 = vadd.f32 %v9650, %v9989
    %9991 = vmatprep.mubr.f32.mxu0 0.0
    %9992 = vmatmul.mubr.f32.gmra.mxu0 %v9704
    %v9993 = vpop.f32.mrf.mxu0
    %v9994 = vadd.f32 %v9654, %v9993
    %v9995 = vpop.f32.mrf.mxu0
    %v9996 = vadd.f32 %v9656, %v9995
    %9997 = vmatprep.mubr.f32.mxu0 0.0
    %9998 = vmatmul.mubr.f32.gmra.mxu0 %v9707
    %v9999 = vpop.f32.mrf.mxu0
    %v10000 = vadd.f32 %v9660, %v9999
    %v10001 = vpop.f32.mrf.mxu0
    %v10002 = vadd.f32 %v9662, %v10001
    %10003 = vmatprep.mubr.f32.mxu0 0.0
    %10004 = vmatmul.mubr.f32.gmra.mxu0 %v9710
    %v10005 = vpop.f32.mrf.mxu0
    %v10006 = vadd.f32 %v9666, %v10005
    %v10007 = vpop.f32.mrf.mxu0
    %v10008 = vadd.f32 %v9668, %v10007
    %10009 = vdwg.mxu0
    %s10010 = scalar_lea.vmem %s5, 224
    %v10011 = vld [vmem:[%s10010] sm:$0xff]
    %v10012 = vld [vmem:[%s10010 + $0x8] sm:$0xff]
    %v10013 = vld [vmem:[%s10010 + $0x10] sm:$0xff]
    %v10014 = vld [vmem:[%s10010 + $0x18] sm:$0xff]
    %v10015 = vld [vmem:[%s10010 + $0x20] sm:$0xff]
    %v10016 = vld [vmem:[%s10010 + $0x28] sm:$0xff]
    %v10017 = vld [vmem:[%s10010 + $0x30] sm:$0xff]
    %v10018 = vld [vmem:[%s10010 + $0x38] sm:$0xff]
    %v10019 = vld [vmem:[%s10010 + $0x40] sm:$0xff]
    %v10020 = vld [vmem:[%s10010 + $0x48] sm:$0xff]
    %v10021 = vld [vmem:[%s10010 + $0x50] sm:$0xff]
    %v10022 = vld [vmem:[%s10010 + $0x58] sm:$0xff]
    %v10023 = vld [vmem:[%s10010 + $0x60] sm:$0xff]
    %v10024 = vld [vmem:[%s10010 + $0x68] sm:$0xff]
    %v10026 = vsel %vm9329, %v10011, 0
    %v10029 = vsel %vm9329, %v10012, 0
    %v10032 = vsel %vm9329, %v10013, 0
    %v10035 = vsel %vm9329, %v10014, 0
    %v10038 = vsel %vm9329, %v10015, 0
    %v10041 = vsel %vm9329, %v10016, 0
    %v10044 = vsel %vm9329, %v10017, 0
    %v10047 = vsel %vm9329, %v10018, 0
    %v10050 = vsel %vm9329, %v10019, 0
    %v10053 = vsel %vm9329, %v10020, 0
    %v10056 = vsel %vm9329, %v10021, 0
    %v10059 = vsel %vm9329, %v10022, 0
    %v10062 = vsel %vm9329, %v10023, 0
    %v10065 = vsel %vm9329, %v10024, 0
    %10067 = vmatprep.subr.mxu0 0.0
    %10068 = vmatpush1.msra.mxu0 0.0
    %10069 = vmatprep.subr.mxu0 0.0
    %10070 = vmatpush1.msra.mxu0 0.0
    %10071 = vmatprep.subr.mxu0 0.0
    %10072 = vmatpush1.msra.mxu0 0.0
    %10073 = vmatprep.subr.mxu0 0.0
    %10074 = vmatpush1.msra.mxu0 0.0
    %10075 = vmatprep.subr.mxu0 0.0
    %10076 = vmatpush1.msra.mxu0 0.0
    %10077 = vmatprep.subr.mxu0 0.0
    %10078 = vmatpush1.msra.mxu0 0.0
    %10079 = vmatprep.subr.mxu0 0.0
    %10080 = vmatpush1.msra.mxu0 0.0
    %10081 = vmatprep.subr.mxu0 0.0
    %10082 = vmatpush1.msra.mxu0 0.0
    %10083 = vmatprep.subr.mxu0 0.0
    %10084 = vmatpush1.msra.mxu0 0.0
    %10085 = vmatprep.subr.mxu0 %v8870
    %10086 = vmatpush1.msra.mxu0 %v8868
    %10087 = vmatprep.subr.mxu0 %v8864
    %10088 = vmatpush1.msra.mxu0 %v8862
    %10089 = vmatprep.subr.mxu0 %v8860
    %10090 = vmatpush1.msra.mxu0 %v8858
    %10091 = vmatprep.subr.mxu0 %v8854
    %10092 = vmatpush1.msra.mxu0 %v8852
    %10093 = vmatprep.subr.mxu0 %v8850
    %10094 = vmatpush1.msra.mxu0 %v8848
    %10095 = vmatprep.subr.mxu0 %v8844
    %10096 = vmatpush1.msra.mxu0 %v8842
    %10097 = vmatprep.subr.mxu0 %v8840
    %10098 = vmatpush1.msra.mxu0 %v8838
    %10099 = vmatprep.subr.mxu0 0.0
    %10100 = vmatpush2.msra.mxu0 0.0
    %10101 = vmatprep.subr.mxu0 0.0
    %10102 = vmatpush2.msra.mxu0 0.0
    %10103 = vmatprep.subr.mxu0 0.0
    %10104 = vmatpush2.msra.mxu0 0.0
    %10105 = vmatprep.subr.mxu0 0.0
    %10106 = vmatpush2.msra.mxu0 0.0
    %10107 = vmatprep.subr.mxu0 0.0
    %10108 = vmatpush2.msra.mxu0 0.0
    %10109 = vmatprep.subr.mxu0 0.0
    %10110 = vmatpush2.msra.mxu0 0.0
    %10111 = vmatprep.subr.mxu0 0.0
    %10112 = vmatpush2.msra.mxu0 0.0
    %10113 = vmatprep.subr.mxu0 0.0
    %10114 = vmatpush2.msra.mxu0 0.0
    %10115 = vmatprep.subr.mxu0 0.0
    %10116 = vmatpush2.msra.mxu0 0.0
    %10117 = vmatprep.subr.mxu0 0.0
    %10118 = vmatpush2.msra.mxu0 0.0
    %10119 = vmatprep.subr.mxu0 0.0
    %10120 = vmatpush2.msra.mxu0 0.0
    %10121 = vmatprep.subr.mxu0 0.0
    %10122 = vmatpush2.msra.mxu0 0.0
    %10123 = vmatprep.subr.mxu0 0.0
    %10124 = vmatpush2.msra.mxu0 0.0
    %10125 = vmatprep.subr.mxu0 0.0
    %10126 = vmatpush2.msra.mxu0 0.0
    %10127 = vmatprep.subr.mxu0 0.0
    %10128 = vmatpush2.msra.mxu0 0.0
    %10129 = vmatprep.subr.mxu0 0.0
    %10130 = vmatpush2.msra.mxu0 0.0
    %10131 = vmatprep.mubr.f32.mxu0 0.0
    %10132 = vmatmul.mubr.f32.gmra.mxu0 %v10026
    %v10133 = vpop.f32.mrf.mxu0
    %v10134 = vadd.f32 0.0, %v10133
    %v10135 = vpop.f32.mrf.mxu0
    %v10136 = vadd.f32 0.0, %v10135
    %10137 = vmatprep.mubr.f32.mxu0 0.0
    %10138 = vmatmul.mubr.f32.gmra.mxu0 %v10029
    %v10139 = vpop.f32.mrf.mxu0
    %v10140 = vadd.f32 0.0, %v10139
    %v10141 = vpop.f32.mrf.mxu0
    %v10142 = vadd.f32 0.0, %v10141
    %10143 = vmatprep.mubr.f32.mxu0 0.0
    %10144 = vmatmul.mubr.f32.gmra.mxu0 %v10032
    %v10145 = vpop.f32.mrf.mxu0
    %v10146 = vadd.f32 0.0, %v10145
    %v10147 = vpop.f32.mrf.mxu0
    %v10148 = vadd.f32 0.0, %v10147
    %10149 = vmatprep.mubr.f32.mxu0 0.0
    %10150 = vmatmul.mubr.f32.gmra.mxu0 %v10035
    %v10151 = vpop.f32.mrf.mxu0
    %v10152 = vadd.f32 0.0, %v10151
    %v10153 = vpop.f32.mrf.mxu0
    %v10154 = vadd.f32 0.0, %v10153
    %10155 = vmatprep.mubr.f32.mxu0 0.0
    %10156 = vmatmul.mubr.f32.gmra.mxu0 %v10038
    %v10157 = vpop.f32.mrf.mxu0
    %v10158 = vadd.f32 0.0, %v10157
    %v10159 = vpop.f32.mrf.mxu0
    %v10160 = vadd.f32 0.0, %v10159
    %10161 = vmatprep.mubr.f32.mxu0 0.0
    %10162 = vmatmul.mubr.f32.gmra.mxu0 %v10041
    %v10163 = vpop.f32.mrf.mxu0
    %v10164 = vadd.f32 0.0, %v10163
    %v10165 = vpop.f32.mrf.mxu0
    %v10166 = vadd.f32 0.0, %v10165
    %10167 = vmatprep.mubr.f32.mxu0 0.0
    %10168 = vmatmul.mubr.f32.gmra.mxu0 %v10044
    %v10169 = vpop.f32.mrf.mxu0
    %v10170 = vadd.f32 0.0, %v10169
    %v10171 = vpop.f32.mrf.mxu0
    %v10172 = vadd.f32 0.0, %v10171
    %10173 = vmatprep.mubr.f32.mxu0 0.0
    %10174 = vmatmul.mubr.f32.gmra.mxu0 %v10047
    %v10175 = vpop.f32.mrf.mxu0
    %v10176 = vadd.f32 0.0, %v10175
    %v10177 = vpop.f32.mrf.mxu0
    %v10178 = vadd.f32 0.0, %v10177
    %10179 = vmatprep.mubr.f32.mxu0 0.0
    %10180 = vmatmul.mubr.f32.gmra.mxu0 %v10050
    %v10181 = vpop.f32.mrf.mxu0
    %v10182 = vadd.f32 0.0, %v10181
    %v10183 = vpop.f32.mrf.mxu0
    %v10184 = vadd.f32 0.0, %v10183
    %10185 = vmatprep.mubr.f32.mxu0 0.0
    %10186 = vmatmul.mubr.f32.gmra.mxu0 %v10053
    %v10187 = vpop.f32.mrf.mxu0
    %v10188 = vadd.f32 0.0, %v10187
    %v10189 = vpop.f32.mrf.mxu0
    %v10190 = vadd.f32 0.0, %v10189
    %10191 = vmatprep.mubr.f32.mxu0 0.0
    %10192 = vmatmul.mubr.f32.gmra.mxu0 %v10056
    %v10193 = vpop.f32.mrf.mxu0
    %v10194 = vadd.f32 0.0, %v10193
    %v10195 = vpop.f32.mrf.mxu0
    %v10196 = vadd.f32 0.0, %v10195
    %10197 = vmatprep.mubr.f32.mxu0 0.0
    %10198 = vmatmul.mubr.f32.gmra.mxu0 %v10059
    %v10199 = vpop.f32.mrf.mxu0
    %v10200 = vadd.f32 0.0, %v10199
    %v10201 = vpop.f32.mrf.mxu0
    %v10202 = vadd.f32 0.0, %v10201
    %10203 = vmatprep.mubr.f32.mxu0 0.0
    %10204 = vmatmul.mubr.f32.gmra.mxu0 %v10062
    %v10205 = vpop.f32.mrf.mxu0
    %v10206 = vadd.f32 0.0, %v10205
    %v10207 = vpop.f32.mrf.mxu0
    %v10208 = vadd.f32 0.0, %v10207
    %10209 = vmatprep.mubr.f32.mxu0 0.0
    %10210 = vmatmul.mubr.f32.gmra.mxu0 %v10065
    %v10211 = vpop.f32.mrf.mxu0
    %v10212 = vadd.f32 0.0, %v10211
    %v10213 = vpop.f32.mrf.mxu0
    %v10214 = vadd.f32 0.0, %v10213
    %10215 = vdwg.mxu0
    %10216 = vmatprep.subr.mxu0 0.0
    %10217 = vmatpush1.msra.mxu0 0.0
    %10218 = vmatprep.subr.mxu0 0.0
    %10219 = vmatpush1.msra.mxu0 0.0
    %10220 = vmatprep.subr.mxu0 0.0
    %10221 = vmatpush1.msra.mxu0 0.0
    %10222 = vmatprep.subr.mxu0 0.0
    %10223 = vmatpush1.msra.mxu0 0.0
    %10224 = vmatprep.subr.mxu0 0.0
    %10225 = vmatpush1.msra.mxu0 0.0
    %10226 = vmatprep.subr.mxu0 0.0
    %10227 = vmatpush1.msra.mxu0 0.0
    %10228 = vmatprep.subr.mxu0 0.0
    %10229 = vmatpush1.msra.mxu0 0.0
    %10230 = vmatprep.subr.mxu0 0.0
    %10231 = vmatpush1.msra.mxu0 0.0
    %10232 = vmatprep.subr.mxu0 0.0
    %10233 = vmatpush1.msra.mxu0 0.0
    %10234 = vmatprep.subr.mxu0 %v9012
    %10235 = vmatpush1.msra.mxu0 %v9010
    %10236 = vmatprep.subr.mxu0 %v9006
    %10237 = vmatpush1.msra.mxu0 %v9004
    %10238 = vmatprep.subr.mxu0 %v9002
    %10239 = vmatpush1.msra.mxu0 %v9000
    %10240 = vmatprep.subr.mxu0 %v8996
    %10241 = vmatpush1.msra.mxu0 %v8994
    %10242 = vmatprep.subr.mxu0 %v8992
    %10243 = vmatpush1.msra.mxu0 %v8990
    %10244 = vmatprep.subr.mxu0 %v8986
    %10245 = vmatpush1.msra.mxu0 %v8984
    %10246 = vmatprep.subr.mxu0 %v8982
    %10247 = vmatpush1.msra.mxu0 %v8980
    %10248 = vmatprep.subr.mxu0 0.0
    %10249 = vmatpush2.msra.mxu0 0.0
    %10250 = vmatprep.subr.mxu0 0.0
    %10251 = vmatpush2.msra.mxu0 0.0
    %10252 = vmatprep.subr.mxu0 0.0
    %10253 = vmatpush2.msra.mxu0 0.0
    %10254 = vmatprep.subr.mxu0 0.0
    %10255 = vmatpush2.msra.mxu0 0.0
    %10256 = vmatprep.subr.mxu0 0.0
    %10257 = vmatpush2.msra.mxu0 0.0
    %10258 = vmatprep.subr.mxu0 0.0
    %10259 = vmatpush2.msra.mxu0 0.0
    %10260 = vmatprep.subr.mxu0 0.0
    %10261 = vmatpush2.msra.mxu0 0.0
    %10262 = vmatprep.subr.mxu0 0.0
    %10263 = vmatpush2.msra.mxu0 0.0
    %10264 = vmatprep.subr.mxu0 0.0
    %10265 = vmatpush2.msra.mxu0 0.0
    %10266 = vmatprep.subr.mxu0 0.0
    %10267 = vmatpush2.msra.mxu0 0.0
    %10268 = vmatprep.subr.mxu0 0.0
    %10269 = vmatpush2.msra.mxu0 0.0
    %10270 = vmatprep.subr.mxu0 0.0
    %10271 = vmatpush2.msra.mxu0 0.0
    %10272 = vmatprep.subr.mxu0 0.0
    %10273 = vmatpush2.msra.mxu0 0.0
    %10274 = vmatprep.subr.mxu0 0.0
    %10275 = vmatpush2.msra.mxu0 0.0
    %10276 = vmatprep.subr.mxu0 0.0
    %10277 = vmatpush2.msra.mxu0 0.0
    %10278 = vmatprep.subr.mxu0 0.0
    %10279 = vmatpush2.msra.mxu0 0.0
    %10280 = vmatprep.mubr.f32.mxu0 0.0
    %10281 = vmatmul.mubr.f32.gmra.mxu0 %v10026
    %v10282 = vpop.f32.mrf.mxu0
    %v10283 = vadd.f32 0.0, %v10282
    %v10284 = vpop.f32.mrf.mxu0
    %v10285 = vadd.f32 0.0, %v10284
    %10286 = vmatprep.mubr.f32.mxu0 0.0
    %10287 = vmatmul.mubr.f32.gmra.mxu0 %v10029
    %v10288 = vpop.f32.mrf.mxu0
    %v10289 = vadd.f32 0.0, %v10288
    %v10290 = vpop.f32.mrf.mxu0
    %v10291 = vadd.f32 0.0, %v10290
    %10292 = vmatprep.mubr.f32.mxu0 0.0
    %10293 = vmatmul.mubr.f32.gmra.mxu0 %v10032
    %v10294 = vpop.f32.mrf.mxu0
    %v10295 = vadd.f32 0.0, %v10294
    %v10296 = vpop.f32.mrf.mxu0
    %v10297 = vadd.f32 0.0, %v10296
    %10298 = vmatprep.mubr.f32.mxu0 0.0
    %10299 = vmatmul.mubr.f32.gmra.mxu0 %v10035
    %v10300 = vpop.f32.mrf.mxu0
    %v10301 = vadd.f32 0.0, %v10300
    %v10302 = vpop.f32.mrf.mxu0
    %v10303 = vadd.f32 0.0, %v10302
    %10304 = vmatprep.mubr.f32.mxu0 0.0
    %10305 = vmatmul.mubr.f32.gmra.mxu0 %v10038
    %v10306 = vpop.f32.mrf.mxu0
    %v10307 = vadd.f32 0.0, %v10306
    %v10308 = vpop.f32.mrf.mxu0
    %v10309 = vadd.f32 0.0, %v10308
    %10310 = vmatprep.mubr.f32.mxu0 0.0
    %10311 = vmatmul.mubr.f32.gmra.mxu0 %v10041
    %v10312 = vpop.f32.mrf.mxu0
    %v10313 = vadd.f32 0.0, %v10312
    %v10314 = vpop.f32.mrf.mxu0
    %v10315 = vadd.f32 0.0, %v10314
    %10316 = vmatprep.mubr.f32.mxu0 0.0
    %10317 = vmatmul.mubr.f32.gmra.mxu0 %v10044
    %v10318 = vpop.f32.mrf.mxu0
    %v10319 = vadd.f32 0.0, %v10318
    %v10320 = vpop.f32.mrf.mxu0
    %v10321 = vadd.f32 0.0, %v10320
    %10322 = vmatprep.mubr.f32.mxu0 0.0
    %10323 = vmatmul.mubr.f32.gmra.mxu0 %v10047
    %v10324 = vpop.f32.mrf.mxu0
    %v10325 = vadd.f32 0.0, %v10324
    %v10326 = vpop.f32.mrf.mxu0
    %v10327 = vadd.f32 0.0, %v10326
    %10328 = vmatprep.mubr.f32.mxu0 0.0
    %10329 = vmatmul.mubr.f32.gmra.mxu0 %v10050
    %v10330 = vpop.f32.mrf.mxu0
    %v10331 = vadd.f32 0.0, %v10330
    %v10332 = vpop.f32.mrf.mxu0
    %v10333 = vadd.f32 0.0, %v10332
    %10334 = vmatprep.mubr.f32.mxu0 0.0
    %10335 = vmatmul.mubr.f32.gmra.mxu0 %v10053
    %v10336 = vpop.f32.mrf.mxu0
    %v10337 = vadd.f32 0.0, %v10336
    %v10338 = vpop.f32.mrf.mxu0
    %v10339 = vadd.f32 0.0, %v10338
    %10340 = vmatprep.mubr.f32.mxu0 0.0
    %10341 = vmatmul.mubr.f32.gmra.mxu0 %v10056
    %v10342 = vpop.f32.mrf.mxu0
    %v10343 = vadd.f32 0.0, %v10342
    %v10344 = vpop.f32.mrf.mxu0
    %v10345 = vadd.f32 0.0, %v10344
    %10346 = vmatprep.mubr.f32.mxu0 0.0
    %10347 = vmatmul.mubr.f32.gmra.mxu0 %v10059
    %v10348 = vpop.f32.mrf.mxu0
    %v10349 = vadd.f32 0.0, %v10348
    %v10350 = vpop.f32.mrf.mxu0
    %v10351 = vadd.f32 0.0, %v10350
    %10352 = vmatprep.mubr.f32.mxu0 0.0
    %10353 = vmatmul.mubr.f32.gmra.mxu0 %v10062
    %v10354 = vpop.f32.mrf.mxu0
    %v10355 = vadd.f32 0.0, %v10354
    %v10356 = vpop.f32.mrf.mxu0
    %v10357 = vadd.f32 0.0, %v10356
    %10358 = vmatprep.mubr.f32.mxu0 0.0
    %10359 = vmatmul.mubr.f32.gmra.mxu0 %v10065
    %v10360 = vpop.f32.mrf.mxu0
    %v10361 = vadd.f32 0.0, %v10360
    %v10362 = vpop.f32.mrf.mxu0
    %v10363 = vadd.f32 0.0, %v10362
    %10364 = vdwg.mxu0
    %v10365 = vadd.f32 %v9779, %v10134
    %v10366 = vadd.f32 %v9781, %v10136
    %v10367 = vadd.f32 %v9928, %v10283
    %v10368 = vadd.f32 %v9930, %v10285
    %v10369 = vadd.f32 %v9785, %v10140
    %v10370 = vadd.f32 %v9787, %v10142
    %v10371 = vadd.f32 %v9934, %v10289
    %v10372 = vadd.f32 %v9936, %v10291
    %v10373 = vadd.f32 %v9791, %v10146
    %v10374 = vadd.f32 %v9793, %v10148
    %v10375 = vadd.f32 %v9940, %v10295
    %v10376 = vadd.f32 %v9942, %v10297
    %v10377 = vadd.f32 %v9797, %v10152
    %v10378 = vadd.f32 %v9799, %v10154
    %v10379 = vadd.f32 %v9946, %v10301
    %v10380 = vadd.f32 %v9948, %v10303
    %v10381 = vadd.f32 %v9803, %v10158
    %v10382 = vadd.f32 %v9805, %v10160
    %v10383 = vadd.f32 %v9952, %v10307
    %v10384 = vadd.f32 %v9954, %v10309
    %v10385 = vadd.f32 %v9809, %v10164
    %v10386 = vadd.f32 %v9811, %v10166
    %v10387 = vadd.f32 %v9958, %v10313
    %v10388 = vadd.f32 %v9960, %v10315
    %v10389 = vadd.f32 %v9815, %v10170
    %v10390 = vadd.f32 %v9817, %v10172
    %v10391 = vadd.f32 %v9964, %v10319
    %v10392 = vadd.f32 %v9966, %v10321
    %v10393 = vadd.f32 %v9821, %v10176
    %v10394 = vadd.f32 %v9823, %v10178
    %v10395 = vadd.f32 %v9970, %v10325
    %v10396 = vadd.f32 %v9972, %v10327
    %v10397 = vadd.f32 %v9827, %v10182
    %v10398 = vadd.f32 %v9829, %v10184
    %v10399 = vadd.f32 %v9976, %v10331
    %v10400 = vadd.f32 %v9978, %v10333
    %v10401 = vadd.f32 %v9833, %v10188
    %v10402 = vadd.f32 %v9835, %v10190
    %v10403 = vadd.f32 %v9982, %v10337
    %v10404 = vadd.f32 %v9984, %v10339
    %v10405 = vadd.f32 %v9839, %v10194
    %v10406 = vadd.f32 %v9841, %v10196
    %v10407 = vadd.f32 %v9988, %v10343
    %v10408 = vadd.f32 %v9990, %v10345
    %v10409 = vadd.f32 %v9845, %v10200
    %v10410 = vadd.f32 %v9847, %v10202
    %v10411 = vadd.f32 %v9994, %v10349
    %v10412 = vadd.f32 %v9996, %v10351
    %v10413 = vadd.f32 %v9851, %v10206
    %v10414 = vadd.f32 %v9853, %v10208
    %v10415 = vadd.f32 %v10000, %v10355
    %v10416 = vadd.f32 %v10002, %v10357
    %v10417 = vadd.f32 %v9857, %v10212
    %v10418 = vadd.f32 %v9859, %v10214
    %v10419 = vadd.f32 %v10006, %v10361
    %v10420 = vadd.f32 %v10008, %v10363
    %s10421 = scalar_lea.vmem %s5, 336
    %v10422 = vld [vmem:[%s10421] sm:$0xff]
    %v10423 = vld [vmem:[%s10421 + $0x8] sm:$0xff]
    %v10424 = vld [vmem:[%s10421 + $0x10] sm:$0xff]
    %v10425 = vld [vmem:[%s10421 + $0x18] sm:$0xff]
    %v10426 = vld [vmem:[%s10421 + $0x20] sm:$0xff]
    %v10427 = vld [vmem:[%s10421 + $0x28] sm:$0xff]
    %v10428 = vld [vmem:[%s10421 + $0x30] sm:$0xff]
    %v10429 = vld [vmem:[%s10421 + $0x38] sm:$0xff]
    %v10430 = vld [vmem:[%s10421 + $0x40] sm:$0xff]
    %v10431 = vld [vmem:[%s10421 + $0x48] sm:$0xff]
    %v10432 = vld [vmem:[%s10421 + $0x50] sm:$0xff]
    %v10433 = vld [vmem:[%s10421 + $0x58] sm:$0xff]
    %v10434 = vld [vmem:[%s10421 + $0x60] sm:$0xff]
    %v10435 = vld [vmem:[%s10421 + $0x68] sm:$0xff]
    %v10437 = vsel %vm9329, %v10422, 0
    %v10440 = vsel %vm9329, %v10423, 0
    %v10443 = vsel %vm9329, %v10424, 0
    %v10446 = vsel %vm9329, %v10425, 0
    %v10449 = vsel %vm9329, %v10426, 0
    %v10452 = vsel %vm9329, %v10427, 0
    %v10455 = vsel %vm9329, %v10428, 0
    %v10458 = vsel %vm9329, %v10429, 0
    %v10461 = vsel %vm9329, %v10430, 0
    %v10464 = vsel %vm9329, %v10431, 0
    %v10467 = vsel %vm9329, %v10432, 0
    %v10470 = vsel %vm9329, %v10433, 0
    %v10473 = vsel %vm9329, %v10434, 0
    %v10476 = vsel %vm9329, %v10435, 0
    %10478 = vmatprep.subr.mxu0 0.0
    %10479 = vmatpush1.msra.mxu0 0.0
    %10480 = vmatprep.subr.mxu0 0.0
    %10481 = vmatpush1.msra.mxu0 0.0
    %10482 = vmatprep.subr.mxu0 0.0
    %10483 = vmatpush1.msra.mxu0 0.0
    %10484 = vmatprep.subr.mxu0 0.0
    %10485 = vmatpush1.msra.mxu0 0.0
    %10486 = vmatprep.subr.mxu0 0.0
    %10487 = vmatpush1.msra.mxu0 0.0
    %10488 = vmatprep.subr.mxu0 0.0
    %10489 = vmatpush1.msra.mxu0 0.0
    %10490 = vmatprep.subr.mxu0 0.0
    %10491 = vmatpush1.msra.mxu0 0.0
    %10492 = vmatprep.subr.mxu0 0.0
    %10493 = vmatpush1.msra.mxu0 0.0
    %10494 = vmatprep.subr.mxu0 0.0
    %10495 = vmatpush1.msra.mxu0 0.0
    %10496 = vmatprep.subr.mxu0 %v9154
    %10497 = vmatpush1.msra.mxu0 %v9152
    %10498 = vmatprep.subr.mxu0 %v9148
    %10499 = vmatpush1.msra.mxu0 %v9146
    %10500 = vmatprep.subr.mxu0 %v9144
    %10501 = vmatpush1.msra.mxu0 %v9142
    %10502 = vmatprep.subr.mxu0 %v9138
    %10503 = vmatpush1.msra.mxu0 %v9136
    %10504 = vmatprep.subr.mxu0 %v9134
    %10505 = vmatpush1.msra.mxu0 %v9132
    %10506 = vmatprep.subr.mxu0 %v9128
    %10507 = vmatpush1.msra.mxu0 %v9126
    %10508 = vmatprep.subr.mxu0 %v9124
    %10509 = vmatpush1.msra.mxu0 %v9122
    %10510 = vmatprep.subr.mxu0 0.0
    %10511 = vmatpush2.msra.mxu0 0.0
    %10512 = vmatprep.subr.mxu0 0.0
    %10513 = vmatpush2.msra.mxu0 0.0
    %10514 = vmatprep.subr.mxu0 0.0
    %10515 = vmatpush2.msra.mxu0 0.0
    %10516 = vmatprep.subr.mxu0 0.0
    %10517 = vmatpush2.msra.mxu0 0.0
    %10518 = vmatprep.subr.mxu0 0.0
    %10519 = vmatpush2.msra.mxu0 0.0
    %10520 = vmatprep.subr.mxu0 0.0
    %10521 = vmatpush2.msra.mxu0 0.0
    %10522 = vmatprep.subr.mxu0 0.0
    %10523 = vmatpush2.msra.mxu0 0.0
    %10524 = vmatprep.subr.mxu0 0.0
    %10525 = vmatpush2.msra.mxu0 0.0
    %10526 = vmatprep.subr.mxu0 0.0
    %10527 = vmatpush2.msra.mxu0 0.0
    %10528 = vmatprep.subr.mxu0 0.0
    %10529 = vmatpush2.msra.mxu0 0.0
    %10530 = vmatprep.subr.mxu0 0.0
    %10531 = vmatpush2.msra.mxu0 0.0
    %10532 = vmatprep.subr.mxu0 0.0
    %10533 = vmatpush2.msra.mxu0 0.0
    %10534 = vmatprep.subr.mxu0 0.0
    %10535 = vmatpush2.msra.mxu0 0.0
    %10536 = vmatprep.subr.mxu0 0.0
    %10537 = vmatpush2.msra.mxu0 0.0
    %10538 = vmatprep.subr.mxu0 0.0
    %10539 = vmatpush2.msra.mxu0 0.0
    %10540 = vmatprep.subr.mxu0 0.0
    %10541 = vmatpush2.msra.mxu0 0.0
    %10542 = vmatprep.mubr.f32.mxu0 0.0
    %10543 = vmatmul.mubr.f32.gmra.mxu0 %v10437
    %v10544 = vpop.f32.mrf.mxu0
    %v10545 = vadd.f32 0.0, %v10544
    %v10546 = vpop.f32.mrf.mxu0
    %v10547 = vadd.f32 0.0, %v10546
    %10548 = vmatprep.mubr.f32.mxu0 0.0
    %10549 = vmatmul.mubr.f32.gmra.mxu0 %v10440
    %v10550 = vpop.f32.mrf.mxu0
    %v10551 = vadd.f32 0.0, %v10550
    %v10552 = vpop.f32.mrf.mxu0
    %v10553 = vadd.f32 0.0, %v10552
    %10554 = vmatprep.mubr.f32.mxu0 0.0
    %10555 = vmatmul.mubr.f32.gmra.mxu0 %v10443
    %v10556 = vpop.f32.mrf.mxu0
    %v10557 = vadd.f32 0.0, %v10556
    %v10558 = vpop.f32.mrf.mxu0
    %v10559 = vadd.f32 0.0, %v10558
    %10560 = vmatprep.mubr.f32.mxu0 0.0
    %10561 = vmatmul.mubr.f32.gmra.mxu0 %v10446
    %v10562 = vpop.f32.mrf.mxu0
    %v10563 = vadd.f32 0.0, %v10562
    %v10564 = vpop.f32.mrf.mxu0
    %v10565 = vadd.f32 0.0, %v10564
    %10566 = vmatprep.mubr.f32.mxu0 0.0
    %10567 = vmatmul.mubr.f32.gmra.mxu0 %v10449
    %v10568 = vpop.f32.mrf.mxu0
    %v10569 = vadd.f32 0.0, %v10568
    %v10570 = vpop.f32.mrf.mxu0
    %v10571 = vadd.f32 0.0, %v10570
    %10572 = vmatprep.mubr.f32.mxu0 0.0
    %10573 = vmatmul.mubr.f32.gmra.mxu0 %v10452
    %v10574 = vpop.f32.mrf.mxu0
    %v10575 = vadd.f32 0.0, %v10574
    %v10576 = vpop.f32.mrf.mxu0
    %v10577 = vadd.f32 0.0, %v10576
    %10578 = vmatprep.mubr.f32.mxu0 0.0
    %10579 = vmatmul.mubr.f32.gmra.mxu0 %v10455
    %v10580 = vpop.f32.mrf.mxu0
    %v10581 = vadd.f32 0.0, %v10580
    %v10582 = vpop.f32.mrf.mxu0
    %v10583 = vadd.f32 0.0, %v10582
    %10584 = vmatprep.mubr.f32.mxu0 0.0
    %10585 = vmatmul.mubr.f32.gmra.mxu0 %v10458
    %v10586 = vpop.f32.mrf.mxu0
    %v10587 = vadd.f32 0.0, %v10586
    %v10588 = vpop.f32.mrf.mxu0
    %v10589 = vadd.f32 0.0, %v10588
    %10590 = vmatprep.mubr.f32.mxu0 0.0
    %10591 = vmatmul.mubr.f32.gmra.mxu0 %v10461
    %v10592 = vpop.f32.mrf.mxu0
    %v10593 = vadd.f32 0.0, %v10592
    %v10594 = vpop.f32.mrf.mxu0
    %v10595 = vadd.f32 0.0, %v10594
    %10596 = vmatprep.mubr.f32.mxu0 0.0
    %10597 = vmatmul.mubr.f32.gmra.mxu0 %v10464
    %v10598 = vpop.f32.mrf.mxu0
    %v10599 = vadd.f32 0.0, %v10598
    %v10600 = vpop.f32.mrf.mxu0
    %v10601 = vadd.f32 0.0, %v10600
    %10602 = vmatprep.mubr.f32.mxu0 0.0
    %10603 = vmatmul.mubr.f32.gmra.mxu0 %v10467
    %v10604 = vpop.f32.mrf.mxu0
    %v10605 = vadd.f32 0.0, %v10604
    %v10606 = vpop.f32.mrf.mxu0
    %v10607 = vadd.f32 0.0, %v10606
    %10608 = vmatprep.mubr.f32.mxu0 0.0
    %10609 = vmatmul.mubr.f32.gmra.mxu0 %v10470
    %v10610 = vpop.f32.mrf.mxu0
    %v10611 = vadd.f32 0.0, %v10610
    %v10612 = vpop.f32.mrf.mxu0
    %v10613 = vadd.f32 0.0, %v10612
    %10614 = vmatprep.mubr.f32.mxu0 0.0
    %10615 = vmatmul.mubr.f32.gmra.mxu0 %v10473
    %v10616 = vpop.f32.mrf.mxu0
    %v10617 = vadd.f32 0.0, %v10616
    %v10618 = vpop.f32.mrf.mxu0
    %v10619 = vadd.f32 0.0, %v10618
    %10620 = vmatprep.mubr.f32.mxu0 0.0
    %10621 = vmatmul.mubr.f32.gmra.mxu0 %v10476
    %v10622 = vpop.f32.mrf.mxu0
    %v10623 = vadd.f32 0.0, %v10622
    %v10624 = vpop.f32.mrf.mxu0
    %v10625 = vadd.f32 0.0, %v10624
    %10626 = vdwg.mxu0
    %10627 = vmatprep.subr.mxu0 0.0
    %10628 = vmatpush1.msra.mxu0 0.0
    %10629 = vmatprep.subr.mxu0 0.0
    %10630 = vmatpush1.msra.mxu0 0.0
    %10631 = vmatprep.subr.mxu0 0.0
    %10632 = vmatpush1.msra.mxu0 0.0
    %10633 = vmatprep.subr.mxu0 0.0
    %10634 = vmatpush1.msra.mxu0 0.0
    %10635 = vmatprep.subr.mxu0 0.0
    %10636 = vmatpush1.msra.mxu0 0.0
    %10637 = vmatprep.subr.mxu0 0.0
    %10638 = vmatpush1.msra.mxu0 0.0
    %10639 = vmatprep.subr.mxu0 0.0
    %10640 = vmatpush1.msra.mxu0 0.0
    %10641 = vmatprep.subr.mxu0 0.0
    %10642 = vmatpush1.msra.mxu0 0.0
    %10643 = vmatprep.subr.mxu0 0.0
    %10644 = vmatpush1.msra.mxu0 0.0
    %10645 = vmatprep.subr.mxu0 %v9296
    %10646 = vmatpush1.msra.mxu0 %v9294
    %10647 = vmatprep.subr.mxu0 %v9290
    %10648 = vmatpush1.msra.mxu0 %v9288
    %10649 = vmatprep.subr.mxu0 %v9286
    %10650 = vmatpush1.msra.mxu0 %v9284
    %10651 = vmatprep.subr.mxu0 %v9280
    %10652 = vmatpush1.msra.mxu0 %v9278
    %10653 = vmatprep.subr.mxu0 %v9276
    %10654 = vmatpush1.msra.mxu0 %v9274
    %10655 = vmatprep.subr.mxu0 %v9270
    %10656 = vmatpush1.msra.mxu0 %v9268
    %10657 = vmatprep.subr.mxu0 %v9266
    %10658 = vmatpush1.msra.mxu0 %v9264
    %10659 = vmatprep.subr.mxu0 0.0
    %10660 = vmatpush2.msra.mxu0 0.0
    %10661 = vmatprep.subr.mxu0 0.0
    %10662 = vmatpush2.msra.mxu0 0.0
    %10663 = vmatprep.subr.mxu0 0.0
    %10664 = vmatpush2.msra.mxu0 0.0
    %10665 = vmatprep.subr.mxu0 0.0
    %10666 = vmatpush2.msra.mxu0 0.0
    %10667 = vmatprep.subr.mxu0 0.0
    %10668 = vmatpush2.msra.mxu0 0.0
    %10669 = vmatprep.subr.mxu0 0.0
    %10670 = vmatpush2.msra.mxu0 0.0
    %10671 = vmatprep.subr.mxu0 0.0
    %10672 = vmatpush2.msra.mxu0 0.0
    %10673 = vmatprep.subr.mxu0 0.0
    %10674 = vmatpush2.msra.mxu0 0.0
    %10675 = vmatprep.subr.mxu0 0.0
    %10676 = vmatpush2.msra.mxu0 0.0
    %10677 = vmatprep.subr.mxu0 0.0
    %10678 = vmatpush2.msra.mxu0 0.0
    %10679 = vmatprep.subr.mxu0 0.0
    %10680 = vmatpush2.msra.mxu0 0.0
    %10681 = vmatprep.subr.mxu0 0.0
    %10682 = vmatpush2.msra.mxu0 0.0
    %10683 = vmatprep.subr.mxu0 0.0
    %10684 = vmatpush2.msra.mxu0 0.0
    %10685 = vmatprep.subr.mxu0 0.0
    %10686 = vmatpush2.msra.mxu0 0.0
    %10687 = vmatprep.subr.mxu0 0.0
    %10688 = vmatpush2.msra.mxu0 0.0
    %10689 = vmatprep.subr.mxu0 0.0
    %10690 = vmatpush2.msra.mxu0 0.0
    %10691 = vmatprep.mubr.f32.mxu0 0.0
    %10692 = vmatmul.mubr.f32.gmra.mxu0 %v10437
    %v10693 = vpop.f32.mrf.mxu0
    %v10694 = vadd.f32 0.0, %v10693
    %v10695 = vpop.f32.mrf.mxu0
    %v10696 = vadd.f32 0.0, %v10695
    %10697 = vmatprep.mubr.f32.mxu0 0.0
    %10698 = vmatmul.mubr.f32.gmra.mxu0 %v10440
    %v10699 = vpop.f32.mrf.mxu0
    %v10700 = vadd.f32 0.0, %v10699
    %v10701 = vpop.f32.mrf.mxu0
    %v10702 = vadd.f32 0.0, %v10701
    %10703 = vmatprep.mubr.f32.mxu0 0.0
    %10704 = vmatmul.mubr.f32.gmra.mxu0 %v10443
    %v10705 = vpop.f32.mrf.mxu0
    %v10706 = vadd.f32 0.0, %v10705
    %v10707 = vpop.f32.mrf.mxu0
    %v10708 = vadd.f32 0.0, %v10707
    %10709 = vmatprep.mubr.f32.mxu0 0.0
    %10710 = vmatmul.mubr.f32.gmra.mxu0 %v10446
    %v10711 = vpop.f32.mrf.mxu0
    %v10712 = vadd.f32 0.0, %v10711
    %v10713 = vpop.f32.mrf.mxu0
    %v10714 = vadd.f32 0.0, %v10713
    %10715 = vmatprep.mubr.f32.mxu0 0.0
    %10716 = vmatmul.mubr.f32.gmra.mxu0 %v10449
    %v10717 = vpop.f32.mrf.mxu0
    %v10718 = vadd.f32 0.0, %v10717
    %v10719 = vpop.f32.mrf.mxu0
    %v10720 = vadd.f32 0.0, %v10719
    %10721 = vmatprep.mubr.f32.mxu0 0.0
    %10722 = vmatmul.mubr.f32.gmra.mxu0 %v10452
    %v10723 = vpop.f32.mrf.mxu0
    %v10724 = vadd.f32 0.0, %v10723
    %v10725 = vpop.f32.mrf.mxu0
    %v10726 = vadd.f32 0.0, %v10725
    %10727 = vmatprep.mubr.f32.mxu0 0.0
    %10728 = vmatmul.mubr.f32.gmra.mxu0 %v10455
    %v10729 = vpop.f32.mrf.mxu0
    %v10730 = vadd.f32 0.0, %v10729
    %v10731 = vpop.f32.mrf.mxu0
    %v10732 = vadd.f32 0.0, %v10731
    %10733 = vmatprep.mubr.f32.mxu0 0.0
    %10734 = vmatmul.mubr.f32.gmra.mxu0 %v10458
    %v10735 = vpop.f32.mrf.mxu0
    %v10736 = vadd.f32 0.0, %v10735
    %v10737 = vpop.f32.mrf.mxu0
    %v10738 = vadd.f32 0.0, %v10737
    %10739 = vmatprep.mubr.f32.mxu0 0.0
    %10740 = vmatmul.mubr.f32.gmra.mxu0 %v10461
    %v10741 = vpop.f32.mrf.mxu0
    %v10742 = vadd.f32 0.0, %v10741
    %v10743 = vpop.f32.mrf.mxu0
    %v10744 = vadd.f32 0.0, %v10743
    %10745 = vmatprep.mubr.f32.mxu0 0.0
    %10746 = vmatmul.mubr.f32.gmra.mxu0 %v10464
    %v10747 = vpop.f32.mrf.mxu0
    %v10748 = vadd.f32 0.0, %v10747
    %v10749 = vpop.f32.mrf.mxu0
    %v10750 = vadd.f32 0.0, %v10749
    %10751 = vmatprep.mubr.f32.mxu0 0.0
    %10752 = vmatmul.mubr.f32.gmra.mxu0 %v10467
    %v10753 = vpop.f32.mrf.mxu0
    %v10754 = vadd.f32 0.0, %v10753
    %v10755 = vpop.f32.mrf.mxu0
    %v10756 = vadd.f32 0.0, %v10755
    %10757 = vmatprep.mubr.f32.mxu0 0.0
    %10758 = vmatmul.mubr.f32.gmra.mxu0 %v10470
    %v10759 = vpop.f32.mrf.mxu0
    %v10760 = vadd.f32 0.0, %v10759
    %v10761 = vpop.f32.mrf.mxu0
    %v10762 = vadd.f32 0.0, %v10761
    %10763 = vmatprep.mubr.f32.mxu0 0.0
    %10764 = vmatmul.mubr.f32.gmra.mxu0 %v10473
    %v10765 = vpop.f32.mrf.mxu0
    %v10766 = vadd.f32 0.0, %v10765
    %v10767 = vpop.f32.mrf.mxu0
    %v10768 = vadd.f32 0.0, %v10767
    %10769 = vmatprep.mubr.f32.mxu0 0.0
    %10770 = vmatmul.mubr.f32.gmra.mxu0 %v10476
    %v10771 = vpop.f32.mrf.mxu0
    %v10772 = vadd.f32 0.0, %v10771
    %v10773 = vpop.f32.mrf.mxu0
    %v10774 = vadd.f32 0.0, %v10773
    %10775 = vdwg.mxu0
    %v10776 = vadd.f32 %v10365, %v10545
    %v10777 = vadd.f32 %v10366, %v10547
    %v10778 = vadd.f32 %v10367, %v10694
    %v10779 = vadd.f32 %v10368, %v10696
    %v10780 = vadd.f32 %v10369, %v10551
    %v10781 = vadd.f32 %v10370, %v10553
    %v10782 = vadd.f32 %v10371, %v10700
    %v10783 = vadd.f32 %v10372, %v10702
    %v10784 = vadd.f32 %v10373, %v10557
    %v10785 = vadd.f32 %v10374, %v10559
    %v10786 = vadd.f32 %v10375, %v10706
    %v10787 = vadd.f32 %v10376, %v10708
    %v10788 = vadd.f32 %v10377, %v10563
    %v10789 = vadd.f32 %v10378, %v10565
    %v10790 = vadd.f32 %v10379, %v10712
    %v10791 = vadd.f32 %v10380, %v10714
    %v10792 = vadd.f32 %v10381, %v10569
    %v10793 = vadd.f32 %v10382, %v10571
    %v10794 = vadd.f32 %v10383, %v10718
    %v10795 = vadd.f32 %v10384, %v10720
    %v10796 = vadd.f32 %v10385, %v10575
    %v10797 = vadd.f32 %v10386, %v10577
    %v10798 = vadd.f32 %v10387, %v10724
    %v10799 = vadd.f32 %v10388, %v10726
    %v10800 = vadd.f32 %v10389, %v10581
    %v10801 = vadd.f32 %v10390, %v10583
    %v10802 = vadd.f32 %v10391, %v10730
    %v10803 = vadd.f32 %v10392, %v10732
    %v10804 = vadd.f32 %v10393, %v10587
    %v10805 = vadd.f32 %v10394, %v10589
    %v10806 = vadd.f32 %v10395, %v10736
    %v10807 = vadd.f32 %v10396, %v10738
    %v10808 = vadd.f32 %v10397, %v10593
    %v10809 = vadd.f32 %v10398, %v10595
    %v10810 = vadd.f32 %v10399, %v10742
    %v10811 = vadd.f32 %v10400, %v10744
    %v10812 = vadd.f32 %v10401, %v10599
    %v10813 = vadd.f32 %v10402, %v10601
    %v10814 = vadd.f32 %v10403, %v10748
    %v10815 = vadd.f32 %v10404, %v10750
    %v10816 = vadd.f32 %v10405, %v10605
    %v10817 = vadd.f32 %v10406, %v10607
    %v10818 = vadd.f32 %v10407, %v10754
    %v10819 = vadd.f32 %v10408, %v10756
    %v10820 = vadd.f32 %v10409, %v10611
    %v10821 = vadd.f32 %v10410, %v10613
    %v10822 = vadd.f32 %v10411, %v10760
    %v10823 = vadd.f32 %v10412, %v10762
    %v10824 = vadd.f32 %v10413, %v10617
    %v10825 = vadd.f32 %v10414, %v10619
    %v10826 = vadd.f32 %v10415, %v10766
    %v10827 = vadd.f32 %v10416, %v10768
    %v10828 = vadd.f32 %v10417, %v10623
    %v10829 = vadd.f32 %v10418, %v10625
    %v10830 = vadd.f32 %v10419, %v10772
    %v10831 = vadd.f32 %v10420, %v10774
    %v10832 = vmax.f32 %v10776, 0.0
    %v10833 = vmax.f32 %v10777, 0.0
    %v10834 = vmax.f32 %v10778, 0.0
    %v10835 = vmax.f32 %v10779, 0.0
    %v10836 = vmax.f32 %v10780, 0.0
    %v10837 = vmax.f32 %v10781, 0.0
    %v10838 = vmax.f32 %v10782, 0.0
    %v10839 = vmax.f32 %v10783, 0.0
    %v10840 = vmax.f32 %v10784, 0.0
    %v10841 = vmax.f32 %v10785, 0.0
    %v10842 = vmax.f32 %v10786, 0.0
    %v10843 = vmax.f32 %v10787, 0.0
    %v10844 = vmax.f32 %v10788, 0.0
    %v10845 = vmax.f32 %v10789, 0.0
    %v10846 = vmax.f32 %v10790, 0.0
    %v10847 = vmax.f32 %v10791, 0.0
    %v10848 = vmax.f32 %v10792, 0.0
    %v10849 = vmax.f32 %v10793, 0.0
    %v10850 = vmax.f32 %v10794, 0.0
    %v10851 = vmax.f32 %v10795, 0.0
    %v10852 = vmax.f32 %v10796, 0.0
    %v10853 = vmax.f32 %v10797, 0.0
    %v10854 = vmax.f32 %v10798, 0.0
    %v10855 = vmax.f32 %v10799, 0.0
    %v10856 = vmax.f32 %v10800, 0.0
    %v10857 = vmax.f32 %v10801, 0.0
    %v10858 = vmax.f32 %v10802, 0.0
    %v10859 = vmax.f32 %v10803, 0.0
    %v10860 = vmax.f32 %v10804, 0.0
    %v10861 = vmax.f32 %v10805, 0.0
    %v10862 = vmax.f32 %v10806, 0.0
    %v10863 = vmax.f32 %v10807, 0.0
    %v10864 = vmax.f32 %v10808, 0.0
    %v10865 = vmax.f32 %v10809, 0.0
    %v10866 = vmax.f32 %v10810, 0.0
    %v10867 = vmax.f32 %v10811, 0.0
    %v10868 = vmax.f32 %v10812, 0.0
    %v10869 = vmax.f32 %v10813, 0.0
    %v10870 = vmax.f32 %v10814, 0.0
    %v10871 = vmax.f32 %v10815, 0.0
    %v10872 = vmax.f32 %v10816, 0.0
    %v10873 = vmax.f32 %v10817, 0.0
    %v10874 = vmax.f32 %v10818, 0.0
    %v10875 = vmax.f32 %v10819, 0.0
    %v10876 = vmax.f32 %v10820, 0.0
    %v10877 = vmax.f32 %v10821, 0.0
    %v10878 = vmax.f32 %v10822, 0.0
    %v10879 = vmax.f32 %v10823, 0.0
    %v10880 = vmax.f32 %v10824, 0.0
    %v10881 = vmax.f32 %v10825, 0.0
    %v10882 = vmax.f32 %v10826, 0.0
    %v10883 = vmax.f32 %v10827, 0.0
    %v10884 = vmax.f32 %v10828, 0.0
    %v10885 = vmax.f32 %v10829, 0.0
    %v10886 = vmax.f32 %v10830, 0.0
    %v10887 = vmax.f32 %v10831, 0.0
    %v10888 = vpack.c.bf16 %v10836, %v10832
    %v10889 = vpack.c.bf16 %v10837, %v10833
    %v10890 = vpack.c.bf16 %v10838, %v10834
    %v10891 = vpack.c.bf16 %v10839, %v10835
    %v10892 = vpack.c.bf16 %v10844, %v10840
    %v10893 = vpack.c.bf16 %v10845, %v10841
    %v10894 = vpack.c.bf16 %v10846, %v10842
    %v10895 = vpack.c.bf16 %v10847, %v10843
    %v10896 = vpack.c.bf16 %v10852, %v10848
    %v10897 = vpack.c.bf16 %v10853, %v10849
    %v10898 = vpack.c.bf16 %v10854, %v10850
    %v10899 = vpack.c.bf16 %v10855, %v10851
    %v10900 = vpack.c.bf16 %v10860, %v10856
    %v10901 = vpack.c.bf16 %v10861, %v10857
    %v10902 = vpack.c.bf16 %v10862, %v10858
    %v10903 = vpack.c.bf16 %v10863, %v10859
    %v10904 = vpack.c.bf16 %v10868, %v10864
    %v10905 = vpack.c.bf16 %v10869, %v10865
    %v10906 = vpack.c.bf16 %v10870, %v10866
    %v10907 = vpack.c.bf16 %v10871, %v10867
    %v10908 = vpack.c.bf16 %v10876, %v10872
    %v10909 = vpack.c.bf16 %v10877, %v10873
    %v10910 = vpack.c.bf16 %v10878, %v10874
    %v10911 = vpack.c.bf16 %v10879, %v10875
    %v10912 = vpack.c.bf16 %v10884, %v10880
    %v10913 = vpack.c.bf16 %v10885, %v10881
    %v10914 = vpack.c.bf16 %v10886, %v10882
    %v10915 = vpack.c.bf16 %v10887, %v10883
    %v10916 = vld [vmem:[#allocation11] sm:$0xff]
    %v10917 = vld [vmem:[#allocation11 + $0x8] sm:$0xff]
    %v10918 = vld [vmem:[#allocation11 + $0x10] sm:$0xff]
    %v10919 = vld [vmem:[#allocation11 + $0x18] sm:$0xff]
    %v10920 = vld [vmem:[#allocation11 + $0x20] sm:$0xff]
    %v10921 = vld [vmem:[#allocation11 + $0x28] sm:$0xff]
    %v10922 = vld [vmem:[#allocation11 + $0x30] sm:$0xff]
    %v10923 = vld [vmem:[#allocation11 + $0x38] sm:$0xff]
    %v10924 = vld [vmem:[#allocation11 + $0x40] sm:$0xff]
    %v10925 = vld [vmem:[#allocation11 + $0x48] sm:$0xff]
    %v10926 = vld [vmem:[#allocation11 + $0x50] sm:$0xff]
    %v10927 = vld [vmem:[#allocation11 + $0x58] sm:$0xff]
    %v10928 = vld [vmem:[#allocation11 + $0x60] sm:$0xff]
    %v10929 = vld [vmem:[#allocation11 + $0x68] sm:$0xff]
    %v10930 = vld [vmem:[#allocation11 + $0x70] sm:$0xff]
    %v10931 = vld [vmem:[#allocation11 + $0x78] sm:$0xff]
    %v10932 = vld [vmem:[#allocation11 + $0x80] sm:$0xff]
    %v10933 = vld [vmem:[#allocation11 + $0x88] sm:$0xff]
    %v10934 = vld [vmem:[#allocation11 + $0x90] sm:$0xff]
    %v10935 = vld [vmem:[#allocation11 + $0x98] sm:$0xff]
    %v10936 = vld [vmem:[#allocation11 + $0xa0] sm:$0xff]
    %v10937 = vld [vmem:[#allocation11 + $0xa8] sm:$0xff]
    %v10938 = vld [vmem:[#allocation11 + $0xb0] sm:$0xff]
    %v10939 = vld [vmem:[#allocation11 + $0xb8] sm:$0xff]
    %v10940 = vld [vmem:[#allocation11 + $0xc0] sm:$0xff]
    %v10941 = vld [vmem:[#allocation11 + $0xc8] sm:$0xff]
    %v10942 = vld [vmem:[#allocation11 + $0xd0] sm:$0xff]
    %v10943 = vld [vmem:[#allocation11 + $0xd8] sm:$0xff]
    %v10944 = vld [vmem:[#allocation11 + $0xe0] sm:$0xff]
    %v10945 = vld [vmem:[#allocation11 + $0xe8] sm:$0xff]
    %v10946 = vld [vmem:[#allocation11 + $0xf0] sm:$0xff]
    %v10947 = vld [vmem:[#allocation11 + $0xf8] sm:$0xff]
    %v10948 = vld [vmem:[#allocation11 + $0x100] sm:$0xff]
    %v10949 = vld [vmem:[#allocation11 + $0x108] sm:$0xff]
    %v10950 = vld [vmem:[#allocation11 + $0x110] sm:$0xff]
    %v10951 = vld [vmem:[#allocation11 + $0x118] sm:$0xff]
    %v10952 = vld [vmem:[#allocation11 + $0x120] sm:$0xff]
    %v10953 = vld [vmem:[#allocation11 + $0x128] sm:$0xff]
    %v10954 = vld [vmem:[#allocation11 + $0x130] sm:$0xff]
    %v10955 = vld [vmem:[#allocation11 + $0x138] sm:$0xff]
    %v10956 = vld [vmem:[#allocation11 + $0x140] sm:$0xff]
    %v10957 = vld [vmem:[#allocation11 + $0x148] sm:$0xff]
    %v10958 = vld [vmem:[#allocation11 + $0x150] sm:$0xff]
    %v10959 = vld [vmem:[#allocation11 + $0x158] sm:$0xff]
    %v10960 = vld [vmem:[#allocation11 + $0x160] sm:$0xff]
    %v10961 = vld [vmem:[#allocation11 + $0x168] sm:$0xff]
    %v10962 = vld [vmem:[#allocation11 + $0x170] sm:$0xff]
    %v10963 = vld [vmem:[#allocation11 + $0x178] sm:$0xff]
    %v10964 = vld [vmem:[#allocation11 + $0x180] sm:$0xff]
    %v10965 = vld [vmem:[#allocation11 + $0x188] sm:$0xff]
    %v10966 = vld [vmem:[#allocation11 + $0x190] sm:$0xff]
    %v10967 = vld [vmem:[#allocation11 + $0x198] sm:$0xff]
    %v10968 = vld [vmem:[#allocation11 + $0x1a0] sm:$0xff]
    %v10969 = vld [vmem:[#allocation11 + $0x1a8] sm:$0xff]
    %v10970 = vld [vmem:[#allocation11 + $0x1b0] sm:$0xff]
    %v10971 = vld [vmem:[#allocation11 + $0x1b8] sm:$0xff]
    %v10972 = vld [vmem:[#allocation11 + $0x1c0] sm:$0xff]
    %v10973 = vld [vmem:[#allocation11 + $0x1c8] sm:$0xff]
    %v10974 = vld [vmem:[#allocation11 + $0x1d0] sm:$0xff]
    %v10975 = vld [vmem:[#allocation11 + $0x1d8] sm:$0xff]
    %v10976 = vld [vmem:[#allocation11 + $0x1e0] sm:$0xff]
    %v10977 = vld [vmem:[#allocation11 + $0x1e8] sm:$0xff]
    %v10978 = vld [vmem:[#allocation11 + $0x1f0] sm:$0xff]
    %v10979 = vld [vmem:[#allocation11 + $0x1f8] sm:$0xff]
    %v10980 = vld [vmem:[#allocation11 + $0x200] sm:$0xff]
    %v10981 = vld [vmem:[#allocation11 + $0x208] sm:$0xff]
    %v10982 = vld [vmem:[#allocation11 + $0x210] sm:$0xff]
    %v10983 = vld [vmem:[#allocation11 + $0x218] sm:$0xff]
    %v10984 = vld [vmem:[#allocation11 + $0x220] sm:$0xff]
    %v10985 = vld [vmem:[#allocation11 + $0x228] sm:$0xff]
    %v10986 = vld [vmem:[#allocation11 + $0x230] sm:$0xff]
    %v10987 = vld [vmem:[#allocation11 + $0x238] sm:$0xff]
    %v10988 = vld [vmem:[#allocation11 + $0x240] sm:$0xff]
    %v10989 = vld [vmem:[#allocation11 + $0x248] sm:$0xff]
    %v10990 = vld [vmem:[#allocation11 + $0x250] sm:$0xff]
    %v10991 = vld [vmem:[#allocation11 + $0x258] sm:$0xff]
    %v10992 = vld [vmem:[#allocation11 + $0x260] sm:$0xff]
    %v10993 = vld [vmem:[#allocation11 + $0x268] sm:$0xff]
    %v10994 = vld [vmem:[#allocation11 + $0x270] sm:$0xff]
    %v10995 = vld [vmem:[#allocation11 + $0x278] sm:$0xff]
    %v10996 = vld [vmem:[#allocation11 + $0x280] sm:$0xff]
    %v10997 = vld [vmem:[#allocation11 + $0x288] sm:$0xff]
    %v10998 = vld [vmem:[#allocation11 + $0x290] sm:$0xff]
    %v10999 = vld [vmem:[#allocation11 + $0x298] sm:$0xff]
    %v11000 = vld [vmem:[#allocation11 + $0x2a0] sm:$0xff]
    %v11001 = vld [vmem:[#allocation11 + $0x2a8] sm:$0xff]
    %v11002 = vld [vmem:[#allocation11 + $0x2b0] sm:$0xff]
    %v11003 = vld [vmem:[#allocation11 + $0x2b8] sm:$0xff]
    %v11004 = vld [vmem:[#allocation11 + $0x2c0] sm:$0xff]
    %v11005 = vld [vmem:[#allocation11 + $0x2c8] sm:$0xff]
    %v11006 = vld [vmem:[#allocation11 + $0x2d0] sm:$0xff]
    %v11007 = vld [vmem:[#allocation11 + $0x2d8] sm:$0xff]
    %v11008 = vld [vmem:[#allocation11 + $0x2e0] sm:$0xff]
    %v11009 = vld [vmem:[#allocation11 + $0x2e8] sm:$0xff]
    %v11010 = vld [vmem:[#allocation11 + $0x2f0] sm:$0xff]
    %v11011 = vld [vmem:[#allocation11 + $0x2f8] sm:$0xff]
    %v11012 = vld [vmem:[#allocation11 + $0x300] sm:$0xff]
    %v11013 = vld [vmem:[#allocation11 + $0x308] sm:$0xff]
    %v11014 = vld [vmem:[#allocation11 + $0x310] sm:$0xff]
    %v11015 = vld [vmem:[#allocation11 + $0x318] sm:$0xff]
    %v11016 = vld [vmem:[#allocation11 + $0x320] sm:$0xff]
    %v11017 = vld [vmem:[#allocation11 + $0x328] sm:$0xff]
    %v11018 = vld [vmem:[#allocation11 + $0x330] sm:$0xff]
    %v11019 = vld [vmem:[#allocation11 + $0x338] sm:$0xff]
    %v11020 = vld [vmem:[#allocation11 + $0x340] sm:$0xff]
    %v11021 = vld [vmem:[#allocation11 + $0x348] sm:$0xff]
    %v11022 = vld [vmem:[#allocation11 + $0x350] sm:$0xff]
    %v11023 = vld [vmem:[#allocation11 + $0x358] sm:$0xff]
    %v11024 = vld [vmem:[#allocation11 + $0x360] sm:$0xff]
    %v11025 = vld [vmem:[#allocation11 + $0x368] sm:$0xff]
    %v11026 = vld [vmem:[#allocation11 + $0x370] sm:$0xff]
    %v11027 = vld [vmem:[#allocation11 + $0x378] sm:$0xff]
    %v11028 = vld [vmem:[#allocation11 + $0x380] sm:$0xff]
    %v11029 = vld [vmem:[#allocation11 + $0x388] sm:$0xff]
    %v11030 = vld [vmem:[#allocation11 + $0x390] sm:$0xff]
    %v11031 = vld [vmem:[#allocation11 + $0x398] sm:$0xff]
    %v11032 = vld [vmem:[#allocation11 + $0x3a0] sm:$0xff]
    %v11033 = vld [vmem:[#allocation11 + $0x3a8] sm:$0xff]
    %v11034 = vld [vmem:[#allocation11 + $0x3b0] sm:$0xff]
    %v11035 = vld [vmem:[#allocation11 + $0x3b8] sm:$0xff]
    %v11036 = vld [vmem:[#allocation11 + $0x3c0] sm:$0xff]
    %v11037 = vld [vmem:[#allocation11 + $0x3c8] sm:$0xff]
    %v11038 = vld [vmem:[#allocation11 + $0x3d0] sm:$0xff]
    %v11039 = vld [vmem:[#allocation11 + $0x3d8] sm:$0xff]
    %v11040 = vld [vmem:[#allocation11 + $0x3e0] sm:$0xff]
    %v11041 = vld [vmem:[#allocation11 + $0x3e8] sm:$0xff]
    %v11042 = vld [vmem:[#allocation11 + $0x3f0] sm:$0xff]
    %v11043 = vld [vmem:[#allocation11 + $0x3f8] sm:$0xff]
    %v11172 = vunpack.c.l.b16 %v10916
    %v11173 = vunpack.c.h.b16 %v10916
    %v11174 = vunpack.c.l.b16 %v10917
    %v11175 = vunpack.c.h.b16 %v10917
    %v11176 = vunpack.c.l.b16 %v10918
    %v11177 = vunpack.c.h.b16 %v10918
    %v11178 = vunpack.c.l.b16 %v10919
    %v11179 = vunpack.c.h.b16 %v10919
    %v11180 = vunpack.c.l.b16 %v10920
    %v11181 = vunpack.c.h.b16 %v10920
    %v11182 = vunpack.c.l.b16 %v10921
    %v11183 = vunpack.c.h.b16 %v10921
    %v11184 = vunpack.c.l.b16 %v10922
    %v11185 = vunpack.c.h.b16 %v10922
    %v11186 = vunpack.c.l.b16 %v10923
    %v11187 = vunpack.c.h.b16 %v10923
    %v11188 = vunpack.c.l.b16 %v10924
    %v11189 = vunpack.c.h.b16 %v10924
    %v11190 = vunpack.c.l.b16 %v10925
    %v11191 = vunpack.c.h.b16 %v10925
    %v11192 = vunpack.c.l.b16 %v10926
    %v11193 = vunpack.c.h.b16 %v10926
    %v11194 = vunpack.c.l.b16 %v10927
    %v11195 = vunpack.c.h.b16 %v10927
    %v11196 = vunpack.c.l.b16 %v10928
    %v11197 = vunpack.c.h.b16 %v10928
    %v11198 = vunpack.c.l.b16 %v10929
    %v11199 = vunpack.c.h.b16 %v10929
    %v11200 = vunpack.c.l.b16 %v10930
    %v11201 = vunpack.c.h.b16 %v10930
    %v11202 = vunpack.c.l.b16 %v10931
    %v11203 = vunpack.c.h.b16 %v10931
    %v11204 = vunpack.c.l.b16 %v10932
    %v11205 = vunpack.c.h.b16 %v10932
    %v11206 = vunpack.c.l.b16 %v10933
    %v11207 = vunpack.c.h.b16 %v10933
    %v11208 = vunpack.c.l.b16 %v10934
    %v11209 = vunpack.c.h.b16 %v10934
    %v11210 = vunpack.c.l.b16 %v10935
    %v11211 = vunpack.c.h.b16 %v10935
    %v11212 = vunpack.c.l.b16 %v10936
    %v11213 = vunpack.c.h.b16 %v10936
    %v11214 = vunpack.c.l.b16 %v10937
    %v11215 = vunpack.c.h.b16 %v10937
    %v11216 = vunpack.c.l.b16 %v10938
    %v11217 = vunpack.c.h.b16 %v10938
    %v11218 = vunpack.c.l.b16 %v10939
    %v11219 = vunpack.c.h.b16 %v10939
    %v11220 = vunpack.c.l.b16 %v10940
    %v11221 = vunpack.c.h.b16 %v10940
    %v11222 = vunpack.c.l.b16 %v10941
    %v11223 = vunpack.c.h.b16 %v10941
    %v11224 = vunpack.c.l.b16 %v10942
    %v11225 = vunpack.c.h.b16 %v10942
    %v11226 = vunpack.c.l.b16 %v10943
    %v11227 = vunpack.c.h.b16 %v10943
    %v11228 = vunpack.c.l.b16 %v10944
    %v11229 = vunpack.c.h.b16 %v10944
    %v11230 = vunpack.c.l.b16 %v10945
    %v11231 = vunpack.c.h.b16 %v10945
    %v11232 = vunpack.c.l.b16 %v10946
    %v11233 = vunpack.c.h.b16 %v10946
    %v11234 = vunpack.c.l.b16 %v10947
    %v11235 = vunpack.c.h.b16 %v10947
    %v11236 = vunpack.c.l.b16 %v10948
    %v11237 = vunpack.c.h.b16 %v10948
    %v11238 = vunpack.c.l.b16 %v10949
    %v11239 = vunpack.c.h.b16 %v10949
    %v11240 = vunpack.c.l.b16 %v10950
    %v11241 = vunpack.c.h.b16 %v10950
    %v11242 = vunpack.c.l.b16 %v10951
    %v11243 = vunpack.c.h.b16 %v10951
    %v11244 = vunpack.c.l.b16 %v10952
    %v11245 = vunpack.c.h.b16 %v10952
    %v11246 = vunpack.c.l.b16 %v10953
    %v11247 = vunpack.c.h.b16 %v10953
    %v11248 = vunpack.c.l.b16 %v10954
    %v11249 = vunpack.c.h.b16 %v10954
    %v11250 = vunpack.c.l.b16 %v10955
    %v11251 = vunpack.c.h.b16 %v10955
    %v11252 = vunpack.c.l.b16 %v10956
    %v11253 = vunpack.c.h.b16 %v10956
    %v11254 = vunpack.c.l.b16 %v10957
    %v11255 = vunpack.c.h.b16 %v10957
    %v11256 = vunpack.c.l.b16 %v10958
    %v11257 = vunpack.c.h.b16 %v10958
    %v11258 = vunpack.c.l.b16 %v10959
    %v11259 = vunpack.c.h.b16 %v10959
    %v11260 = vunpack.c.l.b16 %v10960
    %v11261 = vunpack.c.h.b16 %v10960
    %v11262 = vunpack.c.l.b16 %v10961
    %v11263 = vunpack.c.h.b16 %v10961
    %v11264 = vunpack.c.l.b16 %v10962
    %v11265 = vunpack.c.h.b16 %v10962
    %v11266 = vunpack.c.l.b16 %v10963
    %v11267 = vunpack.c.h.b16 %v10963
    %v11268 = vunpack.c.l.b16 %v10964
    %v11269 = vunpack.c.h.b16 %v10964
    %v11270 = vunpack.c.l.b16 %v10965
    %v11271 = vunpack.c.h.b16 %v10965
    %v11272 = vunpack.c.l.b16 %v10966
    %v11273 = vunpack.c.h.b16 %v10966
    %v11274 = vunpack.c.l.b16 %v10967
    %v11275 = vunpack.c.h.b16 %v10967
    %v11276 = vunpack.c.l.b16 %v10968
    %v11277 = vunpack.c.h.b16 %v10968
    %v11278 = vunpack.c.l.b16 %v10969
    %v11279 = vunpack.c.h.b16 %v10969
    %v11280 = vunpack.c.l.b16 %v10970
    %v11281 = vunpack.c.h.b16 %v10970
    %v11282 = vunpack.c.l.b16 %v10971
    %v11283 = vunpack.c.h.b16 %v10971
    %v11284 = vunpack.c.l.b16 %v10972
    %v11285 = vunpack.c.h.b16 %v10972
    %v11286 = vunpack.c.l.b16 %v10973
    %v11287 = vunpack.c.h.b16 %v10973
    %v11288 = vunpack.c.l.b16 %v10974
    %v11289 = vunpack.c.h.b16 %v10974
    %v11290 = vunpack.c.l.b16 %v10975
    %v11291 = vunpack.c.h.b16 %v10975
    %v11292 = vunpack.c.l.b16 %v10976
    %v11293 = vunpack.c.h.b16 %v10976
    %v11294 = vunpack.c.l.b16 %v10977
    %v11295 = vunpack.c.h.b16 %v10977
    %v11296 = vunpack.c.l.b16 %v10978
    %v11297 = vunpack.c.h.b16 %v10978
    %v11298 = vunpack.c.l.b16 %v10979
    %v11299 = vunpack.c.h.b16 %v10979
    %v11300 = vunpack.c.l.b16 %v10980
    %v11301 = vunpack.c.h.b16 %v10980
    %v11302 = vunpack.c.l.b16 %v10981
    %v11303 = vunpack.c.h.b16 %v10981
    %v11304 = vunpack.c.l.b16 %v10982
    %v11305 = vunpack.c.h.b16 %v10982
    %v11306 = vunpack.c.l.b16 %v10983
    %v11307 = vunpack.c.h.b16 %v10983
    %v11308 = vunpack.c.l.b16 %v10984
    %v11309 = vunpack.c.h.b16 %v10984
    %v11310 = vunpack.c.l.b16 %v10985
    %v11311 = vunpack.c.h.b16 %v10985
    %v11312 = vunpack.c.l.b16 %v10986
    %v11313 = vunpack.c.h.b16 %v10986
    %v11314 = vunpack.c.l.b16 %v10987
    %v11315 = vunpack.c.h.b16 %v10987
    %v11316 = vunpack.c.l.b16 %v10988
    %v11317 = vunpack.c.h.b16 %v10988
    %v11318 = vunpack.c.l.b16 %v10989
    %v11319 = vunpack.c.h.b16 %v10989
    %v11320 = vunpack.c.l.b16 %v10990
    %v11321 = vunpack.c.h.b16 %v10990
    %v11322 = vunpack.c.l.b16 %v10991
    %v11323 = vunpack.c.h.b16 %v10991
    %v11324 = vunpack.c.l.b16 %v10992
    %v11325 = vunpack.c.h.b16 %v10992
    %v11326 = vunpack.c.l.b16 %v10993
    %v11327 = vunpack.c.h.b16 %v10993
    %v11328 = vunpack.c.l.b16 %v10994
    %v11329 = vunpack.c.h.b16 %v10994
    %v11330 = vunpack.c.l.b16 %v10995
    %v11331 = vunpack.c.h.b16 %v10995
    %v11332 = vunpack.c.l.b16 %v10996
    %v11333 = vunpack.c.h.b16 %v10996
    %v11334 = vunpack.c.l.b16 %v10997
    %v11335 = vunpack.c.h.b16 %v10997
    %v11336 = vunpack.c.l.b16 %v10998
    %v11337 = vunpack.c.h.b16 %v10998
    %v11338 = vunpack.c.l.b16 %v10999
    %v11339 = vunpack.c.h.b16 %v10999
    %v11340 = vunpack.c.l.b16 %v11000
    %v11341 = vunpack.c.h.b16 %v11000
    %v11342 = vunpack.c.l.b16 %v11001
    %v11343 = vunpack.c.h.b16 %v11001
    %v11344 = vunpack.c.l.b16 %v11002
    %v11345 = vunpack.c.h.b16 %v11002
    %v11346 = vunpack.c.l.b16 %v11003
    %v11347 = vunpack.c.h.b16 %v11003
    %v11348 = vunpack.c.l.b16 %v11004
    %v11349 = vunpack.c.h.b16 %v11004
    %v11350 = vunpack.c.l.b16 %v11005
    %v11351 = vunpack.c.h.b16 %v11005
    %v11352 = vunpack.c.l.b16 %v11006
    %v11353 = vunpack.c.h.b16 %v11006
    %v11354 = vunpack.c.l.b16 %v11007
    %v11355 = vunpack.c.h.b16 %v11007
    %v11356 = vunpack.c.l.b16 %v11008
    %v11357 = vunpack.c.h.b16 %v11008
    %v11358 = vunpack.c.l.b16 %v11009
    %v11359 = vunpack.c.h.b16 %v11009
    %v11360 = vunpack.c.l.b16 %v11010
    %v11361 = vunpack.c.h.b16 %v11010
    %v11362 = vunpack.c.l.b16 %v11011
    %v11363 = vunpack.c.h.b16 %v11011
    %v11364 = vunpack.c.l.b16 %v11012
    %v11365 = vunpack.c.h.b16 %v11012
    %v11366 = vunpack.c.l.b16 %v11013
    %v11367 = vunpack.c.h.b16 %v11013
    %v11368 = vunpack.c.l.b16 %v11014
    %v11369 = vunpack.c.h.b16 %v11014
    %v11370 = vunpack.c.l.b16 %v11015
    %v11371 = vunpack.c.h.b16 %v11015
    %v11372 = vunpack.c.l.b16 %v11016
    %v11373 = vunpack.c.h.b16 %v11016
    %v11374 = vunpack.c.l.b16 %v11017
    %v11375 = vunpack.c.h.b16 %v11017
    %v11376 = vunpack.c.l.b16 %v11018
    %v11377 = vunpack.c.h.b16 %v11018
    %v11378 = vunpack.c.l.b16 %v11019
    %v11379 = vunpack.c.h.b16 %v11019
    %v11380 = vunpack.c.l.b16 %v11020
    %v11381 = vunpack.c.h.b16 %v11020
    %v11382 = vunpack.c.l.b16 %v11021
    %v11383 = vunpack.c.h.b16 %v11021
    %v11384 = vunpack.c.l.b16 %v11022
    %v11385 = vunpack.c.h.b16 %v11022
    %v11386 = vunpack.c.l.b16 %v11023
    %v11387 = vunpack.c.h.b16 %v11023
    %v11388 = vunpack.c.l.b16 %v11024
    %v11389 = vunpack.c.h.b16 %v11024
    %v11390 = vunpack.c.l.b16 %v11025
    %v11391 = vunpack.c.h.b16 %v11025
    %v11392 = vunpack.c.l.b16 %v11026
    %v11393 = vunpack.c.h.b16 %v11026
    %v11394 = vunpack.c.l.b16 %v11027
    %v11395 = vunpack.c.h.b16 %v11027
    %v11396 = vunpack.c.l.b16 %v11028
    %v11397 = vunpack.c.h.b16 %v11028
    %v11398 = vunpack.c.l.b16 %v11029
    %v11399 = vunpack.c.h.b16 %v11029
    %v11400 = vunpack.c.l.b16 %v11030
    %v11401 = vunpack.c.h.b16 %v11030
    %v11402 = vunpack.c.l.b16 %v11031
    %v11403 = vunpack.c.h.b16 %v11031
    %v11404 = vunpack.c.l.b16 %v11032
    %v11405 = vunpack.c.h.b16 %v11032
    %v11406 = vunpack.c.l.b16 %v11033
    %v11407 = vunpack.c.h.b16 %v11033
    %v11408 = vunpack.c.l.b16 %v11034
    %v11409 = vunpack.c.h.b16 %v11034
    %v11410 = vunpack.c.l.b16 %v11035
    %v11411 = vunpack.c.h.b16 %v11035
    %v11412 = vunpack.c.l.b16 %v11036
    %v11413 = vunpack.c.h.b16 %v11036
    %v11414 = vunpack.c.l.b16 %v11037
    %v11415 = vunpack.c.h.b16 %v11037
    %v11416 = vunpack.c.l.b16 %v11038
    %v11417 = vunpack.c.h.b16 %v11038
    %v11418 = vunpack.c.l.b16 %v11039
    %v11419 = vunpack.c.h.b16 %v11039
    %v11420 = vunpack.c.l.b16 %v11040
    %v11421 = vunpack.c.h.b16 %v11040
    %v11422 = vunpack.c.l.b16 %v11041
    %v11423 = vunpack.c.h.b16 %v11041
    %v11424 = vunpack.c.l.b16 %v11042
    %v11425 = vunpack.c.h.b16 %v11042
    %v11426 = vunpack.c.l.b16 %v11043
    %v11427 = vunpack.c.h.b16 %v11043
    %v11428 = vpack.c.b16 %v11176, %v11172
    %v11429 = vpack.c.b16 %v11177, %v11173
    %v11430 = vpack.c.b16 %v11178, %v11174
    %v11431 = vpack.c.b16 %v11179, %v11175
    %v11432 = vpack.c.b16 %v11184, %v11180
    %v11433 = vpack.c.b16 %v11185, %v11181
    %v11434 = vpack.c.b16 %v11186, %v11182
    %v11435 = vpack.c.b16 %v11187, %v11183
    %v11436 = vpack.c.b16 %v11192, %v11188
    %v11437 = vpack.c.b16 %v11193, %v11189
    %v11438 = vpack.c.b16 %v11194, %v11190
    %v11439 = vpack.c.b16 %v11195, %v11191
    %v11440 = vpack.c.b16 %v11200, %v11196
    %v11441 = vpack.c.b16 %v11201, %v11197
    %v11442 = vpack.c.b16 %v11202, %v11198
    %v11443 = vpack.c.b16 %v11203, %v11199
    %v11444 = vpack.c.b16 %v11208, %v11204
    %v11445 = vpack.c.b16 %v11209, %v11205
    %v11446 = vpack.c.b16 %v11210, %v11206
    %v11447 = vpack.c.b16 %v11211, %v11207
    %v11448 = vpack.c.b16 %v11216, %v11212
    %v11449 = vpack.c.b16 %v11217, %v11213
    %v11450 = vpack.c.b16 %v11218, %v11214
    %v11451 = vpack.c.b16 %v11219, %v11215
    %v11452 = vpack.c.b16 %v11224, %v11220
    %v11453 = vpack.c.b16 %v11225, %v11221
    %v11454 = vpack.c.b16 %v11226, %v11222
    %v11455 = vpack.c.b16 %v11227, %v11223
    %v11456 = vpack.c.b16 %v11232, %v11228
    %v11457 = vpack.c.b16 %v11233, %v11229
    %v11458 = vpack.c.b16 %v11234, %v11230
    %v11459 = vpack.c.b16 %v11235, %v11231
    %v11460 = vpack.c.b16 %v11240, %v11236
    %v11461 = vpack.c.b16 %v11241, %v11237
    %v11462 = vpack.c.b16 %v11242, %v11238
    %v11463 = vpack.c.b16 %v11243, %v11239
    %v11464 = vpack.c.b16 %v11248, %v11244
    %v11465 = vpack.c.b16 %v11249, %v11245
    %v11466 = vpack.c.b16 %v11250, %v11246
    %v11467 = vpack.c.b16 %v11251, %v11247
    %v11468 = vpack.c.b16 %v11256, %v11252
    %v11469 = vpack.c.b16 %v11257, %v11253
    %v11470 = vpack.c.b16 %v11258, %v11254
    %v11471 = vpack.c.b16 %v11259, %v11255
    %v11472 = vpack.c.b16 %v11264, %v11260
    %v11473 = vpack.c.b16 %v11265, %v11261
    %v11474 = vpack.c.b16 %v11266, %v11262
    %v11475 = vpack.c.b16 %v11267, %v11263
    %v11476 = vpack.c.b16 %v11272, %v11268
    %v11477 = vpack.c.b16 %v11273, %v11269
    %v11478 = vpack.c.b16 %v11274, %v11270
    %v11479 = vpack.c.b16 %v11275, %v11271
    %v11480 = vpack.c.b16 %v11280, %v11276
    %v11481 = vpack.c.b16 %v11281, %v11277
    %v11482 = vpack.c.b16 %v11282, %v11278
    %v11483 = vpack.c.b16 %v11283, %v11279
    %v11484 = vpack.c.b16 %v11288, %v11284
    %v11485 = vpack.c.b16 %v11289, %v11285
    %v11486 = vpack.c.b16 %v11290, %v11286
    %v11487 = vpack.c.b16 %v11291, %v11287
    %v11488 = vpack.c.b16 %v11296, %v11292
    %v11489 = vpack.c.b16 %v11297, %v11293
    %v11490 = vpack.c.b16 %v11298, %v11294
    %v11491 = vpack.c.b16 %v11299, %v11295
    %v11492 = vpack.c.b16 %v11304, %v11300
    %v11493 = vpack.c.b16 %v11305, %v11301
    %v11494 = vpack.c.b16 %v11306, %v11302
    %v11495 = vpack.c.b16 %v11307, %v11303
    %v11496 = vpack.c.b16 %v11312, %v11308
    %v11497 = vpack.c.b16 %v11313, %v11309
    %v11498 = vpack.c.b16 %v11314, %v11310
    %v11499 = vpack.c.b16 %v11315, %v11311
    %v11500 = vpack.c.b16 %v11320, %v11316
    %v11501 = vpack.c.b16 %v11321, %v11317
    %v11502 = vpack.c.b16 %v11322, %v11318
    %v11503 = vpack.c.b16 %v11323, %v11319
    %v11504 = vpack.c.b16 %v11328, %v11324
    %v11505 = vpack.c.b16 %v11329, %v11325
    %v11506 = vpack.c.b16 %v11330, %v11326
    %v11507 = vpack.c.b16 %v11331, %v11327
    %v11508 = vpack.c.b16 %v11336, %v11332
    %v11509 = vpack.c.b16 %v11337, %v11333
    %v11510 = vpack.c.b16 %v11338, %v11334
    %v11511 = vpack.c.b16 %v11339, %v11335
    %v11512 = vpack.c.b16 %v11344, %v11340
    %v11513 = vpack.c.b16 %v11345, %v11341
    %v11514 = vpack.c.b16 %v11346, %v11342
    %v11515 = vpack.c.b16 %v11347, %v11343
    %v11516 = vpack.c.b16 %v11352, %v11348
    %v11517 = vpack.c.b16 %v11353, %v11349
    %v11518 = vpack.c.b16 %v11354, %v11350
    %v11519 = vpack.c.b16 %v11355, %v11351
    %v11520 = vpack.c.b16 %v11360, %v11356
    %v11521 = vpack.c.b16 %v11361, %v11357
    %v11522 = vpack.c.b16 %v11362, %v11358
    %v11523 = vpack.c.b16 %v11363, %v11359
    %v11524 = vpack.c.b16 %v11368, %v11364
    %v11525 = vpack.c.b16 %v11369, %v11365
    %v11526 = vpack.c.b16 %v11370, %v11366
    %v11527 = vpack.c.b16 %v11371, %v11367
    %v11528 = vpack.c.b16 %v11376, %v11372
    %v11529 = vpack.c.b16 %v11377, %v11373
    %v11530 = vpack.c.b16 %v11378, %v11374
    %v11531 = vpack.c.b16 %v11379, %v11375
    %v11532 = vpack.c.b16 %v11384, %v11380
    %v11533 = vpack.c.b16 %v11385, %v11381
    %v11534 = vpack.c.b16 %v11386, %v11382
    %v11535 = vpack.c.b16 %v11387, %v11383
    %v11536 = vpack.c.b16 %v11392, %v11388
    %v11537 = vpack.c.b16 %v11393, %v11389
    %v11538 = vpack.c.b16 %v11394, %v11390
    %v11539 = vpack.c.b16 %v11395, %v11391
    %v11540 = vpack.c.b16 %v11400, %v11396
    %v11541 = vpack.c.b16 %v11401, %v11397
    %v11542 = vpack.c.b16 %v11402, %v11398
    %v11543 = vpack.c.b16 %v11403, %v11399
    %v11544 = vpack.c.b16 %v11408, %v11404
    %v11545 = vpack.c.b16 %v11409, %v11405
    %v11546 = vpack.c.b16 %v11410, %v11406
    %v11547 = vpack.c.b16 %v11411, %v11407
    %v11548 = vpack.c.b16 %v11416, %v11412
    %v11549 = vpack.c.b16 %v11417, %v11413
    %v11550 = vpack.c.b16 %v11418, %v11414
    %v11551 = vpack.c.b16 %v11419, %v11415
    %v11552 = vpack.c.b16 %v11424, %v11420
    %v11553 = vpack.c.b16 %v11425, %v11421
    %v11554 = vpack.c.b16 %v11426, %v11422
    %v11555 = vpack.c.b16 %v11427, %v11423
    %11684 = vmatprep.subr.bf16.mxu0 %v11457
    %11685 = vmatpush1.bf16.msra.mxu0 %v11456
    %11686 = vmatprep.subr.bf16.mxu0 %v11453
    %11687 = vmatpush1.bf16.msra.mxu0 %v11452
    %11688 = vmatprep.subr.bf16.mxu0 %v11449
    %11689 = vmatpush1.bf16.msra.mxu0 %v11448
    %11690 = vmatprep.subr.bf16.mxu0 %v11445
    %11691 = vmatpush1.bf16.msra.mxu0 %v11444
    %11692 = vmatprep.subr.bf16.mxu0 %v11441
    %11693 = vmatpush1.bf16.msra.mxu0 %v11440
    %11694 = vmatprep.subr.bf16.mxu0 %v11437
    %11695 = vmatpush1.bf16.msra.mxu0 %v11436
    %11696 = vmatprep.subr.bf16.mxu0 %v11433
    %11697 = vmatpush1.bf16.msra.mxu0 %v11432
    %11698 = vmatprep.subr.bf16.mxu0 %v11429
    %11699 = vmatpush1.bf16.msra.mxu0 %v11428
    %11700 = vmatprep.subr.bf16.mxu0 %v11489
    %11701 = vmatpush2.bf16.msra.mxu0 %v11488
    %11702 = vmatprep.subr.bf16.mxu0 %v11485
    %11703 = vmatpush2.bf16.msra.mxu0 %v11484
    %11704 = vmatprep.subr.bf16.mxu0 %v11481
    %11705 = vmatpush2.bf16.msra.mxu0 %v11480
    %11706 = vmatprep.subr.bf16.mxu0 %v11477
    %11707 = vmatpush2.bf16.msra.mxu0 %v11476
    %11708 = vmatprep.subr.bf16.mxu0 %v11473
    %11709 = vmatpush2.bf16.msra.mxu0 %v11472
    %11710 = vmatprep.subr.bf16.mxu0 %v11469
    %11711 = vmatpush2.bf16.msra.mxu0 %v11468
    %11712 = vmatprep.subr.bf16.mxu0 %v11465
    %11713 = vmatpush2.bf16.msra.mxu0 %v11464
    %11714 = vmatprep.subr.bf16.mxu0 %v11461
    %11715 = vmatpush2.bf16.msra.mxu0 %v11460
    %11716 = vmatprep.mubr.bf16.mxu0 %v10889
    %11717 = vmatmul.mubr.bf16.gmra.mxu0 %v10888
    %v11718 = vpop.f32.mrf.mxu0
    %v11719 = vadd.f32 0.0, %v11718
    %v11720 = vpop.f32.mrf.mxu0
    %v11721 = vadd.f32 0.0, %v11720
    %v11722 = vpop.f32.mrf.mxu0
    %v11723 = vadd.f32 0.0, %v11722
    %v11724 = vpop.f32.mrf.mxu0
    %v11725 = vadd.f32 0.0, %v11724
    %11726 = vmatprep.mubr.bf16.mxu0 %v10893
    %11727 = vmatmul.mubr.bf16.gmra.mxu0 %v10892
    %v11728 = vpop.f32.mrf.mxu0
    %v11729 = vadd.f32 0.0, %v11728
    %v11730 = vpop.f32.mrf.mxu0
    %v11731 = vadd.f32 0.0, %v11730
    %v11732 = vpop.f32.mrf.mxu0
    %v11733 = vadd.f32 0.0, %v11732
    %v11734 = vpop.f32.mrf.mxu0
    %v11735 = vadd.f32 0.0, %v11734
    %11736 = vmatprep.mubr.bf16.mxu0 %v10897
    %11737 = vmatmul.mubr.bf16.gmra.mxu0 %v10896
    %v11738 = vpop.f32.mrf.mxu0
    %v11739 = vadd.f32 0.0, %v11738
    %v11740 = vpop.f32.mrf.mxu0
    %v11741 = vadd.f32 0.0, %v11740
    %v11742 = vpop.f32.mrf.mxu0
    %v11743 = vadd.f32 0.0, %v11742
    %v11744 = vpop.f32.mrf.mxu0
    %v11745 = vadd.f32 0.0, %v11744
    %11746 = vmatprep.mubr.bf16.mxu0 %v10901
    %11747 = vmatmul.mubr.bf16.gmra.mxu0 %v10900
    %v11748 = vpop.f32.mrf.mxu0
    %v11749 = vadd.f32 0.0, %v11748
    %v11750 = vpop.f32.mrf.mxu0
    %v11751 = vadd.f32 0.0, %v11750
    %v11752 = vpop.f32.mrf.mxu0
    %v11753 = vadd.f32 0.0, %v11752
    %v11754 = vpop.f32.mrf.mxu0
    %v11755 = vadd.f32 0.0, %v11754
    %11756 = vmatprep.mubr.bf16.mxu0 %v10905
    %11757 = vmatmul.mubr.bf16.gmra.mxu0 %v10904
    %v11758 = vpop.f32.mrf.mxu0
    %v11759 = vadd.f32 0.0, %v11758
    %v11760 = vpop.f32.mrf.mxu0
    %v11761 = vadd.f32 0.0, %v11760
    %v11762 = vpop.f32.mrf.mxu0
    %v11763 = vadd.f32 0.0, %v11762
    %v11764 = vpop.f32.mrf.mxu0
    %v11765 = vadd.f32 0.0, %v11764
    %11766 = vmatprep.mubr.bf16.mxu0 %v10909
    %11767 = vmatmul.mubr.bf16.gmra.mxu0 %v10908
    %v11768 = vpop.f32.mrf.mxu0
    %v11769 = vadd.f32 0.0, %v11768
    %v11770 = vpop.f32.mrf.mxu0
    %v11771 = vadd.f32 0.0, %v11770
    %v11772 = vpop.f32.mrf.mxu0
    %v11773 = vadd.f32 0.0, %v11772
    %v11774 = vpop.f32.mrf.mxu0
    %v11775 = vadd.f32 0.0, %v11774
    %11776 = vmatprep.mubr.bf16.mxu0 %v10913
    %11777 = vmatmul.mubr.bf16.gmra.mxu0 %v10912
    %v11778 = vpop.f32.mrf.mxu0
    %v11779 = vadd.f32 0.0, %v11778
    %v11780 = vpop.f32.mrf.mxu0
    %v11781 = vadd.f32 0.0, %v11780
    %v11782 = vpop.f32.mrf.mxu0
    %v11783 = vadd.f32 0.0, %v11782
    %v11784 = vpop.f32.mrf.mxu0
    %v11785 = vadd.f32 0.0, %v11784
    %11786 = vdwg.mxu0
    %11787 = vmatprep.subr.bf16.mxu0 %v11521
    %11788 = vmatpush1.bf16.msra.mxu0 %v11520
    %11789 = vmatprep.subr.bf16.mxu0 %v11517
    %11790 = vmatpush1.bf16.msra.mxu0 %v11516
    %11791 = vmatprep.subr.bf16.mxu0 %v11513
    %11792 = vmatpush1.bf16.msra.mxu0 %v11512
    %11793 = vmatprep.subr.bf16.mxu0 %v11509
    %11794 = vmatpush1.bf16.msra.mxu0 %v11508
    %11795 = vmatprep.subr.bf16.mxu0 %v11505
    %11796 = vmatpush1.bf16.msra.mxu0 %v11504
    %11797 = vmatprep.subr.bf16.mxu0 %v11501
    %11798 = vmatpush1.bf16.msra.mxu0 %v11500
    %11799 = vmatprep.subr.bf16.mxu0 %v11497
    %11800 = vmatpush1.bf16.msra.mxu0 %v11496
    %11801 = vmatprep.subr.bf16.mxu0 %v11493
    %11802 = vmatpush1.bf16.msra.mxu0 %v11492
    %11803 = vmatprep.subr.bf16.mxu0 %v11553
    %11804 = vmatpush2.bf16.msra.mxu0 %v11552
    %11805 = vmatprep.subr.bf16.mxu0 %v11549
    %11806 = vmatpush2.bf16.msra.mxu0 %v11548
    %11807 = vmatprep.subr.bf16.mxu0 %v11545
    %11808 = vmatpush2.bf16.msra.mxu0 %v11544
    %11809 = vmatprep.subr.bf16.mxu0 %v11541
    %11810 = vmatpush2.bf16.msra.mxu0 %v11540
    %11811 = vmatprep.subr.bf16.mxu0 %v11537
    %11812 = vmatpush2.bf16.msra.mxu0 %v11536
    %11813 = vmatprep.subr.bf16.mxu0 %v11533
    %11814 = vmatpush2.bf16.msra.mxu0 %v11532
    %11815 = vmatprep.subr.bf16.mxu0 %v11529
    %11816 = vmatpush2.bf16.msra.mxu0 %v11528
    %11817 = vmatprep.subr.bf16.mxu0 %v11525
    %11818 = vmatpush2.bf16.msra.mxu0 %v11524
    %11819 = vmatprep.mubr.bf16.mxu0 %v10891
    %11820 = vmatmul.mubr.bf16.gmra.mxu0 %v10890
    %v11821 = vpop.f32.mrf.mxu0
    %v11822 = vadd.f32 %v11719, %v11821
    %v11823 = vpop.f32.mrf.mxu0
    %v11824 = vadd.f32 %v11721, %v11823
    %v11825 = vpop.f32.mrf.mxu0
    %v11826 = vadd.f32 %v11723, %v11825
    %v11827 = vpop.f32.mrf.mxu0
    %v11828 = vadd.f32 %v11725, %v11827
    %11829 = vmatprep.mubr.bf16.mxu0 %v10895
    %11830 = vmatmul.mubr.bf16.gmra.mxu0 %v10894
    %v11831 = vpop.f32.mrf.mxu0
    %v11832 = vadd.f32 %v11729, %v11831
    %v11833 = vpop.f32.mrf.mxu0
    %v11834 = vadd.f32 %v11731, %v11833
    %v11835 = vpop.f32.mrf.mxu0
    %v11836 = vadd.f32 %v11733, %v11835
    %v11837 = vpop.f32.mrf.mxu0
    %v11838 = vadd.f32 %v11735, %v11837
    %11839 = vmatprep.mubr.bf16.mxu0 %v10899
    %11840 = vmatmul.mubr.bf16.gmra.mxu0 %v10898
    %v11841 = vpop.f32.mrf.mxu0
    %v11842 = vadd.f32 %v11739, %v11841
    %v11843 = vpop.f32.mrf.mxu0
    %v11844 = vadd.f32 %v11741, %v11843
    %v11845 = vpop.f32.mrf.mxu0
    %v11846 = vadd.f32 %v11743, %v11845
    %v11847 = vpop.f32.mrf.mxu0
    %v11848 = vadd.f32 %v11745, %v11847
    %11849 = vmatprep.mubr.bf16.mxu0 %v10903
    %11850 = vmatmul.mubr.bf16.gmra.mxu0 %v10902
    %v11851 = vpop.f32.mrf.mxu0
    %v11852 = vadd.f32 %v11749, %v11851
    %v11853 = vpop.f32.mrf.mxu0
    %v11854 = vadd.f32 %v11751, %v11853
    %v11855 = vpop.f32.mrf.mxu0
    %v11856 = vadd.f32 %v11753, %v11855
    %v11857 = vpop.f32.mrf.mxu0
    %v11858 = vadd.f32 %v11755, %v11857
    %11859 = vmatprep.mubr.bf16.mxu0 %v10907
    %11860 = vmatmul.mubr.bf16.gmra.mxu0 %v10906
    %v11861 = vpop.f32.mrf.mxu0
    %v11862 = vadd.f32 %v11759, %v11861
    %v11863 = vpop.f32.mrf.mxu0
    %v11864 = vadd.f32 %v11761, %v11863
    %v11865 = vpop.f32.mrf.mxu0
    %v11866 = vadd.f32 %v11763, %v11865
    %v11867 = vpop.f32.mrf.mxu0
    %v11868 = vadd.f32 %v11765, %v11867
    %11869 = vmatprep.mubr.bf16.mxu0 %v10911
    %11870 = vmatmul.mubr.bf16.gmra.mxu0 %v10910
    %v11871 = vpop.f32.mrf.mxu0
    %v11872 = vadd.f32 %v11769, %v11871
    %v11873 = vpop.f32.mrf.mxu0
    %v11874 = vadd.f32 %v11771, %v11873
    %v11875 = vpop.f32.mrf.mxu0
    %v11876 = vadd.f32 %v11773, %v11875
    %v11877 = vpop.f32.mrf.mxu0
    %v11878 = vadd.f32 %v11775, %v11877
    %11879 = vmatprep.mubr.bf16.mxu0 %v10915
    %11880 = vmatmul.mubr.bf16.gmra.mxu0 %v10914
    %v11881 = vpop.f32.mrf.mxu0
    %v11882 = vadd.f32 %v11779, %v11881
    %v11883 = vpop.f32.mrf.mxu0
    %v11884 = vadd.f32 %v11781, %v11883
    %v11885 = vpop.f32.mrf.mxu0
    %v11886 = vadd.f32 %v11783, %v11885
    %v11887 = vpop.f32.mrf.mxu0
    %v11888 = vadd.f32 %v11785, %v11887
    %11889 = vdwg.mxu0
    %11890 = vmatprep.subr.bf16.mxu0 %v11459
    %11891 = vmatpush1.bf16.msra.mxu0 %v11458
    %11892 = vmatprep.subr.bf16.mxu0 %v11455
    %11893 = vmatpush1.bf16.msra.mxu0 %v11454
    %11894 = vmatprep.subr.bf16.mxu0 %v11451
    %11895 = vmatpush1.bf16.msra.mxu0 %v11450
    %11896 = vmatprep.subr.bf16.mxu0 %v11447
    %11897 = vmatpush1.bf16.msra.mxu0 %v11446
    %11898 = vmatprep.subr.bf16.mxu0 %v11443
    %11899 = vmatpush1.bf16.msra.mxu0 %v11442
    %11900 = vmatprep.subr.bf16.mxu0 %v11439
    %11901 = vmatpush1.bf16.msra.mxu0 %v11438
    %11902 = vmatprep.subr.bf16.mxu0 %v11435
    %11903 = vmatpush1.bf16.msra.mxu0 %v11434
    %11904 = vmatprep.subr.bf16.mxu0 %v11431
    %11905 = vmatpush1.bf16.msra.mxu0 %v11430
    %11906 = vmatprep.subr.bf16.mxu0 %v11491
    %11907 = vmatpush2.bf16.msra.mxu0 %v11490
    %11908 = vmatprep.subr.bf16.mxu0 %v11487
    %11909 = vmatpush2.bf16.msra.mxu0 %v11486
    %11910 = vmatprep.subr.bf16.mxu0 %v11483
    %11911 = vmatpush2.bf16.msra.mxu0 %v11482
    %11912 = vmatprep.subr.bf16.mxu0 %v11479
    %11913 = vmatpush2.bf16.msra.mxu0 %v11478
    %11914 = vmatprep.subr.bf16.mxu0 %v11475
    %11915 = vmatpush2.bf16.msra.mxu0 %v11474
    %11916 = vmatprep.subr.bf16.mxu0 %v11471
    %11917 = vmatpush2.bf16.msra.mxu0 %v11470
    %11918 = vmatprep.subr.bf16.mxu0 %v11467
    %11919 = vmatpush2.bf16.msra.mxu0 %v11466
    %11920 = vmatprep.subr.bf16.mxu0 %v11463
    %11921 = vmatpush2.bf16.msra.mxu0 %v11462
    %11922 = vmatprep.mubr.bf16.mxu0 %v10889
    %11923 = vmatmul.mubr.bf16.gmra.mxu0 %v10888
    %v11924 = vpop.f32.mrf.mxu0
    %v11925 = vadd.f32 0.0, %v11924
    %v11926 = vpop.f32.mrf.mxu0
    %v11927 = vadd.f32 0.0, %v11926
    %v11928 = vpop.f32.mrf.mxu0
    %v11929 = vadd.f32 0.0, %v11928
    %v11930 = vpop.f32.mrf.mxu0
    %v11931 = vadd.f32 0.0, %v11930
    %11932 = vmatprep.mubr.bf16.mxu0 %v10893
    %11933 = vmatmul.mubr.bf16.gmra.mxu0 %v10892
    %v11934 = vpop.f32.mrf.mxu0
    %v11935 = vadd.f32 0.0, %v11934
    %v11936 = vpop.f32.mrf.mxu0
    %v11937 = vadd.f32 0.0, %v11936
    %v11938 = vpop.f32.mrf.mxu0
    %v11939 = vadd.f32 0.0, %v11938
    %v11940 = vpop.f32.mrf.mxu0
    %v11941 = vadd.f32 0.0, %v11940
    %11942 = vmatprep.mubr.bf16.mxu0 %v10897
    %11943 = vmatmul.mubr.bf16.gmra.mxu0 %v10896
    %v11944 = vpop.f32.mrf.mxu0
    %v11945 = vadd.f32 0.0, %v11944
    %v11946 = vpop.f32.mrf.mxu0
    %v11947 = vadd.f32 0.0, %v11946
    %v11948 = vpop.f32.mrf.mxu0
    %v11949 = vadd.f32 0.0, %v11948
    %v11950 = vpop.f32.mrf.mxu0
    %v11951 = vadd.f32 0.0, %v11950
    %11952 = vmatprep.mubr.bf16.mxu0 %v10901
    %11953 = vmatmul.mubr.bf16.gmra.mxu0 %v10900
    %v11954 = vpop.f32.mrf.mxu0
    %v11955 = vadd.f32 0.0, %v11954
    %v11956 = vpop.f32.mrf.mxu0
    %v11957 = vadd.f32 0.0, %v11956
    %v11958 = vpop.f32.mrf.mxu0
    %v11959 = vadd.f32 0.0, %v11958
    %v11960 = vpop.f32.mrf.mxu0
    %v11961 = vadd.f32 0.0, %v11960
    %11962 = vmatprep.mubr.bf16.mxu0 %v10905
    %11963 = vmatmul.mubr.bf16.gmra.mxu0 %v10904
    %v11964 = vpop.f32.mrf.mxu0
    %v11965 = vadd.f32 0.0, %v11964
    %v11966 = vpop.f32.mrf.mxu0
    %v11967 = vadd.f32 0.0, %v11966
    %v11968 = vpop.f32.mrf.mxu0
    %v11969 = vadd.f32 0.0, %v11968
    %v11970 = vpop.f32.mrf.mxu0
    %v11971 = vadd.f32 0.0, %v11970
    %11972 = vmatprep.mubr.bf16.mxu0 %v10909
    %11973 = vmatmul.mubr.bf16.gmra.mxu0 %v10908
    %v11974 = vpop.f32.mrf.mxu0
    %v11975 = vadd.f32 0.0, %v11974
    %v11976 = vpop.f32.mrf.mxu0
    %v11977 = vadd.f32 0.0, %v11976
    %v11978 = vpop.f32.mrf.mxu0
    %v11979 = vadd.f32 0.0, %v11978
    %v11980 = vpop.f32.mrf.mxu0
    %v11981 = vadd.f32 0.0, %v11980
    %11982 = vmatprep.mubr.bf16.mxu0 %v10913
    %11983 = vmatmul.mubr.bf16.gmra.mxu0 %v10912
    %v11984 = vpop.f32.mrf.mxu0
    %v11985 = vadd.f32 0.0, %v11984
    %v11986 = vpop.f32.mrf.mxu0
    %v11987 = vadd.f32 0.0, %v11986
    %v11988 = vpop.f32.mrf.mxu0
    %v11989 = vadd.f32 0.0, %v11988
    %v11990 = vpop.f32.mrf.mxu0
    %v11991 = vadd.f32 0.0, %v11990
    %11992 = vdwg.mxu0
    %11993 = vmatprep.subr.bf16.mxu0 %v11523
    %11994 = vmatpush1.bf16.msra.mxu0 %v11522
    %11995 = vmatprep.subr.bf16.mxu0 %v11519
    %11996 = vmatpush1.bf16.msra.mxu0 %v11518
    %11997 = vmatprep.subr.bf16.mxu0 %v11515
    %11998 = vmatpush1.bf16.msra.mxu0 %v11514
    %11999 = vmatprep.subr.bf16.mxu0 %v11511
    %12000 = vmatpush1.bf16.msra.mxu0 %v11510
    %12001 = vmatprep.subr.bf16.mxu0 %v11507
    %12002 = vmatpush1.bf16.msra.mxu0 %v11506
    %12003 = vmatprep.subr.bf16.mxu0 %v11503
    %12004 = vmatpush1.bf16.msra.mxu0 %v11502
    %12005 = vmatprep.subr.bf16.mxu0 %v11499
    %12006 = vmatpush1.bf16.msra.mxu0 %v11498
    %12007 = vmatprep.subr.bf16.mxu0 %v11495
    %12008 = vmatpush1.bf16.msra.mxu0 %v11494
    %12009 = vmatprep.subr.bf16.mxu0 %v11555
    %12010 = vmatpush2.bf16.msra.mxu0 %v11554
    %12011 = vmatprep.subr.bf16.mxu0 %v11551
    %12012 = vmatpush2.bf16.msra.mxu0 %v11550
    %12013 = vmatprep.subr.bf16.mxu0 %v11547
    %12014 = vmatpush2.bf16.msra.mxu0 %v11546
    %12015 = vmatprep.subr.bf16.mxu0 %v11543
    %12016 = vmatpush2.bf16.msra.mxu0 %v11542
    %12017 = vmatprep.subr.bf16.mxu0 %v11539
    %12018 = vmatpush2.bf16.msra.mxu0 %v11538
    %12019 = vmatprep.subr.bf16.mxu0 %v11535
    %12020 = vmatpush2.bf16.msra.mxu0 %v11534
    %12021 = vmatprep.subr.bf16.mxu0 %v11531
    %12022 = vmatpush2.bf16.msra.mxu0 %v11530
    %12023 = vmatprep.subr.bf16.mxu0 %v11527
    %12024 = vmatpush2.bf16.msra.mxu0 %v11526
    %12025 = vmatprep.mubr.bf16.mxu0 %v10891
    %12026 = vmatmul.mubr.bf16.gmra.mxu0 %v10890
    %v12027 = vpop.f32.mrf.mxu0
    %v12028 = vadd.f32 %v11925, %v12027
    %v12029 = vpop.f32.mrf.mxu0
    %v12030 = vadd.f32 %v11927, %v12029
    %v12031 = vpop.f32.mrf.mxu0
    %v12032 = vadd.f32 %v11929, %v12031
    %v12033 = vpop.f32.mrf.mxu0
    %v12034 = vadd.f32 %v11931, %v12033
    %12035 = vmatprep.mubr.bf16.mxu0 %v10895
    %12036 = vmatmul.mubr.bf16.gmra.mxu0 %v10894
    %v12037 = vpop.f32.mrf.mxu0
    %v12038 = vadd.f32 %v11935, %v12037
    %v12039 = vpop.f32.mrf.mxu0
    %v12040 = vadd.f32 %v11937, %v12039
    %v12041 = vpop.f32.mrf.mxu0
    %v12042 = vadd.f32 %v11939, %v12041
    %v12043 = vpop.f32.mrf.mxu0
    %v12044 = vadd.f32 %v11941, %v12043
    %12045 = vmatprep.mubr.bf16.mxu0 %v10899
    %12046 = vmatmul.mubr.bf16.gmra.mxu0 %v10898
    %v12047 = vpop.f32.mrf.mxu0
    %v12048 = vadd.f32 %v11945, %v12047
    %v12049 = vpop.f32.mrf.mxu0
    %v12050 = vadd.f32 %v11947, %v12049
    %v12051 = vpop.f32.mrf.mxu0
    %v12052 = vadd.f32 %v11949, %v12051
    %v12053 = vpop.f32.mrf.mxu0
    %v12054 = vadd.f32 %v11951, %v12053
    %12055 = vmatprep.mubr.bf16.mxu0 %v10903
    %12056 = vmatmul.mubr.bf16.gmra.mxu0 %v10902
    %v12057 = vpop.f32.mrf.mxu0
    %v12058 = vadd.f32 %v11955, %v12057
    %v12059 = vpop.f32.mrf.mxu0
    %v12060 = vadd.f32 %v11957, %v12059
    %v12061 = vpop.f32.mrf.mxu0
    %v12062 = vadd.f32 %v11959, %v12061
    %v12063 = vpop.f32.mrf.mxu0
    %v12064 = vadd.f32 %v11961, %v12063
    %12065 = vmatprep.mubr.bf16.mxu0 %v10907
    %12066 = vmatmul.mubr.bf16.gmra.mxu0 %v10906
    %v12067 = vpop.f32.mrf.mxu0
    %v12068 = vadd.f32 %v11965, %v12067
    %v12069 = vpop.f32.mrf.mxu0
    %v12070 = vadd.f32 %v11967, %v12069
    %v12071 = vpop.f32.mrf.mxu0
    %v12072 = vadd.f32 %v11969, %v12071
    %v12073 = vpop.f32.mrf.mxu0
    %v12074 = vadd.f32 %v11971, %v12073
    %12075 = vmatprep.mubr.bf16.mxu0 %v10911
    %12076 = vmatmul.mubr.bf16.gmra.mxu0 %v10910
    %v12077 = vpop.f32.mrf.mxu0
    %v12078 = vadd.f32 %v11975, %v12077
    %v12079 = vpop.f32.mrf.mxu0
    %v12080 = vadd.f32 %v11977, %v12079
    %v12081 = vpop.f32.mrf.mxu0
    %v12082 = vadd.f32 %v11979, %v12081
    %v12083 = vpop.f32.mrf.mxu0
    %v12084 = vadd.f32 %v11981, %v12083
    %12085 = vmatprep.mubr.bf16.mxu0 %v10915
    %12086 = vmatmul.mubr.bf16.gmra.mxu0 %v10914
    %v12087 = vpop.f32.mrf.mxu0
    %v12088 = vadd.f32 %v11985, %v12087
    %v12089 = vpop.f32.mrf.mxu0
    %v12090 = vadd.f32 %v11987, %v12089
    %v12091 = vpop.f32.mrf.mxu0
    %v12092 = vadd.f32 %v11989, %v12091
    %v12093 = vpop.f32.mrf.mxu0
    %v12094 = vadd.f32 %v11991, %v12093
    %12095 = vdwg.mxu0
    %v12096 = vld [vmem:[#allocation10] sm:$0xff]
    %v12097 = vld [vmem:[#allocation10 + $0x8] sm:$0xff]
    %v12098 = vld [vmem:[#allocation10 + $0x10] sm:$0xff]
    %v12099 = vld [vmem:[#allocation10 + $0x18] sm:$0xff]
    %v12100 = vld [vmem:[#allocation10 + $0x20] sm:$0xff]
    %v12101 = vld [vmem:[#allocation10 + $0x28] sm:$0xff]
    %v12102 = vld [vmem:[#allocation10 + $0x30] sm:$0xff]
    %v12103 = vld [vmem:[#allocation10 + $0x38] sm:$0xff]
    %v12104 = vld [vmem:[#allocation10 + $0x40] sm:$0xff]
    %v12105 = vld [vmem:[#allocation10 + $0x48] sm:$0xff]
    %v12106 = vld [vmem:[#allocation10 + $0x50] sm:$0xff]
    %v12107 = vld [vmem:[#allocation10 + $0x58] sm:$0xff]
    %v12108 = vld [vmem:[#allocation10 + $0x60] sm:$0xff]
    %v12109 = vld [vmem:[#allocation10 + $0x68] sm:$0xff]
    %v12110 = vld [vmem:[#allocation10 + $0x70] sm:$0xff]
    %v12111 = vld [vmem:[#allocation10 + $0x78] sm:$0xff]
    %v12112 = vld [vmem:[#allocation10 + $0x80] sm:$0xff]
    %v12113 = vld [vmem:[#allocation10 + $0x88] sm:$0xff]
    %v12114 = vld [vmem:[#allocation10 + $0x90] sm:$0xff]
    %v12115 = vld [vmem:[#allocation10 + $0x98] sm:$0xff]
    %v12116 = vld [vmem:[#allocation10 + $0xa0] sm:$0xff]
    %v12117 = vld [vmem:[#allocation10 + $0xa8] sm:$0xff]
    %v12118 = vld [vmem:[#allocation10 + $0xb0] sm:$0xff]
    %v12119 = vld [vmem:[#allocation10 + $0xb8] sm:$0xff]
    %v12120 = vld [vmem:[#allocation10 + $0xc0] sm:$0xff]
    %v12121 = vld [vmem:[#allocation10 + $0xc8] sm:$0xff]
    %v12122 = vld [vmem:[#allocation10 + $0xd0] sm:$0xff]
    %v12123 = vld [vmem:[#allocation10 + $0xd8] sm:$0xff]
    %s12124 = scalar_lea.vmem [#allocation10], 224
    %v12125 = vld [vmem:[%s12124] sm:$0xff]
    %v12126 = vld [vmem:[%s12124 + $0x8] sm:$0xff]
    %v12127 = vld [vmem:[%s12124 + $0x10] sm:$0xff]
    %v12128 = vld [vmem:[%s12124 + $0x18] sm:$0xff]
    %v12129 = vld [vmem:[%s12124 + $0x20] sm:$0xff]
    %v12130 = vld [vmem:[%s12124 + $0x28] sm:$0xff]
    %v12131 = vld [vmem:[%s12124 + $0x30] sm:$0xff]
    %v12132 = vld [vmem:[%s12124 + $0x38] sm:$0xff]
    %v12133 = vld [vmem:[%s12124 + $0x40] sm:$0xff]
    %v12134 = vld [vmem:[%s12124 + $0x48] sm:$0xff]
    %v12135 = vld [vmem:[%s12124 + $0x50] sm:$0xff]
    %v12136 = vld [vmem:[%s12124 + $0x58] sm:$0xff]
    %v12137 = vld [vmem:[%s12124 + $0x60] sm:$0xff]
    %v12138 = vld [vmem:[%s12124 + $0x68] sm:$0xff]
    %v12139 = vld [vmem:[%s12124 + $0x70] sm:$0xff]
    %v12140 = vld [vmem:[%s12124 + $0x78] sm:$0xff]
    %v12141 = vld [vmem:[%s12124 + $0x80] sm:$0xff]
    %v12142 = vld [vmem:[%s12124 + $0x88] sm:$0xff]
    %v12143 = vld [vmem:[%s12124 + $0x90] sm:$0xff]
    %v12144 = vld [vmem:[%s12124 + $0x98] sm:$0xff]
    %v12145 = vld [vmem:[%s12124 + $0xa0] sm:$0xff]
    %v12146 = vld [vmem:[%s12124 + $0xa8] sm:$0xff]
    %v12147 = vld [vmem:[%s12124 + $0xb0] sm:$0xff]
    %v12148 = vld [vmem:[%s12124 + $0xb8] sm:$0xff]
    %v12149 = vld [vmem:[%s12124 + $0xc0] sm:$0xff]
    %v12150 = vld [vmem:[%s12124 + $0xc8] sm:$0xff]
    %v12151 = vld [vmem:[%s12124 + $0xd0] sm:$0xff]
    %v12152 = vld [vmem:[%s12124 + $0xd8] sm:$0xff]
    %vm12153 = vcmask 916480
    %v12155 = vsel %vm12153, %v12125, 0
    %v12158 = vsel %vm12153, %v12126, 0
    %v12161 = vsel %vm12153, %v12127, 0
    %v12164 = vsel %vm12153, %v12128, 0
    %v12167 = vsel %vm12153, %v12129, 0
    %v12170 = vsel %vm12153, %v12130, 0
    %v12173 = vsel %vm12153, %v12131, 0
    %v12176 = vsel %vm12153, %v12132, 0
    %v12179 = vsel %vm12153, %v12133, 0
    %v12182 = vsel %vm12153, %v12134, 0
    %v12185 = vsel %vm12153, %v12135, 0
    %v12188 = vsel %vm12153, %v12136, 0
    %v12191 = vsel %vm12153, %v12137, 0
    %v12194 = vsel %vm12153, %v12138, 0
    %v12197 = vsel %vm12153, %v12139, 0
    %v12200 = vsel %vm12153, %v12140, 0
    %v12203 = vsel %vm12153, %v12141, 0
    %v12206 = vsel %vm12153, %v12142, 0
    %v12209 = vsel %vm12153, %v12143, 0
    %v12212 = vsel %vm12153, %v12144, 0
    %v12215 = vsel %vm12153, %v12145, 0
    %v12218 = vsel %vm12153, %v12146, 0
    %v12221 = vsel %vm12153, %v12147, 0
    %v12224 = vsel %vm12153, %v12148, 0
    %v12227 = vsel %vm12153, %v12149, 0
    %v12230 = vsel %vm12153, %v12150, 0
    %v12233 = vsel %vm12153, %v12151, 0
    %v12236 = vsel %vm12153, %v12152, 0
    %12238 = vmatprep.subr.mxu0 0.0
    %12239 = vmatpush1.msra.mxu0 0.0
    %12240 = vmatprep.subr.mxu0 0.0
    %12241 = vmatpush1.msra.mxu0 0.0
    %12242 = vmatprep.subr.mxu0 0.0
    %12243 = vmatpush1.msra.mxu0 %v11888
    %12244 = vmatprep.subr.mxu0 0.0
    %12245 = vmatpush1.msra.mxu0 %v11884
    %12246 = vmatprep.subr.mxu0 0.0
    %12247 = vmatpush1.msra.mxu0 %v11878
    %12248 = vmatprep.subr.mxu0 0.0
    %12249 = vmatpush1.msra.mxu0 %v11874
    %12250 = vmatprep.subr.mxu0 0.0
    %12251 = vmatpush1.msra.mxu0 %v11868
    %12252 = vmatprep.subr.mxu0 0.0
    %12253 = vmatpush1.msra.mxu0 %v11864
    %12254 = vmatprep.subr.mxu0 0.0
    %12255 = vmatpush1.msra.mxu0 %v11858
    %12256 = vmatprep.subr.mxu0 0.0
    %12257 = vmatpush1.msra.mxu0 %v11854
    %12258 = vmatprep.subr.mxu0 0.0
    %12259 = vmatpush1.msra.mxu0 %v11848
    %12260 = vmatprep.subr.mxu0 0.0
    %12261 = vmatpush1.msra.mxu0 %v11844
    %12262 = vmatprep.subr.mxu0 0.0
    %12263 = vmatpush1.msra.mxu0 %v11838
    %12264 = vmatprep.subr.mxu0 0.0
    %12265 = vmatpush1.msra.mxu0 %v11834
    %12266 = vmatprep.subr.mxu0 0.0
    %12267 = vmatpush1.msra.mxu0 %v11828
    %12268 = vmatprep.subr.mxu0 0.0
    %12269 = vmatpush1.msra.mxu0 %v11824
    %12270 = vmatprep.subr.mxu0 0.0
    %12271 = vmatpush2.msra.mxu0 0.0
    %12272 = vmatprep.subr.mxu0 0.0
    %12273 = vmatpush2.msra.mxu0 0.0
    %12274 = vmatprep.subr.mxu0 0.0
    %12275 = vmatpush2.msra.mxu0 0.0
    %12276 = vmatprep.subr.mxu0 0.0
    %12277 = vmatpush2.msra.mxu0 0.0
    %12278 = vmatprep.subr.mxu0 0.0
    %12279 = vmatpush2.msra.mxu0 0.0
    %12280 = vmatprep.subr.mxu0 0.0
    %12281 = vmatpush2.msra.mxu0 0.0
    %12282 = vmatprep.subr.mxu0 0.0
    %12283 = vmatpush2.msra.mxu0 0.0
    %12284 = vmatprep.subr.mxu0 0.0
    %12285 = vmatpush2.msra.mxu0 0.0
    %12286 = vmatprep.subr.mxu0 0.0
    %12287 = vmatpush2.msra.mxu0 0.0
    %12288 = vmatprep.subr.mxu0 0.0
    %12289 = vmatpush2.msra.mxu0 0.0
    %12290 = vmatprep.subr.mxu0 0.0
    %12291 = vmatpush2.msra.mxu0 0.0
    %12292 = vmatprep.subr.mxu0 0.0
    %12293 = vmatpush2.msra.mxu0 0.0
    %12294 = vmatprep.subr.mxu0 0.0
    %12295 = vmatpush2.msra.mxu0 0.0
    %12296 = vmatprep.subr.mxu0 0.0
    %12297 = vmatpush2.msra.mxu0 0.0
    %12298 = vmatprep.subr.mxu0 0.0
    %12299 = vmatpush2.msra.mxu0 0.0
    %12300 = vmatprep.subr.mxu0 0.0
    %12301 = vmatpush2.msra.mxu0 0.0
    %12302 = vmatprep.mubr.f32.mxu0 0.0
    %12303 = vmatmul.mubr.f32.gmra.mxu0 %v12155
    %v12304 = vpop.f32.mrf.mxu0
    %v12305 = vadd.f32 0.0, %v12304
    %v12306 = vpop.f32.mrf.mxu0
    %12307 = vmatprep.mubr.f32.mxu0 0.0
    %12308 = vmatmul.mubr.f32.gmra.mxu0 %v12158
    %v12309 = vpop.f32.mrf.mxu0
    %v12310 = vadd.f32 0.0, %v12309
    %v12311 = vpop.f32.mrf.mxu0
    %12312 = vmatprep.mubr.f32.mxu0 0.0
    %12313 = vmatmul.mubr.f32.gmra.mxu0 %v12161
    %v12314 = vpop.f32.mrf.mxu0
    %v12315 = vadd.f32 0.0, %v12314
    %v12316 = vpop.f32.mrf.mxu0
    %12317 = vmatprep.mubr.f32.mxu0 0.0
    %12318 = vmatmul.mubr.f32.gmra.mxu0 %v12164
    %v12319 = vpop.f32.mrf.mxu0
    %v12320 = vadd.f32 0.0, %v12319
    %v12321 = vpop.f32.mrf.mxu0
    %12322 = vmatprep.mubr.f32.mxu0 0.0
    %12323 = vmatmul.mubr.f32.gmra.mxu0 %v12167
    %v12324 = vpop.f32.mrf.mxu0
    %v12325 = vadd.f32 0.0, %v12324
    %v12326 = vpop.f32.mrf.mxu0
    %12327 = vmatprep.mubr.f32.mxu0 0.0
    %12328 = vmatmul.mubr.f32.gmra.mxu0 %v12170
    %v12329 = vpop.f32.mrf.mxu0
    %v12330 = vadd.f32 0.0, %v12329
    %v12331 = vpop.f32.mrf.mxu0
    %12332 = vmatprep.mubr.f32.mxu0 0.0
    %12333 = vmatmul.mubr.f32.gmra.mxu0 %v12173
    %v12334 = vpop.f32.mrf.mxu0
    %v12335 = vadd.f32 0.0, %v12334
    %v12336 = vpop.f32.mrf.mxu0
    %12337 = vmatprep.mubr.f32.mxu0 0.0
    %12338 = vmatmul.mubr.f32.gmra.mxu0 %v12176
    %v12339 = vpop.f32.mrf.mxu0
    %v12340 = vadd.f32 0.0, %v12339
    %v12341 = vpop.f32.mrf.mxu0
    %12342 = vmatprep.mubr.f32.mxu0 0.0
    %12343 = vmatmul.mubr.f32.gmra.mxu0 %v12179
    %v12344 = vpop.f32.mrf.mxu0
    %v12345 = vadd.f32 0.0, %v12344
    %v12346 = vpop.f32.mrf.mxu0
    %12347 = vmatprep.mubr.f32.mxu0 0.0
    %12348 = vmatmul.mubr.f32.gmra.mxu0 %v12182
    %v12349 = vpop.f32.mrf.mxu0
    %v12350 = vadd.f32 0.0, %v12349
    %v12351 = vpop.f32.mrf.mxu0
    %12352 = vmatprep.mubr.f32.mxu0 0.0
    %12353 = vmatmul.mubr.f32.gmra.mxu0 %v12185
    %v12354 = vpop.f32.mrf.mxu0
    %v12355 = vadd.f32 0.0, %v12354
    %v12356 = vpop.f32.mrf.mxu0
    %12357 = vmatprep.mubr.f32.mxu0 0.0
    %12358 = vmatmul.mubr.f32.gmra.mxu0 %v12188
    %v12359 = vpop.f32.mrf.mxu0
    %v12360 = vadd.f32 0.0, %v12359
    %v12361 = vpop.f32.mrf.mxu0
    %12362 = vmatprep.mubr.f32.mxu0 0.0
    %12363 = vmatmul.mubr.f32.gmra.mxu0 %v12191
    %v12364 = vpop.f32.mrf.mxu0
    %v12365 = vadd.f32 0.0, %v12364
    %v12366 = vpop.f32.mrf.mxu0
    %12367 = vmatprep.mubr.f32.mxu0 0.0
    %12368 = vmatmul.mubr.f32.gmra.mxu0 %v12194
    %v12369 = vpop.f32.mrf.mxu0
    %v12370 = vadd.f32 0.0, %v12369
    %v12371 = vpop.f32.mrf.mxu0
    %12372 = vmatprep.mubr.f32.mxu0 0.0
    %12373 = vmatmul.mubr.f32.gmra.mxu0 %v12197
    %v12374 = vpop.f32.mrf.mxu0
    %v12375 = vadd.f32 0.0, %v12374
    %v12376 = vpop.f32.mrf.mxu0
    %12377 = vmatprep.mubr.f32.mxu0 0.0
    %12378 = vmatmul.mubr.f32.gmra.mxu0 %v12200
    %v12379 = vpop.f32.mrf.mxu0
    %v12380 = vadd.f32 0.0, %v12379
    %v12381 = vpop.f32.mrf.mxu0
    %12382 = vmatprep.mubr.f32.mxu0 0.0
    %12383 = vmatmul.mubr.f32.gmra.mxu0 %v12203
    %v12384 = vpop.f32.mrf.mxu0
    %v12385 = vadd.f32 0.0, %v12384
    %v12386 = vpop.f32.mrf.mxu0
    %12387 = vmatprep.mubr.f32.mxu0 0.0
    %12388 = vmatmul.mubr.f32.gmra.mxu0 %v12206
    %v12389 = vpop.f32.mrf.mxu0
    %v12390 = vadd.f32 0.0, %v12389
    %v12391 = vpop.f32.mrf.mxu0
    %12392 = vmatprep.mubr.f32.mxu0 0.0
    %12393 = vmatmul.mubr.f32.gmra.mxu0 %v12209
    %v12394 = vpop.f32.mrf.mxu0
    %v12395 = vadd.f32 0.0, %v12394
    %v12396 = vpop.f32.mrf.mxu0
    %12397 = vmatprep.mubr.f32.mxu0 0.0
    %12398 = vmatmul.mubr.f32.gmra.mxu0 %v12212
    %v12399 = vpop.f32.mrf.mxu0
    %v12400 = vadd.f32 0.0, %v12399
    %v12401 = vpop.f32.mrf.mxu0
    %12402 = vmatprep.mubr.f32.mxu0 0.0
    %12403 = vmatmul.mubr.f32.gmra.mxu0 %v12215
    %v12404 = vpop.f32.mrf.mxu0
    %v12405 = vadd.f32 0.0, %v12404
    %v12406 = vpop.f32.mrf.mxu0
    %12407 = vmatprep.mubr.f32.mxu0 0.0
    %12408 = vmatmul.mubr.f32.gmra.mxu0 %v12218
    %v12409 = vpop.f32.mrf.mxu0
    %v12410 = vadd.f32 0.0, %v12409
    %v12411 = vpop.f32.mrf.mxu0
    %12412 = vmatprep.mubr.f32.mxu0 0.0
    %12413 = vmatmul.mubr.f32.gmra.mxu0 %v12221
    %v12414 = vpop.f32.mrf.mxu0
    %v12415 = vadd.f32 0.0, %v12414
    %v12416 = vpop.f32.mrf.mxu0
    %12417 = vmatprep.mubr.f32.mxu0 0.0
    %12418 = vmatmul.mubr.f32.gmra.mxu0 %v12224
    %v12419 = vpop.f32.mrf.mxu0
    %v12420 = vadd.f32 0.0, %v12419
    %v12421 = vpop.f32.mrf.mxu0
    %12422 = vmatprep.mubr.f32.mxu0 0.0
    %12423 = vmatmul.mubr.f32.gmra.mxu0 %v12227
    %v12424 = vpop.f32.mrf.mxu0
    %v12425 = vadd.f32 0.0, %v12424
    %v12426 = vpop.f32.mrf.mxu0
    %12427 = vmatprep.mubr.f32.mxu0 0.0
    %12428 = vmatmul.mubr.f32.gmra.mxu0 %v12230
    %v12429 = vpop.f32.mrf.mxu0
    %v12430 = vadd.f32 0.0, %v12429
    %v12431 = vpop.f32.mrf.mxu0
    %12432 = vmatprep.mubr.f32.mxu0 0.0
    %12433 = vmatmul.mubr.f32.gmra.mxu0 %v12233
    %v12434 = vpop.f32.mrf.mxu0
    %v12435 = vadd.f32 0.0, %v12434
    %v12436 = vpop.f32.mrf.mxu0
    %12437 = vmatprep.mubr.f32.mxu0 0.0
    %12438 = vmatmul.mubr.f32.gmra.mxu0 %v12236
    %v12439 = vpop.f32.mrf.mxu0
    %v12440 = vadd.f32 0.0, %v12439
    %v12441 = vpop.f32.mrf.mxu0
    %12442 = vdwg.mxu0
    %v12444 = vsel %vm12153, %v12096, 0
    %v12447 = vsel %vm12153, %v12097, 0
    %v12450 = vsel %vm12153, %v12098, 0
    %v12453 = vsel %vm12153, %v12099, 0
    %v12456 = vsel %vm12153, %v12100, 0
    %v12459 = vsel %vm12153, %v12101, 0
    %v12462 = vsel %vm12153, %v12102, 0
    %v12465 = vsel %vm12153, %v12103, 0
    %v12468 = vsel %vm12153, %v12104, 0
    %v12471 = vsel %vm12153, %v12105, 0
    %v12474 = vsel %vm12153, %v12106, 0
    %v12477 = vsel %vm12153, %v12107, 0
    %v12480 = vsel %vm12153, %v12108, 0
    %v12483 = vsel %vm12153, %v12109, 0
    %v12486 = vsel %vm12153, %v12110, 0
    %v12489 = vsel %vm12153, %v12111, 0
    %v12492 = vsel %vm12153, %v12112, 0
    %v12495 = vsel %vm12153, %v12113, 0
    %v12498 = vsel %vm12153, %v12114, 0
    %v12501 = vsel %vm12153, %v12115, 0
    %v12504 = vsel %vm12153, %v12116, 0
    %v12507 = vsel %vm12153, %v12117, 0
    %v12510 = vsel %vm12153, %v12118, 0
    %v12513 = vsel %vm12153, %v12119, 0
    %v12516 = vsel %vm12153, %v12120, 0
    %v12519 = vsel %vm12153, %v12121, 0
    %v12522 = vsel %vm12153, %v12122, 0
    %v12525 = vsel %vm12153, %v12123, 0
    %12527 = vmatprep.subr.mxu0 0.0
    %12528 = vmatpush1.msra.mxu0 0.0
    %12529 = vmatprep.subr.mxu0 0.0
    %12530 = vmatpush1.msra.mxu0 0.0
    %12531 = vmatprep.subr.mxu0 0.0
    %12532 = vmatpush1.msra.mxu0 %v11886
    %12533 = vmatprep.subr.mxu0 0.0
    %12534 = vmatpush1.msra.mxu0 %v11882
    %12535 = vmatprep.subr.mxu0 0.0
    %12536 = vmatpush1.msra.mxu0 %v11876
    %12537 = vmatprep.subr.mxu0 0.0
    %12538 = vmatpush1.msra.mxu0 %v11872
    %12539 = vmatprep.subr.mxu0 0.0
    %12540 = vmatpush1.msra.mxu0 %v11866
    %12541 = vmatprep.subr.mxu0 0.0
    %12542 = vmatpush1.msra.mxu0 %v11862
    %12543 = vmatprep.subr.mxu0 0.0
    %12544 = vmatpush1.msra.mxu0 %v11856
    %12545 = vmatprep.subr.mxu0 0.0
    %12546 = vmatpush1.msra.mxu0 %v11852
    %12547 = vmatprep.subr.mxu0 0.0
    %12548 = vmatpush1.msra.mxu0 %v11846
    %12549 = vmatprep.subr.mxu0 0.0
    %12550 = vmatpush1.msra.mxu0 %v11842
    %12551 = vmatprep.subr.mxu0 0.0
    %12552 = vmatpush1.msra.mxu0 %v11836
    %12553 = vmatprep.subr.mxu0 0.0
    %12554 = vmatpush1.msra.mxu0 %v11832
    %12555 = vmatprep.subr.mxu0 0.0
    %12556 = vmatpush1.msra.mxu0 %v11826
    %12557 = vmatprep.subr.mxu0 0.0
    %12558 = vmatpush1.msra.mxu0 %v11822
    %12559 = vmatprep.subr.mxu0 0.0
    %12560 = vmatpush2.msra.mxu0 0.0
    %12561 = vmatprep.subr.mxu0 0.0
    %12562 = vmatpush2.msra.mxu0 0.0
    %12563 = vmatprep.subr.mxu0 0.0
    %12564 = vmatpush2.msra.mxu0 0.0
    %12565 = vmatprep.subr.mxu0 0.0
    %12566 = vmatpush2.msra.mxu0 0.0
    %12567 = vmatprep.subr.mxu0 0.0
    %12568 = vmatpush2.msra.mxu0 0.0
    %12569 = vmatprep.subr.mxu0 0.0
    %12570 = vmatpush2.msra.mxu0 0.0
    %12571 = vmatprep.subr.mxu0 0.0
    %12572 = vmatpush2.msra.mxu0 0.0
    %12573 = vmatprep.subr.mxu0 0.0
    %12574 = vmatpush2.msra.mxu0 0.0
    %12575 = vmatprep.subr.mxu0 0.0
    %12576 = vmatpush2.msra.mxu0 0.0
    %12577 = vmatprep.subr.mxu0 0.0
    %12578 = vmatpush2.msra.mxu0 0.0
    %12579 = vmatprep.subr.mxu0 0.0
    %12580 = vmatpush2.msra.mxu0 0.0
    %12581 = vmatprep.subr.mxu0 0.0
    %12582 = vmatpush2.msra.mxu0 0.0
    %12583 = vmatprep.subr.mxu0 0.0
    %12584 = vmatpush2.msra.mxu0 0.0
    %12585 = vmatprep.subr.mxu0 0.0
    %12586 = vmatpush2.msra.mxu0 0.0
    %12587 = vmatprep.subr.mxu0 0.0
    %12588 = vmatpush2.msra.mxu0 0.0
    %12589 = vmatprep.subr.mxu0 0.0
    %12590 = vmatpush2.msra.mxu0 0.0
    %12591 = vmatprep.mubr.f32.mxu0 0.0
    %12592 = vmatmul.mubr.f32.gmra.mxu0 %v12444
    %v12593 = vpop.f32.mrf.mxu0
    %v12594 = vadd.f32 %v12305, %v12593
    %v12595 = vpop.f32.mrf.mxu0
    %12596 = vmatprep.mubr.f32.mxu0 0.0
    %12597 = vmatmul.mubr.f32.gmra.mxu0 %v12447
    %v12598 = vpop.f32.mrf.mxu0
    %v12599 = vadd.f32 %v12310, %v12598
    %v12600 = vpop.f32.mrf.mxu0
    %12601 = vmatprep.mubr.f32.mxu0 0.0
    %12602 = vmatmul.mubr.f32.gmra.mxu0 %v12450
    %v12603 = vpop.f32.mrf.mxu0
    %v12604 = vadd.f32 %v12315, %v12603
    %v12605 = vpop.f32.mrf.mxu0
    %12606 = vmatprep.mubr.f32.mxu0 0.0
    %12607 = vmatmul.mubr.f32.gmra.mxu0 %v12453
    %v12608 = vpop.f32.mrf.mxu0
    %v12609 = vadd.f32 %v12320, %v12608
    %v12610 = vpop.f32.mrf.mxu0
    %12611 = vmatprep.mubr.f32.mxu0 0.0
    %12612 = vmatmul.mubr.f32.gmra.mxu0 %v12456
    %v12613 = vpop.f32.mrf.mxu0
    %v12614 = vadd.f32 %v12325, %v12613
    %v12615 = vpop.f32.mrf.mxu0
    %12616 = vmatprep.mubr.f32.mxu0 0.0
    %12617 = vmatmul.mubr.f32.gmra.mxu0 %v12459
    %v12618 = vpop.f32.mrf.mxu0
    %v12619 = vadd.f32 %v12330, %v12618
    %v12620 = vpop.f32.mrf.mxu0
    %12621 = vmatprep.mubr.f32.mxu0 0.0
    %12622 = vmatmul.mubr.f32.gmra.mxu0 %v12462
    %v12623 = vpop.f32.mrf.mxu0
    %v12624 = vadd.f32 %v12335, %v12623
    %v12625 = vpop.f32.mrf.mxu0
    %12626 = vmatprep.mubr.f32.mxu0 0.0
    %12627 = vmatmul.mubr.f32.gmra.mxu0 %v12465
    %v12628 = vpop.f32.mrf.mxu0
    %v12629 = vadd.f32 %v12340, %v12628
    %v12630 = vpop.f32.mrf.mxu0
    %12631 = vmatprep.mubr.f32.mxu0 0.0
    %12632 = vmatmul.mubr.f32.gmra.mxu0 %v12468
    %v12633 = vpop.f32.mrf.mxu0
    %v12634 = vadd.f32 %v12345, %v12633
    %v12635 = vpop.f32.mrf.mxu0
    %12636 = vmatprep.mubr.f32.mxu0 0.0
    %12637 = vmatmul.mubr.f32.gmra.mxu0 %v12471
    %v12638 = vpop.f32.mrf.mxu0
    %v12639 = vadd.f32 %v12350, %v12638
    %v12640 = vpop.f32.mrf.mxu0
    %12641 = vmatprep.mubr.f32.mxu0 0.0
    %12642 = vmatmul.mubr.f32.gmra.mxu0 %v12474
    %v12643 = vpop.f32.mrf.mxu0
    %v12644 = vadd.f32 %v12355, %v12643
    %v12645 = vpop.f32.mrf.mxu0
    %12646 = vmatprep.mubr.f32.mxu0 0.0
    %12647 = vmatmul.mubr.f32.gmra.mxu0 %v12477
    %v12648 = vpop.f32.mrf.mxu0
    %v12649 = vadd.f32 %v12360, %v12648
    %v12650 = vpop.f32.mrf.mxu0
    %12651 = vmatprep.mubr.f32.mxu0 0.0
    %12652 = vmatmul.mubr.f32.gmra.mxu0 %v12480
    %v12653 = vpop.f32.mrf.mxu0
    %v12654 = vadd.f32 %v12365, %v12653
    %v12655 = vpop.f32.mrf.mxu0
    %12656 = vmatprep.mubr.f32.mxu0 0.0
    %12657 = vmatmul.mubr.f32.gmra.mxu0 %v12483
    %v12658 = vpop.f32.mrf.mxu0
    %v12659 = vadd.f32 %v12370, %v12658
    %v12660 = vpop.f32.mrf.mxu0
    %12661 = vmatprep.mubr.f32.mxu0 0.0
    %12662 = vmatmul.mubr.f32.gmra.mxu0 %v12486
    %v12663 = vpop.f32.mrf.mxu0
    %v12664 = vadd.f32 %v12375, %v12663
    %v12665 = vpop.f32.mrf.mxu0
    %12666 = vmatprep.mubr.f32.mxu0 0.0
    %12667 = vmatmul.mubr.f32.gmra.mxu0 %v12489
    %v12668 = vpop.f32.mrf.mxu0
    %v12669 = vadd.f32 %v12380, %v12668
    %v12670 = vpop.f32.mrf.mxu0
    %12671 = vmatprep.mubr.f32.mxu0 0.0
    %12672 = vmatmul.mubr.f32.gmra.mxu0 %v12492
    %v12673 = vpop.f32.mrf.mxu0
    %v12674 = vadd.f32 %v12385, %v12673
    %v12675 = vpop.f32.mrf.mxu0
    %12676 = vmatprep.mubr.f32.mxu0 0.0
    %12677 = vmatmul.mubr.f32.gmra.mxu0 %v12495
    %v12678 = vpop.f32.mrf.mxu0
    %v12679 = vadd.f32 %v12390, %v12678
    %v12680 = vpop.f32.mrf.mxu0
    %12681 = vmatprep.mubr.f32.mxu0 0.0
    %12682 = vmatmul.mubr.f32.gmra.mxu0 %v12498
    %v12683 = vpop.f32.mrf.mxu0
    %v12684 = vadd.f32 %v12395, %v12683
    %v12685 = vpop.f32.mrf.mxu0
    %12686 = vmatprep.mubr.f32.mxu0 0.0
    %12687 = vmatmul.mubr.f32.gmra.mxu0 %v12501
    %v12688 = vpop.f32.mrf.mxu0
    %v12689 = vadd.f32 %v12400, %v12688
    %v12690 = vpop.f32.mrf.mxu0
    %12691 = vmatprep.mubr.f32.mxu0 0.0
    %12692 = vmatmul.mubr.f32.gmra.mxu0 %v12504
    %v12693 = vpop.f32.mrf.mxu0
    %v12694 = vadd.f32 %v12405, %v12693
    %v12695 = vpop.f32.mrf.mxu0
    %12696 = vmatprep.mubr.f32.mxu0 0.0
    %12697 = vmatmul.mubr.f32.gmra.mxu0 %v12507
    %v12698 = vpop.f32.mrf.mxu0
    %v12699 = vadd.f32 %v12410, %v12698
    %v12700 = vpop.f32.mrf.mxu0
    %12701 = vmatprep.mubr.f32.mxu0 0.0
    %12702 = vmatmul.mubr.f32.gmra.mxu0 %v12510
    %v12703 = vpop.f32.mrf.mxu0
    %v12704 = vadd.f32 %v12415, %v12703
    %v12705 = vpop.f32.mrf.mxu0
    %12706 = vmatprep.mubr.f32.mxu0 0.0
    %12707 = vmatmul.mubr.f32.gmra.mxu0 %v12513
    %v12708 = vpop.f32.mrf.mxu0
    %v12709 = vadd.f32 %v12420, %v12708
    %v12710 = vpop.f32.mrf.mxu0
    %12711 = vmatprep.mubr.f32.mxu0 0.0
    %12712 = vmatmul.mubr.f32.gmra.mxu0 %v12516
    %v12713 = vpop.f32.mrf.mxu0
    %v12714 = vadd.f32 %v12425, %v12713
    %v12715 = vpop.f32.mrf.mxu0
    %12716 = vmatprep.mubr.f32.mxu0 0.0
    %12717 = vmatmul.mubr.f32.gmra.mxu0 %v12519
    %v12718 = vpop.f32.mrf.mxu0
    %v12719 = vadd.f32 %v12430, %v12718
    %v12720 = vpop.f32.mrf.mxu0
    %12721 = vmatprep.mubr.f32.mxu0 0.0
    %12722 = vmatmul.mubr.f32.gmra.mxu0 %v12522
    %v12723 = vpop.f32.mrf.mxu0
    %v12724 = vadd.f32 %v12435, %v12723
    %v12725 = vpop.f32.mrf.mxu0
    %12726 = vmatprep.mubr.f32.mxu0 0.0
    %12727 = vmatmul.mubr.f32.gmra.mxu0 %v12525
    %v12728 = vpop.f32.mrf.mxu0
    %v12729 = vadd.f32 %v12440, %v12728
    %v12730 = vpop.f32.mrf.mxu0
    %12731 = vdwg.mxu0
    %s12732 = scalar_lea.vmem [#allocation10], 448
    %v12733 = vld [vmem:[%s12732] sm:$0xff]
    %v12734 = vld [vmem:[%s12732 + $0x8] sm:$0xff]
    %v12735 = vld [vmem:[%s12732 + $0x10] sm:$0xff]
    %v12736 = vld [vmem:[%s12732 + $0x18] sm:$0xff]
    %v12737 = vld [vmem:[%s12732 + $0x20] sm:$0xff]
    %v12738 = vld [vmem:[%s12732 + $0x28] sm:$0xff]
    %v12739 = vld [vmem:[%s12732 + $0x30] sm:$0xff]
    %v12740 = vld [vmem:[%s12732 + $0x38] sm:$0xff]
    %v12741 = vld [vmem:[%s12732 + $0x40] sm:$0xff]
    %v12742 = vld [vmem:[%s12732 + $0x48] sm:$0xff]
    %v12743 = vld [vmem:[%s12732 + $0x50] sm:$0xff]
    %v12744 = vld [vmem:[%s12732 + $0x58] sm:$0xff]
    %v12745 = vld [vmem:[%s12732 + $0x60] sm:$0xff]
    %v12746 = vld [vmem:[%s12732 + $0x68] sm:$0xff]
    %v12747 = vld [vmem:[%s12732 + $0x70] sm:$0xff]
    %v12748 = vld [vmem:[%s12732 + $0x78] sm:$0xff]
    %v12749 = vld [vmem:[%s12732 + $0x80] sm:$0xff]
    %v12750 = vld [vmem:[%s12732 + $0x88] sm:$0xff]
    %v12751 = vld [vmem:[%s12732 + $0x90] sm:$0xff]
    %v12752 = vld [vmem:[%s12732 + $0x98] sm:$0xff]
    %v12753 = vld [vmem:[%s12732 + $0xa0] sm:$0xff]
    %v12754 = vld [vmem:[%s12732 + $0xa8] sm:$0xff]
    %v12755 = vld [vmem:[%s12732 + $0xb0] sm:$0xff]
    %v12756 = vld [vmem:[%s12732 + $0xb8] sm:$0xff]
    %v12757 = vld [vmem:[%s12732 + $0xc0] sm:$0xff]
    %v12758 = vld [vmem:[%s12732 + $0xc8] sm:$0xff]
    %v12759 = vld [vmem:[%s12732 + $0xd0] sm:$0xff]
    %v12760 = vld [vmem:[%s12732 + $0xd8] sm:$0xff]
    %v12762 = vsel %vm12153, %v12733, 0
    %v12765 = vsel %vm12153, %v12734, 0
    %v12768 = vsel %vm12153, %v12735, 0
    %v12771 = vsel %vm12153, %v12736, 0
    %v12774 = vsel %vm12153, %v12737, 0
    %v12777 = vsel %vm12153, %v12738, 0
    %v12780 = vsel %vm12153, %v12739, 0
    %v12783 = vsel %vm12153, %v12740, 0
    %v12786 = vsel %vm12153, %v12741, 0
    %v12789 = vsel %vm12153, %v12742, 0
    %v12792 = vsel %vm12153, %v12743, 0
    %v12795 = vsel %vm12153, %v12744, 0
    %v12798 = vsel %vm12153, %v12745, 0
    %v12801 = vsel %vm12153, %v12746, 0
    %v12804 = vsel %vm12153, %v12747, 0
    %v12807 = vsel %vm12153, %v12748, 0
    %v12810 = vsel %vm12153, %v12749, 0
    %v12813 = vsel %vm12153, %v12750, 0
    %v12816 = vsel %vm12153, %v12751, 0
    %v12819 = vsel %vm12153, %v12752, 0
    %v12822 = vsel %vm12153, %v12753, 0
    %v12825 = vsel %vm12153, %v12754, 0
    %v12828 = vsel %vm12153, %v12755, 0
    %v12831 = vsel %vm12153, %v12756, 0
    %v12834 = vsel %vm12153, %v12757, 0
    %v12837 = vsel %vm12153, %v12758, 0
    %v12840 = vsel %vm12153, %v12759, 0
    %v12843 = vsel %vm12153, %v12760, 0
    %12845 = vmatprep.subr.mxu0 0.0
    %12846 = vmatpush1.msra.mxu0 0.0
    %12847 = vmatprep.subr.mxu0 0.0
    %12848 = vmatpush1.msra.mxu0 0.0
    %12849 = vmatprep.subr.mxu0 0.0
    %12850 = vmatpush1.msra.mxu0 %v12092
    %12851 = vmatprep.subr.mxu0 0.0
    %12852 = vmatpush1.msra.mxu0 %v12088
    %12853 = vmatprep.subr.mxu0 0.0
    %12854 = vmatpush1.msra.mxu0 %v12082
    %12855 = vmatprep.subr.mxu0 0.0
    %12856 = vmatpush1.msra.mxu0 %v12078
    %12857 = vmatprep.subr.mxu0 0.0
    %12858 = vmatpush1.msra.mxu0 %v12072
    %12859 = vmatprep.subr.mxu0 0.0
    %12860 = vmatpush1.msra.mxu0 %v12068
    %12861 = vmatprep.subr.mxu0 0.0
    %12862 = vmatpush1.msra.mxu0 %v12062
    %12863 = vmatprep.subr.mxu0 0.0
    %12864 = vmatpush1.msra.mxu0 %v12058
    %12865 = vmatprep.subr.mxu0 0.0
    %12866 = vmatpush1.msra.mxu0 %v12052
    %12867 = vmatprep.subr.mxu0 0.0
    %12868 = vmatpush1.msra.mxu0 %v12048
    %12869 = vmatprep.subr.mxu0 0.0
    %12870 = vmatpush1.msra.mxu0 %v12042
    %12871 = vmatprep.subr.mxu0 0.0
    %12872 = vmatpush1.msra.mxu0 %v12038
    %12873 = vmatprep.subr.mxu0 0.0
    %12874 = vmatpush1.msra.mxu0 %v12032
    %12875 = vmatprep.subr.mxu0 0.0
    %12876 = vmatpush1.msra.mxu0 %v12028
    %12877 = vmatprep.subr.mxu0 0.0
    %12878 = vmatpush2.msra.mxu0 0.0
    %12879 = vmatprep.subr.mxu0 0.0
    %12880 = vmatpush2.msra.mxu0 0.0
    %12881 = vmatprep.subr.mxu0 0.0
    %12882 = vmatpush2.msra.mxu0 0.0
    %12883 = vmatprep.subr.mxu0 0.0
    %12884 = vmatpush2.msra.mxu0 0.0
    %12885 = vmatprep.subr.mxu0 0.0
    %12886 = vmatpush2.msra.mxu0 0.0
    %12887 = vmatprep.subr.mxu0 0.0
    %12888 = vmatpush2.msra.mxu0 0.0
    %12889 = vmatprep.subr.mxu0 0.0
    %12890 = vmatpush2.msra.mxu0 0.0
    %12891 = vmatprep.subr.mxu0 0.0
    %12892 = vmatpush2.msra.mxu0 0.0
    %12893 = vmatprep.subr.mxu0 0.0
    %12894 = vmatpush2.msra.mxu0 0.0
    %12895 = vmatprep.subr.mxu0 0.0
    %12896 = vmatpush2.msra.mxu0 0.0
    %12897 = vmatprep.subr.mxu0 0.0
    %12898 = vmatpush2.msra.mxu0 0.0
    %12899 = vmatprep.subr.mxu0 0.0
    %12900 = vmatpush2.msra.mxu0 0.0
    %12901 = vmatprep.subr.mxu0 0.0
    %12902 = vmatpush2.msra.mxu0 0.0
    %12903 = vmatprep.subr.mxu0 0.0
    %12904 = vmatpush2.msra.mxu0 0.0
    %12905 = vmatprep.subr.mxu0 0.0
    %12906 = vmatpush2.msra.mxu0 0.0
    %12907 = vmatprep.subr.mxu0 0.0
    %12908 = vmatpush2.msra.mxu0 0.0
    %12909 = vmatprep.mubr.f32.mxu0 0.0
    %12910 = vmatmul.mubr.f32.gmra.mxu0 %v12762
    %v12911 = vpop.f32.mrf.mxu0
    %v12912 = vadd.f32 0.0, %v12911
    %v12913 = vpop.f32.mrf.mxu0
    %12914 = vmatprep.mubr.f32.mxu0 0.0
    %12915 = vmatmul.mubr.f32.gmra.mxu0 %v12765
    %v12916 = vpop.f32.mrf.mxu0
    %v12917 = vadd.f32 0.0, %v12916
    %v12918 = vpop.f32.mrf.mxu0
    %12919 = vmatprep.mubr.f32.mxu0 0.0
    %12920 = vmatmul.mubr.f32.gmra.mxu0 %v12768
    %v12921 = vpop.f32.mrf.mxu0
    %v12922 = vadd.f32 0.0, %v12921
    %v12923 = vpop.f32.mrf.mxu0
    %12924 = vmatprep.mubr.f32.mxu0 0.0
    %12925 = vmatmul.mubr.f32.gmra.mxu0 %v12771
    %v12926 = vpop.f32.mrf.mxu0
    %v12927 = vadd.f32 0.0, %v12926
    %v12928 = vpop.f32.mrf.mxu0
    %12929 = vmatprep.mubr.f32.mxu0 0.0
    %12930 = vmatmul.mubr.f32.gmra.mxu0 %v12774
    %v12931 = vpop.f32.mrf.mxu0
    %v12932 = vadd.f32 0.0, %v12931
    %v12933 = vpop.f32.mrf.mxu0
    %12934 = vmatprep.mubr.f32.mxu0 0.0
    %12935 = vmatmul.mubr.f32.gmra.mxu0 %v12777
    %v12936 = vpop.f32.mrf.mxu0
    %v12937 = vadd.f32 0.0, %v12936
    %v12938 = vpop.f32.mrf.mxu0
    %12939 = vmatprep.mubr.f32.mxu0 0.0
    %12940 = vmatmul.mubr.f32.gmra.mxu0 %v12780
    %v12941 = vpop.f32.mrf.mxu0
    %v12942 = vadd.f32 0.0, %v12941
    %v12943 = vpop.f32.mrf.mxu0
    %12944 = vmatprep.mubr.f32.mxu0 0.0
    %12945 = vmatmul.mubr.f32.gmra.mxu0 %v12783
    %v12946 = vpop.f32.mrf.mxu0
    %v12947 = vadd.f32 0.0, %v12946
    %v12948 = vpop.f32.mrf.mxu0
    %12949 = vmatprep.mubr.f32.mxu0 0.0
    %12950 = vmatmul.mubr.f32.gmra.mxu0 %v12786
    %v12951 = vpop.f32.mrf.mxu0
    %v12952 = vadd.f32 0.0, %v12951
    %v12953 = vpop.f32.mrf.mxu0
    %12954 = vmatprep.mubr.f32.mxu0 0.0
    %12955 = vmatmul.mubr.f32.gmra.mxu0 %v12789
    %v12956 = vpop.f32.mrf.mxu0
    %v12957 = vadd.f32 0.0, %v12956
    %v12958 = vpop.f32.mrf.mxu0
    %12959 = vmatprep.mubr.f32.mxu0 0.0
    %12960 = vmatmul.mubr.f32.gmra.mxu0 %v12792
    %v12961 = vpop.f32.mrf.mxu0
    %v12962 = vadd.f32 0.0, %v12961
    %v12963 = vpop.f32.mrf.mxu0
    %12964 = vmatprep.mubr.f32.mxu0 0.0
    %12965 = vmatmul.mubr.f32.gmra.mxu0 %v12795
    %v12966 = vpop.f32.mrf.mxu0
    %v12967 = vadd.f32 0.0, %v12966
    %v12968 = vpop.f32.mrf.mxu0
    %12969 = vmatprep.mubr.f32.mxu0 0.0
    %12970 = vmatmul.mubr.f32.gmra.mxu0 %v12798
    %v12971 = vpop.f32.mrf.mxu0
    %v12972 = vadd.f32 0.0, %v12971
    %v12973 = vpop.f32.mrf.mxu0
    %12974 = vmatprep.mubr.f32.mxu0 0.0
    %12975 = vmatmul.mubr.f32.gmra.mxu0 %v12801
    %v12976 = vpop.f32.mrf.mxu0
    %v12977 = vadd.f32 0.0, %v12976
    %v12978 = vpop.f32.mrf.mxu0
    %12979 = vmatprep.mubr.f32.mxu0 0.0
    %12980 = vmatmul.mubr.f32.gmra.mxu0 %v12804
    %v12981 = vpop.f32.mrf.mxu0
    %v12982 = vadd.f32 0.0, %v12981
    %v12983 = vpop.f32.mrf.mxu0
    %12984 = vmatprep.mubr.f32.mxu0 0.0
    %12985 = vmatmul.mubr.f32.gmra.mxu0 %v12807
    %v12986 = vpop.f32.mrf.mxu0
    %v12987 = vadd.f32 0.0, %v12986
    %v12988 = vpop.f32.mrf.mxu0
    %12989 = vmatprep.mubr.f32.mxu0 0.0
    %12990 = vmatmul.mubr.f32.gmra.mxu0 %v12810
    %v12991 = vpop.f32.mrf.mxu0
    %v12992 = vadd.f32 0.0, %v12991
    %v12993 = vpop.f32.mrf.mxu0
    %12994 = vmatprep.mubr.f32.mxu0 0.0
    %12995 = vmatmul.mubr.f32.gmra.mxu0 %v12813
    %v12996 = vpop.f32.mrf.mxu0
    %v12997 = vadd.f32 0.0, %v12996
    %v12998 = vpop.f32.mrf.mxu0
    %12999 = vmatprep.mubr.f32.mxu0 0.0
    %13000 = vmatmul.mubr.f32.gmra.mxu0 %v12816
    %v13001 = vpop.f32.mrf.mxu0
    %v13002 = vadd.f32 0.0, %v13001
    %v13003 = vpop.f32.mrf.mxu0
    %13004 = vmatprep.mubr.f32.mxu0 0.0
    %13005 = vmatmul.mubr.f32.gmra.mxu0 %v12819
    %v13006 = vpop.f32.mrf.mxu0
    %v13007 = vadd.f32 0.0, %v13006
    %v13008 = vpop.f32.mrf.mxu0
    %13009 = vmatprep.mubr.f32.mxu0 0.0
    %13010 = vmatmul.mubr.f32.gmra.mxu0 %v12822
    %v13011 = vpop.f32.mrf.mxu0
    %v13012 = vadd.f32 0.0, %v13011
    %v13013 = vpop.f32.mrf.mxu0
    %13014 = vmatprep.mubr.f32.mxu0 0.0
    %13015 = vmatmul.mubr.f32.gmra.mxu0 %v12825
    %v13016 = vpop.f32.mrf.mxu0
    %v13017 = vadd.f32 0.0, %v13016
    %v13018 = vpop.f32.mrf.mxu0
    %13019 = vmatprep.mubr.f32.mxu0 0.0
    %13020 = vmatmul.mubr.f32.gmra.mxu0 %v12828
    %v13021 = vpop.f32.mrf.mxu0
    %v13022 = vadd.f32 0.0, %v13021
    %v13023 = vpop.f32.mrf.mxu0
    %13024 = vmatprep.mubr.f32.mxu0 0.0
    %13025 = vmatmul.mubr.f32.gmra.mxu0 %v12831
    %v13026 = vpop.f32.mrf.mxu0
    %v13027 = vadd.f32 0.0, %v13026
    %v13028 = vpop.f32.mrf.mxu0
    %13029 = vmatprep.mubr.f32.mxu0 0.0
    %13030 = vmatmul.mubr.f32.gmra.mxu0 %v12834
    %v13031 = vpop.f32.mrf.mxu0
    %v13032 = vadd.f32 0.0, %v13031
    %v13033 = vpop.f32.mrf.mxu0
    %13034 = vmatprep.mubr.f32.mxu0 0.0
    %13035 = vmatmul.mubr.f32.gmra.mxu0 %v12837
    %v13036 = vpop.f32.mrf.mxu0
    %v13037 = vadd.f32 0.0, %v13036
    %v13038 = vpop.f32.mrf.mxu0
    %13039 = vmatprep.mubr.f32.mxu0 0.0
    %13040 = vmatmul.mubr.f32.gmra.mxu0 %v12840
    %v13041 = vpop.f32.mrf.mxu0
    %v13042 = vadd.f32 0.0, %v13041
    %v13043 = vpop.f32.mrf.mxu0
    %13044 = vmatprep.mubr.f32.mxu0 0.0
    %13045 = vmatmul.mubr.f32.gmra.mxu0 %v12843
    %v13046 = vpop.f32.mrf.mxu0
    %v13047 = vadd.f32 0.0, %v13046
    %v13048 = vpop.f32.mrf.mxu0
    %13049 = vdwg.mxu0
    %v13050 = vadd.f32 %v12594, %v12912
    %v13051 = vadd.f32 %v12599, %v12917
    %v13052 = vadd.f32 %v12604, %v12922
    %v13053 = vadd.f32 %v12609, %v12927
    %v13054 = vadd.f32 %v12614, %v12932
    %v13055 = vadd.f32 %v12619, %v12937
    %v13056 = vadd.f32 %v12624, %v12942
    %v13057 = vadd.f32 %v12629, %v12947
    %v13058 = vadd.f32 %v12634, %v12952
    %v13059 = vadd.f32 %v12639, %v12957
    %v13060 = vadd.f32 %v12644, %v12962
    %v13061 = vadd.f32 %v12649, %v12967
    %v13062 = vadd.f32 %v12654, %v12972
    %v13063 = vadd.f32 %v12659, %v12977
    %v13064 = vadd.f32 %v12664, %v12982
    %v13065 = vadd.f32 %v12669, %v12987
    %v13066 = vadd.f32 %v12674, %v12992
    %v13067 = vadd.f32 %v12679, %v12997
    %v13068 = vadd.f32 %v12684, %v13002
    %v13069 = vadd.f32 %v12689, %v13007
    %v13070 = vadd.f32 %v12694, %v13012
    %v13071 = vadd.f32 %v12699, %v13017
    %v13072 = vadd.f32 %v12704, %v13022
    %v13073 = vadd.f32 %v12709, %v13027
    %v13074 = vadd.f32 %v12714, %v13032
    %v13075 = vadd.f32 %v12719, %v13037
    %v13076 = vadd.f32 %v12724, %v13042
    %v13077 = vadd.f32 %v12729, %v13047
    %s13078 = scalar_lea.vmem [#allocation10], 672
    %v13079 = vld [vmem:[%s13078] sm:$0xff]
    %v13080 = vld [vmem:[%s13078 + $0x8] sm:$0xff]
    %v13081 = vld [vmem:[%s13078 + $0x10] sm:$0xff]
    %v13082 = vld [vmem:[%s13078 + $0x18] sm:$0xff]
    %v13083 = vld [vmem:[%s13078 + $0x20] sm:$0xff]
    %v13084 = vld [vmem:[%s13078 + $0x28] sm:$0xff]
    %v13085 = vld [vmem:[%s13078 + $0x30] sm:$0xff]
    %v13086 = vld [vmem:[%s13078 + $0x38] sm:$0xff]
    %v13087 = vld [vmem:[%s13078 + $0x40] sm:$0xff]
    %v13088 = vld [vmem:[%s13078 + $0x48] sm:$0xff]
    %v13089 = vld [vmem:[%s13078 + $0x50] sm:$0xff]
    %v13090 = vld [vmem:[%s13078 + $0x58] sm:$0xff]
    %v13091 = vld [vmem:[%s13078 + $0x60] sm:$0xff]
    %v13092 = vld [vmem:[%s13078 + $0x68] sm:$0xff]
    %v13093 = vld [vmem:[%s13078 + $0x70] sm:$0xff]
    %v13094 = vld [vmem:[%s13078 + $0x78] sm:$0xff]
    %v13095 = vld [vmem:[%s13078 + $0x80] sm:$0xff]
    %v13096 = vld [vmem:[%s13078 + $0x88] sm:$0xff]
    %v13097 = vld [vmem:[%s13078 + $0x90] sm:$0xff]
    %v13098 = vld [vmem:[%s13078 + $0x98] sm:$0xff]
    %v13099 = vld [vmem:[%s13078 + $0xa0] sm:$0xff]
    %v13100 = vld [vmem:[%s13078 + $0xa8] sm:$0xff]
    %v13101 = vld [vmem:[%s13078 + $0xb0] sm:$0xff]
    %v13102 = vld [vmem:[%s13078 + $0xb8] sm:$0xff]
    %v13103 = vld [vmem:[%s13078 + $0xc0] sm:$0xff]
    %v13104 = vld [vmem:[%s13078 + $0xc8] sm:$0xff]
    %v13105 = vld [vmem:[%s13078 + $0xd0] sm:$0xff]
    %v13106 = vld [vmem:[%s13078 + $0xd8] sm:$0xff]
    %v13108 = vsel %vm12153, %v13079, 0
    %v13111 = vsel %vm12153, %v13080, 0
    %v13114 = vsel %vm12153, %v13081, 0
    %v13117 = vsel %vm12153, %v13082, 0
    %v13120 = vsel %vm12153, %v13083, 0
    %v13123 = vsel %vm12153, %v13084, 0
    %v13126 = vsel %vm12153, %v13085, 0
    %v13129 = vsel %vm12153, %v13086, 0
    %v13132 = vsel %vm12153, %v13087, 0
    %v13135 = vsel %vm12153, %v13088, 0
    %v13138 = vsel %vm12153, %v13089, 0
    %v13141 = vsel %vm12153, %v13090, 0
    %v13144 = vsel %vm12153, %v13091, 0
    %v13147 = vsel %vm12153, %v13092, 0
    %v13150 = vsel %vm12153, %v13093, 0
    %v13153 = vsel %vm12153, %v13094, 0
    %v13156 = vsel %vm12153, %v13095, 0
    %v13159 = vsel %vm12153, %v13096, 0
    %v13162 = vsel %vm12153, %v13097, 0
    %v13165 = vsel %vm12153, %v13098, 0
    %v13168 = vsel %vm12153, %v13099, 0
    %v13171 = vsel %vm12153, %v13100, 0
    %v13174 = vsel %vm12153, %v13101, 0
    %v13177 = vsel %vm12153, %v13102, 0
    %v13180 = vsel %vm12153, %v13103, 0
    %v13183 = vsel %vm12153, %v13104, 0
    %v13186 = vsel %vm12153, %v13105, 0
    %v13189 = vsel %vm12153, %v13106, 0
    %13191 = vmatprep.subr.mxu0 0.0
    %13192 = vmatpush1.msra.mxu0 0.0
    %13193 = vmatprep.subr.mxu0 0.0
    %13194 = vmatpush1.msra.mxu0 0.0
    %13195 = vmatprep.subr.mxu0 0.0
    %13196 = vmatpush1.msra.mxu0 %v12094
    %13197 = vmatprep.subr.mxu0 0.0
    %13198 = vmatpush1.msra.mxu0 %v12090
    %13199 = vmatprep.subr.mxu0 0.0
    %13200 = vmatpush1.msra.mxu0 %v12084
    %13201 = vmatprep.subr.mxu0 0.0
    %13202 = vmatpush1.msra.mxu0 %v12080
    %13203 = vmatprep.subr.mxu0 0.0
    %13204 = vmatpush1.msra.mxu0 %v12074
    %13205 = vmatprep.subr.mxu0 0.0
    %13206 = vmatpush1.msra.mxu0 %v12070
    %13207 = vmatprep.subr.mxu0 0.0
    %13208 = vmatpush1.msra.mxu0 %v12064
    %13209 = vmatprep.subr.mxu0 0.0
    %13210 = vmatpush1.msra.mxu0 %v12060
    %13211 = vmatprep.subr.mxu0 0.0
    %13212 = vmatpush1.msra.mxu0 %v12054
    %13213 = vmatprep.subr.mxu0 0.0
    %13214 = vmatpush1.msra.mxu0 %v12050
    %13215 = vmatprep.subr.mxu0 0.0
    %13216 = vmatpush1.msra.mxu0 %v12044
    %13217 = vmatprep.subr.mxu0 0.0
    %13218 = vmatpush1.msra.mxu0 %v12040
    %13219 = vmatprep.subr.mxu0 0.0
    %13220 = vmatpush1.msra.mxu0 %v12034
    %13221 = vmatprep.subr.mxu0 0.0
    %13222 = vmatpush1.msra.mxu0 %v12030
    %13223 = vmatprep.subr.mxu0 0.0
    %13224 = vmatpush2.msra.mxu0 0.0
    %13225 = vmatprep.subr.mxu0 0.0
    %13226 = vmatpush2.msra.mxu0 0.0
    %13227 = vmatprep.subr.mxu0 0.0
    %13228 = vmatpush2.msra.mxu0 0.0
    %13229 = vmatprep.subr.mxu0 0.0
    %13230 = vmatpush2.msra.mxu0 0.0
    %13231 = vmatprep.subr.mxu0 0.0
    %13232 = vmatpush2.msra.mxu0 0.0
    %13233 = vmatprep.subr.mxu0 0.0
    %13234 = vmatpush2.msra.mxu0 0.0
    %13235 = vmatprep.subr.mxu0 0.0
    %13236 = vmatpush2.msra.mxu0 0.0
    %13237 = vmatprep.subr.mxu0 0.0
    %13238 = vmatpush2.msra.mxu0 0.0
    %13239 = vmatprep.subr.mxu0 0.0
    %13240 = vmatpush2.msra.mxu0 0.0
    %13241 = vmatprep.subr.mxu0 0.0
    %13242 = vmatpush2.msra.mxu0 0.0
    %13243 = vmatprep.subr.mxu0 0.0
    %13244 = vmatpush2.msra.mxu0 0.0
    %13245 = vmatprep.subr.mxu0 0.0
    %13246 = vmatpush2.msra.mxu0 0.0
    %13247 = vmatprep.subr.mxu0 0.0
    %13248 = vmatpush2.msra.mxu0 0.0
    %13249 = vmatprep.subr.mxu0 0.0
    %13250 = vmatpush2.msra.mxu0 0.0
    %13251 = vmatprep.subr.mxu0 0.0
    %13252 = vmatpush2.msra.mxu0 0.0
    %13253 = vmatprep.subr.mxu0 0.0
    %13254 = vmatpush2.msra.mxu0 0.0
    %13255 = vmatprep.mubr.f32.mxu0 0.0
    %13256 = vmatmul.mubr.f32.gmra.mxu0 %v13108
    %v13257 = vpop.f32.mrf.mxu0
    %v13258 = vadd.f32 0.0, %v13257
    %v13259 = vpop.f32.mrf.mxu0
    %13260 = vmatprep.mubr.f32.mxu0 0.0
    %13261 = vmatmul.mubr.f32.gmra.mxu0 %v13111
    %v13262 = vpop.f32.mrf.mxu0
    %v13263 = vadd.f32 0.0, %v13262
    %v13264 = vpop.f32.mrf.mxu0
    %13265 = vmatprep.mubr.f32.mxu0 0.0
    %13266 = vmatmul.mubr.f32.gmra.mxu0 %v13114
    %v13267 = vpop.f32.mrf.mxu0
    %v13268 = vadd.f32 0.0, %v13267
    %v13269 = vpop.f32.mrf.mxu0
    %13270 = vmatprep.mubr.f32.mxu0 0.0
    %13271 = vmatmul.mubr.f32.gmra.mxu0 %v13117
    %v13272 = vpop.f32.mrf.mxu0
    %v13273 = vadd.f32 0.0, %v13272
    %v13274 = vpop.f32.mrf.mxu0
    %13275 = vmatprep.mubr.f32.mxu0 0.0
    %13276 = vmatmul.mubr.f32.gmra.mxu0 %v13120
    %v13277 = vpop.f32.mrf.mxu0
    %v13278 = vadd.f32 0.0, %v13277
    %v13279 = vpop.f32.mrf.mxu0
    %13280 = vmatprep.mubr.f32.mxu0 0.0
    %13281 = vmatmul.mubr.f32.gmra.mxu0 %v13123
    %v13282 = vpop.f32.mrf.mxu0
    %v13283 = vadd.f32 0.0, %v13282
    %v13284 = vpop.f32.mrf.mxu0
    %13285 = vmatprep.mubr.f32.mxu0 0.0
    %13286 = vmatmul.mubr.f32.gmra.mxu0 %v13126
    %v13287 = vpop.f32.mrf.mxu0
    %v13288 = vadd.f32 0.0, %v13287
    %v13289 = vpop.f32.mrf.mxu0
    %13290 = vmatprep.mubr.f32.mxu0 0.0
    %13291 = vmatmul.mubr.f32.gmra.mxu0 %v13129
    %v13292 = vpop.f32.mrf.mxu0
    %v13293 = vadd.f32 0.0, %v13292
    %v13294 = vpop.f32.mrf.mxu0
    %13295 = vmatprep.mubr.f32.mxu0 0.0
    %13296 = vmatmul.mubr.f32.gmra.mxu0 %v13132
    %v13297 = vpop.f32.mrf.mxu0
    %v13298 = vadd.f32 0.0, %v13297
    %v13299 = vpop.f32.mrf.mxu0
    %13300 = vmatprep.mubr.f32.mxu0 0.0
    %13301 = vmatmul.mubr.f32.gmra.mxu0 %v13135
    %v13302 = vpop.f32.mrf.mxu0
    %v13303 = vadd.f32 0.0, %v13302
    %v13304 = vpop.f32.mrf.mxu0
    %13305 = vmatprep.mubr.f32.mxu0 0.0
    %13306 = vmatmul.mubr.f32.gmra.mxu0 %v13138
    %v13307 = vpop.f32.mrf.mxu0
    %v13308 = vadd.f32 0.0, %v13307
    %v13309 = vpop.f32.mrf.mxu0
    %13310 = vmatprep.mubr.f32.mxu0 0.0
    %13311 = vmatmul.mubr.f32.gmra.mxu0 %v13141
    %v13312 = vpop.f32.mrf.mxu0
    %v13313 = vadd.f32 0.0, %v13312
    %v13314 = vpop.f32.mrf.mxu0
    %13315 = vmatprep.mubr.f32.mxu0 0.0
    %13316 = vmatmul.mubr.f32.gmra.mxu0 %v13144
    %v13317 = vpop.f32.mrf.mxu0
    %v13318 = vadd.f32 0.0, %v13317
    %v13319 = vpop.f32.mrf.mxu0
    %13320 = vmatprep.mubr.f32.mxu0 0.0
    %13321 = vmatmul.mubr.f32.gmra.mxu0 %v13147
    %v13322 = vpop.f32.mrf.mxu0
    %v13323 = vadd.f32 0.0, %v13322
    %v13324 = vpop.f32.mrf.mxu0
    %13325 = vmatprep.mubr.f32.mxu0 0.0
    %13326 = vmatmul.mubr.f32.gmra.mxu0 %v13150
    %v13327 = vpop.f32.mrf.mxu0
    %v13328 = vadd.f32 0.0, %v13327
    %v13329 = vpop.f32.mrf.mxu0
    %13330 = vmatprep.mubr.f32.mxu0 0.0
    %13331 = vmatmul.mubr.f32.gmra.mxu0 %v13153
    %v13332 = vpop.f32.mrf.mxu0
    %v13333 = vadd.f32 0.0, %v13332
    %v13334 = vpop.f32.mrf.mxu0
    %13335 = vmatprep.mubr.f32.mxu0 0.0
    %13336 = vmatmul.mubr.f32.gmra.mxu0 %v13156
    %v13337 = vpop.f32.mrf.mxu0
    %v13338 = vadd.f32 0.0, %v13337
    %v13339 = vpop.f32.mrf.mxu0
    %13340 = vmatprep.mubr.f32.mxu0 0.0
    %13341 = vmatmul.mubr.f32.gmra.mxu0 %v13159
    %v13342 = vpop.f32.mrf.mxu0
    %v13343 = vadd.f32 0.0, %v13342
    %v13344 = vpop.f32.mrf.mxu0
    %13345 = vmatprep.mubr.f32.mxu0 0.0
    %13346 = vmatmul.mubr.f32.gmra.mxu0 %v13162
    %v13347 = vpop.f32.mrf.mxu0
    %v13348 = vadd.f32 0.0, %v13347
    %v13349 = vpop.f32.mrf.mxu0
    %13350 = vmatprep.mubr.f32.mxu0 0.0
    %13351 = vmatmul.mubr.f32.gmra.mxu0 %v13165
    %v13352 = vpop.f32.mrf.mxu0
    %v13353 = vadd.f32 0.0, %v13352
    %v13354 = vpop.f32.mrf.mxu0
    %13355 = vmatprep.mubr.f32.mxu0 0.0
    %13356 = vmatmul.mubr.f32.gmra.mxu0 %v13168
    %v13357 = vpop.f32.mrf.mxu0
    %v13358 = vadd.f32 0.0, %v13357
    %v13359 = vpop.f32.mrf.mxu0
    %13360 = vmatprep.mubr.f32.mxu0 0.0
    %13361 = vmatmul.mubr.f32.gmra.mxu0 %v13171
    %v13362 = vpop.f32.mrf.mxu0
    %v13363 = vadd.f32 0.0, %v13362
    %v13364 = vpop.f32.mrf.mxu0
    %13365 = vmatprep.mubr.f32.mxu0 0.0
    %13366 = vmatmul.mubr.f32.gmra.mxu0 %v13174
    %v13367 = vpop.f32.mrf.mxu0
    %v13368 = vadd.f32 0.0, %v13367
    %v13369 = vpop.f32.mrf.mxu0
    %13370 = vmatprep.mubr.f32.mxu0 0.0
    %13371 = vmatmul.mubr.f32.gmra.mxu0 %v13177
    %v13372 = vpop.f32.mrf.mxu0
    %v13373 = vadd.f32 0.0, %v13372
    %v13374 = vpop.f32.mrf.mxu0
    %13375 = vmatprep.mubr.f32.mxu0 0.0
    %13376 = vmatmul.mubr.f32.gmra.mxu0 %v13180
    %v13377 = vpop.f32.mrf.mxu0
    %v13378 = vadd.f32 0.0, %v13377
    %v13379 = vpop.f32.mrf.mxu0
    %13380 = vmatprep.mubr.f32.mxu0 0.0
    %13381 = vmatmul.mubr.f32.gmra.mxu0 %v13183
    %v13382 = vpop.f32.mrf.mxu0
    %v13383 = vadd.f32 0.0, %v13382
    %v13384 = vpop.f32.mrf.mxu0
    %13385 = vmatprep.mubr.f32.mxu0 0.0
    %13386 = vmatmul.mubr.f32.gmra.mxu0 %v13186
    %v13387 = vpop.f32.mrf.mxu0
    %v13388 = vadd.f32 0.0, %v13387
    %v13389 = vpop.f32.mrf.mxu0
    %13390 = vmatprep.mubr.f32.mxu0 0.0
    %13391 = vmatmul.mubr.f32.gmra.mxu0 %v13189
    %v13392 = vpop.f32.mrf.mxu0
    %v13393 = vadd.f32 0.0, %v13392
    %v13394 = vpop.f32.mrf.mxu0
    %13395 = vdwg.mxu0
    %v13396 = vadd.f32 %v13050, %v13258
    %v13397 = vadd.f32 %v13051, %v13263
    %v13398 = vadd.f32 %v13052, %v13268
    %v13399 = vadd.f32 %v13053, %v13273
    %v13400 = vadd.f32 %v13054, %v13278
    %v13401 = vadd.f32 %v13055, %v13283
    %v13402 = vadd.f32 %v13056, %v13288
    %v13403 = vadd.f32 %v13057, %v13293
    %v13404 = vadd.f32 %v13058, %v13298
    %v13405 = vadd.f32 %v13059, %v13303
    %v13406 = vadd.f32 %v13060, %v13308
    %v13407 = vadd.f32 %v13061, %v13313
    %v13408 = vadd.f32 %v13062, %v13318
    %v13409 = vadd.f32 %v13063, %v13323
    %v13410 = vadd.f32 %v13064, %v13328
    %v13411 = vadd.f32 %v13065, %v13333
    %v13412 = vadd.f32 %v13066, %v13338
    %v13413 = vadd.f32 %v13067, %v13343
    %v13414 = vadd.f32 %v13068, %v13348
    %v13415 = vadd.f32 %v13069, %v13353
    %v13416 = vadd.f32 %v13070, %v13358
    %v13417 = vadd.f32 %v13071, %v13363
    %v13418 = vadd.f32 %v13072, %v13368
    %v13419 = vadd.f32 %v13073, %v13373
    %v13420 = vadd.f32 %v13074, %v13378
    %v13421 = vadd.f32 %v13075, %v13383
    %v13422 = vadd.f32 %v13076, %v13388
    %v13423 = vadd.f32 %v13077, %v13393
    %v13424 = vtanh.pop %v13396
    %v13425 = vtanh.pop %v13397
    %v13426 = vtanh.pop %v13398
    %v13427 = vtanh.pop %v13399
    %v13428 = vtanh.pop %v13400
    %v13429 = vtanh.pop %v13401
    %v13430 = vtanh.pop %v13402
    %v13431 = vtanh.pop %v13403
    %v13432 = vtanh.pop %v13404
    %v13433 = vtanh.pop %v13405
    %v13434 = vtanh.pop %v13406
    %v13435 = vtanh.pop %v13407
    %v13436 = vtanh.pop %v13408
    %v13437 = vtanh.pop %v13409
    %v13438 = vtanh.pop %v13410
    %v13439 = vtanh.pop %v13411
    %v13440 = vtanh.pop %v13412
    %v13441 = vtanh.pop %v13413
    %v13442 = vtanh.pop %v13414
    %v13443 = vtanh.pop %v13415
    %v13444 = vtanh.pop %v13416
    %v13445 = vtanh.pop %v13417
    %v13446 = vtanh.pop %v13418
    %v13447 = vtanh.pop %v13419
    %v13448 = vtanh.pop %v13420
    %v13449 = vtanh.pop %v13421
    %v13450 = vtanh.pop %v13422
    %v13451 = vtanh.pop %v13423
    %v13480 = vcombine.high %v13424, %v13424
    %v13481 = vcombine.high %v13425, %v13425
    %v13482 = vcombine.high %v13426, %v13426
    %v13483 = vcombine.high %v13427, %v13427
    %v13484 = vcombine.high %v13428, %v13428
    %v13485 = vcombine.high %v13429, %v13429
    %v13486 = vcombine.high %v13430, %v13430
    %v13487 = vcombine.high %v13431, %v13431
    %v13488 = vcombine.high %v13432, %v13432
    %v13489 = vcombine.high %v13433, %v13433
    %v13490 = vcombine.high %v13434, %v13434
    %v13491 = vcombine.high %v13435, %v13435
    %v13492 = vcombine.high %v13436, %v13436
    %v13493 = vcombine.high %v13437, %v13437
    %v13494 = vcombine.high %v13438, %v13438
    %v13495 = vcombine.high %v13439, %v13439
    %v13496 = vcombine.high %v13440, %v13440
    %v13497 = vcombine.high %v13441, %v13441
    %v13498 = vcombine.high %v13442, %v13442
    %v13499 = vcombine.high %v13443, %v13443
    %v13500 = vcombine.high %v13444, %v13444
    %v13501 = vcombine.high %v13445, %v13445
    %v13502 = vcombine.high %v13446, %v13446
    %v13503 = vcombine.high %v13447, %v13447
    %v13504 = vcombine.high %v13448, %v13448
    %v13505 = vcombine.high %v13449, %v13449
    %v13506 = vcombine.high %v13450, %v13450
    %v13507 = vcombine.high %v13451, %v13451
    %v13512 = vcombine.low %v13424, %v13480
    %v13513 = vcombine.low %v13425, %v13481
    %v13514 = vcombine.low %v13426, %v13482
    %v13515 = vcombine.low %v13483, %v13428
    %v13516 = vcombine.low %v13484, %v13429
    %v13517 = vcombine.low %v13485, %v13430
    %v13518 = vcombine.low %v13431, %v13487
    %v13519 = vcombine.low %v13432, %v13488
    %v13520 = vcombine.low %v13433, %v13489
    %v13521 = vcombine.low %v13490, %v13435
    %v13522 = vcombine.low %v13491, %v13436
    %v13523 = vcombine.low %v13492, %v13437
    %v13524 = vcombine.low %v13438, %v13494
    %v13525 = vcombine.low %v13439, %v13495
    %v13526 = vcombine.low %v13440, %v13496
    %v13527 = vcombine.low %v13497, %v13442
    %v13528 = vcombine.low %v13498, %v13443
    %v13529 = vcombine.low %v13499, %v13444
    %v13530 = vcombine.low %v13445, %v13501
    %v13531 = vcombine.low %v13446, %v13502
    %v13532 = vcombine.low %v13447, %v13503
    %v13533 = vcombine.low %v13504, %v13449
    %v13534 = vcombine.low %v13505, %v13450
    %v13535 = vcombine.low %v13506, %v13451
    %vm13560 = vcmask 228352
    %13561 = vst.msk [vmem:[%s9] sm:$0xff] %vm13560, %v13512
    %13562 = vst.msk [vmem:[%s9 + $0x8] sm:$0xff] %vm13560, %v13513
    %13563 = vst.msk [vmem:[%s9 + $0x10] sm:$0xff] %vm13560, %v13514
    %vm13564 = vcmask 224256
    %13565 = vst.msk [vmem:[%s9 + $0x18] sm:$0xf] %vm13564, %v13427
    %13566 = vst.msk [vmem:[%s9 + $0x20] sm:$0xff] %vm13560, %v13515
    %13567 = vst.msk [vmem:[%s9 + $0x28] sm:$0xff] %vm13560, %v13516
    %13568 = vst.msk [vmem:[%s9 + $0x30] sm:$0xff] %vm13560, %v13517
    %13569 = vst.msk [vmem:[%s9 + $0x38] sm:$0xf] %vm13564, %v13486
    %13570 = vst.msk [vmem:[%s9 + $0x40] sm:$0xff] %vm13560, %v13518
    %13571 = vst.msk [vmem:[%s9 + $0x48] sm:$0xff] %vm13560, %v13519
    %13572 = vst.msk [vmem:[%s9 + $0x50] sm:$0xff] %vm13560, %v13520
    %13573 = vst.msk [vmem:[%s9 + $0x58] sm:$0xf] %vm13564, %v13434
    %13574 = vst.msk [vmem:[%s9 + $0x60] sm:$0xff] %vm13560, %v13521
    %13575 = vst.msk [vmem:[%s9 + $0x68] sm:$0xff] %vm13560, %v13522
    %13576 = vst.msk [vmem:[%s9 + $0x70] sm:$0xff] %vm13560, %v13523
    %13577 = vst.msk [vmem:[%s9 + $0x78] sm:$0xf] %vm13564, %v13493
    %13578 = vst.msk [vmem:[%s9 + $0x80] sm:$0xff] %vm13560, %v13524
    %13579 = vst.msk [vmem:[%s9 + $0x88] sm:$0xff] %vm13560, %v13525
    %13580 = vst.msk [vmem:[%s9 + $0x90] sm:$0xff] %vm13560, %v13526
    %13581 = vst.msk [vmem:[%s9 + $0x98] sm:$0xf] %vm13564, %v13441
    %13582 = vst.msk [vmem:[%s9 + $0xa0] sm:$0xff] %vm13560, %v13527
    %13583 = vst.msk [vmem:[%s9 + $0xa8] sm:$0xff] %vm13560, %v13528
    %13584 = vst.msk [vmem:[%s9 + $0xb0] sm:$0xff] %vm13560, %v13529
    %13585 = vst.msk [vmem:[%s9 + $0xb8] sm:$0xf] %vm13564, %v13500
    %13586 = vst.msk [vmem:[%s9 + $0xc0] sm:$0xff] %vm13560, %v13530
    %13587 = vst.msk [vmem:[%s9 + $0xc8] sm:$0xff] %vm13560, %v13531
    %13588 = vst.msk [vmem:[%s9 + $0xd0] sm:$0xff] %vm13560, %v13532
    %13589 = vst.msk [vmem:[%s9 + $0xd8] sm:$0xf] %vm13564, %v13448
    %13590 = vst.msk [vmem:[%s9 + $0xe0] sm:$0xff] %vm13560, %v13533
    %13591 = vst.msk [vmem:[%s9 + $0xe8] sm:$0xff] %vm13560, %v13534
    %13592 = vst.msk [vmem:[%s9 + $0xf0] sm:$0xff] %vm13560, %v13535
    %13593 = vst.msk [vmem:[%s9 + $0xf8] sm:$0xf] %vm13564, %v13507
    // Predicated region
    $region62: #{generator_forward.1} parent=1 // pred_check
      _
    $region63: #{generator_forward.1} parent=1 // pred_check_branch
      %13595 = sbr.rel (0) target = $region65
    $region64: #{generator_forward.1} parent=1 // pred_region
      _
    $region65: #{generator_forward.1} parent=1 // pred_fallthru
      _
    // Predicated region
    $region66: #{generator_forward.1} parent=1 // pred_check
      _
    $region67: #{generator_forward.1} parent=1 // pred_check_branch
      %13597 = sbr.rel (0) target = $region69
    $region68: #{generator_forward.1} parent=1 // pred_region
      _
    $region69: #{generator_forward.1} parent=1 // pred_fallthru
      _
    %13598 = vsyncpa [#allocation4], 1
    %13599 = vsyncpa [#allocation6], 1
    %13600 = vsyncpa [#allocation9], 1
    %13601 = vsyncpa [#allocation12], 1

</llo_original>
